<compile_context>
chip_gen: v5e
topology: v5e:2x2
jax: 0.10.0
libtpu: 0.0.40
codegen_flags: <defaults>
</compile_context>

<pallas_src>
import functools
import math

import jax
import jax.numpy as jnp
import numpy as np
from jax import lax
from jax.experimental import pallas as pl
from jax.experimental.pallas import tpu as pltpu


def _round_up(x, m):
    return (x + m - 1) // m * m


def gru_chunk_kernel(gi0_ref, whh0_ref, bhh0n_ref, w1_ref, b1_ref,
                     h1out_ref, hid_ref,
                     h0_scr, h1_scr,
                     *, hidden_size, t_chunk, seq_len, mask_tail):
    """One grid step == one chunk of T_CHUNK time steps.

    gi0_ref   : (T_CHUNK, B, 3H)  precomputed x@W_ih0^T + b_ih0 (+ b_hh0 r/z folded)
    whh0_ref  : (H, 3H)           layer-0 W_hh^T (no bias; n-gate bias separate)
    bhh0n_ref : (1, H)            layer-0 b_hh n-gate part
    w1_ref    : (2H, 4H)          fused layer-1 weights -> [s_rz | i_n | h_n]
    b1_ref    : (1, 4H)           fused layer-1 biases
    h1out_ref : (T_CHUNK, B, H)   per-step top-layer hidden (lane-dense, width H)
    hid_ref   : (2, B, H)         final hidden of both layers (resident block)
    """
    H = hidden_size
    c = pl.program_id(0)

    @pl.when(c == 0)
    def _():
        # PyTorch default: zero initial hidden state.
        h0_scr[...] = jnp.zeros_like(h0_scr)
        h1_scr[...] = jnp.zeros_like(h1_scr)

    # Hoist weight/bias loads out of the unrolled time loop.
    whh0 = whh0_ref[...]
    bhh0n = bhh0n_ref[...]
    w1 = w1_ref[...]
    b1 = b1_ref[...]

    def step(i, carry):
        h0, h1 = carry

        # ---- GRU layer 0 (input projection precomputed) ------------------
        gi0 = gi0_ref[i]                                        # (B, 3H)
        gh0 = jnp.dot(h0, whh0, preferred_element_type=jnp.float32)
        r0 = jax.nn.sigmoid(gi0[:, 0:H] + gh0[:, 0:H])
        z0 = jax.nn.sigmoid(gi0[:, H:2 * H] + gh0[:, H:2 * H])
        n0 = jnp.tanh(gi0[:, 2 * H:3 * H] + r0 * (gh0[:, 2 * H:3 * H] + bhh0n))
        h0n = (1.0 - z0) * n0 + z0 * h0

        # ---- GRU layer 1 (single fused matmul, K = 2H) --------------------
        hcat = jnp.concatenate([h0n, h1], axis=-1)              # (B, 2H)
        g1 = jnp.dot(hcat, w1, preferred_element_type=jnp.float32) + b1
        r1 = jax.nn.sigmoid(g1[:, 0:H])
        z1 = jax.nn.sigmoid(g1[:, H:2 * H])
        n1 = jnp.tanh(g1[:, 2 * H:3 * H] + r1 * g1[:, 3 * H:4 * H])
        h1n = (1.0 - z1) * n1 + z1 * h1

        if mask_tail:
            # Padded time steps (t >= seq_len) must not advance the recurrence,
            # so the final hidden reflects the last *real* step.
            valid = (c * t_chunk + i) < seq_len
            h0n = jnp.where(valid, h0n, h0)
            h1n = jnp.where(valid, h1n, h1)

        h1out_ref[i] = h1n
        return (h0n, h1n)

    h0_fin, h1_fin = lax.fori_loop(0, t_chunk, step,
                                   (h0_scr[...], h1_scr[...]), unroll=True)
    h0_scr[...] = h0_fin
    h1_scr[...] = h1_fin

    # Final hidden: single gated write (block is resident across the grid).
    @pl.when(c == pl.num_programs(0) - 1)
    def _():
        hid_ref[0] = h0_fin
        hid_ref[1] = h1_fin


def gaussian_handwriting_forward(x, params, *, n_gaussian, rnn_size, t_chunk=16):
    """Returns (mu1, mu2, log_sigma1, log_sigma2, rho, pi, zo, hidden), matching
    the PyTorch module's forward (time-major input, zero initial hidden)."""
    (w_ih0_t, w_hh0_t, b_ih0, b_hh0,
     w_ih1_t, w_hh1_t, b_ih1, b_hh1,
     w_lin_t, b_lin) = params

    seq_len, batch, _ = x.shape
    H = rnn_size
    K = n_gaussian
    out_dim = 6 * K + 1
    hp = lax.Precision.HIGHEST

    t_chunk = max(1, min(t_chunk, seq_len))
    seq_pad = _round_up(seq_len, t_chunk)
    num_chunks = seq_pad // t_chunk
    B = _round_up(max(batch, 8), 8)          # pad batch to the sublane quantum

    # --- hoisted layer-0 input projection (one time-parallel matmul) --------
    gi0 = jnp.einsum('tbi,ih->tbh', x, w_ih0_t, precision=hp) + b_ih0
    # Fold layer-0 b_hh for the r/z gates into the precomputed projection
    # (only the n-gate hh-bias must stay separate: n = tanh(i_n + r*(h_n+b_hn))).
    gi0 = gi0.at[:, :, 0:2 * H].add(b_hh0[:, 0:2 * H])
    gi0 = jnp.pad(gi0, ((0, seq_pad - seq_len), (0, B - batch), (0, 0)))
    bhh0_n = b_hh0[:, 2 * H:3 * H]                                   # (1, H)

    # --- fused layer-1 weights: [h0, h1] @ W1 -> [i_rz + h_rz | i_n | h_n] ---
    w1_big = jnp.zeros((2 * H, 4 * H), jnp.float32)
    w1_big = w1_big.at[0:H, 0:2 * H].set(w_ih1_t[:, 0:2 * H])
    w1_big = w1_big.at[H:2 * H, 0:2 * H].set(w_hh1_t[:, 0:2 * H])
    w1_big = w1_big.at[0:H, 2 * H:3 * H].set(w_ih1_t[:, 2 * H:3 * H])
    w1_big = w1_big.at[H:2 * H, 3 * H:4 * H].set(w_hh1_t[:, 2 * H:3 * H])
    b1_big = jnp.concatenate([b_ih1[:, 0:2 * H] + b_hh1[:, 0:2 * H],
                              b_ih1[:, 2 * H:3 * H],
                              b_hh1[:, 2 * H:3 * H]], axis=1)        # (1, 4H)
    # NOTE: on v6e/v7x these weights could be cast to bf16 (f32 accumulate) for
    # 2x MXU throughput; kept f32 here for a tight numerical check.

    kernel = functools.partial(gru_chunk_kernel, hidden_size=H, t_chunk=t_chunk,
                               seq_len=seq_len, mask_tail=(seq_pad != seq_len))

    h1_all, hid = pl.pallas_call(
        kernel,
        out_shape=(jax.ShapeDtypeStruct((seq_pad, B, H), jnp.float32),
                   jax.ShapeDtypeStruct((2, B, H), jnp.float32)),
        grid_spec=pltpu.PrefetchScalarGridSpec(
            num_scalar_prefetch=0,
            grid=(num_chunks,),
            in_specs=[
                pl.BlockSpec((t_chunk, B, 3 * H), lambda c: (c, 0, 0)),  # gi0 chunk
                pl.BlockSpec((H, 3 * H), lambda c: (0, 0)),              # W_hh0^T
                pl.BlockSpec((1, H), lambda c: (0, 0)),                  # b_hh0 (n gate)
                pl.BlockSpec((2 * H, 4 * H), lambda c: (0, 0)),          # fused layer-1 W
                pl.BlockSpec((1, 4 * H), lambda c: (0, 0)),              # fused layer-1 b
            ],
            out_specs=[
                pl.BlockSpec((t_chunk, B, H), lambda c: (c, 0, 0)),      # per-step h1
                pl.BlockSpec((2, B, H), lambda c: (0, 0, 0)),            # final hidden
            ],
            scratch_shapes=[pltpu.VMEM((B, H), jnp.float32),             # h0 carry
                            pltpu.VMEM((B, H), jnp.float32)],            # h1 carry
        ),
        compiler_params=pltpu.CompilerParams(
            dimension_semantics=("arbitrary",)),                         # recurrence
    )(gi0, w_hh0_t, bhh0_n, w1_big, b1_big)

    # --- hoisted final Linear: one big (seq*B, H) @ (H, 6K+1) matmul ---------
    h1_real = h1_all[:seq_len, :batch].reshape(seq_len * batch, H)
    flat = jnp.dot(h1_real, w_lin_t, precision=hp) + b_lin               # (N, 6K+1)
    hidden = hid[:, :batch, :]

    mu1 = flat[:, 0 * K:1 * K]
    mu2 = flat[:, 1 * K:2 * K]
    log_sigma1 = flat[:, 2 * K:3 * K]
    log_sigma2 = flat[:, 3 * K:4 * K]
    rho = flat[:, 4 * K:5 * K]
    pi = flat[:, 5 * K:6 * K]
    zo = flat[:, 6 * K:6 * K + 1]
    return mu1, mu2, log_sigma1, log_sigma2, rho, pi, zo, hidden


def init_params(key, n_gaussian, rnn_size):
    """Deterministic init mimicking PyTorch's uniform(-1/sqrt(H), 1/sqrt(H)).
    Weights are stored pre-transposed; GRU gate order is [r, z, n]."""
    H = rnn_size
    out_dim = 6 * n_gaussian + 1
    k = 1.0 / math.sqrt(H)
    keys = jax.random.split(key, 10)
    u = lambda kk, shape: jax.random.uniform(kk, shape, jnp.float32, -k, k)
    w_ih0_t = u(keys[0], (3, 3 * H))      # layer 0, input_size = 3
    w_hh0_t = u(keys[1], (H, 3 * H))
    b_ih0 = u(keys[2], (1, 3 * H))
    b_hh0 = u(keys[3], (1, 3 * H))
    w_ih1_t = u(keys[4], (H, 3 * H))      # layer 1, input_size = H
    w_hh1_t = u(keys[5], (H, 3 * H))
    b_ih1 = u(keys[6], (1, 3 * H))
    b_hh1 = u(keys[7], (1, 3 * H))
    w_lin_t = u(keys[8], (H, out_dim))
    b_lin = u(keys[9], (1, out_dim))
    return (w_ih0_t, w_hh0_t, b_ih0, b_hh0,
            w_ih1_t, w_hh1_t, b_ih1, b_hh1,
            w_lin_t, b_lin)


def reference_forward(x, params, n_gaussian, rnn_size):
    """Pure-JAX reference (PyTorch GRU semantics) for correctness checking."""
    (w_ih0_t, w_hh0_t, b_ih0, b_hh0,
     w_ih1_t, w_hh1_t, b_ih1, b_hh1,
     w_lin_t, b_lin) = params
    H = rnn_size
    seq_len, batch, _ = x.shape
    hp = lax.Precision.HIGHEST

    def cell(x_t, h, wih, whh, bih, bhh):
        gi = jnp.dot(x_t, wih, precision=hp) + bih
        gh = jnp.dot(h, whh, precision=hp) + bhh
        i_r, i_z, i_n = jnp.split(gi, 3, axis=1)
        h_r, h_z, h_n = jnp.split(gh, 3, axis=1)
        r = jax.nn.sigmoid(i_r + h_r)
        z = jax.nn.sigmoid(i_z + h_z)
        n = jnp.tanh(i_n + r * h_n)
        return (1.0 - z) * n + z * h

    h0 = jnp.zeros((batch, H), jnp.float32)
    h1 = jnp.zeros((batch, H), jnp.float32)
    outs = []
    for t in range(seq_len):
        h0 = cell(x[t], h0, w_ih0_t, w_hh0_t, b_ih0, b_hh0)
        h1 = cell(h0, h1, w_ih1_t, w_hh1_t, b_ih1, b_hh1)
        outs.append(jnp.dot(h1, w_lin_t, precision=hp) + b_lin)
    out = jnp.stack(outs).reshape(seq_len * batch, -1)
    hidden = jnp.stack([h0, h1])
    return out, hidden


if __name__ == "__main__":
    n_gaussian = 20
    rnn_size = 128          # 128-lane-aligned gates (module default is 256)
    seq_len, batch = 20, 2  # exercises time-chunking (T_CHUNK=16) + tail masking

    key = jax.random.PRNGKey(0)
    kp, kx = jax.random.split(key)
    params = init_params(kp, n_gaussian, rnn_size)
    x = jax.random.normal(kx, (seq_len, batch, 3), jnp.float32)

    fwd = jax.jit(functools.partial(gaussian_handwriting_forward,
                                    n_gaussian=n_gaussian, rnn_size=rnn_size))
    outs = jax.block_until_ready(fwd(x, params))
    mu1, mu2, log_sigma1, log_sigma2, rho, pi, zo, hidden = outs

    # shape checks (match torch forward: (seq*batch, K) splits, zo width 1, hidden (2,B,H))
    N = seq_len * batch
    assert mu1.shape == (N, n_gaussian) and zo.shape == (N, 1)
    assert hidden.shape == (2, batch, rnn_size)

    # numeric check vs pure-JAX reference (tightened from 1e-2)
    ref_out, ref_hid = reference_forward(x, params, n_gaussian, rnn_size)
    got = jnp.concatenate([mu1, mu2, log_sigma1, log_sigma2, rho, pi, zo], axis=1)
    np.testing.assert_allclose(np.asarray(got), np.asarray(ref_out), rtol=5e-4, atol=5e-4)
    np.testing.assert_allclose(np.asarray(hidden), np.asarray(ref_hid), rtol=5e-4, atol=5e-4)

    print("KERNEL_OK")
</pallas_src>

<mosaic_0001>
module attributes {stable_mosaic.version = 11 : i64} {
  func.func @gru_chunk_kernel(%arg0: i32, %arg1: memref<16x8x384xf32, #tpu.memory_space<vmem>>, %arg2: memref<128x384xf32, #tpu.memory_space<vmem>>, %arg3: memref<1x128xf32, #tpu.memory_space<vmem>>, %arg4: memref<256x512xf32, #tpu.memory_space<vmem>>, %arg5: memref<1x512xf32, #tpu.memory_space<vmem>>, %arg6: memref<16x8x128xf32, #tpu.memory_space<vmem>>, %arg7: memref<2x8x128xf32, #tpu.memory_space<vmem>>, %arg8: memref<8x128xf32, #tpu.memory_space<vmem>>, %arg9: memref<8x128xf32, #tpu.memory_space<vmem>>) attributes {dimension_semantics = [#tpu.dimension_semantics<arbitrary>], iteration_bounds = array<i64: 2>, scalar_prefetch = 0 : i64, scratch_operands = 2 : i64, tpu.core_type = #tpu.core_type<tc>, window_params = [{transform_indices = @transform_0, window_bounds = array<i64: 16, 8, 384>}, {pipeline_mode = #tpu.pipeline_mode<synchronous>, transform_indices = @transform_1, window_bounds = array<i64: 128, 384>}, {pipeline_mode = #tpu.pipeline_mode<synchronous>, transform_indices = @transform_2, window_bounds = array<i64: 1, 128>}, {pipeline_mode = #tpu.pipeline_mode<synchronous>, transform_indices = @transform_3, window_bounds = array<i64: 256, 512>}, {pipeline_mode = #tpu.pipeline_mode<synchronous>, transform_indices = @transform_4, window_bounds = array<i64: 1, 512>}, {transform_indices = @transform_5, window_bounds = array<i64: 16, 8, 128>}, {pipeline_mode = #tpu.pipeline_mode<synchronous>, transform_indices = @transform_6, window_bounds = array<i64: 2, 8, 128>}]} {
    %c0_i32 = arith.constant 0 : i32
    %0 = arith.cmpi eq, %arg0, %c0_i32 : i32
    %1 = arith.extui %0 : i1 to i32
    %c0_i32_0 = arith.constant 0 : i32
    %2 = arith.cmpi ne, %1, %c0_i32_0 : i32
    scf.if %2 {
      %cst_241 = arith.constant 0.000000e+00 : f32
      %1086 = vector.broadcast %cst_241 : f32 to vector<8x128xf32>
      %c0_242 = arith.constant 0 : index
      %c0_243 = arith.constant 0 : index
      %1087 = vector.load %arg8[%c0_242, %c0_243] : memref<8x128xf32, #tpu.memory_space<vmem>>, vector<8x128xf32>
      tpu.vector_store %arg8[%c0_242, %c0_243], %1086 {strides = array<i32>} : memref<8x128xf32, #tpu.memory_space<vmem>>, vector<8x128xf32>,
      %cst_244 = arith.constant 0.000000e+00 : f32
      %1088 = vector.broadcast %cst_244 : f32 to vector<8x128xf32>
      %c0_245 = arith.constant 0 : index
      %c0_246 = arith.constant 0 : index
      %1089 = vector.load %arg9[%c0_245, %c0_246] : memref<8x128xf32, #tpu.memory_space<vmem>>, vector<8x128xf32>
      tpu.vector_store %arg9[%c0_245, %c0_246], %1088 {strides = array<i32>} : memref<8x128xf32, #tpu.memory_space<vmem>>, vector<8x128xf32>,
    } else {
    }
    %c0 = arith.constant 0 : index
    %c0_1 = arith.constant 0 : index
    %3 = vector.load %arg2[%c0, %c0_1] : memref<128x384xf32, #tpu.memory_space<vmem>>, vector<128x384xf32>
    %c0_2 = arith.constant 0 : index
    %c0_3 = arith.constant 0 : index
    %4 = vector.load %arg3[%c0_2, %c0_3] : memref<1x128xf32, #tpu.memory_space<vmem>>, vector<1x128xf32>
    %c0_4 = arith.constant 0 : index
    %c0_5 = arith.constant 0 : index
    %5 = vector.load %arg4[%c0_4, %c0_5] : memref<256x512xf32, #tpu.memory_space<vmem>>, vector<256x512xf32>
    %c0_6 = arith.constant 0 : index
    %c0_7 = arith.constant 0 : index
    %6 = vector.load %arg5[%c0_6, %c0_7] : memref<1x512xf32, #tpu.memory_space<vmem>>, vector<1x512xf32>
    %c0_8 = arith.constant 0 : index
    %c0_9 = arith.constant 0 : index
    %7 = vector.load %arg8[%c0_8, %c0_9] : memref<8x128xf32, #tpu.memory_space<vmem>>, vector<8x128xf32>
    %c0_10 = arith.constant 0 : index
    %c0_11 = arith.constant 0 : index
    %8 = vector.load %arg9[%c0_10, %c0_11] : memref<8x128xf32, #tpu.memory_space<vmem>>, vector<8x128xf32>
    %c0_i32_12 = arith.constant 0 : i32
    %9 = arith.index_cast %c0_i32_12 : i32 to index
    %c0_13 = arith.constant 0 : index
    %c0_14 = arith.constant 0 : index
    %10 = vector.load %arg1[%9, %c0_13, %c0_14] : memref<16x8x384xf32, #tpu.memory_space<vmem>>, vector<1x8x384xf32>
    %11 = vector.shape_cast %10 : vector<1x8x384xf32> to vector<8x384xf32>
    %cst = arith.constant dense<0.000000e+00> : vector<8x384xf32>
    %12 = tpu.matmul %7, %3, %cst {dimension_numbers = #tpu.dot_dimension_numbers<[1], [0], [0], [1], [0, 0, 1, 1], [], []>} : vector<8x128xf32>, vector<128x384xf32>, vector<8x384xf32> -> vector<8x384xf32>
    %13 = vector.extract_strided_slice %11 {offsets = [0, 0], sizes = [8, 128], strides = [1, 1]} : vector<8x384xf32> to vector<8x128xf32>
    %14 = vector.extract_strided_slice %12 {offsets = [0, 0], sizes = [8, 128], strides = [1, 1]} : vector<8x384xf32> to vector<8x128xf32>
    %15 = arith.addf %13, %14 : vector<8x128xf32>
    %16 = arith.negf %15 : vector<8x128xf32>
    %17 = math.exp %16 : vector<8x128xf32>
    %cst_15 = arith.constant 1.000000e+00 : f32
    %18 = vector.broadcast %cst_15 : f32 to vector<8x128xf32>
    %19 = arith.addf %18, %17 : vector<8x128xf32>
    %20 = arith.divf %18, %19 : vector<8x128xf32>
    %21 = vector.extract_strided_slice %11 {offsets = [0, 128], sizes = [8, 128], strides = [1, 1]} : vector<8x384xf32> to vector<8x128xf32>
    %22 = vector.extract_strided_slice %12 {offsets = [0, 128], sizes = [8, 128], strides = [1, 1]} : vector<8x384xf32> to vector<8x128xf32>
    %23 = arith.addf %21, %22 : vector<8x128xf32>
    %24 = arith.negf %23 : vector<8x128xf32>
    %25 = math.exp %24 : vector<8x128xf32>
    %cst_16 = arith.constant 1.000000e+00 : f32
    %26 = vector.broadcast %cst_16 : f32 to vector<8x128xf32>
    %27 = arith.addf %26, %25 : vector<8x128xf32>
    %28 = arith.divf %26, %27 : vector<8x128xf32>
    %29 = vector.extract_strided_slice %11 {offsets = [0, 256], sizes = [8, 128], strides = [1, 1]} : vector<8x384xf32> to vector<8x128xf32>
    %30 = vector.extract_strided_slice %12 {offsets = [0, 256], sizes = [8, 128], strides = [1, 1]} : vector<8x384xf32> to vector<8x128xf32>
    %31 = vector.broadcast %4 : vector<1x128xf32> to vector<8x128xf32>
    %32 = arith.addf %30, %31 : vector<8x128xf32>
    %33 = arith.mulf %20, %32 : vector<8x128xf32>
    %34 = arith.addf %29, %33 : vector<8x128xf32>
    %35 = math.tanh %34 : vector<8x128xf32>
    %cst_17 = arith.constant 1.000000e+00 : f32
    %36 = vector.broadcast %cst_17 : f32 to vector<8x128xf32>
    %37 = arith.subf %36, %28 : vector<8x128xf32>
    %38 = arith.mulf %37, %35 : vector<8x128xf32>
    %39 = arith.mulf %28, %7 : vector<8x128xf32>
    %40 = arith.addf %38, %39 : vector<8x128xf32>
    %41 = tpu.concatenate %40, %8 in 1 : vector<8x128xf32>, vector<8x128xf32> -> vector<8x256xf32>
    %cst_18 = arith.constant dense<0.000000e+00> : vector<8x512xf32>
    %42 = tpu.matmul %41, %5, %cst_18 {dimension_numbers = #tpu.dot_dimension_numbers<[1], [0], [0], [1], [0, 0, 1, 1], [], []>} : vector<8x256xf32>, vector<256x512xf32>, vector<8x512xf32> -> vector<8x512xf32>
    %43 = vector.broadcast %6 : vector<1x512xf32> to vector<8x512xf32>
    %44 = arith.addf %42, %43 : vector<8x512xf32>
    %45 = vector.extract_strided_slice %44 {offsets = [0, 0], sizes = [8, 128], strides = [1, 1]} : vector<8x512xf32> to vector<8x128xf32>
    %46 = arith.negf %45 : vector<8x128xf32>
    %47 = math.exp %46 : vector<8x128xf32>
    %cst_19 = arith.constant 1.000000e+00 : f32
    %48 = vector.broadcast %cst_19 : f32 to vector<8x128xf32>
    %49 = arith.addf %48, %47 : vector<8x128xf32>
    %50 = arith.divf %48, %49 : vector<8x128xf32>
    %51 = vector.extract_strided_slice %44 {offsets = [0, 128], sizes = [8, 128], strides = [1, 1]} : vector<8x512xf32> to vector<8x128xf32>
    %52 = arith.negf %51 : vector<8x128xf32>
    %53 = math.exp %52 : vector<8x128xf32>
    %cst_20 = arith.constant 1.000000e+00 : f32
    %54 = vector.broadcast %cst_20 : f32 to vector<8x128xf32>
    %55 = arith.addf %54, %53 : vector<8x128xf32>
    %56 = arith.divf %54, %55 : vector<8x128xf32>
    %57 = vector.extract_strided_slice %44 {offsets = [0, 256], sizes = [8, 128], strides = [1, 1]} : vector<8x512xf32> to vector<8x128xf32>
    %58 = vector.extract_strided_slice %44 {offsets = [0, 384], sizes = [8, 128], strides = [1, 1]} : vector<8x512xf32> to vector<8x128xf32>
    %59 = arith.mulf %50, %58 : vector<8x128xf32>
    %60 = arith.addf %57, %59 : vector<8x128xf32>
    %61 = math.tanh %60 : vector<8x128xf32>
    %cst_21 = arith.constant 1.000000e+00 : f32
    %62 = vector.broadcast %cst_21 : f32 to vector<8x128xf32>
    %63 = arith.subf %62, %56 : vector<8x128xf32>
    %64 = arith.mulf %63, %61 : vector<8x128xf32>
    %65 = arith.mulf %56, %8 : vector<8x128xf32>
    %66 = arith.addf %64, %65 : vector<8x128xf32>
    %c16_i32 = arith.constant 16 : i32
    %67 = arith.muli %arg0, %c16_i32 : i32
    %68 = arith.addi %67, %c0_i32_12 : i32
    %c20_i32 = arith.constant 20 : i32
    %69 = arith.cmpi slt, %68, %c20_i32 : i32
    %70 = arith.select %69, %40, %7 : vector<8x128xf32>
    %71 = arith.select %69, %66, %8 : vector<8x128xf32>
    %72 = arith.index_cast %c0_i32_12 : i32 to index
    %c0_22 = arith.constant 0 : index
    %c0_23 = arith.constant 0 : index
    %73 = vector.load %arg6[%72, %c0_22, %c0_23] : memref<16x8x128xf32, #tpu.memory_space<vmem>>, vector<1x8x128xf32>
    %74 = vector.shape_cast %73 : vector<1x8x128xf32> to vector<8x128xf32>
    %75 = vector.shape_cast %71 : vector<8x128xf32> to vector<1x8x128xf32>
    tpu.vector_store %arg6[%72, %c0_22, %c0_23], %75 {strides = array<i32>} : memref<16x8x128xf32, #tpu.memory_space<vmem>>, vector<1x8x128xf32>,
    %c1_i32 = arith.constant 1 : i32
    %76 = arith.index_cast %c1_i32 : i32 to index
    %c0_24 = arith.constant 0 : index
    %c0_25 = arith.constant 0 : index
    %77 = vector.load %arg1[%76, %c0_24, %c0_25] : memref<16x8x384xf32, #tpu.memory_space<vmem>>, vector<1x8x384xf32>
    %78 = vector.shape_cast %77 : vector<1x8x384xf32> to vector<8x384xf32>
    %cst_26 = arith.constant dense<0.000000e+00> : vector<8x384xf32>
    %79 = tpu.matmul %70, %3, %cst_26 {dimension_numbers = #tpu.dot_dimension_numbers<[1], [0], [0], [1], [0, 0, 1, 1], [], []>} : vector<8x128xf32>, vector<128x384xf32>, vector<8x384xf32> -> vector<8x384xf32>
    %80 = vector.extract_strided_slice %78 {offsets = [0, 0], sizes = [8, 128], strides = [1, 1]} : vector<8x384xf32> to vector<8x128xf32>
    %81 = vector.extract_strided_slice %79 {offsets = [0, 0], sizes = [8, 128], strides = [1, 1]} : vector<8x384xf32> to vector<8x128xf32>
    %82 = arith.addf %80, %81 : vector<8x128xf32>
    %83 = arith.negf %82 : vector<8x128xf32>
    %84 = math.exp %83 : vector<8x128xf32>
    %cst_27 = arith.constant 1.000000e+00 : f32
    %85 = vector.broadcast %cst_27 : f32 to vector<8x128xf32>
    %86 = arith.addf %85, %84 : vector<8x128xf32>
    %87 = arith.divf %85, %86 : vector<8x128xf32>
    %88 = vector.extract_strided_slice %78 {offsets = [0, 128], sizes = [8, 128], strides = [1, 1]} : vector<8x384xf32> to vector<8x128xf32>
    %89 = vector.extract_strided_slice %79 {offsets = [0, 128], sizes = [8, 128], strides = [1, 1]} : vector<8x384xf32> to vector<8x128xf32>
    %90 = arith.addf %88, %89 : vector<8x128xf32>
    %91 = arith.negf %90 : vector<8x128xf32>
    %92 = math.exp %91 : vector<8x128xf32>
    %cst_28 = arith.constant 1.000000e+00 : f32
    %93 = vector.broadcast %cst_28 : f32 to vector<8x128xf32>
    %94 = arith.addf %93, %92 : vector<8x128xf32>
    %95 = arith.divf %93, %94 : vector<8x128xf32>
    %96 = vector.extract_strided_slice %78 {offsets = [0, 256], sizes = [8, 128], strides = [1, 1]} : vector<8x384xf32> to vector<8x128xf32>
    %97 = vector.extract_strided_slice %79 {offsets = [0, 256], sizes = [8, 128], strides = [1, 1]} : vector<8x384xf32> to vector<8x128xf32>
    %98 = vector.broadcast %4 : vector<1x128xf32> to vector<8x128xf32>
    %99 = arith.addf %97, %98 : vector<8x128xf32>
    %100 = arith.mulf %87, %99 : vector<8x128xf32>
    %101 = arith.addf %96, %100 : vector<8x128xf32>
    %102 = math.tanh %101 : vector<8x128xf32>
    %cst_29 = arith.constant 1.000000e+00 : f32
    %103 = vector.broadcast %cst_29 : f32 to vector<8x128xf32>
    %104 = arith.subf %103, %95 : vector<8x128xf32>
    %105 = arith.mulf %104, %102 : vector<8x128xf32>
    %106 = arith.mulf %95, %70 : vector<8x128xf32>
    %107 = arith.addf %105, %106 : vector<8x128xf32>
    %108 = tpu.concatenate %107, %71 in 1 : vector<8x128xf32>, vector<8x128xf32> -> vector<8x256xf32>
    %cst_30 = arith.constant dense<0.000000e+00> : vector<8x512xf32>
    %109 = tpu.matmul %108, %5, %cst_30 {dimension_numbers = #tpu.dot_dimension_numbers<[1], [0], [0], [1], [0, 0, 1, 1], [], []>} : vector<8x256xf32>, vector<256x512xf32>, vector<8x512xf32> -> vector<8x512xf32>
    %110 = vector.broadcast %6 : vector<1x512xf32> to vector<8x512xf32>
    %111 = arith.addf %109, %110 : vector<8x512xf32>
    %112 = vector.extract_strided_slice %111 {offsets = [0, 0], sizes = [8, 128], strides = [1, 1]} : vector<8x512xf32> to vector<8x128xf32>
    %113 = arith.negf %112 : vector<8x128xf32>
    %114 = math.exp %113 : vector<8x128xf32>
    %cst_31 = arith.constant 1.000000e+00 : f32
    %115 = vector.broadcast %cst_31 : f32 to vector<8x128xf32>
    %116 = arith.addf %115, %114 : vector<8x128xf32>
    %117 = arith.divf %115, %116 : vector<8x128xf32>
    %118 = vector.extract_strided_slice %111 {offsets = [0, 128], sizes = [8, 128], strides = [1, 1]} : vector<8x512xf32> to vector<8x128xf32>
    %119 = arith.negf %118 : vector<8x128xf32>
    %120 = math.exp %119 : vector<8x128xf32>
    %cst_32 = arith.constant 1.000000e+00 : f32
    %121 = vector.broadcast %cst_32 : f32 to vector<8x128xf32>
    %122 = arith.addf %121, %120 : vector<8x128xf32>
    %123 = arith.divf %121, %122 : vector<8x128xf32>
    %124 = vector.extract_strided_slice %111 {offsets = [0, 256], sizes = [8, 128], strides = [1, 1]} : vector<8x512xf32> to vector<8x128xf32>
    %125 = vector.extract_strided_slice %111 {offsets = [0, 384], sizes = [8, 128], strides = [1, 1]} : vector<8x512xf32> to vector<8x128xf32>
    %126 = arith.mulf %117, %125 : vector<8x128xf32>
    %127 = arith.addf %124, %126 : vector<8x128xf32>
    %128 = math.tanh %127 : vector<8x128xf32>
    %cst_33 = arith.constant 1.000000e+00 : f32
    %129 = vector.broadcast %cst_33 : f32 to vector<8x128xf32>
    %130 = arith.subf %129, %123 : vector<8x128xf32>
    %131 = arith.mulf %130, %128 : vector<8x128xf32>
    %132 = arith.mulf %123, %71 : vector<8x128xf32>
    %133 = arith.addf %131, %132 : vector<8x128xf32>
    %c16_i32_34 = arith.constant 16 : i32
    %134 = arith.muli %arg0, %c16_i32_34 : i32
    %135 = arith.addi %134, %c1_i32 : i32
    %c20_i32_35 = arith.constant 20 : i32
    %136 = arith.cmpi slt, %135, %c20_i32_35 : i32
    %137 = arith.select %136, %107, %70 : vector<8x128xf32>
    %138 = arith.select %136, %133, %71 : vector<8x128xf32>
    %139 = arith.index_cast %c1_i32 : i32 to index
    %c0_36 = arith.constant 0 : index
    %c0_37 = arith.constant 0 : index
    %140 = vector.load %arg6[%139, %c0_36, %c0_37] : memref<16x8x128xf32, #tpu.memory_space<vmem>>, vector<1x8x128xf32>
    %141 = vector.shape_cast %140 : vector<1x8x128xf32> to vector<8x128xf32>
    %142 = vector.shape_cast %138 : vector<8x128xf32> to vector<1x8x128xf32>
    tpu.vector_store %arg6[%139, %c0_36, %c0_37], %142 {strides = array<i32>} : memref<16x8x128xf32, #tpu.memory_space<vmem>>, vector<1x8x128xf32>,
    %c2_i32 = arith.constant 2 : i32
    %143 = arith.index_cast %c2_i32 : i32 to index
    %c0_38 = arith.constant 0 : index
    %c0_39 = arith.constant 0 : index
    %144 = vector.load %arg1[%143, %c0_38, %c0_39] : memref<16x8x384xf32, #tpu.memory_space<vmem>>, vector<1x8x384xf32>
    %145 = vector.shape_cast %144 : vector<1x8x384xf32> to vector<8x384xf32>
    %cst_40 = arith.constant dense<0.000000e+00> : vector<8x384xf32>
    %146 = tpu.matmul %137, %3, %cst_40 {dimension_numbers = #tpu.dot_dimension_numbers<[1], [0], [0], [1], [0, 0, 1, 1], [], []>} : vector<8x128xf32>, vector<128x384xf32>, vector<8x384xf32> -> vector<8x384xf32>
    %147 = vector.extract_strided_slice %145 {offsets = [0, 0], sizes = [8, 128], strides = [1, 1]} : vector<8x384xf32> to vector<8x128xf32>
    %148 = vector.extract_strided_slice %146 {offsets = [0, 0], sizes = [8, 128], strides = [1, 1]} : vector<8x384xf32> to vector<8x128xf32>
    %149 = arith.addf %147, %148 : vector<8x128xf32>
    %150 = arith.negf %149 : vector<8x128xf32>
    %151 = math.exp %150 : vector<8x128xf32>
    %cst_41 = arith.constant 1.000000e+00 : f32
    %152 = vector.broadcast %cst_41 : f32 to vector<8x128xf32>
    %153 = arith.addf %152, %151 : vector<8x128xf32>
    %154 = arith.divf %152, %153 : vector<8x128xf32>
    %155 = vector.extract_strided_slice %145 {offsets = [0, 128], sizes = [8, 128], strides = [1, 1]} : vector<8x384xf32> to vector<8x128xf32>
    %156 = vector.extract_strided_slice %146 {offsets = [0, 128], sizes = [8, 128], strides = [1, 1]} : vector<8x384xf32> to vector<8x128xf32>
    %157 = arith.addf %155, %156 : vector<8x128xf32>
    %158 = arith.negf %157 : vector<8x128xf32>
    %159 = math.exp %158 : vector<8x128xf32>
    %cst_42 = arith.constant 1.000000e+00 : f32
    %160 = vector.broadcast %cst_42 : f32 to vector<8x128xf32>
    %161 = arith.addf %160, %159 : vector<8x128xf32>
    %162 = arith.divf %160, %161 : vector<8x128xf32>
    %163 = vector.extract_strided_slice %145 {offsets = [0, 256], sizes = [8, 128], strides = [1, 1]} : vector<8x384xf32> to vector<8x128xf32>
    %164 = vector.extract_strided_slice %146 {offsets = [0, 256], sizes = [8, 128], strides = [1, 1]} : vector<8x384xf32> to vector<8x128xf32>
    %165 = vector.broadcast %4 : vector<1x128xf32> to vector<8x128xf32>
    %166 = arith.addf %164, %165 : vector<8x128xf32>
    %167 = arith.mulf %154, %166 : vector<8x128xf32>
    %168 = arith.addf %163, %167 : vector<8x128xf32>
    %169 = math.tanh %168 : vector<8x128xf32>
    %cst_43 = arith.constant 1.000000e+00 : f32
    %170 = vector.broadcast %cst_43 : f32 to vector<8x128xf32>
    %171 = arith.subf %170, %162 : vector<8x128xf32>
    %172 = arith.mulf %171, %169 : vector<8x128xf32>
    %173 = arith.mulf %162, %137 : vector<8x128xf32>
    %174 = arith.addf %172, %173 : vector<8x128xf32>
    %175 = tpu.concatenate %174, %138 in 1 : vector<8x128xf32>, vector<8x128xf32> -> vector<8x256xf32>
    %cst_44 = arith.constant dense<0.000000e+00> : vector<8x512xf32>
    %176 = tpu.matmul %175, %5, %cst_44 {dimension_numbers = #tpu.dot_dimension_numbers<[1], [0], [0], [1], [0, 0, 1, 1], [], []>} : vector<8x256xf32>, vector<256x512xf32>, vector<8x512xf32> -> vector<8x512xf32>
    %177 = vector.broadcast %6 : vector<1x512xf32> to vector<8x512xf32>
    %178 = arith.addf %176, %177 : vector<8x512xf32>
    %179 = vector.extract_strided_slice %178 {offsets = [0, 0], sizes = [8, 128], strides = [1, 1]} : vector<8x512xf32> to vector<8x128xf32>
    %180 = arith.negf %179 : vector<8x128xf32>
    %181 = math.exp %180 : vector<8x128xf32>
    %cst_45 = arith.constant 1.000000e+00 : f32
    %182 = vector.broadcast %cst_45 : f32 to vector<8x128xf32>
    %183 = arith.addf %182, %181 : vector<8x128xf32>
    %184 = arith.divf %182, %183 : vector<8x128xf32>
    %185 = vector.extract_strided_slice %178 {offsets = [0, 128], sizes = [8, 128], strides = [1, 1]} : vector<8x512xf32> to vector<8x128xf32>
    %186 = arith.negf %185 : vector<8x128xf32>
    %187 = math.exp %186 : vector<8x128xf32>
    %cst_46 = arith.constant 1.000000e+00 : f32
    %188 = vector.broadcast %cst_46 : f32 to vector<8x128xf32>
    %189 = arith.addf %188, %187 : vector<8x128xf32>
    %190 = arith.divf %188, %189 : vector<8x128xf32>
    %191 = vector.extract_strided_slice %178 {offsets = [0, 256], sizes = [8, 128], strides = [1, 1]} : vector<8x512xf32> to vector<8x128xf32>
    %192 = vector.extract_strided_slice %178 {offsets = [0, 384], sizes = [8, 128], strides = [1, 1]} : vector<8x512xf32> to vector<8x128xf32>
    %193 = arith.mulf %184, %192 : vector<8x128xf32>
    %194 = arith.addf %191, %193 : vector<8x128xf32>
    %195 = math.tanh %194 : vector<8x128xf32>
    %cst_47 = arith.constant 1.000000e+00 : f32
    %196 = vector.broadcast %cst_47 : f32 to vector<8x128xf32>
    %197 = arith.subf %196, %190 : vector<8x128xf32>
    %198 = arith.mulf %197, %195 : vector<8x128xf32>
    %199 = arith.mulf %190, %138 : vector<8x128xf32>
    %200 = arith.addf %198, %199 : vector<8x128xf32>
    %c16_i32_48 = arith.constant 16 : i32
    %201 = arith.muli %arg0, %c16_i32_48 : i32
    %202 = arith.addi %201, %c2_i32 : i32
    %c20_i32_49 = arith.constant 20 : i32
    %203 = arith.cmpi slt, %202, %c20_i32_49 : i32
    %204 = arith.select %203, %174, %137 : vector<8x128xf32>
    %205 = arith.select %203, %200, %138 : vector<8x128xf32>
    %206 = arith.index_cast %c2_i32 : i32 to index
    %c0_50 = arith.constant 0 : index
    %c0_51 = arith.constant 0 : index
    %207 = vector.load %arg6[%206, %c0_50, %c0_51] : memref<16x8x128xf32, #tpu.memory_space<vmem>>, vector<1x8x128xf32>
    %208 = vector.shape_cast %207 : vector<1x8x128xf32> to vector<8x128xf32>
    %209 = vector.shape_cast %205 : vector<8x128xf32> to vector<1x8x128xf32>
    tpu.vector_store %arg6[%206, %c0_50, %c0_51], %209 {strides = array<i32>} : memref<16x8x128xf32, #tpu.memory_space<vmem>>, vector<1x8x128xf32>,
    %c3_i32 = arith.constant 3 : i32
    %210 = arith.index_cast %c3_i32 : i32 to index
    %c0_52 = arith.constant 0 : index
    %c0_53 = arith.constant 0 : index
    %211 = vector.load %arg1[%210, %c0_52, %c0_53] : memref<16x8x384xf32, #tpu.memory_space<vmem>>, vector<1x8x384xf32>
    %212 = vector.shape_cast %211 : vector<1x8x384xf32> to vector<8x384xf32>
    %cst_54 = arith.constant dense<0.000000e+00> : vector<8x384xf32>
    %213 = tpu.matmul %204, %3, %cst_54 {dimension_numbers = #tpu.dot_dimension_numbers<[1], [0], [0], [1], [0, 0, 1, 1], [], []>} : vector<8x128xf32>, vector<128x384xf32>, vector<8x384xf32> -> vector<8x384xf32>
    %214 = vector.extract_strided_slice %212 {offsets = [0, 0], sizes = [8, 128], strides = [1, 1]} : vector<8x384xf32> to vector<8x128xf32>
    %215 = vector.extract_strided_slice %213 {offsets = [0, 0], sizes = [8, 128], strides = [1, 1]} : vector<8x384xf32> to vector<8x128xf32>
    %216 = arith.addf %214, %215 : vector<8x128xf32>
    %217 = arith.negf %216 : vector<8x128xf32>
    %218 = math.exp %217 : vector<8x128xf32>
    %cst_55 = arith.constant 1.000000e+00 : f32
    %219 = vector.broadcast %cst_55 : f32 to vector<8x128xf32>
    %220 = arith.addf %219, %218 : vector<8x128xf32>
    %221 = arith.divf %219, %220 : vector<8x128xf32>
    %222 = vector.extract_strided_slice %212 {offsets = [0, 128], sizes = [8, 128], strides = [1, 1]} : vector<8x384xf32> to vector<8x128xf32>
    %223 = vector.extract_strided_slice %213 {offsets = [0, 128], sizes = [8, 128], strides = [1, 1]} : vector<8x384xf32> to vector<8x128xf32>
    %224 = arith.addf %222, %223 : vector<8x128xf32>
    %225 = arith.negf %224 : vector<8x128xf32>
    %226 = math.exp %225 : vector<8x128xf32>
    %cst_56 = arith.constant 1.000000e+00 : f32
    %227 = vector.broadcast %cst_56 : f32 to vector<8x128xf32>
    %228 = arith.addf %227, %226 : vector<8x128xf32>
    %229 = arith.divf %227, %228 : vector<8x128xf32>
    %230 = vector.extract_strided_slice %212 {offsets = [0, 256], sizes = [8, 128], strides = [1, 1]} : vector<8x384xf32> to vector<8x128xf32>
    %231 = vector.extract_strided_slice %213 {offsets = [0, 256], sizes = [8, 128], strides = [1, 1]} : vector<8x384xf32> to vector<8x128xf32>
    %232 = vector.broadcast %4 : vector<1x128xf32> to vector<8x128xf32>
    %233 = arith.addf %231, %232 : vector<8x128xf32>
    %234 = arith.mulf %221, %233 : vector<8x128xf32>
    %235 = arith.addf %230, %234 : vector<8x128xf32>
    %236 = math.tanh %235 : vector<8x128xf32>
    %cst_57 = arith.constant 1.000000e+00 : f32
    %237 = vector.broadcast %cst_57 : f32 to vector<8x128xf32>
    %238 = arith.subf %237, %229 : vector<8x128xf32>
    %239 = arith.mulf %238, %236 : vector<8x128xf32>
    %240 = arith.mulf %229, %204 : vector<8x128xf32>
    %241 = arith.addf %239, %240 : vector<8x128xf32>
    %242 = tpu.concatenate %241, %205 in 1 : vector<8x128xf32>, vector<8x128xf32> -> vector<8x256xf32>
    %cst_58 = arith.constant dense<0.000000e+00> : vector<8x512xf32>
    %243 = tpu.matmul %242, %5, %cst_58 {dimension_numbers = #tpu.dot_dimension_numbers<[1], [0], [0], [1], [0, 0, 1, 1], [], []>} : vector<8x256xf32>, vector<256x512xf32>, vector<8x512xf32> -> vector<8x512xf32>
    %244 = vector.broadcast %6 : vector<1x512xf32> to vector<8x512xf32>
    %245 = arith.addf %243, %244 : vector<8x512xf32>
    %246 = vector.extract_strided_slice %245 {offsets = [0, 0], sizes = [8, 128], strides = [1, 1]} : vector<8x512xf32> to vector<8x128xf32>
    %247 = arith.negf %246 : vector<8x128xf32>
    %248 = math.exp %247 : vector<8x128xf32>
    %cst_59 = arith.constant 1.000000e+00 : f32
    %249 = vector.broadcast %cst_59 : f32 to vector<8x128xf32>
    %250 = arith.addf %249, %248 : vector<8x128xf32>
    %251 = arith.divf %249, %250 : vector<8x128xf32>
    %252 = vector.extract_strided_slice %245 {offsets = [0, 128], sizes = [8, 128], strides = [1, 1]} : vector<8x512xf32> to vector<8x128xf32>
    %253 = arith.negf %252 : vector<8x128xf32>
    %254 = math.exp %253 : vector<8x128xf32>
    %cst_60 = arith.constant 1.000000e+00 : f32
    %255 = vector.broadcast %cst_60 : f32 to vector<8x128xf32>
    %256 = arith.addf %255, %254 : vector<8x128xf32>
    %257 = arith.divf %255, %256 : vector<8x128xf32>
    %258 = vector.extract_strided_slice %245 {offsets = [0, 256], sizes = [8, 128], strides = [1, 1]} : vector<8x512xf32> to vector<8x128xf32>
    %259 = vector.extract_strided_slice %245 {offsets = [0, 384], sizes = [8, 128], strides = [1, 1]} : vector<8x512xf32> to vector<8x128xf32>
    %260 = arith.mulf %251, %259 : vector<8x128xf32>
    %261 = arith.addf %258, %260 : vector<8x128xf32>
    %262 = math.tanh %261 : vector<8x128xf32>
    %cst_61 = arith.constant 1.000000e+00 : f32
    %263 = vector.broadcast %cst_61 : f32 to vector<8x128xf32>
    %264 = arith.subf %263, %257 : vector<8x128xf32>
    %265 = arith.mulf %264, %262 : vector<8x128xf32>
    %266 = arith.mulf %257, %205 : vector<8x128xf32>
    %267 = arith.addf %265, %266 : vector<8x128xf32>
    %c16_i32_62 = arith.constant 16 : i32
    %268 = arith.muli %arg0, %c16_i32_62 : i32
    %269 = arith.addi %268, %c3_i32 : i32
    %c20_i32_63 = arith.constant 20 : i32
    %270 = arith.cmpi slt, %269, %c20_i32_63 : i32
    %271 = arith.select %270, %241, %204 : vector<8x128xf32>
    %272 = arith.select %270, %267, %205 : vector<8x128xf32>
    %273 = arith.index_cast %c3_i32 : i32 to index
    %c0_64 = arith.constant 0 : index
    %c0_65 = arith.constant 0 : index
    %274 = vector.load %arg6[%273, %c0_64, %c0_65] : memref<16x8x128xf32, #tpu.memory_space<vmem>>, vector<1x8x128xf32>
    %275 = vector.shape_cast %274 : vector<1x8x128xf32> to vector<8x128xf32>
    %276 = vector.shape_cast %272 : vector<8x128xf32> to vector<1x8x128xf32>
    tpu.vector_store %arg6[%273, %c0_64, %c0_65], %276 {strides = array<i32>} : memref<16x8x128xf32, #tpu.memory_space<vmem>>, vector<1x8x128xf32>,
    %c4_i32 = arith.constant 4 : i32
    %277 = arith.index_cast %c4_i32 : i32 to index
    %c0_66 = arith.constant 0 : index
    %c0_67 = arith.constant 0 : index
    %278 = vector.load %arg1[%277, %c0_66, %c0_67] : memref<16x8x384xf32, #tpu.memory_space<vmem>>, vector<1x8x384xf32>
    %279 = vector.shape_cast %278 : vector<1x8x384xf32> to vector<8x384xf32>
    %cst_68 = arith.constant dense<0.000000e+00> : vector<8x384xf32>
    %280 = tpu.matmul %271, %3, %cst_68 {dimension_numbers = #tpu.dot_dimension_numbers<[1], [0], [0], [1], [0, 0, 1, 1], [], []>} : vector<8x128xf32>, vector<128x384xf32>, vector<8x384xf32> -> vector<8x384xf32>
    %281 = vector.extract_strided_slice %279 {offsets = [0, 0], sizes = [8, 128], strides = [1, 1]} : vector<8x384xf32> to vector<8x128xf32>
    %282 = vector.extract_strided_slice %280 {offsets = [0, 0], sizes = [8, 128], strides = [1, 1]} : vector<8x384xf32> to vector<8x128xf32>
    %283 = arith.addf %281, %282 : vector<8x128xf32>
    %284 = arith.negf %283 : vector<8x128xf32>
    %285 = math.exp %284 : vector<8x128xf32>
    %cst_69 = arith.constant 1.000000e+00 : f32
    %286 = vector.broadcast %cst_69 : f32 to vector<8x128xf32>
    %287 = arith.addf %286, %285 : vector<8x128xf32>
    %288 = arith.divf %286, %287 : vector<8x128xf32>
    %289 = vector.extract_strided_slice %279 {offsets = [0, 128], sizes = [8, 128], strides = [1, 1]} : vector<8x384xf32> to vector<8x128xf32>
    %290 = vector.extract_strided_slice %280 {offsets = [0, 128], sizes = [8, 128], strides = [1, 1]} : vector<8x384xf32> to vector<8x128xf32>
    %291 = arith.addf %289, %290 : vector<8x128xf32>
    %292 = arith.negf %291 : vector<8x128xf32>
    %293 = math.exp %292 : vector<8x128xf32>
    %cst_70 = arith.constant 1.000000e+00 : f32
    %294 = vector.broadcast %cst_70 : f32 to vector<8x128xf32>
    %295 = arith.addf %294, %293 : vector<8x128xf32>
    %296 = arith.divf %294, %295 : vector<8x128xf32>
    %297 = vector.extract_strided_slice %279 {offsets = [0, 256], sizes = [8, 128], strides = [1, 1]} : vector<8x384xf32> to vector<8x128xf32>
    %298 = vector.extract_strided_slice %280 {offsets = [0, 256], sizes = [8, 128], strides = [1, 1]} : vector<8x384xf32> to vector<8x128xf32>
    %299 = vector.broadcast %4 : vector<1x128xf32> to vector<8x128xf32>
    %300 = arith.addf %298, %299 : vector<8x128xf32>
    %301 = arith.mulf %288, %300 : vector<8x128xf32>
    %302 = arith.addf %297, %301 : vector<8x128xf32>
    %303 = math.tanh %302 : vector<8x128xf32>
    %cst_71 = arith.constant 1.000000e+00 : f32
    %304 = vector.broadcast %cst_71 : f32 to vector<8x128xf32>
    %305 = arith.subf %304, %296 : vector<8x128xf32>
    %306 = arith.mulf %305, %303 : vector<8x128xf32>
    %307 = arith.mulf %296, %271 : vector<8x128xf32>
    %308 = arith.addf %306, %307 : vector<8x128xf32>
    %309 = tpu.concatenate %308, %272 in 1 : vector<8x128xf32>, vector<8x128xf32> -> vector<8x256xf32>
    %cst_72 = arith.constant dense<0.000000e+00> : vector<8x512xf32>
    %310 = tpu.matmul %309, %5, %cst_72 {dimension_numbers = #tpu.dot_dimension_numbers<[1], [0], [0], [1], [0, 0, 1, 1], [], []>} : vector<8x256xf32>, vector<256x512xf32>, vector<8x512xf32> -> vector<8x512xf32>
    %311 = vector.broadcast %6 : vector<1x512xf32> to vector<8x512xf32>
    %312 = arith.addf %310, %311 : vector<8x512xf32>
    %313 = vector.extract_strided_slice %312 {offsets = [0, 0], sizes = [8, 128], strides = [1, 1]} : vector<8x512xf32> to vector<8x128xf32>
    %314 = arith.negf %313 : vector<8x128xf32>
    %315 = math.exp %314 : vector<8x128xf32>
    %cst_73 = arith.constant 1.000000e+00 : f32
    %316 = vector.broadcast %cst_73 : f32 to vector<8x128xf32>
    %317 = arith.addf %316, %315 : vector<8x128xf32>
    %318 = arith.divf %316, %317 : vector<8x128xf32>
    %319 = vector.extract_strided_slice %312 {offsets = [0, 128], sizes = [8, 128], strides = [1, 1]} : vector<8x512xf32> to vector<8x128xf32>
    %320 = arith.negf %319 : vector<8x128xf32>
    %321 = math.exp %320 : vector<8x128xf32>
    %cst_74 = arith.constant 1.000000e+00 : f32
    %322 = vector.broadcast %cst_74 : f32 to vector<8x128xf32>
    %323 = arith.addf %322, %321 : vector<8x128xf32>
    %324 = arith.divf %322, %323 : vector<8x128xf32>
    %325 = vector.extract_strided_slice %312 {offsets = [0, 256], sizes = [8, 128], strides = [1, 1]} : vector<8x512xf32> to vector<8x128xf32>
    %326 = vector.extract_strided_slice %312 {offsets = [0, 384], sizes = [8, 128], strides = [1, 1]} : vector<8x512xf32> to vector<8x128xf32>
    %327 = arith.mulf %318, %326 : vector<8x128xf32>
    %328 = arith.addf %325, %327 : vector<8x128xf32>
    %329 = math.tanh %328 : vector<8x128xf32>
    %cst_75 = arith.constant 1.000000e+00 : f32
    %330 = vector.broadcast %cst_75 : f32 to vector<8x128xf32>
    %331 = arith.subf %330, %324 : vector<8x128xf32>
    %332 = arith.mulf %331, %329 : vector<8x128xf32>
    %333 = arith.mulf %324, %272 : vector<8x128xf32>
    %334 = arith.addf %332, %333 : vector<8x128xf32>
    %c16_i32_76 = arith.constant 16 : i32
    %335 = arith.muli %arg0, %c16_i32_76 : i32
    %336 = arith.addi %335, %c4_i32 : i32
    %c20_i32_77 = arith.constant 20 : i32
    %337 = arith.cmpi slt, %336, %c20_i32_77 : i32
    %338 = arith.select %337, %308, %271 : vector<8x128xf32>
    %339 = arith.select %337, %334, %272 : vector<8x128xf32>
    %340 = arith.index_cast %c4_i32 : i32 to index
    %c0_78 = arith.constant 0 : index
    %c0_79 = arith.constant 0 : index
    %341 = vector.load %arg6[%340, %c0_78, %c0_79] : memref<16x8x128xf32, #tpu.memory_space<vmem>>, vector<1x8x128xf32>
    %342 = vector.shape_cast %341 : vector<1x8x128xf32> to vector<8x128xf32>
    %343 = vector.shape_cast %339 : vector<8x128xf32> to vector<1x8x128xf32>
    tpu.vector_store %arg6[%340, %c0_78, %c0_79], %343 {strides = array<i32>} : memref<16x8x128xf32, #tpu.memory_space<vmem>>, vector<1x8x128xf32>,
    %c5_i32 = arith.constant 5 : i32
    %344 = arith.index_cast %c5_i32 : i32 to index
    %c0_80 = arith.constant 0 : index
    %c0_81 = arith.constant 0 : index
    %345 = vector.load %arg1[%344, %c0_80, %c0_81] : memref<16x8x384xf32, #tpu.memory_space<vmem>>, vector<1x8x384xf32>
    %346 = vector.shape_cast %345 : vector<1x8x384xf32> to vector<8x384xf32>
    %cst_82 = arith.constant dense<0.000000e+00> : vector<8x384xf32>
    %347 = tpu.matmul %338, %3, %cst_82 {dimension_numbers = #tpu.dot_dimension_numbers<[1], [0], [0], [1], [0, 0, 1, 1], [], []>} : vector<8x128xf32>, vector<128x384xf32>, vector<8x384xf32> -> vector<8x384xf32>
    %348 = vector.extract_strided_slice %346 {offsets = [0, 0], sizes = [8, 128], strides = [1, 1]} : vector<8x384xf32> to vector<8x128xf32>
    %349 = vector.extract_strided_slice %347 {offsets = [0, 0], sizes = [8, 128], strides = [1, 1]} : vector<8x384xf32> to vector<8x128xf32>
    %350 = arith.addf %348, %349 : vector<8x128xf32>
    %351 = arith.negf %350 : vector<8x128xf32>
    %352 = math.exp %351 : vector<8x128xf32>
    %cst_83 = arith.constant 1.000000e+00 : f32
    %353 = vector.broadcast %cst_83 : f32 to vector<8x128xf32>
    %354 = arith.addf %353, %352 : vector<8x128xf32>
    %355 = arith.divf %353, %354 : vector<8x128xf32>
    %356 = vector.extract_strided_slice %346 {offsets = [0, 128], sizes = [8, 128], strides = [1, 1]} : vector<8x384xf32> to vector<8x128xf32>
    %357 = vector.extract_strided_slice %347 {offsets = [0, 128], sizes = [8, 128], strides = [1, 1]} : vector<8x384xf32> to vector<8x128xf32>
    %358 = arith.addf %356, %357 : vector<8x128xf32>
    %359 = arith.negf %358 : vector<8x128xf32>
    %360 = math.exp %359 : vector<8x128xf32>
    %cst_84 = arith.constant 1.000000e+00 : f32
    %361 = vector.broadcast %cst_84 : f32 to vector<8x128xf32>
    %362 = arith.addf %361, %360 : vector<8x128xf32>
    %363 = arith.divf %361, %362 : vector<8x128xf32>
    %364 = vector.extract_strided_slice %346 {offsets = [0, 256], sizes = [8, 128], strides = [1, 1]} : vector<8x384xf32> to vector<8x128xf32>
    %365 = vector.extract_strided_slice %347 {offsets = [0, 256], sizes = [8, 128], strides = [1, 1]} : vector<8x384xf32> to vector<8x128xf32>
    %366 = vector.broadcast %4 : vector<1x128xf32> to vector<8x128xf32>
    %367 = arith.addf %365, %366 : vector<8x128xf32>
    %368 = arith.mulf %355, %367 : vector<8x128xf32>
    %369 = arith.addf %364, %368 : vector<8x128xf32>
    %370 = math.tanh %369 : vector<8x128xf32>
    %cst_85 = arith.constant 1.000000e+00 : f32
    %371 = vector.broadcast %cst_85 : f32 to vector<8x128xf32>
    %372 = arith.subf %371, %363 : vector<8x128xf32>
    %373 = arith.mulf %372, %370 : vector<8x128xf32>
    %374 = arith.mulf %363, %338 : vector<8x128xf32>
    %375 = arith.addf %373, %374 : vector<8x128xf32>
    %376 = tpu.concatenate %375, %339 in 1 : vector<8x128xf32>, vector<8x128xf32> -> vector<8x256xf32>
    %cst_86 = arith.constant dense<0.000000e+00> : vector<8x512xf32>
    %377 = tpu.matmul %376, %5, %cst_86 {dimension_numbers = #tpu.dot_dimension_numbers<[1], [0], [0], [1], [0, 0, 1, 1], [], []>} : vector<8x256xf32>, vector<256x512xf32>, vector<8x512xf32> -> vector<8x512xf32>
    %378 = vector.broadcast %6 : vector<1x512xf32> to vector<8x512xf32>
    %379 = arith.addf %377, %378 : vector<8x512xf32>
    %380 = vector.extract_strided_slice %379 {offsets = [0, 0], sizes = [8, 128], strides = [1, 1]} : vector<8x512xf32> to vector<8x128xf32>
    %381 = arith.negf %380 : vector<8x128xf32>
    %382 = math.exp %381 : vector<8x128xf32>
    %cst_87 = arith.constant 1.000000e+00 : f32
    %383 = vector.broadcast %cst_87 : f32 to vector<8x128xf32>
    %384 = arith.addf %383, %382 : vector<8x128xf32>
    %385 = arith.divf %383, %384 : vector<8x128xf32>
    %386 = vector.extract_strided_slice %379 {offsets = [0, 128], sizes = [8, 128], strides = [1, 1]} : vector<8x512xf32> to vector<8x128xf32>
    %387 = arith.negf %386 : vector<8x128xf32>
    %388 = math.exp %387 : vector<8x128xf32>
    %cst_88 = arith.constant 1.000000e+00 : f32
    %389 = vector.broadcast %cst_88 : f32 to vector<8x128xf32>
    %390 = arith.addf %389, %388 : vector<8x128xf32>
    %391 = arith.divf %389, %390 : vector<8x128xf32>
    %392 = vector.extract_strided_slice %379 {offsets = [0, 256], sizes = [8, 128], strides = [1, 1]} : vector<8x512xf32> to vector<8x128xf32>
    %393 = vector.extract_strided_slice %379 {offsets = [0, 384], sizes = [8, 128], strides = [1, 1]} : vector<8x512xf32> to vector<8x128xf32>
    %394 = arith.mulf %385, %393 : vector<8x128xf32>
    %395 = arith.addf %392, %394 : vector<8x128xf32>
    %396 = math.tanh %395 : vector<8x128xf32>
    %cst_89 = arith.constant 1.000000e+00 : f32
    %397 = vector.broadcast %cst_89 : f32 to vector<8x128xf32>
    %398 = arith.subf %397, %391 : vector<8x128xf32>
    %399 = arith.mulf %398, %396 : vector<8x128xf32>
    %400 = arith.mulf %391, %339 : vector<8x128xf32>
    %401 = arith.addf %399, %400 : vector<8x128xf32>
    %c16_i32_90 = arith.constant 16 : i32
    %402 = arith.muli %arg0, %c16_i32_90 : i32
    %403 = arith.addi %402, %c5_i32 : i32
    %c20_i32_91 = arith.constant 20 : i32
    %404 = arith.cmpi slt, %403, %c20_i32_91 : i32
    %405 = arith.select %404, %375, %338 : vector<8x128xf32>
    %406 = arith.select %404, %401, %339 : vector<8x128xf32>
    %407 = arith.index_cast %c5_i32 : i32 to index
    %c0_92 = arith.constant 0 : index
    %c0_93 = arith.constant 0 : index
    %408 = vector.load %arg6[%407, %c0_92, %c0_93] : memref<16x8x128xf32, #tpu.memory_space<vmem>>, vector<1x8x128xf32>
    %409 = vector.shape_cast %408 : vector<1x8x128xf32> to vector<8x128xf32>
    %410 = vector.shape_cast %406 : vector<8x128xf32> to vector<1x8x128xf32>
    tpu.vector_store %arg6[%407, %c0_92, %c0_93], %410 {strides = array<i32>} : memref<16x8x128xf32, #tpu.memory_space<vmem>>, vector<1x8x128xf32>,
    %c6_i32 = arith.constant 6 : i32
    %411 = arith.index_cast %c6_i32 : i32 to index
    %c0_94 = arith.constant 0 : index
    %c0_95 = arith.constant 0 : index
    %412 = vector.load %arg1[%411, %c0_94, %c0_95] : memref<16x8x384xf32, #tpu.memory_space<vmem>>, vector<1x8x384xf32>
    %413 = vector.shape_cast %412 : vector<1x8x384xf32> to vector<8x384xf32>
    %cst_96 = arith.constant dense<0.000000e+00> : vector<8x384xf32>
    %414 = tpu.matmul %405, %3, %cst_96 {dimension_numbers = #tpu.dot_dimension_numbers<[1], [0], [0], [1], [0, 0, 1, 1], [], []>} : vector<8x128xf32>, vector<128x384xf32>, vector<8x384xf32> -> vector<8x384xf32>
    %415 = vector.extract_strided_slice %413 {offsets = [0, 0], sizes = [8, 128], strides = [1, 1]} : vector<8x384xf32> to vector<8x128xf32>
    %416 = vector.extract_strided_slice %414 {offsets = [0, 0], sizes = [8, 128], strides = [1, 1]} : vector<8x384xf32> to vector<8x128xf32>
    %417 = arith.addf %415, %416 : vector<8x128xf32>
    %418 = arith.negf %417 : vector<8x128xf32>
    %419 = math.exp %418 : vector<8x128xf32>
    %cst_97 = arith.constant 1.000000e+00 : f32
    %420 = vector.broadcast %cst_97 : f32 to vector<8x128xf32>
    %421 = arith.addf %420, %419 : vector<8x128xf32>
    %422 = arith.divf %420, %421 : vector<8x128xf32>
    %423 = vector.extract_strided_slice %413 {offsets = [0, 128], sizes = [8, 128], strides = [1, 1]} : vector<8x384xf32> to vector<8x128xf32>
    %424 = vector.extract_strided_slice %414 {offsets = [0, 128], sizes = [8, 128], strides = [1, 1]} : vector<8x384xf32> to vector<8x128xf32>
    %425 = arith.addf %423, %424 : vector<8x128xf32>
    %426 = arith.negf %425 : vector<8x128xf32>
    %427 = math.exp %426 : vector<8x128xf32>
    %cst_98 = arith.constant 1.000000e+00 : f32
    %428 = vector.broadcast %cst_98 : f32 to vector<8x128xf32>
    %429 = arith.addf %428, %427 : vector<8x128xf32>
    %430 = arith.divf %428, %429 : vector<8x128xf32>
    %431 = vector.extract_strided_slice %413 {offsets = [0, 256], sizes = [8, 128], strides = [1, 1]} : vector<8x384xf32> to vector<8x128xf32>
    %432 = vector.extract_strided_slice %414 {offsets = [0, 256], sizes = [8, 128], strides = [1, 1]} : vector<8x384xf32> to vector<8x128xf32>
    %433 = vector.broadcast %4 : vector<1x128xf32> to vector<8x128xf32>
    %434 = arith.addf %432, %433 : vector<8x128xf32>
    %435 = arith.mulf %422, %434 : vector<8x128xf32>
    %436 = arith.addf %431, %435 : vector<8x128xf32>
    %437 = math.tanh %436 : vector<8x128xf32>
    %cst_99 = arith.constant 1.000000e+00 : f32
    %438 = vector.broadcast %cst_99 : f32 to vector<8x128xf32>
    %439 = arith.subf %438, %430 : vector<8x128xf32>
    %440 = arith.mulf %439, %437 : vector<8x128xf32>
    %441 = arith.mulf %430, %405 : vector<8x128xf32>
    %442 = arith.addf %440, %441 : vector<8x128xf32>
    %443 = tpu.concatenate %442, %406 in 1 : vector<8x128xf32>, vector<8x128xf32> -> vector<8x256xf32>
    %cst_100 = arith.constant dense<0.000000e+00> : vector<8x512xf32>
    %444 = tpu.matmul %443, %5, %cst_100 {dimension_numbers = #tpu.dot_dimension_numbers<[1], [0], [0], [1], [0, 0, 1, 1], [], []>} : vector<8x256xf32>, vector<256x512xf32>, vector<8x512xf32> -> vector<8x512xf32>
    %445 = vector.broadcast %6 : vector<1x512xf32> to vector<8x512xf32>
    %446 = arith.addf %444, %445 : vector<8x512xf32>
    %447 = vector.extract_strided_slice %446 {offsets = [0, 0], sizes = [8, 128], strides = [1, 1]} : vector<8x512xf32> to vector<8x128xf32>
    %448 = arith.negf %447 : vector<8x128xf32>
    %449 = math.exp %448 : vector<8x128xf32>
    %cst_101 = arith.constant 1.000000e+00 : f32
    %450 = vector.broadcast %cst_101 : f32 to vector<8x128xf32>
    %451 = arith.addf %450, %449 : vector<8x128xf32>
    %452 = arith.divf %450, %451 : vector<8x128xf32>
    %453 = vector.extract_strided_slice %446 {offsets = [0, 128], sizes = [8, 128], strides = [1, 1]} : vector<8x512xf32> to vector<8x128xf32>
    %454 = arith.negf %453 : vector<8x128xf32>
    %455 = math.exp %454 : vector<8x128xf32>
    %cst_102 = arith.constant 1.000000e+00 : f32
    %456 = vector.broadcast %cst_102 : f32 to vector<8x128xf32>
    %457 = arith.addf %456, %455 : vector<8x128xf32>
    %458 = arith.divf %456, %457 : vector<8x128xf32>
    %459 = vector.extract_strided_slice %446 {offsets = [0, 256], sizes = [8, 128], strides = [1, 1]} : vector<8x512xf32> to vector<8x128xf32>
    %460 = vector.extract_strided_slice %446 {offsets = [0, 384], sizes = [8, 128], strides = [1, 1]} : vector<8x512xf32> to vector<8x128xf32>
    %461 = arith.mulf %452, %460 : vector<8x128xf32>
    %462 = arith.addf %459, %461 : vector<8x128xf32>
    %463 = math.tanh %462 : vector<8x128xf32>
    %cst_103 = arith.constant 1.000000e+00 : f32
    %464 = vector.broadcast %cst_103 : f32 to vector<8x128xf32>
    %465 = arith.subf %464, %458 : vector<8x128xf32>
    %466 = arith.mulf %465, %463 : vector<8x128xf32>
    %467 = arith.mulf %458, %406 : vector<8x128xf32>
    %468 = arith.addf %466, %467 : vector<8x128xf32>
    %c16_i32_104 = arith.constant 16 : i32
    %469 = arith.muli %arg0, %c16_i32_104 : i32
    %470 = arith.addi %469, %c6_i32 : i32
    %c20_i32_105 = arith.constant 20 : i32
    %471 = arith.cmpi slt, %470, %c20_i32_105 : i32
    %472 = arith.select %471, %442, %405 : vector<8x128xf32>
    %473 = arith.select %471, %468, %406 : vector<8x128xf32>
    %474 = arith.index_cast %c6_i32 : i32 to index
    %c0_106 = arith.constant 0 : index
    %c0_107 = arith.constant 0 : index
    %475 = vector.load %arg6[%474, %c0_106, %c0_107] : memref<16x8x128xf32, #tpu.memory_space<vmem>>, vector<1x8x128xf32>
    %476 = vector.shape_cast %475 : vector<1x8x128xf32> to vector<8x128xf32>
    %477 = vector.shape_cast %473 : vector<8x128xf32> to vector<1x8x128xf32>
    tpu.vector_store %arg6[%474, %c0_106, %c0_107], %477 {strides = array<i32>} : memref<16x8x128xf32, #tpu.memory_space<vmem>>, vector<1x8x128xf32>,
    %c7_i32 = arith.constant 7 : i32
    %478 = arith.index_cast %c7_i32 : i32 to index
    %c0_108 = arith.constant 0 : index
    %c0_109 = arith.constant 0 : index
    %479 = vector.load %arg1[%478, %c0_108, %c0_109] : memref<16x8x384xf32, #tpu.memory_space<vmem>>, vector<1x8x384xf32>
    %480 = vector.shape_cast %479 : vector<1x8x384xf32> to vector<8x384xf32>
    %cst_110 = arith.constant dense<0.000000e+00> : vector<8x384xf32>
    %481 = tpu.matmul %472, %3, %cst_110 {dimension_numbers = #tpu.dot_dimension_numbers<[1], [0], [0], [1], [0, 0, 1, 1], [], []>} : vector<8x128xf32>, vector<128x384xf32>, vector<8x384xf32> -> vector<8x384xf32>
    %482 = vector.extract_strided_slice %480 {offsets = [0, 0], sizes = [8, 128], strides = [1, 1]} : vector<8x384xf32> to vector<8x128xf32>
    %483 = vector.extract_strided_slice %481 {offsets = [0, 0], sizes = [8, 128], strides = [1, 1]} : vector<8x384xf32> to vector<8x128xf32>
    %484 = arith.addf %482, %483 : vector<8x128xf32>
    %485 = arith.negf %484 : vector<8x128xf32>
    %486 = math.exp %485 : vector<8x128xf32>
    %cst_111 = arith.constant 1.000000e+00 : f32
    %487 = vector.broadcast %cst_111 : f32 to vector<8x128xf32>
    %488 = arith.addf %487, %486 : vector<8x128xf32>
    %489 = arith.divf %487, %488 : vector<8x128xf32>
    %490 = vector.extract_strided_slice %480 {offsets = [0, 128], sizes = [8, 128], strides = [1, 1]} : vector<8x384xf32> to vector<8x128xf32>
    %491 = vector.extract_strided_slice %481 {offsets = [0, 128], sizes = [8, 128], strides = [1, 1]} : vector<8x384xf32> to vector<8x128xf32>
    %492 = arith.addf %490, %491 : vector<8x128xf32>
    %493 = arith.negf %492 : vector<8x128xf32>
    %494 = math.exp %493 : vector<8x128xf32>
    %cst_112 = arith.constant 1.000000e+00 : f32
    %495 = vector.broadcast %cst_112 : f32 to vector<8x128xf32>
    %496 = arith.addf %495, %494 : vector<8x128xf32>
    %497 = arith.divf %495, %496 : vector<8x128xf32>
    %498 = vector.extract_strided_slice %480 {offsets = [0, 256], sizes = [8, 128], strides = [1, 1]} : vector<8x384xf32> to vector<8x128xf32>
    %499 = vector.extract_strided_slice %481 {offsets = [0, 256], sizes = [8, 128], strides = [1, 1]} : vector<8x384xf32> to vector<8x128xf32>
    %500 = vector.broadcast %4 : vector<1x128xf32> to vector<8x128xf32>
    %501 = arith.addf %499, %500 : vector<8x128xf32>
    %502 = arith.mulf %489, %501 : vector<8x128xf32>
    %503 = arith.addf %498, %502 : vector<8x128xf32>
    %504 = math.tanh %503 : vector<8x128xf32>
    %cst_113 = arith.constant 1.000000e+00 : f32
    %505 = vector.broadcast %cst_113 : f32 to vector<8x128xf32>
    %506 = arith.subf %505, %497 : vector<8x128xf32>
    %507 = arith.mulf %506, %504 : vector<8x128xf32>
    %508 = arith.mulf %497, %472 : vector<8x128xf32>
    %509 = arith.addf %507, %508 : vector<8x128xf32>
    %510 = tpu.concatenate %509, %473 in 1 : vector<8x128xf32>, vector<8x128xf32> -> vector<8x256xf32>
    %cst_114 = arith.constant dense<0.000000e+00> : vector<8x512xf32>
    %511 = tpu.matmul %510, %5, %cst_114 {dimension_numbers = #tpu.dot_dimension_numbers<[1], [0], [0], [1], [0, 0, 1, 1], [], []>} : vector<8x256xf32>, vector<256x512xf32>, vector<8x512xf32> -> vector<8x512xf32>
    %512 = vector.broadcast %6 : vector<1x512xf32> to vector<8x512xf32>
    %513 = arith.addf %511, %512 : vector<8x512xf32>
    %514 = vector.extract_strided_slice %513 {offsets = [0, 0], sizes = [8, 128], strides = [1, 1]} : vector<8x512xf32> to vector<8x128xf32>
    %515 = arith.negf %514 : vector<8x128xf32>
    %516 = math.exp %515 : vector<8x128xf32>
    %cst_115 = arith.constant 1.000000e+00 : f32
    %517 = vector.broadcast %cst_115 : f32 to vector<8x128xf32>
    %518 = arith.addf %517, %516 : vector<8x128xf32>
    %519 = arith.divf %517, %518 : vector<8x128xf32>
    %520 = vector.extract_strided_slice %513 {offsets = [0, 128], sizes = [8, 128], strides = [1, 1]} : vector<8x512xf32> to vector<8x128xf32>
    %521 = arith.negf %520 : vector<8x128xf32>
    %522 = math.exp %521 : vector<8x128xf32>
    %cst_116 = arith.constant 1.000000e+00 : f32
    %523 = vector.broadcast %cst_116 : f32 to vector<8x128xf32>
    %524 = arith.addf %523, %522 : vector<8x128xf32>
    %525 = arith.divf %523, %524 : vector<8x128xf32>
    %526 = vector.extract_strided_slice %513 {offsets = [0, 256], sizes = [8, 128], strides = [1, 1]} : vector<8x512xf32> to vector<8x128xf32>
    %527 = vector.extract_strided_slice %513 {offsets = [0, 384], sizes = [8, 128], strides = [1, 1]} : vector<8x512xf32> to vector<8x128xf32>
    %528 = arith.mulf %519, %527 : vector<8x128xf32>
    %529 = arith.addf %526, %528 : vector<8x128xf32>
    %530 = math.tanh %529 : vector<8x128xf32>
    %cst_117 = arith.constant 1.000000e+00 : f32
    %531 = vector.broadcast %cst_117 : f32 to vector<8x128xf32>
    %532 = arith.subf %531, %525 : vector<8x128xf32>
    %533 = arith.mulf %532, %530 : vector<8x128xf32>
    %534 = arith.mulf %525, %473 : vector<8x128xf32>
    %535 = arith.addf %533, %534 : vector<8x128xf32>
    %c16_i32_118 = arith.constant 16 : i32
    %536 = arith.muli %arg0, %c16_i32_118 : i32
    %537 = arith.addi %536, %c7_i32 : i32
    %c20_i32_119 = arith.constant 20 : i32
    %538 = arith.cmpi slt, %537, %c20_i32_119 : i32
    %539 = arith.select %538, %509, %472 : vector<8x128xf32>
    %540 = arith.select %538, %535, %473 : vector<8x128xf32>
    %541 = arith.index_cast %c7_i32 : i32 to index
    %c0_120 = arith.constant 0 : index
    %c0_121 = arith.constant 0 : index
    %542 = vector.load %arg6[%541, %c0_120, %c0_121] : memref<16x8x128xf32, #tpu.memory_space<vmem>>, vector<1x8x128xf32>
    %543 = vector.shape_cast %542 : vector<1x8x128xf32> to vector<8x128xf32>
    %544 = vector.shape_cast %540 : vector<8x128xf32> to vector<1x8x128xf32>
    tpu.vector_store %arg6[%541, %c0_120, %c0_121], %544 {strides = array<i32>} : memref<16x8x128xf32, #tpu.memory_space<vmem>>, vector<1x8x128xf32>,
    %c8_i32 = arith.constant 8 : i32
    %545 = arith.index_cast %c8_i32 : i32 to index
    %c0_122 = arith.constant 0 : index
    %c0_123 = arith.constant 0 : index
    %546 = vector.load %arg1[%545, %c0_122, %c0_123] : memref<16x8x384xf32, #tpu.memory_space<vmem>>, vector<1x8x384xf32>
    %547 = vector.shape_cast %546 : vector<1x8x384xf32> to vector<8x384xf32>
    %cst_124 = arith.constant dense<0.000000e+00> : vector<8x384xf32>
    %548 = tpu.matmul %539, %3, %cst_124 {dimension_numbers = #tpu.dot_dimension_numbers<[1], [0], [0], [1], [0, 0, 1, 1], [], []>} : vector<8x128xf32>, vector<128x384xf32>, vector<8x384xf32> -> vector<8x384xf32>
    %549 = vector.extract_strided_slice %547 {offsets = [0, 0], sizes = [8, 128], strides = [1, 1]} : vector<8x384xf32> to vector<8x128xf32>
    %550 = vector.extract_strided_slice %548 {offsets = [0, 0], sizes = [8, 128], strides = [1, 1]} : vector<8x384xf32> to vector<8x128xf32>
    %551 = arith.addf %549, %550 : vector<8x128xf32>
    %552 = arith.negf %551 : vector<8x128xf32>
    %553 = math.exp %552 : vector<8x128xf32>
    %cst_125 = arith.constant 1.000000e+00 : f32
    %554 = vector.broadcast %cst_125 : f32 to vector<8x128xf32>
    %555 = arith.addf %554, %553 : vector<8x128xf32>
    %556 = arith.divf %554, %555 : vector<8x128xf32>
    %557 = vector.extract_strided_slice %547 {offsets = [0, 128], sizes = [8, 128], strides = [1, 1]} : vector<8x384xf32> to vector<8x128xf32>
    %558 = vector.extract_strided_slice %548 {offsets = [0, 128], sizes = [8, 128], strides = [1, 1]} : vector<8x384xf32> to vector<8x128xf32>
    %559 = arith.addf %557, %558 : vector<8x128xf32>
    %560 = arith.negf %559 : vector<8x128xf32>
    %561 = math.exp %560 : vector<8x128xf32>
    %cst_126 = arith.constant 1.000000e+00 : f32
    %562 = vector.broadcast %cst_126 : f32 to vector<8x128xf32>
    %563 = arith.addf %562, %561 : vector<8x128xf32>
    %564 = arith.divf %562, %563 : vector<8x128xf32>
    %565 = vector.extract_strided_slice %547 {offsets = [0, 256], sizes = [8, 128], strides = [1, 1]} : vector<8x384xf32> to vector<8x128xf32>
    %566 = vector.extract_strided_slice %548 {offsets = [0, 256], sizes = [8, 128], strides = [1, 1]} : vector<8x384xf32> to vector<8x128xf32>
    %567 = vector.broadcast %4 : vector<1x128xf32> to vector<8x128xf32>
    %568 = arith.addf %566, %567 : vector<8x128xf32>
    %569 = arith.mulf %556, %568 : vector<8x128xf32>
    %570 = arith.addf %565, %569 : vector<8x128xf32>
    %571 = math.tanh %570 : vector<8x128xf32>
    %cst_127 = arith.constant 1.000000e+00 : f32
    %572 = vector.broadcast %cst_127 : f32 to vector<8x128xf32>
    %573 = arith.subf %572, %564 : vector<8x128xf32>
    %574 = arith.mulf %573, %571 : vector<8x128xf32>
    %575 = arith.mulf %564, %539 : vector<8x128xf32>
    %576 = arith.addf %574, %575 : vector<8x128xf32>
    %577 = tpu.concatenate %576, %540 in 1 : vector<8x128xf32>, vector<8x128xf32> -> vector<8x256xf32>
    %cst_128 = arith.constant dense<0.000000e+00> : vector<8x512xf32>
    %578 = tpu.matmul %577, %5, %cst_128 {dimension_numbers = #tpu.dot_dimension_numbers<[1], [0], [0], [1], [0, 0, 1, 1], [], []>} : vector<8x256xf32>, vector<256x512xf32>, vector<8x512xf32> -> vector<8x512xf32>
    %579 = vector.broadcast %6 : vector<1x512xf32> to vector<8x512xf32>
    %580 = arith.addf %578, %579 : vector<8x512xf32>
    %581 = vector.extract_strided_slice %580 {offsets = [0, 0], sizes = [8, 128], strides = [1, 1]} : vector<8x512xf32> to vector<8x128xf32>
    %582 = arith.negf %581 : vector<8x128xf32>
    %583 = math.exp %582 : vector<8x128xf32>
    %cst_129 = arith.constant 1.000000e+00 : f32
    %584 = vector.broadcast %cst_129 : f32 to vector<8x128xf32>
    %585 = arith.addf %584, %583 : vector<8x128xf32>
    %586 = arith.divf %584, %585 : vector<8x128xf32>
    %587 = vector.extract_strided_slice %580 {offsets = [0, 128], sizes = [8, 128], strides = [1, 1]} : vector<8x512xf32> to vector<8x128xf32>
    %588 = arith.negf %587 : vector<8x128xf32>
    %589 = math.exp %588 : vector<8x128xf32>
    %cst_130 = arith.constant 1.000000e+00 : f32
    %590 = vector.broadcast %cst_130 : f32 to vector<8x128xf32>
    %591 = arith.addf %590, %589 : vector<8x128xf32>
    %592 = arith.divf %590, %591 : vector<8x128xf32>
    %593 = vector.extract_strided_slice %580 {offsets = [0, 256], sizes = [8, 128], strides = [1, 1]} : vector<8x512xf32> to vector<8x128xf32>
    %594 = vector.extract_strided_slice %580 {offsets = [0, 384], sizes = [8, 128], strides = [1, 1]} : vector<8x512xf32> to vector<8x128xf32>
    %595 = arith.mulf %586, %594 : vector<8x128xf32>
    %596 = arith.addf %593, %595 : vector<8x128xf32>
    %597 = math.tanh %596 : vector<8x128xf32>
    %cst_131 = arith.constant 1.000000e+00 : f32
    %598 = vector.broadcast %cst_131 : f32 to vector<8x128xf32>
    %599 = arith.subf %598, %592 : vector<8x128xf32>
    %600 = arith.mulf %599, %597 : vector<8x128xf32>
    %601 = arith.mulf %592, %540 : vector<8x128xf32>
    %602 = arith.addf %600, %601 : vector<8x128xf32>
    %c16_i32_132 = arith.constant 16 : i32
    %603 = arith.muli %arg0, %c16_i32_132 : i32
    %604 = arith.addi %603, %c8_i32 : i32
    %c20_i32_133 = arith.constant 20 : i32
    %605 = arith.cmpi slt, %604, %c20_i32_133 : i32
    %606 = arith.select %605, %576, %539 : vector<8x128xf32>
    %607 = arith.select %605, %602, %540 : vector<8x128xf32>
    %608 = arith.index_cast %c8_i32 : i32 to index
    %c0_134 = arith.constant 0 : index
    %c0_135 = arith.constant 0 : index
    %609 = vector.load %arg6[%608, %c0_134, %c0_135] : memref<16x8x128xf32, #tpu.memory_space<vmem>>, vector<1x8x128xf32>
    %610 = vector.shape_cast %609 : vector<1x8x128xf32> to vector<8x128xf32>
    %611 = vector.shape_cast %607 : vector<8x128xf32> to vector<1x8x128xf32>
    tpu.vector_store %arg6[%608, %c0_134, %c0_135], %611 {strides = array<i32>} : memref<16x8x128xf32, #tpu.memory_space<vmem>>, vector<1x8x128xf32>,
    %c9_i32 = arith.constant 9 : i32
    %612 = arith.index_cast %c9_i32 : i32 to index
    %c0_136 = arith.constant 0 : index
    %c0_137 = arith.constant 0 : index
    %613 = vector.load %arg1[%612, %c0_136, %c0_137] : memref<16x8x384xf32, #tpu.memory_space<vmem>>, vector<1x8x384xf32>
    %614 = vector.shape_cast %613 : vector<1x8x384xf32> to vector<8x384xf32>
    %cst_138 = arith.constant dense<0.000000e+00> : vector<8x384xf32>
    %615 = tpu.matmul %606, %3, %cst_138 {dimension_numbers = #tpu.dot_dimension_numbers<[1], [0], [0], [1], [0, 0, 1, 1], [], []>} : vector<8x128xf32>, vector<128x384xf32>, vector<8x384xf32> -> vector<8x384xf32>
    %616 = vector.extract_strided_slice %614 {offsets = [0, 0], sizes = [8, 128], strides = [1, 1]} : vector<8x384xf32> to vector<8x128xf32>
    %617 = vector.extract_strided_slice %615 {offsets = [0, 0], sizes = [8, 128], strides = [1, 1]} : vector<8x384xf32> to vector<8x128xf32>
    %618 = arith.addf %616, %617 : vector<8x128xf32>
    %619 = arith.negf %618 : vector<8x128xf32>
    %620 = math.exp %619 : vector<8x128xf32>
    %cst_139 = arith.constant 1.000000e+00 : f32
    %621 = vector.broadcast %cst_139 : f32 to vector<8x128xf32>
    %622 = arith.addf %621, %620 : vector<8x128xf32>
    %623 = arith.divf %621, %622 : vector<8x128xf32>
    %624 = vector.extract_strided_slice %614 {offsets = [0, 128], sizes = [8, 128], strides = [1, 1]} : vector<8x384xf32> to vector<8x128xf32>
    %625 = vector.extract_strided_slice %615 {offsets = [0, 128], sizes = [8, 128], strides = [1, 1]} : vector<8x384xf32> to vector<8x128xf32>
    %626 = arith.addf %624, %625 : vector<8x128xf32>
    %627 = arith.negf %626 : vector<8x128xf32>
    %628 = math.exp %627 : vector<8x128xf32>
    %cst_140 = arith.constant 1.000000e+00 : f32
    %629 = vector.broadcast %cst_140 : f32 to vector<8x128xf32>
    %630 = arith.addf %629, %628 : vector<8x128xf32>
    %631 = arith.divf %629, %630 : vector<8x128xf32>
    %632 = vector.extract_strided_slice %614 {offsets = [0, 256], sizes = [8, 128], strides = [1, 1]} : vector<8x384xf32> to vector<8x128xf32>
    %633 = vector.extract_strided_slice %615 {offsets = [0, 256], sizes = [8, 128], strides = [1, 1]} : vector<8x384xf32> to vector<8x128xf32>
    %634 = vector.broadcast %4 : vector<1x128xf32> to vector<8x128xf32>
    %635 = arith.addf %633, %634 : vector<8x128xf32>
    %636 = arith.mulf %623, %635 : vector<8x128xf32>
    %637 = arith.addf %632, %636 : vector<8x128xf32>
    %638 = math.tanh %637 : vector<8x128xf32>
    %cst_141 = arith.constant 1.000000e+00 : f32
    %639 = vector.broadcast %cst_141 : f32 to vector<8x128xf32>
    %640 = arith.subf %639, %631 : vector<8x128xf32>
    %641 = arith.mulf %640, %638 : vector<8x128xf32>
    %642 = arith.mulf %631, %606 : vector<8x128xf32>
    %643 = arith.addf %641, %642 : vector<8x128xf32>
    %644 = tpu.concatenate %643, %607 in 1 : vector<8x128xf32>, vector<8x128xf32> -> vector<8x256xf32>
    %cst_142 = arith.constant dense<0.000000e+00> : vector<8x512xf32>
    %645 = tpu.matmul %644, %5, %cst_142 {dimension_numbers = #tpu.dot_dimension_numbers<[1], [0], [0], [1], [0, 0, 1, 1], [], []>} : vector<8x256xf32>, vector<256x512xf32>, vector<8x512xf32> -> vector<8x512xf32>
    %646 = vector.broadcast %6 : vector<1x512xf32> to vector<8x512xf32>
    %647 = arith.addf %645, %646 : vector<8x512xf32>
    %648 = vector.extract_strided_slice %647 {offsets = [0, 0], sizes = [8, 128], strides = [1, 1]} : vector<8x512xf32> to vector<8x128xf32>
    %649 = arith.negf %648 : vector<8x128xf32>
    %650 = math.exp %649 : vector<8x128xf32>
    %cst_143 = arith.constant 1.000000e+00 : f32
    %651 = vector.broadcast %cst_143 : f32 to vector<8x128xf32>
    %652 = arith.addf %651, %650 : vector<8x128xf32>
    %653 = arith.divf %651, %652 : vector<8x128xf32>
    %654 = vector.extract_strided_slice %647 {offsets = [0, 128], sizes = [8, 128], strides = [1, 1]} : vector<8x512xf32> to vector<8x128xf32>
    %655 = arith.negf %654 : vector<8x128xf32>
    %656 = math.exp %655 : vector<8x128xf32>
    %cst_144 = arith.constant 1.000000e+00 : f32
    %657 = vector.broadcast %cst_144 : f32 to vector<8x128xf32>
    %658 = arith.addf %657, %656 : vector<8x128xf32>
    %659 = arith.divf %657, %658 : vector<8x128xf32>
    %660 = vector.extract_strided_slice %647 {offsets = [0, 256], sizes = [8, 128], strides = [1, 1]} : vector<8x512xf32> to vector<8x128xf32>
    %661 = vector.extract_strided_slice %647 {offsets = [0, 384], sizes = [8, 128], strides = [1, 1]} : vector<8x512xf32> to vector<8x128xf32>
    %662 = arith.mulf %653, %661 : vector<8x128xf32>
    %663 = arith.addf %660, %662 : vector<8x128xf32>
    %664 = math.tanh %663 : vector<8x128xf32>
    %cst_145 = arith.constant 1.000000e+00 : f32
    %665 = vector.broadcast %cst_145 : f32 to vector<8x128xf32>
    %666 = arith.subf %665, %659 : vector<8x128xf32>
    %667 = arith.mulf %666, %664 : vector<8x128xf32>
    %668 = arith.mulf %659, %607 : vector<8x128xf32>
    %669 = arith.addf %667, %668 : vector<8x128xf32>
    %c16_i32_146 = arith.constant 16 : i32
    %670 = arith.muli %arg0, %c16_i32_146 : i32
    %671 = arith.addi %670, %c9_i32 : i32
    %c20_i32_147 = arith.constant 20 : i32
    %672 = arith.cmpi slt, %671, %c20_i32_147 : i32
    %673 = arith.select %672, %643, %606 : vector<8x128xf32>
    %674 = arith.select %672, %669, %607 : vector<8x128xf32>
    %675 = arith.index_cast %c9_i32 : i32 to index
    %c0_148 = arith.constant 0 : index
    %c0_149 = arith.constant 0 : index
    %676 = vector.load %arg6[%675, %c0_148, %c0_149] : memref<16x8x128xf32, #tpu.memory_space<vmem>>, vector<1x8x128xf32>
    %677 = vector.shape_cast %676 : vector<1x8x128xf32> to vector<8x128xf32>
    %678 = vector.shape_cast %674 : vector<8x128xf32> to vector<1x8x128xf32>
    tpu.vector_store %arg6[%675, %c0_148, %c0_149], %678 {strides = array<i32>} : memref<16x8x128xf32, #tpu.memory_space<vmem>>, vector<1x8x128xf32>,
    %c10_i32 = arith.constant 10 : i32
    %679 = arith.index_cast %c10_i32 : i32 to index
    %c0_150 = arith.constant 0 : index
    %c0_151 = arith.constant 0 : index
    %680 = vector.load %arg1[%679, %c0_150, %c0_151] : memref<16x8x384xf32, #tpu.memory_space<vmem>>, vector<1x8x384xf32>
    %681 = vector.shape_cast %680 : vector<1x8x384xf32> to vector<8x384xf32>
    %cst_152 = arith.constant dense<0.000000e+00> : vector<8x384xf32>
    %682 = tpu.matmul %673, %3, %cst_152 {dimension_numbers = #tpu.dot_dimension_numbers<[1], [0], [0], [1], [0, 0, 1, 1], [], []>} : vector<8x128xf32>, vector<128x384xf32>, vector<8x384xf32> -> vector<8x384xf32>
    %683 = vector.extract_strided_slice %681 {offsets = [0, 0], sizes = [8, 128], strides = [1, 1]} : vector<8x384xf32> to vector<8x128xf32>
    %684 = vector.extract_strided_slice %682 {offsets = [0, 0], sizes = [8, 128], strides = [1, 1]} : vector<8x384xf32> to vector<8x128xf32>
    %685 = arith.addf %683, %684 : vector<8x128xf32>
    %686 = arith.negf %685 : vector<8x128xf32>
    %687 = math.exp %686 : vector<8x128xf32>
    %cst_153 = arith.constant 1.000000e+00 : f32
    %688 = vector.broadcast %cst_153 : f32 to vector<8x128xf32>
    %689 = arith.addf %688, %687 : vector<8x128xf32>
    %690 = arith.divf %688, %689 : vector<8x128xf32>
    %691 = vector.extract_strided_slice %681 {offsets = [0, 128], sizes = [8, 128], strides = [1, 1]} : vector<8x384xf32> to vector<8x128xf32>
    %692 = vector.extract_strided_slice %682 {offsets = [0, 128], sizes = [8, 128], strides = [1, 1]} : vector<8x384xf32> to vector<8x128xf32>
    %693 = arith.addf %691, %692 : vector<8x128xf32>
    %694 = arith.negf %693 : vector<8x128xf32>
    %695 = math.exp %694 : vector<8x128xf32>
    %cst_154 = arith.constant 1.000000e+00 : f32
    %696 = vector.broadcast %cst_154 : f32 to vector<8x128xf32>
    %697 = arith.addf %696, %695 : vector<8x128xf32>
    %698 = arith.divf %696, %697 : vector<8x128xf32>
    %699 = vector.extract_strided_slice %681 {offsets = [0, 256], sizes = [8, 128], strides = [1, 1]} : vector<8x384xf32> to vector<8x128xf32>
    %700 = vector.extract_strided_slice %682 {offsets = [0, 256], sizes = [8, 128], strides = [1, 1]} : vector<8x384xf32> to vector<8x128xf32>
    %701 = vector.broadcast %4 : vector<1x128xf32> to vector<8x128xf32>
    %702 = arith.addf %700, %701 : vector<8x128xf32>
    %703 = arith.mulf %690, %702 : vector<8x128xf32>
    %704 = arith.addf %699, %703 : vector<8x128xf32>
    %705 = math.tanh %704 : vector<8x128xf32>
    %cst_155 = arith.constant 1.000000e+00 : f32
    %706 = vector.broadcast %cst_155 : f32 to vector<8x128xf32>
    %707 = arith.subf %706, %698 : vector<8x128xf32>
    %708 = arith.mulf %707, %705 : vector<8x128xf32>
    %709 = arith.mulf %698, %673 : vector<8x128xf32>
    %710 = arith.addf %708, %709 : vector<8x128xf32>
    %711 = tpu.concatenate %710, %674 in 1 : vector<8x128xf32>, vector<8x128xf32> -> vector<8x256xf32>
    %cst_156 = arith.constant dense<0.000000e+00> : vector<8x512xf32>
    %712 = tpu.matmul %711, %5, %cst_156 {dimension_numbers = #tpu.dot_dimension_numbers<[1], [0], [0], [1], [0, 0, 1, 1], [], []>} : vector<8x256xf32>, vector<256x512xf32>, vector<8x512xf32> -> vector<8x512xf32>
    %713 = vector.broadcast %6 : vector<1x512xf32> to vector<8x512xf32>
    %714 = arith.addf %712, %713 : vector<8x512xf32>
    %715 = vector.extract_strided_slice %714 {offsets = [0, 0], sizes = [8, 128], strides = [1, 1]} : vector<8x512xf32> to vector<8x128xf32>
    %716 = arith.negf %715 : vector<8x128xf32>
    %717 = math.exp %716 : vector<8x128xf32>
    %cst_157 = arith.constant 1.000000e+00 : f32
    %718 = vector.broadcast %cst_157 : f32 to vector<8x128xf32>
    %719 = arith.addf %718, %717 : vector<8x128xf32>
    %720 = arith.divf %718, %719 : vector<8x128xf32>
    %721 = vector.extract_strided_slice %714 {offsets = [0, 128], sizes = [8, 128], strides = [1, 1]} : vector<8x512xf32> to vector<8x128xf32>
    %722 = arith.negf %721 : vector<8x128xf32>
    %723 = math.exp %722 : vector<8x128xf32>
    %cst_158 = arith.constant 1.000000e+00 : f32
    %724 = vector.broadcast %cst_158 : f32 to vector<8x128xf32>
    %725 = arith.addf %724, %723 : vector<8x128xf32>
    %726 = arith.divf %724, %725 : vector<8x128xf32>
    %727 = vector.extract_strided_slice %714 {offsets = [0, 256], sizes = [8, 128], strides = [1, 1]} : vector<8x512xf32> to vector<8x128xf32>
    %728 = vector.extract_strided_slice %714 {offsets = [0, 384], sizes = [8, 128], strides = [1, 1]} : vector<8x512xf32> to vector<8x128xf32>
    %729 = arith.mulf %720, %728 : vector<8x128xf32>
    %730 = arith.addf %727, %729 : vector<8x128xf32>
    %731 = math.tanh %730 : vector<8x128xf32>
    %cst_159 = arith.constant 1.000000e+00 : f32
    %732 = vector.broadcast %cst_159 : f32 to vector<8x128xf32>
    %733 = arith.subf %732, %726 : vector<8x128xf32>
    %734 = arith.mulf %733, %731 : vector<8x128xf32>
    %735 = arith.mulf %726, %674 : vector<8x128xf32>
    %736 = arith.addf %734, %735 : vector<8x128xf32>
    %c16_i32_160 = arith.constant 16 : i32
    %737 = arith.muli %arg0, %c16_i32_160 : i32
    %738 = arith.addi %737, %c10_i32 : i32
    %c20_i32_161 = arith.constant 20 : i32
    %739 = arith.cmpi slt, %738, %c20_i32_161 : i32
    %740 = arith.select %739, %710, %673 : vector<8x128xf32>
    %741 = arith.select %739, %736, %674 : vector<8x128xf32>
    %742 = arith.index_cast %c10_i32 : i32 to index
    %c0_162 = arith.constant 0 : index
    %c0_163 = arith.constant 0 : index
    %743 = vector.load %arg6[%742, %c0_162, %c0_163] : memref<16x8x128xf32, #tpu.memory_space<vmem>>, vector<1x8x128xf32>
    %744 = vector.shape_cast %743 : vector<1x8x128xf32> to vector<8x128xf32>
    %745 = vector.shape_cast %741 : vector<8x128xf32> to vector<1x8x128xf32>
    tpu.vector_store %arg6[%742, %c0_162, %c0_163], %745 {strides = array<i32>} : memref<16x8x128xf32, #tpu.memory_space<vmem>>, vector<1x8x128xf32>,
    %c11_i32 = arith.constant 11 : i32
    %746 = arith.index_cast %c11_i32 : i32 to index
    %c0_164 = arith.constant 0 : index
    %c0_165 = arith.constant 0 : index
    %747 = vector.load %arg1[%746, %c0_164, %c0_165] : memref<16x8x384xf32, #tpu.memory_space<vmem>>, vector<1x8x384xf32>
    %748 = vector.shape_cast %747 : vector<1x8x384xf32> to vector<8x384xf32>
    %cst_166 = arith.constant dense<0.000000e+00> : vector<8x384xf32>
    %749 = tpu.matmul %740, %3, %cst_166 {dimension_numbers = #tpu.dot_dimension_numbers<[1], [0], [0], [1], [0, 0, 1, 1], [], []>} : vector<8x128xf32>, vector<128x384xf32>, vector<8x384xf32> -> vector<8x384xf32>
    %750 = vector.extract_strided_slice %748 {offsets = [0, 0], sizes = [8, 128], strides = [1, 1]} : vector<8x384xf32> to vector<8x128xf32>
    %751 = vector.extract_strided_slice %749 {offsets = [0, 0], sizes = [8, 128], strides = [1, 1]} : vector<8x384xf32> to vector<8x128xf32>
    %752 = arith.addf %750, %751 : vector<8x128xf32>
    %753 = arith.negf %752 : vector<8x128xf32>
    %754 = math.exp %753 : vector<8x128xf32>
    %cst_167 = arith.constant 1.000000e+00 : f32
    %755 = vector.broadcast %cst_167 : f32 to vector<8x128xf32>
    %756 = arith.addf %755, %754 : vector<8x128xf32>
    %757 = arith.divf %755, %756 : vector<8x128xf32>
    %758 = vector.extract_strided_slice %748 {offsets = [0, 128], sizes = [8, 128], strides = [1, 1]} : vector<8x384xf32> to vector<8x128xf32>
    %759 = vector.extract_strided_slice %749 {offsets = [0, 128], sizes = [8, 128], strides = [1, 1]} : vector<8x384xf32> to vector<8x128xf32>
    %760 = arith.addf %758, %759 : vector<8x128xf32>
    %761 = arith.negf %760 : vector<8x128xf32>
    %762 = math.exp %761 : vector<8x128xf32>
    %cst_168 = arith.constant 1.000000e+00 : f32
    %763 = vector.broadcast %cst_168 : f32 to vector<8x128xf32>
    %764 = arith.addf %763, %762 : vector<8x128xf32>
    %765 = arith.divf %763, %764 : vector<8x128xf32>
    %766 = vector.extract_strided_slice %748 {offsets = [0, 256], sizes = [8, 128], strides = [1, 1]} : vector<8x384xf32> to vector<8x128xf32>
    %767 = vector.extract_strided_slice %749 {offsets = [0, 256], sizes = [8, 128], strides = [1, 1]} : vector<8x384xf32> to vector<8x128xf32>
    %768 = vector.broadcast %4 : vector<1x128xf32> to vector<8x128xf32>
    %769 = arith.addf %767, %768 : vector<8x128xf32>
    %770 = arith.mulf %757, %769 : vector<8x128xf32>
    %771 = arith.addf %766, %770 : vector<8x128xf32>
    %772 = math.tanh %771 : vector<8x128xf32>
    %cst_169 = arith.constant 1.000000e+00 : f32
    %773 = vector.broadcast %cst_169 : f32 to vector<8x128xf32>
    %774 = arith.subf %773, %765 : vector<8x128xf32>
    %775 = arith.mulf %774, %772 : vector<8x128xf32>
    %776 = arith.mulf %765, %740 : vector<8x128xf32>
    %777 = arith.addf %775, %776 : vector<8x128xf32>
    %778 = tpu.concatenate %777, %741 in 1 : vector<8x128xf32>, vector<8x128xf32> -> vector<8x256xf32>
    %cst_170 = arith.constant dense<0.000000e+00> : vector<8x512xf32>
    %779 = tpu.matmul %778, %5, %cst_170 {dimension_numbers = #tpu.dot_dimension_numbers<[1], [0], [0], [1], [0, 0, 1, 1], [], []>} : vector<8x256xf32>, vector<256x512xf32>, vector<8x512xf32> -> vector<8x512xf32>
    %780 = vector.broadcast %6 : vector<1x512xf32> to vector<8x512xf32>
    %781 = arith.addf %779, %780 : vector<8x512xf32>
    %782 = vector.extract_strided_slice %781 {offsets = [0, 0], sizes = [8, 128], strides = [1, 1]} : vector<8x512xf32> to vector<8x128xf32>
    %783 = arith.negf %782 : vector<8x128xf32>
    %784 = math.exp %783 : vector<8x128xf32>
    %cst_171 = arith.constant 1.000000e+00 : f32
    %785 = vector.broadcast %cst_171 : f32 to vector<8x128xf32>
    %786 = arith.addf %785, %784 : vector<8x128xf32>
    %787 = arith.divf %785, %786 : vector<8x128xf32>
    %788 = vector.extract_strided_slice %781 {offsets = [0, 128], sizes = [8, 128], strides = [1, 1]} : vector<8x512xf32> to vector<8x128xf32>
    %789 = arith.negf %788 : vector<8x128xf32>
    %790 = math.exp %789 : vector<8x128xf32>
    %cst_172 = arith.constant 1.000000e+00 : f32
    %791 = vector.broadcast %cst_172 : f32 to vector<8x128xf32>
    %792 = arith.addf %791, %790 : vector<8x128xf32>
    %793 = arith.divf %791, %792 : vector<8x128xf32>
    %794 = vector.extract_strided_slice %781 {offsets = [0, 256], sizes = [8, 128], strides = [1, 1]} : vector<8x512xf32> to vector<8x128xf32>
    %795 = vector.extract_strided_slice %781 {offsets = [0, 384], sizes = [8, 128], strides = [1, 1]} : vector<8x512xf32> to vector<8x128xf32>
    %796 = arith.mulf %787, %795 : vector<8x128xf32>
    %797 = arith.addf %794, %796 : vector<8x128xf32>
    %798 = math.tanh %797 : vector<8x128xf32>
    %cst_173 = arith.constant 1.000000e+00 : f32
    %799 = vector.broadcast %cst_173 : f32 to vector<8x128xf32>
    %800 = arith.subf %799, %793 : vector<8x128xf32>
    %801 = arith.mulf %800, %798 : vector<8x128xf32>
    %802 = arith.mulf %793, %741 : vector<8x128xf32>
    %803 = arith.addf %801, %802 : vector<8x128xf32>
    %c16_i32_174 = arith.constant 16 : i32
    %804 = arith.muli %arg0, %c16_i32_174 : i32
    %805 = arith.addi %804, %c11_i32 : i32
    %c20_i32_175 = arith.constant 20 : i32
    %806 = arith.cmpi slt, %805, %c20_i32_175 : i32
    %807 = arith.select %806, %777, %740 : vector<8x128xf32>
    %808 = arith.select %806, %803, %741 : vector<8x128xf32>
    %809 = arith.index_cast %c11_i32 : i32 to index
    %c0_176 = arith.constant 0 : index
    %c0_177 = arith.constant 0 : index
    %810 = vector.load %arg6[%809, %c0_176, %c0_177] : memref<16x8x128xf32, #tpu.memory_space<vmem>>, vector<1x8x128xf32>
    %811 = vector.shape_cast %810 : vector<1x8x128xf32> to vector<8x128xf32>
    %812 = vector.shape_cast %808 : vector<8x128xf32> to vector<1x8x128xf32>
    tpu.vector_store %arg6[%809, %c0_176, %c0_177], %812 {strides = array<i32>} : memref<16x8x128xf32, #tpu.memory_space<vmem>>, vector<1x8x128xf32>,
    %c12_i32 = arith.constant 12 : i32
    %813 = arith.index_cast %c12_i32 : i32 to index
    %c0_178 = arith.constant 0 : index
    %c0_179 = arith.constant 0 : index
    %814 = vector.load %arg1[%813, %c0_178, %c0_179] : memref<16x8x384xf32, #tpu.memory_space<vmem>>, vector<1x8x384xf32>
    %815 = vector.shape_cast %814 : vector<1x8x384xf32> to vector<8x384xf32>
    %cst_180 = arith.constant dense<0.000000e+00> : vector<8x384xf32>
    %816 = tpu.matmul %807, %3, %cst_180 {dimension_numbers = #tpu.dot_dimension_numbers<[1], [0], [0], [1], [0, 0, 1, 1], [], []>} : vector<8x128xf32>, vector<128x384xf32>, vector<8x384xf32> -> vector<8x384xf32>
    %817 = vector.extract_strided_slice %815 {offsets = [0, 0], sizes = [8, 128], strides = [1, 1]} : vector<8x384xf32> to vector<8x128xf32>
    %818 = vector.extract_strided_slice %816 {offsets = [0, 0], sizes = [8, 128], strides = [1, 1]} : vector<8x384xf32> to vector<8x128xf32>
    %819 = arith.addf %817, %818 : vector<8x128xf32>
    %820 = arith.negf %819 : vector<8x128xf32>
    %821 = math.exp %820 : vector<8x128xf32>
    %cst_181 = arith.constant 1.000000e+00 : f32
    %822 = vector.broadcast %cst_181 : f32 to vector<8x128xf32>
    %823 = arith.addf %822, %821 : vector<8x128xf32>
    %824 = arith.divf %822, %823 : vector<8x128xf32>
    %825 = vector.extract_strided_slice %815 {offsets = [0, 128], sizes = [8, 128], strides = [1, 1]} : vector<8x384xf32> to vector<8x128xf32>
    %826 = vector.extract_strided_slice %816 {offsets = [0, 128], sizes = [8, 128], strides = [1, 1]} : vector<8x384xf32> to vector<8x128xf32>
    %827 = arith.addf %825, %826 : vector<8x128xf32>
    %828 = arith.negf %827 : vector<8x128xf32>
    %829 = math.exp %828 : vector<8x128xf32>
    %cst_182 = arith.constant 1.000000e+00 : f32
    %830 = vector.broadcast %cst_182 : f32 to vector<8x128xf32>
    %831 = arith.addf %830, %829 : vector<8x128xf32>
    %832 = arith.divf %830, %831 : vector<8x128xf32>
    %833 = vector.extract_strided_slice %815 {offsets = [0, 256], sizes = [8, 128], strides = [1, 1]} : vector<8x384xf32> to vector<8x128xf32>
    %834 = vector.extract_strided_slice %816 {offsets = [0, 256], sizes = [8, 128], strides = [1, 1]} : vector<8x384xf32> to vector<8x128xf32>
    %835 = vector.broadcast %4 : vector<1x128xf32> to vector<8x128xf32>
    %836 = arith.addf %834, %835 : vector<8x128xf32>
    %837 = arith.mulf %824, %836 : vector<8x128xf32>
    %838 = arith.addf %833, %837 : vector<8x128xf32>
    %839 = math.tanh %838 : vector<8x128xf32>
    %cst_183 = arith.constant 1.000000e+00 : f32
    %840 = vector.broadcast %cst_183 : f32 to vector<8x128xf32>
    %841 = arith.subf %840, %832 : vector<8x128xf32>
    %842 = arith.mulf %841, %839 : vector<8x128xf32>
    %843 = arith.mulf %832, %807 : vector<8x128xf32>
    %844 = arith.addf %842, %843 : vector<8x128xf32>
    %845 = tpu.concatenate %844, %808 in 1 : vector<8x128xf32>, vector<8x128xf32> -> vector<8x256xf32>
    %cst_184 = arith.constant dense<0.000000e+00> : vector<8x512xf32>
    %846 = tpu.matmul %845, %5, %cst_184 {dimension_numbers = #tpu.dot_dimension_numbers<[1], [0], [0], [1], [0, 0, 1, 1], [], []>} : vector<8x256xf32>, vector<256x512xf32>, vector<8x512xf32> -> vector<8x512xf32>
    %847 = vector.broadcast %6 : vector<1x512xf32> to vector<8x512xf32>
    %848 = arith.addf %846, %847 : vector<8x512xf32>
    %849 = vector.extract_strided_slice %848 {offsets = [0, 0], sizes = [8, 128], strides = [1, 1]} : vector<8x512xf32> to vector<8x128xf32>
    %850 = arith.negf %849 : vector<8x128xf32>
    %851 = math.exp %850 : vector<8x128xf32>
    %cst_185 = arith.constant 1.000000e+00 : f32
    %852 = vector.broadcast %cst_185 : f32 to vector<8x128xf32>
    %853 = arith.addf %852, %851 : vector<8x128xf32>
    %854 = arith.divf %852, %853 : vector<8x128xf32>
    %855 = vector.extract_strided_slice %848 {offsets = [0, 128], sizes = [8, 128], strides = [1, 1]} : vector<8x512xf32> to vector<8x128xf32>
    %856 = arith.negf %855 : vector<8x128xf32>
    %857 = math.exp %856 : vector<8x128xf32>
    %cst_186 = arith.constant 1.000000e+00 : f32
    %858 = vector.broadcast %cst_186 : f32 to vector<8x128xf32>
    %859 = arith.addf %858, %857 : vector<8x128xf32>
    %860 = arith.divf %858, %859 : vector<8x128xf32>
    %861 = vector.extract_strided_slice %848 {offsets = [0, 256], sizes = [8, 128], strides = [1, 1]} : vector<8x512xf32> to vector<8x128xf32>
    %862 = vector.extract_strided_slice %848 {offsets = [0, 384], sizes = [8, 128], strides = [1, 1]} : vector<8x512xf32> to vector<8x128xf32>
    %863 = arith.mulf %854, %862 : vector<8x128xf32>
    %864 = arith.addf %861, %863 : vector<8x128xf32>
    %865 = math.tanh %864 : vector<8x128xf32>
    %cst_187 = arith.constant 1.000000e+00 : f32
    %866 = vector.broadcast %cst_187 : f32 to vector<8x128xf32>
    %867 = arith.subf %866, %860 : vector<8x128xf32>
    %868 = arith.mulf %867, %865 : vector<8x128xf32>
    %869 = arith.mulf %860, %808 : vector<8x128xf32>
    %870 = arith.addf %868, %869 : vector<8x128xf32>
    %c16_i32_188 = arith.constant 16 : i32
    %871 = arith.muli %arg0, %c16_i32_188 : i32
    %872 = arith.addi %871, %c12_i32 : i32
    %c20_i32_189 = arith.constant 20 : i32
    %873 = arith.cmpi slt, %872, %c20_i32_189 : i32
    %874 = arith.select %873, %844, %807 : vector<8x128xf32>
    %875 = arith.select %873, %870, %808 : vector<8x128xf32>
    %876 = arith.index_cast %c12_i32 : i32 to index
    %c0_190 = arith.constant 0 : index
    %c0_191 = arith.constant 0 : index
    %877 = vector.load %arg6[%876, %c0_190, %c0_191] : memref<16x8x128xf32, #tpu.memory_space<vmem>>, vector<1x8x128xf32>
    %878 = vector.shape_cast %877 : vector<1x8x128xf32> to vector<8x128xf32>
    %879 = vector.shape_cast %875 : vector<8x128xf32> to vector<1x8x128xf32>
    tpu.vector_store %arg6[%876, %c0_190, %c0_191], %879 {strides = array<i32>} : memref<16x8x128xf32, #tpu.memory_space<vmem>>, vector<1x8x128xf32>,
    %c13_i32 = arith.constant 13 : i32
    %880 = arith.index_cast %c13_i32 : i32 to index
    %c0_192 = arith.constant 0 : index
    %c0_193 = arith.constant 0 : index
    %881 = vector.load %arg1[%880, %c0_192, %c0_193] : memref<16x8x384xf32, #tpu.memory_space<vmem>>, vector<1x8x384xf32>
    %882 = vector.shape_cast %881 : vector<1x8x384xf32> to vector<8x384xf32>
    %cst_194 = arith.constant dense<0.000000e+00> : vector<8x384xf32>
    %883 = tpu.matmul %874, %3, %cst_194 {dimension_numbers = #tpu.dot_dimension_numbers<[1], [0], [0], [1], [0, 0, 1, 1], [], []>} : vector<8x128xf32>, vector<128x384xf32>, vector<8x384xf32> -> vector<8x384xf32>
    %884 = vector.extract_strided_slice %882 {offsets = [0, 0], sizes = [8, 128], strides = [1, 1]} : vector<8x384xf32> to vector<8x128xf32>
    %885 = vector.extract_strided_slice %883 {offsets = [0, 0], sizes = [8, 128], strides = [1, 1]} : vector<8x384xf32> to vector<8x128xf32>
    %886 = arith.addf %884, %885 : vector<8x128xf32>
    %887 = arith.negf %886 : vector<8x128xf32>
    %888 = math.exp %887 : vector<8x128xf32>
    %cst_195 = arith.constant 1.000000e+00 : f32
    %889 = vector.broadcast %cst_195 : f32 to vector<8x128xf32>
    %890 = arith.addf %889, %888 : vector<8x128xf32>
    %891 = arith.divf %889, %890 : vector<8x128xf32>
    %892 = vector.extract_strided_slice %882 {offsets = [0, 128], sizes = [8, 128], strides = [1, 1]} : vector<8x384xf32> to vector<8x128xf32>
    %893 = vector.extract_strided_slice %883 {offsets = [0, 128], sizes = [8, 128], strides = [1, 1]} : vector<8x384xf32> to vector<8x128xf32>
    %894 = arith.addf %892, %893 : vector<8x128xf32>
    %895 = arith.negf %894 : vector<8x128xf32>
    %896 = math.exp %895 : vector<8x128xf32>
    %cst_196 = arith.constant 1.000000e+00 : f32
    %897 = vector.broadcast %cst_196 : f32 to vector<8x128xf32>
    %898 = arith.addf %897, %896 : vector<8x128xf32>
    %899 = arith.divf %897, %898 : vector<8x128xf32>
    %900 = vector.extract_strided_slice %882 {offsets = [0, 256], sizes = [8, 128], strides = [1, 1]} : vector<8x384xf32> to vector<8x128xf32>
    %901 = vector.extract_strided_slice %883 {offsets = [0, 256], sizes = [8, 128], strides = [1, 1]} : vector<8x384xf32> to vector<8x128xf32>
    %902 = vector.broadcast %4 : vector<1x128xf32> to vector<8x128xf32>
    %903 = arith.addf %901, %902 : vector<8x128xf32>
    %904 = arith.mulf %891, %903 : vector<8x128xf32>
    %905 = arith.addf %900, %904 : vector<8x128xf32>
    %906 = math.tanh %905 : vector<8x128xf32>
    %cst_197 = arith.constant 1.000000e+00 : f32
    %907 = vector.broadcast %cst_197 : f32 to vector<8x128xf32>
    %908 = arith.subf %907, %899 : vector<8x128xf32>
    %909 = arith.mulf %908, %906 : vector<8x128xf32>
    %910 = arith.mulf %899, %874 : vector<8x128xf32>
    %911 = arith.addf %909, %910 : vector<8x128xf32>
    %912 = tpu.concatenate %911, %875 in 1 : vector<8x128xf32>, vector<8x128xf32> -> vector<8x256xf32>
    %cst_198 = arith.constant dense<0.000000e+00> : vector<8x512xf32>
    %913 = tpu.matmul %912, %5, %cst_198 {dimension_numbers = #tpu.dot_dimension_numbers<[1], [0], [0], [1], [0, 0, 1, 1], [], []>} : vector<8x256xf32>, vector<256x512xf32>, vector<8x512xf32> -> vector<8x512xf32>
    %914 = vector.broadcast %6 : vector<1x512xf32> to vector<8x512xf32>
    %915 = arith.addf %913, %914 : vector<8x512xf32>
    %916 = vector.extract_strided_slice %915 {offsets = [0, 0], sizes = [8, 128], strides = [1, 1]} : vector<8x512xf32> to vector<8x128xf32>
    %917 = arith.negf %916 : vector<8x128xf32>
    %918 = math.exp %917 : vector<8x128xf32>
    %cst_199 = arith.constant 1.000000e+00 : f32
    %919 = vector.broadcast %cst_199 : f32 to vector<8x128xf32>
    %920 = arith.addf %919, %918 : vector<8x128xf32>
    %921 = arith.divf %919, %920 : vector<8x128xf32>
    %922 = vector.extract_strided_slice %915 {offsets = [0, 128], sizes = [8, 128], strides = [1, 1]} : vector<8x512xf32> to vector<8x128xf32>
    %923 = arith.negf %922 : vector<8x128xf32>
    %924 = math.exp %923 : vector<8x128xf32>
    %cst_200 = arith.constant 1.000000e+00 : f32
    %925 = vector.broadcast %cst_200 : f32 to vector<8x128xf32>
    %926 = arith.addf %925, %924 : vector<8x128xf32>
    %927 = arith.divf %925, %926 : vector<8x128xf32>
    %928 = vector.extract_strided_slice %915 {offsets = [0, 256], sizes = [8, 128], strides = [1, 1]} : vector<8x512xf32> to vector<8x128xf32>
    %929 = vector.extract_strided_slice %915 {offsets = [0, 384], sizes = [8, 128], strides = [1, 1]} : vector<8x512xf32> to vector<8x128xf32>
    %930 = arith.mulf %921, %929 : vector<8x128xf32>
    %931 = arith.addf %928, %930 : vector<8x128xf32>
    %932 = math.tanh %931 : vector<8x128xf32>
    %cst_201 = arith.constant 1.000000e+00 : f32
    %933 = vector.broadcast %cst_201 : f32 to vector<8x128xf32>
    %934 = arith.subf %933, %927 : vector<8x128xf32>
    %935 = arith.mulf %934, %932 : vector<8x128xf32>
    %936 = arith.mulf %927, %875 : vector<8x128xf32>
    %937 = arith.addf %935, %936 : vector<8x128xf32>
    %c16_i32_202 = arith.constant 16 : i32
    %938 = arith.muli %arg0, %c16_i32_202 : i32
    %939 = arith.addi %938, %c13_i32 : i32
    %c20_i32_203 = arith.constant 20 : i32
    %940 = arith.cmpi slt, %939, %c20_i32_203 : i32
    %941 = arith.select %940, %911, %874 : vector<8x128xf32>
    %942 = arith.select %940, %937, %875 : vector<8x128xf32>
    %943 = arith.index_cast %c13_i32 : i32 to index
    %c0_204 = arith.constant 0 : index
    %c0_205 = arith.constant 0 : index
    %944 = vector.load %arg6[%943, %c0_204, %c0_205] : memref<16x8x128xf32, #tpu.memory_space<vmem>>, vector<1x8x128xf32>
    %945 = vector.shape_cast %944 : vector<1x8x128xf32> to vector<8x128xf32>
    %946 = vector.shape_cast %942 : vector<8x128xf32> to vector<1x8x128xf32>
    tpu.vector_store %arg6[%943, %c0_204, %c0_205], %946 {strides = array<i32>} : memref<16x8x128xf32, #tpu.memory_space<vmem>>, vector<1x8x128xf32>,
    %c14_i32 = arith.constant 14 : i32
    %947 = arith.index_cast %c14_i32 : i32 to index
    %c0_206 = arith.constant 0 : index
    %c0_207 = arith.constant 0 : index
    %948 = vector.load %arg1[%947, %c0_206, %c0_207] : memref<16x8x384xf32, #tpu.memory_space<vmem>>, vector<1x8x384xf32>
    %949 = vector.shape_cast %948 : vector<1x8x384xf32> to vector<8x384xf32>
    %cst_208 = arith.constant dense<0.000000e+00> : vector<8x384xf32>
    %950 = tpu.matmul %941, %3, %cst_208 {dimension_numbers = #tpu.dot_dimension_numbers<[1], [0], [0], [1], [0, 0, 1, 1], [], []>} : vector<8x128xf32>, vector<128x384xf32>, vector<8x384xf32> -> vector<8x384xf32>
    %951 = vector.extract_strided_slice %949 {offsets = [0, 0], sizes = [8, 128], strides = [1, 1]} : vector<8x384xf32> to vector<8x128xf32>
    %952 = vector.extract_strided_slice %950 {offsets = [0, 0], sizes = [8, 128], strides = [1, 1]} : vector<8x384xf32> to vector<8x128xf32>
    %953 = arith.addf %951, %952 : vector<8x128xf32>
    %954 = arith.negf %953 : vector<8x128xf32>
    %955 = math.exp %954 : vector<8x128xf32>
    %cst_209 = arith.constant 1.000000e+00 : f32
    %956 = vector.broadcast %cst_209 : f32 to vector<8x128xf32>
    %957 = arith.addf %956, %955 : vector<8x128xf32>
    %958 = arith.divf %956, %957 : vector<8x128xf32>
    %959 = vector.extract_strided_slice %949 {offsets = [0, 128], sizes = [8, 128], strides = [1, 1]} : vector<8x384xf32> to vector<8x128xf32>
    %960 = vector.extract_strided_slice %950 {offsets = [0, 128], sizes = [8, 128], strides = [1, 1]} : vector<8x384xf32> to vector<8x128xf32>
    %961 = arith.addf %959, %960 : vector<8x128xf32>
    %962 = arith.negf %961 : vector<8x128xf32>
    %963 = math.exp %962 : vector<8x128xf32>
    %cst_210 = arith.constant 1.000000e+00 : f32
    %964 = vector.broadcast %cst_210 : f32 to vector<8x128xf32>
    %965 = arith.addf %964, %963 : vector<8x128xf32>
    %966 = arith.divf %964, %965 : vector<8x128xf32>
    %967 = vector.extract_strided_slice %949 {offsets = [0, 256], sizes = [8, 128], strides = [1, 1]} : vector<8x384xf32> to vector<8x128xf32>
    %968 = vector.extract_strided_slice %950 {offsets = [0, 256], sizes = [8, 128], strides = [1, 1]} : vector<8x384xf32> to vector<8x128xf32>
    %969 = vector.broadcast %4 : vector<1x128xf32> to vector<8x128xf32>
    %970 = arith.addf %968, %969 : vector<8x128xf32>
    %971 = arith.mulf %958, %970 : vector<8x128xf32>
    %972 = arith.addf %967, %971 : vector<8x128xf32>
    %973 = math.tanh %972 : vector<8x128xf32>
    %cst_211 = arith.constant 1.000000e+00 : f32
    %974 = vector.broadcast %cst_211 : f32 to vector<8x128xf32>
    %975 = arith.subf %974, %966 : vector<8x128xf32>
    %976 = arith.mulf %975, %973 : vector<8x128xf32>
    %977 = arith.mulf %966, %941 : vector<8x128xf32>
    %978 = arith.addf %976, %977 : vector<8x128xf32>
    %979 = tpu.concatenate %978, %942 in 1 : vector<8x128xf32>, vector<8x128xf32> -> vector<8x256xf32>
    %cst_212 = arith.constant dense<0.000000e+00> : vector<8x512xf32>
    %980 = tpu.matmul %979, %5, %cst_212 {dimension_numbers = #tpu.dot_dimension_numbers<[1], [0], [0], [1], [0, 0, 1, 1], [], []>} : vector<8x256xf32>, vector<256x512xf32>, vector<8x512xf32> -> vector<8x512xf32>
    %981 = vector.broadcast %6 : vector<1x512xf32> to vector<8x512xf32>
    %982 = arith.addf %980, %981 : vector<8x512xf32>
    %983 = vector.extract_strided_slice %982 {offsets = [0, 0], sizes = [8, 128], strides = [1, 1]} : vector<8x512xf32> to vector<8x128xf32>
    %984 = arith.negf %983 : vector<8x128xf32>
    %985 = math.exp %984 : vector<8x128xf32>
    %cst_213 = arith.constant 1.000000e+00 : f32
    %986 = vector.broadcast %cst_213 : f32 to vector<8x128xf32>
    %987 = arith.addf %986, %985 : vector<8x128xf32>
    %988 = arith.divf %986, %987 : vector<8x128xf32>
    %989 = vector.extract_strided_slice %982 {offsets = [0, 128], sizes = [8, 128], strides = [1, 1]} : vector<8x512xf32> to vector<8x128xf32>
    %990 = arith.negf %989 : vector<8x128xf32>
    %991 = math.exp %990 : vector<8x128xf32>
    %cst_214 = arith.constant 1.000000e+00 : f32
    %992 = vector.broadcast %cst_214 : f32 to vector<8x128xf32>
    %993 = arith.addf %992, %991 : vector<8x128xf32>
    %994 = arith.divf %992, %993 : vector<8x128xf32>
    %995 = vector.extract_strided_slice %982 {offsets = [0, 256], sizes = [8, 128], strides = [1, 1]} : vector<8x512xf32> to vector<8x128xf32>
    %996 = vector.extract_strided_slice %982 {offsets = [0, 384], sizes = [8, 128], strides = [1, 1]} : vector<8x512xf32> to vector<8x128xf32>
    %997 = arith.mulf %988, %996 : vector<8x128xf32>
    %998 = arith.addf %995, %997 : vector<8x128xf32>
    %999 = math.tanh %998 : vector<8x128xf32>
    %cst_215 = arith.constant 1.000000e+00 : f32
    %1000 = vector.broadcast %cst_215 : f32 to vector<8x128xf32>
    %1001 = arith.subf %1000, %994 : vector<8x128xf32>
    %1002 = arith.mulf %1001, %999 : vector<8x128xf32>
    %1003 = arith.mulf %994, %942 : vector<8x128xf32>
    %1004 = arith.addf %1002, %1003 : vector<8x128xf32>
    %c16_i32_216 = arith.constant 16 : i32
    %1005 = arith.muli %arg0, %c16_i32_216 : i32
    %1006 = arith.addi %1005, %c14_i32 : i32
    %c20_i32_217 = arith.constant 20 : i32
    %1007 = arith.cmpi slt, %1006, %c20_i32_217 : i32
    %1008 = arith.select %1007, %978, %941 : vector<8x128xf32>
    %1009 = arith.select %1007, %1004, %942 : vector<8x128xf32>
    %1010 = arith.index_cast %c14_i32 : i32 to index
    %c0_218 = arith.constant 0 : index
    %c0_219 = arith.constant 0 : index
    %1011 = vector.load %arg6[%1010, %c0_218, %c0_219] : memref<16x8x128xf32, #tpu.memory_space<vmem>>, vector<1x8x128xf32>
    %1012 = vector.shape_cast %1011 : vector<1x8x128xf32> to vector<8x128xf32>
    %1013 = vector.shape_cast %1009 : vector<8x128xf32> to vector<1x8x128xf32>
    tpu.vector_store %arg6[%1010, %c0_218, %c0_219], %1013 {strides = array<i32>} : memref<16x8x128xf32, #tpu.memory_space<vmem>>, vector<1x8x128xf32>,
    %c15_i32 = arith.constant 15 : i32
    %1014 = arith.index_cast %c15_i32 : i32 to index
    %c0_220 = arith.constant 0 : index
    %c0_221 = arith.constant 0 : index
    %1015 = vector.load %arg1[%1014, %c0_220, %c0_221] : memref<16x8x384xf32, #tpu.memory_space<vmem>>, vector<1x8x384xf32>
    %1016 = vector.shape_cast %1015 : vector<1x8x384xf32> to vector<8x384xf32>
    %cst_222 = arith.constant dense<0.000000e+00> : vector<8x384xf32>
    %1017 = tpu.matmul %1008, %3, %cst_222 {dimension_numbers = #tpu.dot_dimension_numbers<[1], [0], [0], [1], [0, 0, 1, 1], [], []>} : vector<8x128xf32>, vector<128x384xf32>, vector<8x384xf32> -> vector<8x384xf32>
    %1018 = vector.extract_strided_slice %1016 {offsets = [0, 0], sizes = [8, 128], strides = [1, 1]} : vector<8x384xf32> to vector<8x128xf32>
    %1019 = vector.extract_strided_slice %1017 {offsets = [0, 0], sizes = [8, 128], strides = [1, 1]} : vector<8x384xf32> to vector<8x128xf32>
    %1020 = arith.addf %1018, %1019 : vector<8x128xf32>
    %1021 = arith.negf %1020 : vector<8x128xf32>
    %1022 = math.exp %1021 : vector<8x128xf32>
    %cst_223 = arith.constant 1.000000e+00 : f32
    %1023 = vector.broadcast %cst_223 : f32 to vector<8x128xf32>
    %1024 = arith.addf %1023, %1022 : vector<8x128xf32>
    %1025 = arith.divf %1023, %1024 : vector<8x128xf32>
    %1026 = vector.extract_strided_slice %1016 {offsets = [0, 128], sizes = [8, 128], strides = [1, 1]} : vector<8x384xf32> to vector<8x128xf32>
    %1027 = vector.extract_strided_slice %1017 {offsets = [0, 128], sizes = [8, 128], strides = [1, 1]} : vector<8x384xf32> to vector<8x128xf32>
    %1028 = arith.addf %1026, %1027 : vector<8x128xf32>
    %1029 = arith.negf %1028 : vector<8x128xf32>
    %1030 = math.exp %1029 : vector<8x128xf32>
    %cst_224 = arith.constant 1.000000e+00 : f32
    %1031 = vector.broadcast %cst_224 : f32 to vector<8x128xf32>
    %1032 = arith.addf %1031, %1030 : vector<8x128xf32>
    %1033 = arith.divf %1031, %1032 : vector<8x128xf32>
    %1034 = vector.extract_strided_slice %1016 {offsets = [0, 256], sizes = [8, 128], strides = [1, 1]} : vector<8x384xf32> to vector<8x128xf32>
    %1035 = vector.extract_strided_slice %1017 {offsets = [0, 256], sizes = [8, 128], strides = [1, 1]} : vector<8x384xf32> to vector<8x128xf32>
    %1036 = vector.broadcast %4 : vector<1x128xf32> to vector<8x128xf32>
    %1037 = arith.addf %1035, %1036 : vector<8x128xf32>
    %1038 = arith.mulf %1025, %1037 : vector<8x128xf32>
    %1039 = arith.addf %1034, %1038 : vector<8x128xf32>
    %1040 = math.tanh %1039 : vector<8x128xf32>
    %cst_225 = arith.constant 1.000000e+00 : f32
    %1041 = vector.broadcast %cst_225 : f32 to vector<8x128xf32>
    %1042 = arith.subf %1041, %1033 : vector<8x128xf32>
    %1043 = arith.mulf %1042, %1040 : vector<8x128xf32>
    %1044 = arith.mulf %1033, %1008 : vector<8x128xf32>
    %1045 = arith.addf %1043, %1044 : vector<8x128xf32>
    %1046 = tpu.concatenate %1045, %1009 in 1 : vector<8x128xf32>, vector<8x128xf32> -> vector<8x256xf32>
    %cst_226 = arith.constant dense<0.000000e+00> : vector<8x512xf32>
    %1047 = tpu.matmul %1046, %5, %cst_226 {dimension_numbers = #tpu.dot_dimension_numbers<[1], [0], [0], [1], [0, 0, 1, 1], [], []>} : vector<8x256xf32>, vector<256x512xf32>, vector<8x512xf32> -> vector<8x512xf32>
    %1048 = vector.broadcast %6 : vector<1x512xf32> to vector<8x512xf32>
    %1049 = arith.addf %1047, %1048 : vector<8x512xf32>
    %1050 = vector.extract_strided_slice %1049 {offsets = [0, 0], sizes = [8, 128], strides = [1, 1]} : vector<8x512xf32> to vector<8x128xf32>
    %1051 = arith.negf %1050 : vector<8x128xf32>
    %1052 = math.exp %1051 : vector<8x128xf32>
    %cst_227 = arith.constant 1.000000e+00 : f32
    %1053 = vector.broadcast %cst_227 : f32 to vector<8x128xf32>
    %1054 = arith.addf %1053, %1052 : vector<8x128xf32>
    %1055 = arith.divf %1053, %1054 : vector<8x128xf32>
    %1056 = vector.extract_strided_slice %1049 {offsets = [0, 128], sizes = [8, 128], strides = [1, 1]} : vector<8x512xf32> to vector<8x128xf32>
    %1057 = arith.negf %1056 : vector<8x128xf32>
    %1058 = math.exp %1057 : vector<8x128xf32>
    %cst_228 = arith.constant 1.000000e+00 : f32
    %1059 = vector.broadcast %cst_228 : f32 to vector<8x128xf32>
    %1060 = arith.addf %1059, %1058 : vector<8x128xf32>
    %1061 = arith.divf %1059, %1060 : vector<8x128xf32>
    %1062 = vector.extract_strided_slice %1049 {offsets = [0, 256], sizes = [8, 128], strides = [1, 1]} : vector<8x512xf32> to vector<8x128xf32>
    %1063 = vector.extract_strided_slice %1049 {offsets = [0, 384], sizes = [8, 128], strides = [1, 1]} : vector<8x512xf32> to vector<8x128xf32>
    %1064 = arith.mulf %1055, %1063 : vector<8x128xf32>
    %1065 = arith.addf %1062, %1064 : vector<8x128xf32>
    %1066 = math.tanh %1065 : vector<8x128xf32>
    %cst_229 = arith.constant 1.000000e+00 : f32
    %1067 = vector.broadcast %cst_229 : f32 to vector<8x128xf32>
    %1068 = arith.subf %1067, %1061 : vector<8x128xf32>
    %1069 = arith.mulf %1068, %1066 : vector<8x128xf32>
    %1070 = arith.mulf %1061, %1009 : vector<8x128xf32>
    %1071 = arith.addf %1069, %1070 : vector<8x128xf32>
    %c16_i32_230 = arith.constant 16 : i32
    %1072 = arith.muli %arg0, %c16_i32_230 : i32
    %1073 = arith.addi %1072, %c15_i32 : i32
    %c20_i32_231 = arith.constant 20 : i32
    %1074 = arith.cmpi slt, %1073, %c20_i32_231 : i32
    %1075 = arith.select %1074, %1045, %1008 : vector<8x128xf32>
    %1076 = arith.select %1074, %1071, %1009 : vector<8x128xf32>
    %1077 = arith.index_cast %c15_i32 : i32 to index
    %c0_232 = arith.constant 0 : index
    %c0_233 = arith.constant 0 : index
    %1078 = vector.load %arg6[%1077, %c0_232, %c0_233] : memref<16x8x128xf32, #tpu.memory_space<vmem>>, vector<1x8x128xf32>
    %1079 = vector.shape_cast %1078 : vector<1x8x128xf32> to vector<8x128xf32>
    %1080 = vector.shape_cast %1076 : vector<8x128xf32> to vector<1x8x128xf32>
    tpu.vector_store %arg6[%1077, %c0_232, %c0_233], %1080 {strides = array<i32>} : memref<16x8x128xf32, #tpu.memory_space<vmem>>, vector<1x8x128xf32>,
    %c16_i32_234 = arith.constant 16 : i32
    %c0_235 = arith.constant 0 : index
    %c0_236 = arith.constant 0 : index
    %1081 = vector.load %arg8[%c0_235, %c0_236] : memref<8x128xf32, #tpu.memory_space<vmem>>, vector<8x128xf32>
    tpu.vector_store %arg8[%c0_235, %c0_236], %1075 {strides = array<i32>} : memref<8x128xf32, #tpu.memory_space<vmem>>, vector<8x128xf32>,
    %c0_237 = arith.constant 0 : index
    %c0_238 = arith.constant 0 : index
    %1082 = vector.load %arg9[%c0_237, %c0_238] : memref<8x128xf32, #tpu.memory_space<vmem>>, vector<8x128xf32>
    tpu.vector_store %arg9[%c0_237, %c0_238], %1076 {strides = array<i32>} : memref<8x128xf32, #tpu.memory_space<vmem>>, vector<8x128xf32>,
    %c1_i32_239 = arith.constant 1 : i32
    %1083 = arith.cmpi eq, %arg0, %c1_i32_239 : i32
    %1084 = arith.extui %1083 : i1 to i32
    %c0_i32_240 = arith.constant 0 : i32
    %1085 = arith.cmpi ne, %1084, %c0_i32_240 : i32
    scf.if %1085 {
      %c0_241 = arith.constant 0 : index
      %c0_242 = arith.constant 0 : index
      %c0_243 = arith.constant 0 : index
      %1086 = vector.load %arg7[%c0_241, %c0_242, %c0_243] : memref<2x8x128xf32, #tpu.memory_space<vmem>>, vector<1x8x128xf32>
      %1087 = vector.shape_cast %1086 : vector<1x8x128xf32> to vector<8x128xf32>
      %1088 = vector.shape_cast %1075 : vector<8x128xf32> to vector<1x8x128xf32>
      tpu.vector_store %arg7[%c0_241, %c0_242, %c0_243], %1088 {strides = array<i32>} : memref<2x8x128xf32, #tpu.memory_space<vmem>>, vector<1x8x128xf32>,
      %c1 = arith.constant 1 : index
      %c0_244 = arith.constant 0 : index
      %c0_245 = arith.constant 0 : index
      %1089 = vector.load %arg7[%c1, %c0_244, %c0_245] : memref<2x8x128xf32, #tpu.memory_space<vmem>>, vector<1x8x128xf32>
      %1090 = vector.shape_cast %1089 : vector<1x8x128xf32> to vector<8x128xf32>
      %1091 = vector.shape_cast %1076 : vector<8x128xf32> to vector<1x8x128xf32>
      tpu.vector_store %arg7[%c1, %c0_244, %c0_245], %1091 {strides = array<i32>} : memref<2x8x128xf32, #tpu.memory_space<vmem>>, vector<1x8x128xf32>,
    } else {
    }
    return
  }
  func.func @transform_0(%arg0: i32) -> (i32, i32, i32) {
    %c0_i32 = arith.constant 0 : i32
    %c0_i32_0 = arith.constant 0 : i32
    %c0_i32_1 = arith.constant 0 : i32
    return %arg0, %c0_i32, %c0_i32_0 : i32, i32, i32
  }
  func.func @transform_1(%arg0: i32) -> (i32, i32) {
    %c0_i32 = arith.constant 0 : i32
    %c0_i32_0 = arith.constant 0 : i32
    %c0_i32_1 = arith.constant 0 : i32
    return %c0_i32, %c0_i32_0 : i32, i32
  }
  func.func @transform_2(%arg0: i32) -> (i32, i32) {
    %c0_i32 = arith.constant 0 : i32
    %c0_i32_0 = arith.constant 0 : i32
    %c0_i32_1 = arith.constant 0 : i32
    return %c0_i32, %c0_i32_0 : i32, i32
  }
  func.func @transform_3(%arg0: i32) -> (i32, i32) {
    %c0_i32 = arith.constant 0 : i32
    %c0_i32_0 = arith.constant 0 : i32
    %c0_i32_1 = arith.constant 0 : i32
    return %c0_i32, %c0_i32_0 : i32, i32
  }
  func.func @transform_4(%arg0: i32) -> (i32, i32) {
    %c0_i32 = arith.constant 0 : i32
    %c0_i32_0 = arith.constant 0 : i32
    %c0_i32_1 = arith.constant 0 : i32
    return %c0_i32, %c0_i32_0 : i32, i32
  }
  func.func @transform_5(%arg0: i32) -> (i32, i32, i32) {
    %c0_i32 = arith.constant 0 : i32
    %c0_i32_0 = arith.constant 0 : i32
    %c0_i32_1 = arith.constant 0 : i32
    return %arg0, %c0_i32, %c0_i32_0 : i32, i32, i32
  }
  func.func @transform_6(%arg0: i32) -> (i32, i32, i32) {
    %c0_i32 = arith.constant 0 : i32
    %c0_i32_0 = arith.constant 0 : i32
    %c0_i32_1 = arith.constant 0 : i32
    %c0_i32_2 = arith.constant 0 : i32
    return %c0_i32, %c0_i32_0, %c0_i32_1 : i32, i32, i32
  }
}

</mosaic_0001>

<llo_original>
// kernel: gaussian_handwriting_forward.1
$region0: #{gaussian_handwriting_forward.1}
  #allocation0 [shape = 'u32[]', space=smem, size = 0x4, offset = 0x4, fixed_abs, tag = 'smem constant byte address 0x4 - core index']
  #allocation1 [shape = 'u32[72,128]{1,0:T(1,128)}', space=vmem, size = 0x9000, scoped, tag = 'internal scratch']
  #allocation2 [shape = 'f32[8,128]{1,0:T(8,128)}', space=vmem, size = 0x1000, scoped, tag = 'scratch operand']
  #allocation3 [shape = 'f32[8,128]{1,0:T(8,128)}', space=vmem, size = 0x1000, scoped, tag = 'scratch operand']
  %s0 = inlined_call_operand.vmem [shape: f32[32,8,384], index: 0, kind: input, shape index: {}]
  %s1 = inlined_call_operand.vmem [shape: f32[128,384], index: 1, kind: input, shape index: {}]
  %s2 = inlined_call_operand.vmem [shape: f32[1,128], index: 2, kind: input, shape index: {}]
  %s3 = inlined_call_operand.vmem [shape: f32[256,512], index: 3, kind: input, shape index: {}]
  %s4 = inlined_call_operand.vmem [shape: f32[1,512], index: 4, kind: input, shape index: {}]
  %s5 = inlined_call_operand.vmem [shape: f32[32,8,128], index: 5, kind: output, shape index: {0}]
  %s6 = inlined_call_operand.vmem [shape: f32[2,8,128], index: 6, kind: output, shape index: {1}]
  %7 = xla_tuple %s5, %s6
  %s8 = sld [smem:[#allocation0]]
  $region69: #{gaussian_handwriting_forward.1} parent=0
    _
  %s10 = ssub.s32 1, %s8
  %s11 = scalar_select 0, %s10, %s8
  loop: start=0, step=1, limit=4
  $region2: #{gaussian_handwriting_forward.1} parent=0 // loop_pre_header
    _
  $region3: #{gaussian_handwriting_forward.1} parent=0 // loop_header
    %s13 = sphi 0, %s17
    %p14 = scmp.ge.s32.totalorder %s13, 4
    %s23 = sphi 0, %s25
    %s26 = sphi 0, %s23
    %s27 = sphi 0, %s26
    %s43 = sphi 0, %s27
    %s47 = sphi 0, %s47
    %s49 = sphi 0, %s47
    %s50 = sphi 0, %s49
    %s64 = sphi 0, %s50
    %s68 = sphi 0, %s68
    %s70 = sphi 0, %s68
    %s71 = sphi 0, %s70
    %s85 = sphi 0, %s71
    %s89 = sphi 0, %s89
    %s91 = sphi 0, %s89
    %s92 = sphi 0, %s91
    %s106 = sphi 0, %s92
    %s110 = sphi 0, %s110
    %s112 = sphi 0, %s110
    %s113 = sphi 0, %s112
    %s127 = sphi 0, %s113
    %s133 = sphi 0, %s135
    %s136 = sphi 0, %s133
    %s137 = sphi 0, %s136
    %s153 = sphi 0, %s137
    %s157 = sphi 0, %s157
    %s159 = sphi 0, %s157
    %s160 = sphi 0, %s159
    %s174 = sphi 0, %s160
  $region4: #{gaussian_handwriting_forward.1} parent=0 // loop_header_branch
    %16 = sbr.rel (%p14) target = $region8
  $region5: #{gaussian_handwriting_forward.1} parent=0 // loop_body
    %s18 = ssub.s32 %s13, 1
    %s19 = ssub.s32 %s13, 2
    %s20 = sadd.s32 %s13, 1
    %s21 = ssub.s32 %s13, %s20
    %p22 = scmp.eq.s32.totalorder %s21, 0
    %s24 = sadd.s32 %s23, 1
    %s25 = scalar_select %p22, %s23, %s24
    %p28 = pneg %p22
    %p29 = scmp.eq.s32.totalorder %s13, 1
    %p30 = por %p28, %p29
    %p31 = scmp.ne.s32.totalorder %s23, %s26
    %p32 = scmp.eq.s32.totalorder %s13, 0
    %p33 = por %p31, %p32
    %p34 = scmp.ne.s32.totalorder %s23, %s26
    %p35 = scmp.eq.s32.totalorder %s18, 1
    %p36 = por %p34, %p35
    %p37 = scmp.ne.s32.totalorder %s26, %s27
    %p38 = scmp.eq.s32.totalorder %s18, 0
    %p39 = por %p37, %p38
    %p40 = scmp.ne.s32.totalorder %s26, %s27
    %p41 = scmp.eq.s32.totalorder %s19, 1
    %p42 = por %p40, %p41
    %p44 = scmp.ne.s32.totalorder %s27, %s43
    %p45 = scmp.eq.s32.totalorder %s19, 0
    %p46 = por %p44, %p45
    %s48 = sadd.s32 %s47, 1
    %p51 = scmp.eq.s32.totalorder %s13, 1
    %p52 = scmp.ne.s32.totalorder %s47, %s49
    %p53 = scmp.eq.s32.totalorder %s13, 0
    %p54 = por %p52, %p53
    %p55 = scmp.ne.s32.totalorder %s47, %s49
    %p56 = scmp.eq.s32.totalorder %s18, 1
    %p57 = por %p55, %p56
    %p58 = scmp.ne.s32.totalorder %s49, %s50
    %p59 = scmp.eq.s32.totalorder %s18, 0
    %p60 = por %p58, %p59
    %p61 = scmp.ne.s32.totalorder %s49, %s50
    %p62 = scmp.eq.s32.totalorder %s19, 1
    %p63 = por %p61, %p62
    %p65 = scmp.ne.s32.totalorder %s50, %s64
    %p66 = scmp.eq.s32.totalorder %s19, 0
    %p67 = por %p65, %p66
    %s69 = sadd.s32 %s68, 1
    %p72 = scmp.eq.s32.totalorder %s13, 1
    %p73 = scmp.ne.s32.totalorder %s68, %s70
    %p74 = scmp.eq.s32.totalorder %s13, 0
    %p75 = por %p73, %p74
    %p76 = scmp.ne.s32.totalorder %s68, %s70
    %p77 = scmp.eq.s32.totalorder %s18, 1
    %p78 = por %p76, %p77
    %p79 = scmp.ne.s32.totalorder %s70, %s71
    %p80 = scmp.eq.s32.totalorder %s18, 0
    %p81 = por %p79, %p80
    %p82 = scmp.ne.s32.totalorder %s70, %s71
    %p83 = scmp.eq.s32.totalorder %s19, 1
    %p84 = por %p82, %p83
    %p86 = scmp.ne.s32.totalorder %s71, %s85
    %p87 = scmp.eq.s32.totalorder %s19, 0
    %p88 = por %p86, %p87
    %s90 = sadd.s32 %s89, 1
    %p93 = scmp.eq.s32.totalorder %s13, 1
    %p94 = scmp.ne.s32.totalorder %s89, %s91
    %p95 = scmp.eq.s32.totalorder %s13, 0
    %p96 = por %p94, %p95
    %p97 = scmp.ne.s32.totalorder %s89, %s91
    %p98 = scmp.eq.s32.totalorder %s18, 1
    %p99 = por %p97, %p98
    %p100 = scmp.ne.s32.totalorder %s91, %s92
    %p101 = scmp.eq.s32.totalorder %s18, 0
    %p102 = por %p100, %p101
    %p103 = scmp.ne.s32.totalorder %s91, %s92
    %p104 = scmp.eq.s32.totalorder %s19, 1
    %p105 = por %p103, %p104
    %p107 = scmp.ne.s32.totalorder %s92, %s106
    %p108 = scmp.eq.s32.totalorder %s19, 0
    %p109 = por %p107, %p108
    %s111 = sadd.s32 %s110, 1
    %p114 = scmp.eq.s32.totalorder %s13, 1
    %p115 = scmp.ne.s32.totalorder %s110, %s112
    %p116 = scmp.eq.s32.totalorder %s13, 0
    %p117 = por %p115, %p116
    %p118 = scmp.ne.s32.totalorder %s110, %s112
    %p119 = scmp.eq.s32.totalorder %s18, 1
    %p120 = por %p118, %p119
    %p121 = scmp.ne.s32.totalorder %s112, %s113
    %p122 = scmp.eq.s32.totalorder %s18, 0
    %p123 = por %p121, %p122
    %p124 = scmp.ne.s32.totalorder %s112, %s113
    %p125 = scmp.eq.s32.totalorder %s19, 1
    %p126 = por %p124, %p125
    %p128 = scmp.ne.s32.totalorder %s113, %s127
    %p129 = scmp.eq.s32.totalorder %s19, 0
    %p130 = por %p128, %p129
    %s131 = ssub.s32 %s13, %s20
    %p132 = scmp.eq.s32.totalorder %s131, 0
    %s134 = sadd.s32 %s133, 1
    %s135 = scalar_select %p132, %s133, %s134
    %p138 = pneg %p132
    %p139 = scmp.eq.s32.totalorder %s13, 1
    %p140 = por %p138, %p139
    %p141 = scmp.ne.s32.totalorder %s133, %s136
    %p142 = scmp.eq.s32.totalorder %s13, 0
    %p143 = por %p141, %p142
    %p144 = scmp.ne.s32.totalorder %s133, %s136
    %p145 = scmp.eq.s32.totalorder %s18, 1
    %p146 = por %p144, %p145
    %p147 = scmp.ne.s32.totalorder %s136, %s137
    %p148 = scmp.eq.s32.totalorder %s18, 0
    %p149 = por %p147, %p148
    %p150 = scmp.ne.s32.totalorder %s136, %s137
    %p151 = scmp.eq.s32.totalorder %s19, 1
    %p152 = por %p150, %p151
    %p154 = scmp.ne.s32.totalorder %s137, %s153
    %p155 = scmp.eq.s32.totalorder %s19, 0
    %p156 = por %p154, %p155
    %s158 = sadd.s32 %s157, 1
    %p161 = scmp.eq.s32.totalorder %s13, 1
    %p162 = scmp.ne.s32.totalorder %s157, %s159
    %p163 = scmp.eq.s32.totalorder %s13, 0
    %p164 = por %p162, %p163
    %p165 = scmp.ne.s32.totalorder %s157, %s159
    %p166 = scmp.eq.s32.totalorder %s18, 1
    %p167 = por %p165, %p166
    %p168 = scmp.ne.s32.totalorder %s159, %s160
    %p169 = scmp.eq.s32.totalorder %s18, 0
    %p170 = por %p168, %p169
    %p171 = scmp.ne.s32.totalorder %s159, %s160
    %p172 = scmp.eq.s32.totalorder %s19, 1
    %p173 = por %p171, %p172
    %p175 = scmp.ne.s32.totalorder %s160, %s174
    %p176 = scmp.eq.s32.totalorder %s19, 0
    %p177 = por %p175, %p176
    %p178 = scmp.le.s32.totalorder 1, %s13
    %p179 = scmp.lt.s32.totalorder %s13, 3
    %p180 = pnand %p178, %p179
    %p181 = pneg %p180
    // Predicated region
    $region9: #{gaussian_handwriting_forward.1} parent=5 // pred_check
      _
    $region10: #{gaussian_handwriting_forward.1} parent=5 // pred_check_branch
      %183 = sbr.rel (%p180) target = $region12
    $region11: #{gaussian_handwriting_forward.1} parent=5 // pred_region
      %s184 = ssub.s32 %s13, 1
      // Predicated region
      $region13: #{gaussian_handwriting_forward.1} parent=11 // pred_check
        %p185 = pneg %p60
      $region14: #{gaussian_handwriting_forward.1} parent=11 // pred_check_branch
        %187 = sbr.rel (%p185) target = $region16
      $region15: #{gaussian_handwriting_forward.1} parent=11 // pred_region
        _
      $region16: #{gaussian_handwriting_forward.1} parent=11 // pred_fallthru
        _
      // Predicated region
      $region17: #{gaussian_handwriting_forward.1} parent=11 // pred_check
        %p188 = pneg %p81
      $region18: #{gaussian_handwriting_forward.1} parent=11 // pred_check_branch
        %190 = sbr.rel (%p188) target = $region20
      $region19: #{gaussian_handwriting_forward.1} parent=11 // pred_region
        _
      $region20: #{gaussian_handwriting_forward.1} parent=11 // pred_fallthru
        _
      // Predicated region
      $region21: #{gaussian_handwriting_forward.1} parent=11 // pred_check
        %p191 = pneg %p102
      $region22: #{gaussian_handwriting_forward.1} parent=11 // pred_check_branch
        %193 = sbr.rel (%p191) target = $region24
      $region23: #{gaussian_handwriting_forward.1} parent=11 // pred_region
        _
      $region24: #{gaussian_handwriting_forward.1} parent=11 // pred_fallthru
        _
      // Predicated region
      $region25: #{gaussian_handwriting_forward.1} parent=11 // pred_check
        %p194 = pneg %p123
      $region26: #{gaussian_handwriting_forward.1} parent=11 // pred_check_branch
        %196 = sbr.rel (%p194) target = $region28
      $region27: #{gaussian_handwriting_forward.1} parent=11 // pred_region
        _
      $region28: #{gaussian_handwriting_forward.1} parent=11 // pred_fallthru
        _
    $region12: #{gaussian_handwriting_forward.1} parent=5 // pred_fallthru
      _
    %p197 = scmp.lt.s32.totalorder %s13, 2
    // Predicated region
    $region29: #{gaussian_handwriting_forward.1} parent=5 // pred_check
      %p198 = pneg %p197
    $region30: #{gaussian_handwriting_forward.1} parent=5 // pred_check_branch
      %200 = sbr.rel (%p198) target = $region32
    $region31: #{gaussian_handwriting_forward.1} parent=5 // pred_region
      // Predicated region
      $region33: #{gaussian_handwriting_forward.1} parent=31 // pred_check
        %p201 = pneg %p33
      $region34: #{gaussian_handwriting_forward.1} parent=31 // pred_check_branch
        %203 = sbr.rel (%p201) target = $region36
      $region35: #{gaussian_handwriting_forward.1} parent=31 // pred_region
        %s204 = smul.u32 16, %s13
        %p205 = scmp.lt.s32.totalorder %s204, 31
        %s206 = scalar_select %p205, %s204, 31
        %s207 = smul.addr %s206, 3
        %s208 = smul.addr %s207, 8
        %s209 = scalar_lea.vmem %s0, %s208
        %s210 = smul.u32 16, %s13
      $region36: #{gaussian_handwriting_forward.1} parent=31 // pred_fallthru
        _
    $region32: #{gaussian_handwriting_forward.1} parent=5 // pred_fallthru
      _
    %p211 = scmp.le.s32.totalorder 1, %s13
    %p212 = scmp.lt.s32.totalorder %s13, 3
    %p213 = pnand %p211, %p212
    %p214 = pneg %p213
    // Predicated region
    $region37: #{gaussian_handwriting_forward.1} parent=5 // pred_check
      _
    $region38: #{gaussian_handwriting_forward.1} parent=5 // pred_check_branch
      %216 = sbr.rel (%p213) target = $region40
    $region39: #{gaussian_handwriting_forward.1} parent=5 // pred_region
      %s217 = ssub.s32 %s13, 1
      %s218 = smul.u32 16, %s18
      %p219 = scmp.lt.s32.totalorder %s218, 31
      %s220 = scalar_select %p219, %s218, 31
      %s221 = smul.addr %s220, 3
      %s222 = smul.addr %s221, 8
      %s223 = scalar_lea.vmem %s0, %s222
      %p224 = pneg %p39
      %p225 = pneg %p36
      %p226 = pneg %p60
      %p227 = pneg %p57
      %p228 = pneg %p81
      %p229 = pneg %p78
      %p230 = pneg %p102
      %p231 = pneg %p99
      %p232 = pneg %p123
      %p233 = pneg %p120
      %p234 = pneg %p149
      %p235 = pneg %p146
      %s236 = smul.u32 16, %s18
      %p237 = scmp.lt.s32.totalorder %s236, 31
      %s238 = scalar_select %p237, %s236, 31
      %s239 = smul.addr %s238, 8
      %s240 = scalar_lea.vmem %s5, %s239
      %p241 = pneg %p170
      %p242 = pneg %p167
      %s243 = smul.u32 16, %s18
      %p244 = scmp.lt.s32.totalorder %s243, 31
      %s245 = scalar_select %p244, %s243, 31
      %s246 = smul.addr %s245, 3
      %s247 = smul.addr %s246, 8
      %s248 = scalar_lea.vmem %s0, %s247
      %s249 = smul.u32 16, %s18
      %s250 = smul.u32 16, %s18
      %p251 = scmp.lt.s32.totalorder %s250, 31
      %s252 = scalar_select %p251, %s250, 31
      %s253 = smul.addr %s252, 8
      %s254 = scalar_lea.vmem %s5, %s253
      %s255 = smul.u32 16, %s18
      %p256 = scmp.eq.s32.totalorder %s18, 0
      // Predicated region
      $region41: #{gaussian_handwriting_forward.1} parent=39 // pred_check
        %p257 = pneg %p256
      $region42: #{gaussian_handwriting_forward.1} parent=39 // pred_check_branch
        %259 = sbr.rel (%p257) target = $region44
      $region43: #{gaussian_handwriting_forward.1} parent=39 // pred_region
        %260 = vst [vmem:[#allocation2] sm:$0xff] 0.0
        %261 = vst [vmem:[#allocation3] sm:$0xff] 0.0
      $region44: #{gaussian_handwriting_forward.1} parent=39 // pred_fallthru
        _
      %v262 = vld [vmem:[%s1] sm:$0xff]
      %v263 = vld [vmem:[%s1 + $0x8] sm:$0xff]
      %v264 = vld [vmem:[%s1 + $0x10] sm:$0xff]
      %v265 = vld [vmem:[%s1 + $0x18] sm:$0xff]
      %v266 = vld [vmem:[%s1 + $0x20] sm:$0xff]
      %v267 = vld [vmem:[%s1 + $0x28] sm:$0xff]
      %v268 = vld [vmem:[%s1 + $0x30] sm:$0xff]
      %v269 = vld [vmem:[%s1 + $0x38] sm:$0xff]
      %v270 = vld [vmem:[%s1 + $0x40] sm:$0xff]
      %v271 = vld [vmem:[%s1 + $0x48] sm:$0xff]
      %v272 = vld [vmem:[%s1 + $0x50] sm:$0xff]
      %v273 = vld [vmem:[%s1 + $0x58] sm:$0xff]
      %v274 = vld [vmem:[%s1 + $0x60] sm:$0xff]
      %v275 = vld [vmem:[%s1 + $0x68] sm:$0xff]
      %v276 = vld [vmem:[%s1 + $0x70] sm:$0xff]
      %v277 = vld [vmem:[%s1 + $0x78] sm:$0xff]
      %v278 = vld [vmem:[%s1 + $0x80] sm:$0xff]
      %v279 = vld [vmem:[%s1 + $0x88] sm:$0xff]
      %v280 = vld [vmem:[%s1 + $0x90] sm:$0xff]
      %v281 = vld [vmem:[%s1 + $0x98] sm:$0xff]
      %v282 = vld [vmem:[%s1 + $0xa0] sm:$0xff]
      %v283 = vld [vmem:[%s1 + $0xa8] sm:$0xff]
      %v284 = vld [vmem:[%s1 + $0xb0] sm:$0xff]
      %v285 = vld [vmem:[%s1 + $0xb8] sm:$0xff]
      %v286 = vld [vmem:[%s1 + $0xc0] sm:$0xff]
      %v287 = vld [vmem:[%s1 + $0xc8] sm:$0xff]
      %v288 = vld [vmem:[%s1 + $0xd0] sm:$0xff]
      %v289 = vld [vmem:[%s1 + $0xd8] sm:$0xff]
      %v290 = vld [vmem:[%s1 + $0xe0] sm:$0xff]
      %v291 = vld [vmem:[%s1 + $0xe8] sm:$0xff]
      %v292 = vld [vmem:[%s1 + $0xf0] sm:$0xff]
      %v293 = vld [vmem:[%s1 + $0xf8] sm:$0xff]
      %v294 = vld [vmem:[%s1 + $0x100] sm:$0xff]
      %v295 = vld [vmem:[%s1 + $0x108] sm:$0xff]
      %v296 = vld [vmem:[%s1 + $0x110] sm:$0xff]
      %v297 = vld [vmem:[%s1 + $0x118] sm:$0xff]
      %v298 = vld [vmem:[%s1 + $0x120] sm:$0xff]
      %v299 = vld [vmem:[%s1 + $0x128] sm:$0xff]
      %v300 = vld [vmem:[%s1 + $0x130] sm:$0xff]
      %v301 = vld [vmem:[%s1 + $0x138] sm:$0xff]
      %v302 = vld [vmem:[%s1 + $0x140] sm:$0xff]
      %v303 = vld [vmem:[%s1 + $0x148] sm:$0xff]
      %v304 = vld [vmem:[%s1 + $0x150] sm:$0xff]
      %v305 = vld [vmem:[%s1 + $0x158] sm:$0xff]
      %v306 = vld [vmem:[%s1 + $0x160] sm:$0xff]
      %v307 = vld [vmem:[%s1 + $0x168] sm:$0xff]
      %v308 = vld [vmem:[%s1 + $0x170] sm:$0xff]
      %v309 = vld [vmem:[%s1 + $0x178] sm:$0xff]
      %v310 = vld [vmem:[%s2] sm:$0x1]
      %v311 = vld [vmem:[%s3] sm:$0xff]
      %v312 = vld [vmem:[%s3 + $0x8] sm:$0xff]
      %v313 = vld [vmem:[%s3 + $0x10] sm:$0xff]
      %v314 = vld [vmem:[%s3 + $0x18] sm:$0xff]
      %v315 = vld [vmem:[%s3 + $0x20] sm:$0xff]
      %v316 = vld [vmem:[%s3 + $0x28] sm:$0xff]
      %v317 = vld [vmem:[%s3 + $0x30] sm:$0xff]
      %v318 = vld [vmem:[%s3 + $0x38] sm:$0xff]
      %v319 = vld [vmem:[%s3 + $0x40] sm:$0xff]
      %v320 = vld [vmem:[%s3 + $0x48] sm:$0xff]
      %v321 = vld [vmem:[%s3 + $0x50] sm:$0xff]
      %v322 = vld [vmem:[%s3 + $0x58] sm:$0xff]
      %v323 = vld [vmem:[%s3 + $0x60] sm:$0xff]
      %v324 = vld [vmem:[%s3 + $0x68] sm:$0xff]
      %v325 = vld [vmem:[%s3 + $0x70] sm:$0xff]
      %v326 = vld [vmem:[%s3 + $0x78] sm:$0xff]
      %v327 = vld [vmem:[%s3 + $0x80] sm:$0xff]
      %v328 = vld [vmem:[%s3 + $0x88] sm:$0xff]
      %v329 = vld [vmem:[%s3 + $0x90] sm:$0xff]
      %v330 = vld [vmem:[%s3 + $0x98] sm:$0xff]
      %v331 = vld [vmem:[%s3 + $0xa0] sm:$0xff]
      %v332 = vld [vmem:[%s3 + $0xa8] sm:$0xff]
      %v333 = vld [vmem:[%s3 + $0xb0] sm:$0xff]
      %v334 = vld [vmem:[%s3 + $0xb8] sm:$0xff]
      %v335 = vld [vmem:[%s3 + $0xc0] sm:$0xff]
      %v336 = vld [vmem:[%s3 + $0xc8] sm:$0xff]
      %v337 = vld [vmem:[%s3 + $0xd0] sm:$0xff]
      %v338 = vld [vmem:[%s3 + $0xd8] sm:$0xff]
      %v339 = vld [vmem:[%s3 + $0xe0] sm:$0xff]
      %v340 = vld [vmem:[%s3 + $0xe8] sm:$0xff]
      %v341 = vld [vmem:[%s3 + $0xf0] sm:$0xff]
      %v342 = vld [vmem:[%s3 + $0xf8] sm:$0xff]
      %v343 = vld [vmem:[%s3 + $0x100] sm:$0xff]
      %v344 = vld [vmem:[%s3 + $0x108] sm:$0xff]
      %v345 = vld [vmem:[%s3 + $0x110] sm:$0xff]
      %v346 = vld [vmem:[%s3 + $0x118] sm:$0xff]
      %v347 = vld [vmem:[%s3 + $0x120] sm:$0xff]
      %v348 = vld [vmem:[%s3 + $0x128] sm:$0xff]
      %v349 = vld [vmem:[%s3 + $0x130] sm:$0xff]
      %v350 = vld [vmem:[%s3 + $0x138] sm:$0xff]
      %v351 = vld [vmem:[%s3 + $0x140] sm:$0xff]
      %v352 = vld [vmem:[%s3 + $0x148] sm:$0xff]
      %v353 = vld [vmem:[%s3 + $0x150] sm:$0xff]
      %v354 = vld [vmem:[%s3 + $0x158] sm:$0xff]
      %v355 = vld [vmem:[%s3 + $0x160] sm:$0xff]
      %v356 = vld [vmem:[%s3 + $0x168] sm:$0xff]
      %v357 = vld [vmem:[%s3 + $0x170] sm:$0xff]
      %v358 = vld [vmem:[%s3 + $0x178] sm:$0xff]
      %v359 = vld [vmem:[%s3 + $0x180] sm:$0xff]
      %v360 = vld [vmem:[%s3 + $0x188] sm:$0xff]
      %v361 = vld [vmem:[%s3 + $0x190] sm:$0xff]
      %v362 = vld [vmem:[%s3 + $0x198] sm:$0xff]
      %v363 = vld [vmem:[%s3 + $0x1a0] sm:$0xff]
      %v364 = vld [vmem:[%s3 + $0x1a8] sm:$0xff]
      %v365 = vld [vmem:[%s3 + $0x1b0] sm:$0xff]
      %v366 = vld [vmem:[%s3 + $0x1b8] sm:$0xff]
      %v367 = vld [vmem:[%s3 + $0x1c0] sm:$0xff]
      %v368 = vld [vmem:[%s3 + $0x1c8] sm:$0xff]
      %v369 = vld [vmem:[%s3 + $0x1d0] sm:$0xff]
      %v370 = vld [vmem:[%s3 + $0x1d8] sm:$0xff]
      %v371 = vld [vmem:[%s3 + $0x1e0] sm:$0xff]
      %v372 = vld [vmem:[%s3 + $0x1e8] sm:$0xff]
      %v373 = vld [vmem:[%s3 + $0x1f0] sm:$0xff]
      %v374 = vld [vmem:[%s3 + $0x1f8] sm:$0xff]
      %v375 = vld [vmem:[%s3 + $0x200] sm:$0xff]
      %v376 = vld [vmem:[%s3 + $0x208] sm:$0xff]
      %v377 = vld [vmem:[%s3 + $0x210] sm:$0xff]
      %v378 = vld [vmem:[%s3 + $0x218] sm:$0xff]
      %v379 = vld [vmem:[%s3 + $0x220] sm:$0xff]
      %v380 = vld [vmem:[%s3 + $0x228] sm:$0xff]
      %v381 = vld [vmem:[%s3 + $0x230] sm:$0xff]
      %v382 = vld [vmem:[%s3 + $0x238] sm:$0xff]
      %v383 = vld [vmem:[%s3 + $0x240] sm:$0xff]
      %v384 = vld [vmem:[%s3 + $0x248] sm:$0xff]
      %v385 = vld [vmem:[%s3 + $0x250] sm:$0xff]
      %v386 = vld [vmem:[%s3 + $0x258] sm:$0xff]
      %v387 = vld [vmem:[%s3 + $0x260] sm:$0xff]
      %v388 = vld [vmem:[%s3 + $0x268] sm:$0xff]
      %v389 = vld [vmem:[%s3 + $0x270] sm:$0xff]
      %v390 = vld [vmem:[%s3 + $0x278] sm:$0xff]
      %v391 = vld [vmem:[%s3 + $0x280] sm:$0xff]
      %v392 = vld [vmem:[%s3 + $0x288] sm:$0xff]
      %v393 = vld [vmem:[%s3 + $0x290] sm:$0xff]
      %v394 = vld [vmem:[%s3 + $0x298] sm:$0xff]
      %v395 = vld [vmem:[%s3 + $0x2a0] sm:$0xff]
      %v396 = vld [vmem:[%s3 + $0x2a8] sm:$0xff]
      %v397 = vld [vmem:[%s3 + $0x2b0] sm:$0xff]
      %v398 = vld [vmem:[%s3 + $0x2b8] sm:$0xff]
      %v399 = vld [vmem:[%s3 + $0x2c0] sm:$0xff]
      %v400 = vld [vmem:[%s3 + $0x2c8] sm:$0xff]
      %v401 = vld [vmem:[%s3 + $0x2d0] sm:$0xff]
      %v402 = vld [vmem:[%s3 + $0x2d8] sm:$0xff]
      %v403 = vld [vmem:[%s3 + $0x2e0] sm:$0xff]
      %v404 = vld [vmem:[%s3 + $0x2e8] sm:$0xff]
      %v405 = vld [vmem:[%s3 + $0x2f0] sm:$0xff]
      %v406 = vld [vmem:[%s3 + $0x2f8] sm:$0xff]
      %v407 = vld [vmem:[%s3 + $0x300] sm:$0xff]
      %v408 = vld [vmem:[%s3 + $0x308] sm:$0xff]
      %v409 = vld [vmem:[%s3 + $0x310] sm:$0xff]
      %v410 = vld [vmem:[%s3 + $0x318] sm:$0xff]
      %v411 = vld [vmem:[%s3 + $0x320] sm:$0xff]
      %v412 = vld [vmem:[%s3 + $0x328] sm:$0xff]
      %v413 = vld [vmem:[%s3 + $0x330] sm:$0xff]
      %v414 = vld [vmem:[%s3 + $0x338] sm:$0xff]
      %v415 = vld [vmem:[%s3 + $0x340] sm:$0xff]
      %v416 = vld [vmem:[%s3 + $0x348] sm:$0xff]
      %v417 = vld [vmem:[%s3 + $0x350] sm:$0xff]
      %v418 = vld [vmem:[%s3 + $0x358] sm:$0xff]
      %v419 = vld [vmem:[%s3 + $0x360] sm:$0xff]
      %v420 = vld [vmem:[%s3 + $0x368] sm:$0xff]
      %v421 = vld [vmem:[%s3 + $0x370] sm:$0xff]
      %v422 = vld [vmem:[%s3 + $0x378] sm:$0xff]
      %v423 = vld [vmem:[%s3 + $0x380] sm:$0xff]
      %v424 = vld [vmem:[%s3 + $0x388] sm:$0xff]
      %v425 = vld [vmem:[%s3 + $0x390] sm:$0xff]
      %v426 = vld [vmem:[%s3 + $0x398] sm:$0xff]
      %v427 = vld [vmem:[%s3 + $0x3a0] sm:$0xff]
      %v428 = vld [vmem:[%s3 + $0x3a8] sm:$0xff]
      %v429 = vld [vmem:[%s3 + $0x3b0] sm:$0xff]
      %v430 = vld [vmem:[%s3 + $0x3b8] sm:$0xff]
      %v431 = vld [vmem:[%s3 + $0x3c0] sm:$0xff]
      %v432 = vld [vmem:[%s3 + $0x3c8] sm:$0xff]
      %v433 = vld [vmem:[%s3 + $0x3d0] sm:$0xff]
      %v434 = vld [vmem:[%s3 + $0x3d8] sm:$0xff]
      %v435 = vld [vmem:[%s3 + $0x3e0] sm:$0xff]
      %v436 = vld [vmem:[%s3 + $0x3e8] sm:$0xff]
      %v437 = vld [vmem:[%s3 + $0x3f0] sm:$0xff]
      %v438 = vld [vmem:[%s3 + $0x3f8] sm:$0xff]
      %v439 = vld [vmem:[%s4] sm:$0xf]
      %v440 = vld [vmem:[#allocation2] sm:$0xff]
      %v441 = vld [vmem:[#allocation3] sm:$0xff]
      %v442 = vld [vmem:[%s248] sm:$0xff]
      %v443 = vld [vmem:[%s248 + $0x8] sm:$0xff]
      %v444 = vld [vmem:[%s248 + $0x10] sm:$0xff]
      %445 = vmatpush.msra.mxu0 %v307
      %446 = vmatpush.msra.mxu0 %v304
      %447 = vmatpush.msra.mxu0 %v301
      %448 = vmatpush.msra.mxu0 %v298
      %449 = vmatpush.msra.mxu0 %v295
      %450 = vmatpush.msra.mxu0 %v292
      %451 = vmatpush.msra.mxu0 %v289
      %452 = vmatpush.msra.mxu0 %v286
      %453 = vmatpush.msra.mxu0 %v283
      %454 = vmatpush.msra.mxu0 %v280
      %455 = vmatpush.msra.mxu0 %v277
      %456 = vmatpush.msra.mxu0 %v274
      %457 = vmatpush.msra.mxu0 %v271
      %458 = vmatpush.msra.mxu0 %v268
      %459 = vmatpush.msra.mxu0 %v265
      %460 = vmatpush.msra.mxu0 %v262
      %461 = vmatmul.f32.gmra.mxu0 %v440
      %v462 = vpop.f32.mrf.mxu0
      %v463 = vadd.f32 0.0, %v462
      %464 = vdwg.mxu0
      %465 = vmatpush.msra.mxu0 %v308
      %466 = vmatpush.msra.mxu0 %v305
      %467 = vmatpush.msra.mxu0 %v302
      %468 = vmatpush.msra.mxu0 %v299
      %469 = vmatpush.msra.mxu0 %v296
      %470 = vmatpush.msra.mxu0 %v293
      %471 = vmatpush.msra.mxu0 %v290
      %472 = vmatpush.msra.mxu0 %v287
      %473 = vmatpush.msra.mxu0 %v284
      %474 = vmatpush.msra.mxu0 %v281
      %475 = vmatpush.msra.mxu0 %v278
      %476 = vmatpush.msra.mxu0 %v275
      %477 = vmatpush.msra.mxu0 %v272
      %478 = vmatpush.msra.mxu0 %v269
      %479 = vmatpush.msra.mxu0 %v266
      %480 = vmatpush.msra.mxu0 %v263
      %481 = vmatmul.f32.gmra.mxu0 %v440
      %v482 = vpop.f32.mrf.mxu0
      %v483 = vadd.f32 0.0, %v482
      %484 = vdwg.mxu0
      %485 = vmatpush.msra.mxu0 %v309
      %486 = vmatpush.msra.mxu0 %v306
      %487 = vmatpush.msra.mxu0 %v303
      %488 = vmatpush.msra.mxu0 %v300
      %489 = vmatpush.msra.mxu0 %v297
      %490 = vmatpush.msra.mxu0 %v294
      %491 = vmatpush.msra.mxu0 %v291
      %492 = vmatpush.msra.mxu0 %v288
      %493 = vmatpush.msra.mxu0 %v285
      %494 = vmatpush.msra.mxu0 %v282
      %495 = vmatpush.msra.mxu0 %v279
      %496 = vmatpush.msra.mxu0 %v276
      %497 = vmatpush.msra.mxu0 %v273
      %498 = vmatpush.msra.mxu0 %v270
      %499 = vmatpush.msra.mxu0 %v267
      %500 = vmatpush.msra.mxu0 %v264
      %501 = vmatmul.f32.gmra.mxu0 %v440
      %v502 = vpop.f32.mrf.mxu0
      %v503 = vadd.f32 0.0, %v502
      %504 = vdwg.mxu0
      %v505 = vadd.f32 %v442, %v463
      %v506 = vxor.u32 %v505, 2147483648
      %v507 = vmul.f32 %v506, 1.442695
      %v508 = vpow.pop %v507
      %v509 = vadd.f32 %v508, 1.0
      %v510 = vrcp.pop %v509
      %v511 = vmul.f32 %v509, %v510
      %v512 = vsub.f32 1.0, %v511
      %v513 = vmul.f32 %v510, %v512
      %v514 = vadd.f32 %v510, %v513
      %vm515 = vweird.f32 %v509
      %vm516 = vweird.f32 %v510
      %vm517 = vmor %vm515, %vm516
      %v518 = vsel %vm517, %v510, %v514
      %v519 = vand.u32 2147483647, %v509
      %vm520 = vcmp.eq.f32.partialorder %v519, 8.507059e+37
      %v521 = vand.u32 %v509, 2147483648
      %v522 = vor.u32 1.1754944e-38, %v521
      %v523 = vsel %vm520, %v522, %v518
      %v524 = vmul.f32 1.0, %v523
      %v525 = vadd.f32 %v443, %v483
      %v526 = vxor.u32 %v525, 2147483648
      %v527 = vmul.f32 %v526, 1.442695
      %v528 = vpow.pop %v527
      %v529 = vadd.f32 %v528, 1.0
      %v530 = vrcp.pop %v529
      %v531 = vmul.f32 %v529, %v530
      %v532 = vsub.f32 1.0, %v531
      %v533 = vmul.f32 %v530, %v532
      %v534 = vadd.f32 %v530, %v533
      %vm535 = vweird.f32 %v529
      %vm536 = vweird.f32 %v530
      %vm537 = vmor %vm535, %vm536
      %v538 = vsel %vm537, %v530, %v534
      %v539 = vand.u32 2147483647, %v529
      %vm540 = vcmp.eq.f32.partialorder %v539, 8.507059e+37
      %v541 = vand.u32 %v529, 2147483648
      %v542 = vor.u32 1.1754944e-38, %v541
      %v543 = vsel %vm540, %v542, %v538
      %v544 = vmul.f32 1.0, %v543
      %v546 = vperm.slane %v310, 0
      %v548 = vadd.f32 %v503, %v546
      %v549 = vmul.f32 %v524, %v548
      %v550 = vadd.f32 %v444, %v549
      %v551 = vtanh.pop %v550
      %v552 = vsub.f32 1.0, %v544
      %v553 = vmul.f32 %v552, %v551
      %v554 = vmul.f32 %v544, %v440
      %v555 = vadd.f32 %v553, %v554
      %v557 = vperm.slane %v439, 0
      %v558 = vperm.slane %v439, 1
      %v559 = vperm.slane %v439, 2
      %v560 = vperm.slane %v439, 3
      %565 = vmatpush.msra.mxu0 %v371
      %566 = vmatpush.msra.mxu0 %v367
      %567 = vmatpush.msra.mxu0 %v363
      %568 = vmatpush.msra.mxu0 %v359
      %569 = vmatpush.msra.mxu0 %v355
      %570 = vmatpush.msra.mxu0 %v351
      %571 = vmatpush.msra.mxu0 %v347
      %572 = vmatpush.msra.mxu0 %v343
      %573 = vmatpush.msra.mxu0 %v339
      %574 = vmatpush.msra.mxu0 %v335
      %575 = vmatpush.msra.mxu0 %v331
      %576 = vmatpush.msra.mxu0 %v327
      %577 = vmatpush.msra.mxu0 %v323
      %578 = vmatpush.msra.mxu0 %v319
      %579 = vmatpush.msra.mxu0 %v315
      %580 = vmatpush.msra.mxu0 %v311
      %581 = vmatmul.f32.gmra.mxu0 %v555
      %v582 = vpop.f32.mrf.mxu0
      %v583 = vadd.f32 %v557, %v582
      %584 = vdwg.mxu0
      %585 = vmatpush.msra.mxu0 %v435
      %586 = vmatpush.msra.mxu0 %v431
      %587 = vmatpush.msra.mxu0 %v427
      %588 = vmatpush.msra.mxu0 %v423
      %589 = vmatpush.msra.mxu0 %v419
      %590 = vmatpush.msra.mxu0 %v415
      %591 = vmatpush.msra.mxu0 %v411
      %592 = vmatpush.msra.mxu0 %v407
      %593 = vmatpush.msra.mxu0 %v403
      %594 = vmatpush.msra.mxu0 %v399
      %595 = vmatpush.msra.mxu0 %v395
      %596 = vmatpush.msra.mxu0 %v391
      %597 = vmatpush.msra.mxu0 %v387
      %598 = vmatpush.msra.mxu0 %v383
      %599 = vmatpush.msra.mxu0 %v379
      %600 = vmatpush.msra.mxu0 %v375
      %601 = vmatmul.f32.gmra.mxu0 %v441
      %v602 = vpop.f32.mrf.mxu0
      %v603 = vadd.f32 %v583, %v602
      %604 = vdwg.mxu0
      %605 = vmatpush.msra.mxu0 %v372
      %606 = vmatpush.msra.mxu0 %v368
      %607 = vmatpush.msra.mxu0 %v364
      %608 = vmatpush.msra.mxu0 %v360
      %609 = vmatpush.msra.mxu0 %v356
      %610 = vmatpush.msra.mxu0 %v352
      %611 = vmatpush.msra.mxu0 %v348
      %612 = vmatpush.msra.mxu0 %v344
      %613 = vmatpush.msra.mxu0 %v340
      %614 = vmatpush.msra.mxu0 %v336
      %615 = vmatpush.msra.mxu0 %v332
      %616 = vmatpush.msra.mxu0 %v328
      %617 = vmatpush.msra.mxu0 %v324
      %618 = vmatpush.msra.mxu0 %v320
      %619 = vmatpush.msra.mxu0 %v316
      %620 = vmatpush.msra.mxu0 %v312
      %621 = vmatmul.f32.gmra.mxu0 %v555
      %v622 = vpop.f32.mrf.mxu0
      %v623 = vadd.f32 %v558, %v622
      %624 = vdwg.mxu0
      %625 = vmatpush.msra.mxu0 %v436
      %626 = vmatpush.msra.mxu0 %v432
      %627 = vmatpush.msra.mxu0 %v428
      %628 = vmatpush.msra.mxu0 %v424
      %629 = vmatpush.msra.mxu0 %v420
      %630 = vmatpush.msra.mxu0 %v416
      %631 = vmatpush.msra.mxu0 %v412
      %632 = vmatpush.msra.mxu0 %v408
      %633 = vmatpush.msra.mxu0 %v404
      %634 = vmatpush.msra.mxu0 %v400
      %635 = vmatpush.msra.mxu0 %v396
      %636 = vmatpush.msra.mxu0 %v392
      %637 = vmatpush.msra.mxu0 %v388
      %638 = vmatpush.msra.mxu0 %v384
      %639 = vmatpush.msra.mxu0 %v380
      %640 = vmatpush.msra.mxu0 %v376
      %641 = vmatmul.f32.gmra.mxu0 %v441
      %v642 = vpop.f32.mrf.mxu0
      %v643 = vadd.f32 %v623, %v642
      %644 = vdwg.mxu0
      %645 = vmatpush.msra.mxu0 %v373
      %646 = vmatpush.msra.mxu0 %v369
      %647 = vmatpush.msra.mxu0 %v365
      %648 = vmatpush.msra.mxu0 %v361
      %649 = vmatpush.msra.mxu0 %v357
      %650 = vmatpush.msra.mxu0 %v353
      %651 = vmatpush.msra.mxu0 %v349
      %652 = vmatpush.msra.mxu0 %v345
      %653 = vmatpush.msra.mxu0 %v341
      %654 = vmatpush.msra.mxu0 %v337
      %655 = vmatpush.msra.mxu0 %v333
      %656 = vmatpush.msra.mxu0 %v329
      %657 = vmatpush.msra.mxu0 %v325
      %658 = vmatpush.msra.mxu0 %v321
      %659 = vmatpush.msra.mxu0 %v317
      %660 = vmatpush.msra.mxu0 %v313
      %661 = vmatmul.f32.gmra.mxu0 %v555
      %v662 = vpop.f32.mrf.mxu0
      %v663 = vadd.f32 %v559, %v662
      %664 = vdwg.mxu0
      %665 = vmatpush.msra.mxu0 %v437
      %666 = vmatpush.msra.mxu0 %v433
      %667 = vmatpush.msra.mxu0 %v429
      %668 = vmatpush.msra.mxu0 %v425
      %669 = vmatpush.msra.mxu0 %v421
      %670 = vmatpush.msra.mxu0 %v417
      %671 = vmatpush.msra.mxu0 %v413
      %672 = vmatpush.msra.mxu0 %v409
      %673 = vmatpush.msra.mxu0 %v405
      %674 = vmatpush.msra.mxu0 %v401
      %675 = vmatpush.msra.mxu0 %v397
      %676 = vmatpush.msra.mxu0 %v393
      %677 = vmatpush.msra.mxu0 %v389
      %678 = vmatpush.msra.mxu0 %v385
      %679 = vmatpush.msra.mxu0 %v381
      %680 = vmatpush.msra.mxu0 %v377
      %681 = vmatmul.f32.gmra.mxu0 %v441
      %v682 = vpop.f32.mrf.mxu0
      %v683 = vadd.f32 %v663, %v682
      %684 = vdwg.mxu0
      %685 = vmatpush.msra.mxu0 %v374
      %686 = vmatpush.msra.mxu0 %v370
      %687 = vmatpush.msra.mxu0 %v366
      %688 = vmatpush.msra.mxu0 %v362
      %689 = vmatpush.msra.mxu0 %v358
      %690 = vmatpush.msra.mxu0 %v354
      %691 = vmatpush.msra.mxu0 %v350
      %692 = vmatpush.msra.mxu0 %v346
      %693 = vmatpush.msra.mxu0 %v342
      %694 = vmatpush.msra.mxu0 %v338
      %695 = vmatpush.msra.mxu0 %v334
      %696 = vmatpush.msra.mxu0 %v330
      %697 = vmatpush.msra.mxu0 %v326
      %698 = vmatpush.msra.mxu0 %v322
      %699 = vmatpush.msra.mxu0 %v318
      %700 = vmatpush.msra.mxu0 %v314
      %701 = vmatmul.f32.gmra.mxu0 %v555
      %v702 = vpop.f32.mrf.mxu0
      %v703 = vadd.f32 %v560, %v702
      %704 = vdwg.mxu0
      %705 = vmatpush.msra.mxu0 %v438
      %706 = vmatpush.msra.mxu0 %v434
      %707 = vmatpush.msra.mxu0 %v430
      %708 = vmatpush.msra.mxu0 %v426
      %709 = vmatpush.msra.mxu0 %v422
      %710 = vmatpush.msra.mxu0 %v418
      %711 = vmatpush.msra.mxu0 %v414
      %712 = vmatpush.msra.mxu0 %v410
      %713 = vmatpush.msra.mxu0 %v406
      %714 = vmatpush.msra.mxu0 %v402
      %715 = vmatpush.msra.mxu0 %v398
      %716 = vmatpush.msra.mxu0 %v394
      %717 = vmatpush.msra.mxu0 %v390
      %718 = vmatpush.msra.mxu0 %v386
      %719 = vmatpush.msra.mxu0 %v382
      %720 = vmatpush.msra.mxu0 %v378
      %721 = vmatmul.f32.gmra.mxu0 %v441
      %v722 = vpop.f32.mrf.mxu0
      %v723 = vadd.f32 %v703, %v722
      %724 = vdwg.mxu0
      %v725 = vxor.u32 %v603, 2147483648
      %v726 = vmul.f32 %v725, 1.442695
      %v727 = vpow.pop %v726
      %v728 = vadd.f32 %v727, 1.0
      %v729 = vrcp.pop %v728
      %v730 = vmul.f32 %v728, %v729
      %v731 = vsub.f32 1.0, %v730
      %v732 = vmul.f32 %v729, %v731
      %v733 = vadd.f32 %v729, %v732
      %vm734 = vweird.f32 %v728
      %vm735 = vweird.f32 %v729
      %vm736 = vmor %vm734, %vm735
      %v737 = vsel %vm736, %v729, %v733
      %v738 = vand.u32 2147483647, %v728
      %vm739 = vcmp.eq.f32.partialorder %v738, 8.507059e+37
      %v740 = vand.u32 %v728, 2147483648
      %v741 = vor.u32 1.1754944e-38, %v740
      %v742 = vsel %vm739, %v741, %v737
      %v743 = vmul.f32 1.0, %v742
      %v744 = vxor.u32 %v643, 2147483648
      %v745 = vmul.f32 %v744, 1.442695
      %v746 = vpow.pop %v745
      %v747 = vadd.f32 %v746, 1.0
      %v748 = vrcp.pop %v747
      %v749 = vmul.f32 %v747, %v748
      %v750 = vsub.f32 1.0, %v749
      %v751 = vmul.f32 %v748, %v750
      %v752 = vadd.f32 %v748, %v751
      %vm753 = vweird.f32 %v747
      %vm754 = vweird.f32 %v748
      %vm755 = vmor %vm753, %vm754
      %v756 = vsel %vm755, %v748, %v752
      %v757 = vand.u32 2147483647, %v747
      %vm758 = vcmp.eq.f32.partialorder %v757, 8.507059e+37
      %v759 = vand.u32 %v747, 2147483648
      %v760 = vor.u32 1.1754944e-38, %v759
      %v761 = vsel %vm758, %v760, %v756
      %v762 = vmul.f32 1.0, %v761
      %v763 = vmul.f32 %v743, %v723
      %v764 = vadd.f32 %v683, %v763
      %v765 = vtanh.pop %v764
      %v766 = vsub.f32 1.0, %v762
      %v767 = vmul.f32 %v766, %v765
      %v768 = vmul.f32 %v762, %v441
      %v769 = vadd.f32 %v767, %v768
      %s770 = smul.u32 %s18, 16
      %p771 = scmp.lt.s32.totalorder %s770, 20
      %s772 = scalar_select %p771, 1, 0
      %v773 = vstv %s772
      %vm774 = vcmp.eq.s32.totalorder %v773, 1
      %v775 = vsel %vm774, %v555, %v440
      %v776 = vsel %vm774, %v769, %v441
      %777 = vst [vmem:[%s254] sm:$0xff] %v776
      %s778 = scalar_lea.vmem %s248, 24
      %v779 = vld [vmem:[%s778] sm:$0xff]
      %v780 = vld [vmem:[%s778 + $0x8] sm:$0xff]
      %v781 = vld [vmem:[%s778 + $0x10] sm:$0xff]
      %782 = vmatpush.msra.mxu0 %v307
      %783 = vmatpush.msra.mxu0 %v304
      %784 = vmatpush.msra.mxu0 %v301
      %785 = vmatpush.msra.mxu0 %v298
      %786 = vmatpush.msra.mxu0 %v295
      %787 = vmatpush.msra.mxu0 %v292
      %788 = vmatpush.msra.mxu0 %v289
      %789 = vmatpush.msra.mxu0 %v286
      %790 = vmatpush.msra.mxu0 %v283
      %791 = vmatpush.msra.mxu0 %v280
      %792 = vmatpush.msra.mxu0 %v277
      %793 = vmatpush.msra.mxu0 %v274
      %794 = vmatpush.msra.mxu0 %v271
      %795 = vmatpush.msra.mxu0 %v268
      %796 = vmatpush.msra.mxu0 %v265
      %797 = vmatpush.msra.mxu0 %v262
      %798 = vmatmul.f32.gmra.mxu0 %v775
      %v799 = vpop.f32.mrf.mxu0
      %v800 = vadd.f32 0.0, %v799
      %801 = vdwg.mxu0
      %802 = vmatpush.msra.mxu0 %v308
      %803 = vmatpush.msra.mxu0 %v305
      %804 = vmatpush.msra.mxu0 %v302
      %805 = vmatpush.msra.mxu0 %v299
      %806 = vmatpush.msra.mxu0 %v296
      %807 = vmatpush.msra.mxu0 %v293
      %808 = vmatpush.msra.mxu0 %v290
      %809 = vmatpush.msra.mxu0 %v287
      %810 = vmatpush.msra.mxu0 %v284
      %811 = vmatpush.msra.mxu0 %v281
      %812 = vmatpush.msra.mxu0 %v278
      %813 = vmatpush.msra.mxu0 %v275
      %814 = vmatpush.msra.mxu0 %v272
      %815 = vmatpush.msra.mxu0 %v269
      %816 = vmatpush.msra.mxu0 %v266
      %817 = vmatpush.msra.mxu0 %v263
      %818 = vmatmul.f32.gmra.mxu0 %v775
      %v819 = vpop.f32.mrf.mxu0
      %v820 = vadd.f32 0.0, %v819
      %821 = vdwg.mxu0
      %822 = vmatpush.msra.mxu0 %v309
      %823 = vmatpush.msra.mxu0 %v306
      %824 = vmatpush.msra.mxu0 %v303
      %825 = vmatpush.msra.mxu0 %v300
      %826 = vmatpush.msra.mxu0 %v297
      %827 = vmatpush.msra.mxu0 %v294
      %828 = vmatpush.msra.mxu0 %v291
      %829 = vmatpush.msra.mxu0 %v288
      %830 = vmatpush.msra.mxu0 %v285
      %831 = vmatpush.msra.mxu0 %v282
      %832 = vmatpush.msra.mxu0 %v279
      %833 = vmatpush.msra.mxu0 %v276
      %834 = vmatpush.msra.mxu0 %v273
      %835 = vmatpush.msra.mxu0 %v270
      %836 = vmatpush.msra.mxu0 %v267
      %837 = vmatpush.msra.mxu0 %v264
      %838 = vmatmul.f32.gmra.mxu0 %v775
      %v839 = vpop.f32.mrf.mxu0
      %v840 = vadd.f32 0.0, %v839
      %841 = vdwg.mxu0
      %v842 = vadd.f32 %v779, %v800
      %v843 = vxor.u32 %v842, 2147483648
      %v844 = vmul.f32 %v843, 1.442695
      %v845 = vpow.pop %v844
      %v846 = vadd.f32 %v845, 1.0
      %v847 = vrcp.pop %v846
      %v848 = vmul.f32 %v846, %v847
      %v849 = vsub.f32 1.0, %v848
      %v850 = vmul.f32 %v847, %v849
      %v851 = vadd.f32 %v847, %v850
      %vm852 = vweird.f32 %v846
      %vm853 = vweird.f32 %v847
      %vm854 = vmor %vm852, %vm853
      %v855 = vsel %vm854, %v847, %v851
      %v856 = vand.u32 2147483647, %v846
      %vm857 = vcmp.eq.f32.partialorder %v856, 8.507059e+37
      %v858 = vand.u32 %v846, 2147483648
      %v859 = vor.u32 1.1754944e-38, %v858
      %v860 = vsel %vm857, %v859, %v855
      %v861 = vmul.f32 1.0, %v860
      %v862 = vadd.f32 %v780, %v820
      %v863 = vxor.u32 %v862, 2147483648
      %v864 = vmul.f32 %v863, 1.442695
      %v865 = vpow.pop %v864
      %v866 = vadd.f32 %v865, 1.0
      %v867 = vrcp.pop %v866
      %v868 = vmul.f32 %v866, %v867
      %v869 = vsub.f32 1.0, %v868
      %v870 = vmul.f32 %v867, %v869
      %v871 = vadd.f32 %v867, %v870
      %vm872 = vweird.f32 %v866
      %vm873 = vweird.f32 %v867
      %vm874 = vmor %vm872, %vm873
      %v875 = vsel %vm874, %v867, %v871
      %v876 = vand.u32 2147483647, %v866
      %vm877 = vcmp.eq.f32.partialorder %v876, 8.507059e+37
      %v878 = vand.u32 %v866, 2147483648
      %v879 = vor.u32 1.1754944e-38, %v878
      %v880 = vsel %vm877, %v879, %v875
      %v881 = vmul.f32 1.0, %v880
      %v882 = vadd.f32 %v840, %v546
      %v883 = vmul.f32 %v861, %v882
      %v884 = vadd.f32 %v781, %v883
      %v885 = vtanh.pop %v884
      %v886 = vsub.f32 1.0, %v881
      %v887 = vmul.f32 %v886, %v885
      %v888 = vmul.f32 %v881, %v775
      %v889 = vadd.f32 %v887, %v888
      %890 = vmatpush.msra.mxu0 %v371
      %891 = vmatpush.msra.mxu0 %v367
      %892 = vmatpush.msra.mxu0 %v363
      %893 = vmatpush.msra.mxu0 %v359
      %894 = vmatpush.msra.mxu0 %v355
      %895 = vmatpush.msra.mxu0 %v351
      %896 = vmatpush.msra.mxu0 %v347
      %897 = vmatpush.msra.mxu0 %v343
      %898 = vmatpush.msra.mxu0 %v339
      %899 = vmatpush.msra.mxu0 %v335
      %900 = vmatpush.msra.mxu0 %v331
      %901 = vmatpush.msra.mxu0 %v327
      %902 = vmatpush.msra.mxu0 %v323
      %903 = vmatpush.msra.mxu0 %v319
      %904 = vmatpush.msra.mxu0 %v315
      %905 = vmatpush.msra.mxu0 %v311
      %906 = vmatmul.f32.gmra.mxu0 %v889
      %v907 = vpop.f32.mrf.mxu0
      %v908 = vadd.f32 %v557, %v907
      %909 = vdwg.mxu0
      %910 = vmatpush.msra.mxu0 %v435
      %911 = vmatpush.msra.mxu0 %v431
      %912 = vmatpush.msra.mxu0 %v427
      %913 = vmatpush.msra.mxu0 %v423
      %914 = vmatpush.msra.mxu0 %v419
      %915 = vmatpush.msra.mxu0 %v415
      %916 = vmatpush.msra.mxu0 %v411
      %917 = vmatpush.msra.mxu0 %v407
      %918 = vmatpush.msra.mxu0 %v403
      %919 = vmatpush.msra.mxu0 %v399
      %920 = vmatpush.msra.mxu0 %v395
      %921 = vmatpush.msra.mxu0 %v391
      %922 = vmatpush.msra.mxu0 %v387
      %923 = vmatpush.msra.mxu0 %v383
      %924 = vmatpush.msra.mxu0 %v379
      %925 = vmatpush.msra.mxu0 %v375
      %926 = vmatmul.f32.gmra.mxu0 %v776
      %v927 = vpop.f32.mrf.mxu0
      %v928 = vadd.f32 %v908, %v927
      %929 = vdwg.mxu0
      %930 = vmatpush.msra.mxu0 %v372
      %931 = vmatpush.msra.mxu0 %v368
      %932 = vmatpush.msra.mxu0 %v364
      %933 = vmatpush.msra.mxu0 %v360
      %934 = vmatpush.msra.mxu0 %v356
      %935 = vmatpush.msra.mxu0 %v352
      %936 = vmatpush.msra.mxu0 %v348
      %937 = vmatpush.msra.mxu0 %v344
      %938 = vmatpush.msra.mxu0 %v340
      %939 = vmatpush.msra.mxu0 %v336
      %940 = vmatpush.msra.mxu0 %v332
      %941 = vmatpush.msra.mxu0 %v328
      %942 = vmatpush.msra.mxu0 %v324
      %943 = vmatpush.msra.mxu0 %v320
      %944 = vmatpush.msra.mxu0 %v316
      %945 = vmatpush.msra.mxu0 %v312
      %946 = vmatmul.f32.gmra.mxu0 %v889
      %v947 = vpop.f32.mrf.mxu0
      %v948 = vadd.f32 %v558, %v947
      %949 = vdwg.mxu0
      %950 = vmatpush.msra.mxu0 %v436
      %951 = vmatpush.msra.mxu0 %v432
      %952 = vmatpush.msra.mxu0 %v428
      %953 = vmatpush.msra.mxu0 %v424
      %954 = vmatpush.msra.mxu0 %v420
      %955 = vmatpush.msra.mxu0 %v416
      %956 = vmatpush.msra.mxu0 %v412
      %957 = vmatpush.msra.mxu0 %v408
      %958 = vmatpush.msra.mxu0 %v404
      %959 = vmatpush.msra.mxu0 %v400
      %960 = vmatpush.msra.mxu0 %v396
      %961 = vmatpush.msra.mxu0 %v392
      %962 = vmatpush.msra.mxu0 %v388
      %963 = vmatpush.msra.mxu0 %v384
      %964 = vmatpush.msra.mxu0 %v380
      %965 = vmatpush.msra.mxu0 %v376
      %966 = vmatmul.f32.gmra.mxu0 %v776
      %v967 = vpop.f32.mrf.mxu0
      %v968 = vadd.f32 %v948, %v967
      %969 = vdwg.mxu0
      %970 = vmatpush.msra.mxu0 %v373
      %971 = vmatpush.msra.mxu0 %v369
      %972 = vmatpush.msra.mxu0 %v365
      %973 = vmatpush.msra.mxu0 %v361
      %974 = vmatpush.msra.mxu0 %v357
      %975 = vmatpush.msra.mxu0 %v353
      %976 = vmatpush.msra.mxu0 %v349
      %977 = vmatpush.msra.mxu0 %v345
      %978 = vmatpush.msra.mxu0 %v341
      %979 = vmatpush.msra.mxu0 %v337
      %980 = vmatpush.msra.mxu0 %v333
      %981 = vmatpush.msra.mxu0 %v329
      %982 = vmatpush.msra.mxu0 %v325
      %983 = vmatpush.msra.mxu0 %v321
      %984 = vmatpush.msra.mxu0 %v317
      %985 = vmatpush.msra.mxu0 %v313
      %986 = vmatmul.f32.gmra.mxu0 %v889
      %v987 = vpop.f32.mrf.mxu0
      %v988 = vadd.f32 %v559, %v987
      %989 = vdwg.mxu0
      %990 = vmatpush.msra.mxu0 %v437
      %991 = vmatpush.msra.mxu0 %v433
      %992 = vmatpush.msra.mxu0 %v429
      %993 = vmatpush.msra.mxu0 %v425
      %994 = vmatpush.msra.mxu0 %v421
      %995 = vmatpush.msra.mxu0 %v417
      %996 = vmatpush.msra.mxu0 %v413
      %997 = vmatpush.msra.mxu0 %v409
      %998 = vmatpush.msra.mxu0 %v405
      %999 = vmatpush.msra.mxu0 %v401
      %1000 = vmatpush.msra.mxu0 %v397
      %1001 = vmatpush.msra.mxu0 %v393
      %1002 = vmatpush.msra.mxu0 %v389
      %1003 = vmatpush.msra.mxu0 %v385
      %1004 = vmatpush.msra.mxu0 %v381
      %1005 = vmatpush.msra.mxu0 %v377
      %1006 = vmatmul.f32.gmra.mxu0 %v776
      %v1007 = vpop.f32.mrf.mxu0
      %v1008 = vadd.f32 %v988, %v1007
      %1009 = vdwg.mxu0
      %1010 = vmatpush.msra.mxu0 %v374
      %1011 = vmatpush.msra.mxu0 %v370
      %1012 = vmatpush.msra.mxu0 %v366
      %1013 = vmatpush.msra.mxu0 %v362
      %1014 = vmatpush.msra.mxu0 %v358
      %1015 = vmatpush.msra.mxu0 %v354
      %1016 = vmatpush.msra.mxu0 %v350
      %1017 = vmatpush.msra.mxu0 %v346
      %1018 = vmatpush.msra.mxu0 %v342
      %1019 = vmatpush.msra.mxu0 %v338
      %1020 = vmatpush.msra.mxu0 %v334
      %1021 = vmatpush.msra.mxu0 %v330
      %1022 = vmatpush.msra.mxu0 %v326
      %1023 = vmatpush.msra.mxu0 %v322
      %1024 = vmatpush.msra.mxu0 %v318
      %1025 = vmatpush.msra.mxu0 %v314
      %1026 = vmatmul.f32.gmra.mxu0 %v889
      %v1027 = vpop.f32.mrf.mxu0
      %v1028 = vadd.f32 %v560, %v1027
      %1029 = vdwg.mxu0
      %1030 = vmatpush.msra.mxu0 %v438
      %1031 = vmatpush.msra.mxu0 %v434
      %1032 = vmatpush.msra.mxu0 %v430
      %1033 = vmatpush.msra.mxu0 %v426
      %1034 = vmatpush.msra.mxu0 %v422
      %1035 = vmatpush.msra.mxu0 %v418
      %1036 = vmatpush.msra.mxu0 %v414
      %1037 = vmatpush.msra.mxu0 %v410
      %1038 = vmatpush.msra.mxu0 %v406
      %1039 = vmatpush.msra.mxu0 %v402
      %1040 = vmatpush.msra.mxu0 %v398
      %1041 = vmatpush.msra.mxu0 %v394
      %1042 = vmatpush.msra.mxu0 %v390
      %1043 = vmatpush.msra.mxu0 %v386
      %1044 = vmatpush.msra.mxu0 %v382
      %1045 = vmatpush.msra.mxu0 %v378
      %1046 = vmatmul.f32.gmra.mxu0 %v776
      %v1047 = vpop.f32.mrf.mxu0
      %v1048 = vadd.f32 %v1028, %v1047
      %1049 = vdwg.mxu0
      %v1050 = vxor.u32 %v928, 2147483648
      %v1051 = vmul.f32 %v1050, 1.442695
      %v1052 = vpow.pop %v1051
      %v1053 = vadd.f32 %v1052, 1.0
      %v1054 = vrcp.pop %v1053
      %v1055 = vmul.f32 %v1053, %v1054
      %v1056 = vsub.f32 1.0, %v1055
      %v1057 = vmul.f32 %v1054, %v1056
      %v1058 = vadd.f32 %v1054, %v1057
      %vm1059 = vweird.f32 %v1053
      %vm1060 = vweird.f32 %v1054
      %vm1061 = vmor %vm1059, %vm1060
      %v1062 = vsel %vm1061, %v1054, %v1058
      %v1063 = vand.u32 2147483647, %v1053
      %vm1064 = vcmp.eq.f32.partialorder %v1063, 8.507059e+37
      %v1065 = vand.u32 %v1053, 2147483648
      %v1066 = vor.u32 1.1754944e-38, %v1065
      %v1067 = vsel %vm1064, %v1066, %v1062
      %v1068 = vmul.f32 1.0, %v1067
      %v1069 = vxor.u32 %v968, 2147483648
      %v1070 = vmul.f32 %v1069, 1.442695
      %v1071 = vpow.pop %v1070
      %v1072 = vadd.f32 %v1071, 1.0
      %v1073 = vrcp.pop %v1072
      %v1074 = vmul.f32 %v1072, %v1073
      %v1075 = vsub.f32 1.0, %v1074
      %v1076 = vmul.f32 %v1073, %v1075
      %v1077 = vadd.f32 %v1073, %v1076
      %vm1078 = vweird.f32 %v1072
      %vm1079 = vweird.f32 %v1073
      %vm1080 = vmor %vm1078, %vm1079
      %v1081 = vsel %vm1080, %v1073, %v1077
      %v1082 = vand.u32 2147483647, %v1072
      %vm1083 = vcmp.eq.f32.partialorder %v1082, 8.507059e+37
      %v1084 = vand.u32 %v1072, 2147483648
      %v1085 = vor.u32 1.1754944e-38, %v1084
      %v1086 = vsel %vm1083, %v1085, %v1081
      %v1087 = vmul.f32 1.0, %v1086
      %v1088 = vmul.f32 %v1068, %v1048
      %v1089 = vadd.f32 %v1008, %v1088
      %v1090 = vtanh.pop %v1089
      %v1091 = vsub.f32 1.0, %v1087
      %v1092 = vmul.f32 %v1091, %v1090
      %v1093 = vmul.f32 %v1087, %v776
      %v1094 = vadd.f32 %v1092, %v1093
      %s1095 = sadd.s32 %s770, 1
      %p1096 = scmp.lt.s32.totalorder %s1095, 20
      %s1097 = scalar_select %p1096, 1, 0
      %v1098 = vstv %s1097
      %vm1099 = vcmp.eq.s32.totalorder %v1098, 1
      %v1100 = vsel %vm1099, %v889, %v775
      %v1101 = vsel %vm1099, %v1094, %v776
      %s1102 = scalar_lea.vmem %s254, 8
      %1103 = vst [vmem:[%s1102] sm:$0xff] %v1101
      %s1104 = scalar_lea.vmem %s248, 48
      %v1105 = vld [vmem:[%s1104] sm:$0xff]
      %v1106 = vld [vmem:[%s1104 + $0x8] sm:$0xff]
      %v1107 = vld [vmem:[%s1104 + $0x10] sm:$0xff]
      %1108 = vmatpush.msra.mxu0 %v307
      %1109 = vmatpush.msra.mxu0 %v304
      %1110 = vmatpush.msra.mxu0 %v301
      %1111 = vmatpush.msra.mxu0 %v298
      %1112 = vmatpush.msra.mxu0 %v295
      %1113 = vmatpush.msra.mxu0 %v292
      %1114 = vmatpush.msra.mxu0 %v289
      %1115 = vmatpush.msra.mxu0 %v286
      %1116 = vmatpush.msra.mxu0 %v283
      %1117 = vmatpush.msra.mxu0 %v280
      %1118 = vmatpush.msra.mxu0 %v277
      %1119 = vmatpush.msra.mxu0 %v274
      %1120 = vmatpush.msra.mxu0 %v271
      %1121 = vmatpush.msra.mxu0 %v268
      %1122 = vmatpush.msra.mxu0 %v265
      %1123 = vmatpush.msra.mxu0 %v262
      %1124 = vmatmul.f32.gmra.mxu0 %v1100
      %v1125 = vpop.f32.mrf.mxu0
      %v1126 = vadd.f32 0.0, %v1125
      %1127 = vdwg.mxu0
      %1128 = vmatpush.msra.mxu0 %v308
      %1129 = vmatpush.msra.mxu0 %v305
      %1130 = vmatpush.msra.mxu0 %v302
      %1131 = vmatpush.msra.mxu0 %v299
      %1132 = vmatpush.msra.mxu0 %v296
      %1133 = vmatpush.msra.mxu0 %v293
      %1134 = vmatpush.msra.mxu0 %v290
      %1135 = vmatpush.msra.mxu0 %v287
      %1136 = vmatpush.msra.mxu0 %v284
      %1137 = vmatpush.msra.mxu0 %v281
      %1138 = vmatpush.msra.mxu0 %v278
      %1139 = vmatpush.msra.mxu0 %v275
      %1140 = vmatpush.msra.mxu0 %v272
      %1141 = vmatpush.msra.mxu0 %v269
      %1142 = vmatpush.msra.mxu0 %v266
      %1143 = vmatpush.msra.mxu0 %v263
      %1144 = vmatmul.f32.gmra.mxu0 %v1100
      %v1145 = vpop.f32.mrf.mxu0
      %v1146 = vadd.f32 0.0, %v1145
      %1147 = vdwg.mxu0
      %1148 = vmatpush.msra.mxu0 %v309
      %1149 = vmatpush.msra.mxu0 %v306
      %1150 = vmatpush.msra.mxu0 %v303
      %1151 = vmatpush.msra.mxu0 %v300
      %1152 = vmatpush.msra.mxu0 %v297
      %1153 = vmatpush.msra.mxu0 %v294
      %1154 = vmatpush.msra.mxu0 %v291
      %1155 = vmatpush.msra.mxu0 %v288
      %1156 = vmatpush.msra.mxu0 %v285
      %1157 = vmatpush.msra.mxu0 %v282
      %1158 = vmatpush.msra.mxu0 %v279
      %1159 = vmatpush.msra.mxu0 %v276
      %1160 = vmatpush.msra.mxu0 %v273
      %1161 = vmatpush.msra.mxu0 %v270
      %1162 = vmatpush.msra.mxu0 %v267
      %1163 = vmatpush.msra.mxu0 %v264
      %1164 = vmatmul.f32.gmra.mxu0 %v1100
      %v1165 = vpop.f32.mrf.mxu0
      %v1166 = vadd.f32 0.0, %v1165
      %1167 = vdwg.mxu0
      %v1168 = vadd.f32 %v1105, %v1126
      %v1169 = vxor.u32 %v1168, 2147483648
      %v1170 = vmul.f32 %v1169, 1.442695
      %v1171 = vpow.pop %v1170
      %v1172 = vadd.f32 %v1171, 1.0
      %v1173 = vrcp.pop %v1172
      %v1174 = vmul.f32 %v1172, %v1173
      %v1175 = vsub.f32 1.0, %v1174
      %v1176 = vmul.f32 %v1173, %v1175
      %v1177 = vadd.f32 %v1173, %v1176
      %vm1178 = vweird.f32 %v1172
      %vm1179 = vweird.f32 %v1173
      %vm1180 = vmor %vm1178, %vm1179
      %v1181 = vsel %vm1180, %v1173, %v1177
      %v1182 = vand.u32 2147483647, %v1172
      %vm1183 = vcmp.eq.f32.partialorder %v1182, 8.507059e+37
      %v1184 = vand.u32 %v1172, 2147483648
      %v1185 = vor.u32 1.1754944e-38, %v1184
      %v1186 = vsel %vm1183, %v1185, %v1181
      %v1187 = vmul.f32 1.0, %v1186
      %v1188 = vadd.f32 %v1106, %v1146
      %v1189 = vxor.u32 %v1188, 2147483648
      %v1190 = vmul.f32 %v1189, 1.442695
      %v1191 = vpow.pop %v1190
      %v1192 = vadd.f32 %v1191, 1.0
      %v1193 = vrcp.pop %v1192
      %v1194 = vmul.f32 %v1192, %v1193
      %v1195 = vsub.f32 1.0, %v1194
      %v1196 = vmul.f32 %v1193, %v1195
      %v1197 = vadd.f32 %v1193, %v1196
      %vm1198 = vweird.f32 %v1192
      %vm1199 = vweird.f32 %v1193
      %vm1200 = vmor %vm1198, %vm1199
      %v1201 = vsel %vm1200, %v1193, %v1197
      %v1202 = vand.u32 2147483647, %v1192
      %vm1203 = vcmp.eq.f32.partialorder %v1202, 8.507059e+37
      %v1204 = vand.u32 %v1192, 2147483648
      %v1205 = vor.u32 1.1754944e-38, %v1204
      %v1206 = vsel %vm1203, %v1205, %v1201
      %v1207 = vmul.f32 1.0, %v1206
      %v1208 = vadd.f32 %v1166, %v546
      %v1209 = vmul.f32 %v1187, %v1208
      %v1210 = vadd.f32 %v1107, %v1209
      %v1211 = vtanh.pop %v1210
      %v1212 = vsub.f32 1.0, %v1207
      %v1213 = vmul.f32 %v1212, %v1211
      %v1214 = vmul.f32 %v1207, %v1100
      %v1215 = vadd.f32 %v1213, %v1214
      %1216 = vmatpush.msra.mxu0 %v371
      %1217 = vmatpush.msra.mxu0 %v367
      %1218 = vmatpush.msra.mxu0 %v363
      %1219 = vmatpush.msra.mxu0 %v359
      %1220 = vmatpush.msra.mxu0 %v355
      %1221 = vmatpush.msra.mxu0 %v351
      %1222 = vmatpush.msra.mxu0 %v347
      %1223 = vmatpush.msra.mxu0 %v343
      %1224 = vmatpush.msra.mxu0 %v339
      %1225 = vmatpush.msra.mxu0 %v335
      %1226 = vmatpush.msra.mxu0 %v331
      %1227 = vmatpush.msra.mxu0 %v327
      %1228 = vmatpush.msra.mxu0 %v323
      %1229 = vmatpush.msra.mxu0 %v319
      %1230 = vmatpush.msra.mxu0 %v315
      %1231 = vmatpush.msra.mxu0 %v311
      %1232 = vmatmul.f32.gmra.mxu0 %v1215
      %v1233 = vpop.f32.mrf.mxu0
      %v1234 = vadd.f32 %v557, %v1233
      %1235 = vdwg.mxu0
      %1236 = vmatpush.msra.mxu0 %v435
      %1237 = vmatpush.msra.mxu0 %v431
      %1238 = vmatpush.msra.mxu0 %v427
      %1239 = vmatpush.msra.mxu0 %v423
      %1240 = vmatpush.msra.mxu0 %v419
      %1241 = vmatpush.msra.mxu0 %v415
      %1242 = vmatpush.msra.mxu0 %v411
      %1243 = vmatpush.msra.mxu0 %v407
      %1244 = vmatpush.msra.mxu0 %v403
      %1245 = vmatpush.msra.mxu0 %v399
      %1246 = vmatpush.msra.mxu0 %v395
      %1247 = vmatpush.msra.mxu0 %v391
      %1248 = vmatpush.msra.mxu0 %v387
      %1249 = vmatpush.msra.mxu0 %v383
      %1250 = vmatpush.msra.mxu0 %v379
      %1251 = vmatpush.msra.mxu0 %v375
      %1252 = vmatmul.f32.gmra.mxu0 %v1101
      %v1253 = vpop.f32.mrf.mxu0
      %v1254 = vadd.f32 %v1234, %v1253
      %1255 = vdwg.mxu0
      %1256 = vmatpush.msra.mxu0 %v372
      %1257 = vmatpush.msra.mxu0 %v368
      %1258 = vmatpush.msra.mxu0 %v364
      %1259 = vmatpush.msra.mxu0 %v360
      %1260 = vmatpush.msra.mxu0 %v356
      %1261 = vmatpush.msra.mxu0 %v352
      %1262 = vmatpush.msra.mxu0 %v348
      %1263 = vmatpush.msra.mxu0 %v344
      %1264 = vmatpush.msra.mxu0 %v340
      %1265 = vmatpush.msra.mxu0 %v336
      %1266 = vmatpush.msra.mxu0 %v332
      %1267 = vmatpush.msra.mxu0 %v328
      %1268 = vmatpush.msra.mxu0 %v324
      %1269 = vmatpush.msra.mxu0 %v320
      %1270 = vmatpush.msra.mxu0 %v316
      %1271 = vmatpush.msra.mxu0 %v312
      %1272 = vmatmul.f32.gmra.mxu0 %v1215
      %v1273 = vpop.f32.mrf.mxu0
      %v1274 = vadd.f32 %v558, %v1273
      %1275 = vdwg.mxu0
      %1276 = vmatpush.msra.mxu0 %v436
      %1277 = vmatpush.msra.mxu0 %v432
      %1278 = vmatpush.msra.mxu0 %v428
      %1279 = vmatpush.msra.mxu0 %v424
      %1280 = vmatpush.msra.mxu0 %v420
      %1281 = vmatpush.msra.mxu0 %v416
      %1282 = vmatpush.msra.mxu0 %v412
      %1283 = vmatpush.msra.mxu0 %v408
      %1284 = vmatpush.msra.mxu0 %v404
      %1285 = vmatpush.msra.mxu0 %v400
      %1286 = vmatpush.msra.mxu0 %v396
      %1287 = vmatpush.msra.mxu0 %v392
      %1288 = vmatpush.msra.mxu0 %v388
      %1289 = vmatpush.msra.mxu0 %v384
      %1290 = vmatpush.msra.mxu0 %v380
      %1291 = vmatpush.msra.mxu0 %v376
      %1292 = vmatmul.f32.gmra.mxu0 %v1101
      %v1293 = vpop.f32.mrf.mxu0
      %v1294 = vadd.f32 %v1274, %v1293
      %1295 = vdwg.mxu0
      %1296 = vmatpush.msra.mxu0 %v373
      %1297 = vmatpush.msra.mxu0 %v369
      %1298 = vmatpush.msra.mxu0 %v365
      %1299 = vmatpush.msra.mxu0 %v361
      %1300 = vmatpush.msra.mxu0 %v357
      %1301 = vmatpush.msra.mxu0 %v353
      %1302 = vmatpush.msra.mxu0 %v349
      %1303 = vmatpush.msra.mxu0 %v345
      %1304 = vmatpush.msra.mxu0 %v341
      %1305 = vmatpush.msra.mxu0 %v337
      %1306 = vmatpush.msra.mxu0 %v333
      %1307 = vmatpush.msra.mxu0 %v329
      %1308 = vmatpush.msra.mxu0 %v325
      %1309 = vmatpush.msra.mxu0 %v321
      %1310 = vmatpush.msra.mxu0 %v317
      %1311 = vmatpush.msra.mxu0 %v313
      %1312 = vmatmul.f32.gmra.mxu0 %v1215
      %v1313 = vpop.f32.mrf.mxu0
      %v1314 = vadd.f32 %v559, %v1313
      %1315 = vdwg.mxu0
      %1316 = vmatpush.msra.mxu0 %v437
      %1317 = vmatpush.msra.mxu0 %v433
      %1318 = vmatpush.msra.mxu0 %v429
      %1319 = vmatpush.msra.mxu0 %v425
      %1320 = vmatpush.msra.mxu0 %v421
      %1321 = vmatpush.msra.mxu0 %v417
      %1322 = vmatpush.msra.mxu0 %v413
      %1323 = vmatpush.msra.mxu0 %v409
      %1324 = vmatpush.msra.mxu0 %v405
      %1325 = vmatpush.msra.mxu0 %v401
      %1326 = vmatpush.msra.mxu0 %v397
      %1327 = vmatpush.msra.mxu0 %v393
      %1328 = vmatpush.msra.mxu0 %v389
      %1329 = vmatpush.msra.mxu0 %v385
      %1330 = vmatpush.msra.mxu0 %v381
      %1331 = vmatpush.msra.mxu0 %v377
      %1332 = vmatmul.f32.gmra.mxu0 %v1101
      %v1333 = vpop.f32.mrf.mxu0
      %v1334 = vadd.f32 %v1314, %v1333
      %1335 = vdwg.mxu0
      %1336 = vmatpush.msra.mxu0 %v374
      %1337 = vmatpush.msra.mxu0 %v370
      %1338 = vmatpush.msra.mxu0 %v366
      %1339 = vmatpush.msra.mxu0 %v362
      %1340 = vmatpush.msra.mxu0 %v358
      %1341 = vmatpush.msra.mxu0 %v354
      %1342 = vmatpush.msra.mxu0 %v350
      %1343 = vmatpush.msra.mxu0 %v346
      %1344 = vmatpush.msra.mxu0 %v342
      %1345 = vmatpush.msra.mxu0 %v338
      %1346 = vmatpush.msra.mxu0 %v334
      %1347 = vmatpush.msra.mxu0 %v330
      %1348 = vmatpush.msra.mxu0 %v326
      %1349 = vmatpush.msra.mxu0 %v322
      %1350 = vmatpush.msra.mxu0 %v318
      %1351 = vmatpush.msra.mxu0 %v314
      %1352 = vmatmul.f32.gmra.mxu0 %v1215
      %v1353 = vpop.f32.mrf.mxu0
      %v1354 = vadd.f32 %v560, %v1353
      %1355 = vdwg.mxu0
      %1356 = vmatpush.msra.mxu0 %v438
      %1357 = vmatpush.msra.mxu0 %v434
      %1358 = vmatpush.msra.mxu0 %v430
      %1359 = vmatpush.msra.mxu0 %v426
      %1360 = vmatpush.msra.mxu0 %v422
      %1361 = vmatpush.msra.mxu0 %v418
      %1362 = vmatpush.msra.mxu0 %v414
      %1363 = vmatpush.msra.mxu0 %v410
      %1364 = vmatpush.msra.mxu0 %v406
      %1365 = vmatpush.msra.mxu0 %v402
      %1366 = vmatpush.msra.mxu0 %v398
      %1367 = vmatpush.msra.mxu0 %v394
      %1368 = vmatpush.msra.mxu0 %v390
      %1369 = vmatpush.msra.mxu0 %v386
      %1370 = vmatpush.msra.mxu0 %v382
      %1371 = vmatpush.msra.mxu0 %v378
      %1372 = vmatmul.f32.gmra.mxu0 %v1101
      %v1373 = vpop.f32.mrf.mxu0
      %v1374 = vadd.f32 %v1354, %v1373
      %1375 = vdwg.mxu0
      %v1376 = vxor.u32 %v1254, 2147483648
      %v1377 = vmul.f32 %v1376, 1.442695
      %v1378 = vpow.pop %v1377
      %v1379 = vadd.f32 %v1378, 1.0
      %v1380 = vrcp.pop %v1379
      %v1381 = vmul.f32 %v1379, %v1380
      %v1382 = vsub.f32 1.0, %v1381
      %v1383 = vmul.f32 %v1380, %v1382
      %v1384 = vadd.f32 %v1380, %v1383
      %vm1385 = vweird.f32 %v1379
      %vm1386 = vweird.f32 %v1380
      %vm1387 = vmor %vm1385, %vm1386
      %v1388 = vsel %vm1387, %v1380, %v1384
      %v1389 = vand.u32 2147483647, %v1379
      %vm1390 = vcmp.eq.f32.partialorder %v1389, 8.507059e+37
      %v1391 = vand.u32 %v1379, 2147483648
      %v1392 = vor.u32 1.1754944e-38, %v1391
      %v1393 = vsel %vm1390, %v1392, %v1388
      %v1394 = vmul.f32 1.0, %v1393
      %v1395 = vxor.u32 %v1294, 2147483648
      %v1396 = vmul.f32 %v1395, 1.442695
      %v1397 = vpow.pop %v1396
      %v1398 = vadd.f32 %v1397, 1.0
      %v1399 = vrcp.pop %v1398
      %v1400 = vmul.f32 %v1398, %v1399
      %v1401 = vsub.f32 1.0, %v1400
      %v1402 = vmul.f32 %v1399, %v1401
      %v1403 = vadd.f32 %v1399, %v1402
      %vm1404 = vweird.f32 %v1398
      %vm1405 = vweird.f32 %v1399
      %vm1406 = vmor %vm1404, %vm1405
      %v1407 = vsel %vm1406, %v1399, %v1403
      %v1408 = vand.u32 2147483647, %v1398
      %vm1409 = vcmp.eq.f32.partialorder %v1408, 8.507059e+37
      %v1410 = vand.u32 %v1398, 2147483648
      %v1411 = vor.u32 1.1754944e-38, %v1410
      %v1412 = vsel %vm1409, %v1411, %v1407
      %v1413 = vmul.f32 1.0, %v1412
      %v1414 = vmul.f32 %v1394, %v1374
      %v1415 = vadd.f32 %v1334, %v1414
      %v1416 = vtanh.pop %v1415
      %v1417 = vsub.f32 1.0, %v1413
      %v1418 = vmul.f32 %v1417, %v1416
      %v1419 = vmul.f32 %v1413, %v1101
      %v1420 = vadd.f32 %v1418, %v1419
      %s1421 = sadd.s32 %s770, 2
      %p1422 = scmp.lt.s32.totalorder %s1421, 20
      %s1423 = scalar_select %p1422, 1, 0
      %v1424 = vstv %s1423
      %vm1425 = vcmp.eq.s32.totalorder %v1424, 1
      %v1426 = vsel %vm1425, %v1215, %v1100
      %v1427 = vsel %vm1425, %v1420, %v1101
      %s1428 = scalar_lea.vmem %s254, 16
      %1429 = vst [vmem:[%s1428] sm:$0xff] %v1427
      %s1430 = scalar_lea.vmem %s248, 72
      %v1431 = vld [vmem:[%s1430] sm:$0xff]
      %v1432 = vld [vmem:[%s1430 + $0x8] sm:$0xff]
      %v1433 = vld [vmem:[%s1430 + $0x10] sm:$0xff]
      %1434 = vmatpush.msra.mxu0 %v307
      %1435 = vmatpush.msra.mxu0 %v304
      %1436 = vmatpush.msra.mxu0 %v301
      %1437 = vmatpush.msra.mxu0 %v298
      %1438 = vmatpush.msra.mxu0 %v295
      %1439 = vmatpush.msra.mxu0 %v292
      %1440 = vmatpush.msra.mxu0 %v289
      %1441 = vmatpush.msra.mxu0 %v286
      %1442 = vmatpush.msra.mxu0 %v283
      %1443 = vmatpush.msra.mxu0 %v280
      %1444 = vmatpush.msra.mxu0 %v277
      %1445 = vmatpush.msra.mxu0 %v274
      %1446 = vmatpush.msra.mxu0 %v271
      %1447 = vmatpush.msra.mxu0 %v268
      %1448 = vmatpush.msra.mxu0 %v265
      %1449 = vmatpush.msra.mxu0 %v262
      %1450 = vmatmul.f32.gmra.mxu0 %v1426
      %v1451 = vpop.f32.mrf.mxu0
      %v1452 = vadd.f32 0.0, %v1451
      %1453 = vdwg.mxu0
      %1454 = vmatpush.msra.mxu0 %v308
      %1455 = vmatpush.msra.mxu0 %v305
      %1456 = vmatpush.msra.mxu0 %v302
      %1457 = vmatpush.msra.mxu0 %v299
      %1458 = vmatpush.msra.mxu0 %v296
      %1459 = vmatpush.msra.mxu0 %v293
      %1460 = vmatpush.msra.mxu0 %v290
      %1461 = vmatpush.msra.mxu0 %v287
      %1462 = vmatpush.msra.mxu0 %v284
      %1463 = vmatpush.msra.mxu0 %v281
      %1464 = vmatpush.msra.mxu0 %v278
      %1465 = vmatpush.msra.mxu0 %v275
      %1466 = vmatpush.msra.mxu0 %v272
      %1467 = vmatpush.msra.mxu0 %v269
      %1468 = vmatpush.msra.mxu0 %v266
      %1469 = vmatpush.msra.mxu0 %v263
      %1470 = vmatmul.f32.gmra.mxu0 %v1426
      %v1471 = vpop.f32.mrf.mxu0
      %v1472 = vadd.f32 0.0, %v1471
      %1473 = vdwg.mxu0
      %1474 = vmatpush.msra.mxu0 %v309
      %1475 = vmatpush.msra.mxu0 %v306
      %1476 = vmatpush.msra.mxu0 %v303
      %1477 = vmatpush.msra.mxu0 %v300
      %1478 = vmatpush.msra.mxu0 %v297
      %1479 = vmatpush.msra.mxu0 %v294
      %1480 = vmatpush.msra.mxu0 %v291
      %1481 = vmatpush.msra.mxu0 %v288
      %1482 = vmatpush.msra.mxu0 %v285
      %1483 = vmatpush.msra.mxu0 %v282
      %1484 = vmatpush.msra.mxu0 %v279
      %1485 = vmatpush.msra.mxu0 %v276
      %1486 = vmatpush.msra.mxu0 %v273
      %1487 = vmatpush.msra.mxu0 %v270
      %1488 = vmatpush.msra.mxu0 %v267
      %1489 = vmatpush.msra.mxu0 %v264
      %1490 = vmatmul.f32.gmra.mxu0 %v1426
      %v1491 = vpop.f32.mrf.mxu0
      %v1492 = vadd.f32 0.0, %v1491
      %1493 = vdwg.mxu0
      %v1494 = vadd.f32 %v1431, %v1452
      %v1495 = vxor.u32 %v1494, 2147483648
      %v1496 = vmul.f32 %v1495, 1.442695
      %v1497 = vpow.pop %v1496
      %v1498 = vadd.f32 %v1497, 1.0
      %v1499 = vrcp.pop %v1498
      %v1500 = vmul.f32 %v1498, %v1499
      %v1501 = vsub.f32 1.0, %v1500
      %v1502 = vmul.f32 %v1499, %v1501
      %v1503 = vadd.f32 %v1499, %v1502
      %vm1504 = vweird.f32 %v1498
      %vm1505 = vweird.f32 %v1499
      %vm1506 = vmor %vm1504, %vm1505
      %v1507 = vsel %vm1506, %v1499, %v1503
      %v1508 = vand.u32 2147483647, %v1498
      %vm1509 = vcmp.eq.f32.partialorder %v1508, 8.507059e+37
      %v1510 = vand.u32 %v1498, 2147483648
      %v1511 = vor.u32 1.1754944e-38, %v1510
      %v1512 = vsel %vm1509, %v1511, %v1507
      %v1513 = vmul.f32 1.0, %v1512
      %v1514 = vadd.f32 %v1432, %v1472
      %v1515 = vxor.u32 %v1514, 2147483648
      %v1516 = vmul.f32 %v1515, 1.442695
      %v1517 = vpow.pop %v1516
      %v1518 = vadd.f32 %v1517, 1.0
      %v1519 = vrcp.pop %v1518
      %v1520 = vmul.f32 %v1518, %v1519
      %v1521 = vsub.f32 1.0, %v1520
      %v1522 = vmul.f32 %v1519, %v1521
      %v1523 = vadd.f32 %v1519, %v1522
      %vm1524 = vweird.f32 %v1518
      %vm1525 = vweird.f32 %v1519
      %vm1526 = vmor %vm1524, %vm1525
      %v1527 = vsel %vm1526, %v1519, %v1523
      %v1528 = vand.u32 2147483647, %v1518
      %vm1529 = vcmp.eq.f32.partialorder %v1528, 8.507059e+37
      %v1530 = vand.u32 %v1518, 2147483648
      %v1531 = vor.u32 1.1754944e-38, %v1530
      %v1532 = vsel %vm1529, %v1531, %v1527
      %v1533 = vmul.f32 1.0, %v1532
      %v1534 = vadd.f32 %v1492, %v546
      %v1535 = vmul.f32 %v1513, %v1534
      %v1536 = vadd.f32 %v1433, %v1535
      %v1537 = vtanh.pop %v1536
      %v1538 = vsub.f32 1.0, %v1533
      %v1539 = vmul.f32 %v1538, %v1537
      %v1540 = vmul.f32 %v1533, %v1426
      %v1541 = vadd.f32 %v1539, %v1540
      %1542 = vmatpush.msra.mxu0 %v371
      %1543 = vmatpush.msra.mxu0 %v367
      %1544 = vmatpush.msra.mxu0 %v363
      %1545 = vmatpush.msra.mxu0 %v359
      %1546 = vmatpush.msra.mxu0 %v355
      %1547 = vmatpush.msra.mxu0 %v351
      %1548 = vmatpush.msra.mxu0 %v347
      %1549 = vmatpush.msra.mxu0 %v343
      %1550 = vmatpush.msra.mxu0 %v339
      %1551 = vmatpush.msra.mxu0 %v335
      %1552 = vmatpush.msra.mxu0 %v331
      %1553 = vmatpush.msra.mxu0 %v327
      %1554 = vmatpush.msra.mxu0 %v323
      %1555 = vmatpush.msra.mxu0 %v319
      %1556 = vmatpush.msra.mxu0 %v315
      %1557 = vmatpush.msra.mxu0 %v311
      %1558 = vmatmul.f32.gmra.mxu0 %v1541
      %v1559 = vpop.f32.mrf.mxu0
      %v1560 = vadd.f32 %v557, %v1559
      %1561 = vdwg.mxu0
      %1562 = vmatpush.msra.mxu0 %v435
      %1563 = vmatpush.msra.mxu0 %v431
      %1564 = vmatpush.msra.mxu0 %v427
      %1565 = vmatpush.msra.mxu0 %v423
      %1566 = vmatpush.msra.mxu0 %v419
      %1567 = vmatpush.msra.mxu0 %v415
      %1568 = vmatpush.msra.mxu0 %v411
      %1569 = vmatpush.msra.mxu0 %v407
      %1570 = vmatpush.msra.mxu0 %v403
      %1571 = vmatpush.msra.mxu0 %v399
      %1572 = vmatpush.msra.mxu0 %v395
      %1573 = vmatpush.msra.mxu0 %v391
      %1574 = vmatpush.msra.mxu0 %v387
      %1575 = vmatpush.msra.mxu0 %v383
      %1576 = vmatpush.msra.mxu0 %v379
      %1577 = vmatpush.msra.mxu0 %v375
      %1578 = vmatmul.f32.gmra.mxu0 %v1427
      %v1579 = vpop.f32.mrf.mxu0
      %v1580 = vadd.f32 %v1560, %v1579
      %1581 = vdwg.mxu0
      %1582 = vmatpush.msra.mxu0 %v372
      %1583 = vmatpush.msra.mxu0 %v368
      %1584 = vmatpush.msra.mxu0 %v364
      %1585 = vmatpush.msra.mxu0 %v360
      %1586 = vmatpush.msra.mxu0 %v356
      %1587 = vmatpush.msra.mxu0 %v352
      %1588 = vmatpush.msra.mxu0 %v348
      %1589 = vmatpush.msra.mxu0 %v344
      %1590 = vmatpush.msra.mxu0 %v340
      %1591 = vmatpush.msra.mxu0 %v336
      %1592 = vmatpush.msra.mxu0 %v332
      %1593 = vmatpush.msra.mxu0 %v328
      %1594 = vmatpush.msra.mxu0 %v324
      %1595 = vmatpush.msra.mxu0 %v320
      %1596 = vmatpush.msra.mxu0 %v316
      %1597 = vmatpush.msra.mxu0 %v312
      %1598 = vmatmul.f32.gmra.mxu0 %v1541
      %v1599 = vpop.f32.mrf.mxu0
      %v1600 = vadd.f32 %v558, %v1599
      %1601 = vdwg.mxu0
      %1602 = vmatpush.msra.mxu0 %v436
      %1603 = vmatpush.msra.mxu0 %v432
      %1604 = vmatpush.msra.mxu0 %v428
      %1605 = vmatpush.msra.mxu0 %v424
      %1606 = vmatpush.msra.mxu0 %v420
      %1607 = vmatpush.msra.mxu0 %v416
      %1608 = vmatpush.msra.mxu0 %v412
      %1609 = vmatpush.msra.mxu0 %v408
      %1610 = vmatpush.msra.mxu0 %v404
      %1611 = vmatpush.msra.mxu0 %v400
      %1612 = vmatpush.msra.mxu0 %v396
      %1613 = vmatpush.msra.mxu0 %v392
      %1614 = vmatpush.msra.mxu0 %v388
      %1615 = vmatpush.msra.mxu0 %v384
      %1616 = vmatpush.msra.mxu0 %v380
      %1617 = vmatpush.msra.mxu0 %v376
      %1618 = vmatmul.f32.gmra.mxu0 %v1427
      %v1619 = vpop.f32.mrf.mxu0
      %v1620 = vadd.f32 %v1600, %v1619
      %1621 = vdwg.mxu0
      %1622 = vmatpush.msra.mxu0 %v373
      %1623 = vmatpush.msra.mxu0 %v369
      %1624 = vmatpush.msra.mxu0 %v365
      %1625 = vmatpush.msra.mxu0 %v361
      %1626 = vmatpush.msra.mxu0 %v357
      %1627 = vmatpush.msra.mxu0 %v353
      %1628 = vmatpush.msra.mxu0 %v349
      %1629 = vmatpush.msra.mxu0 %v345
      %1630 = vmatpush.msra.mxu0 %v341
      %1631 = vmatpush.msra.mxu0 %v337
      %1632 = vmatpush.msra.mxu0 %v333
      %1633 = vmatpush.msra.mxu0 %v329
      %1634 = vmatpush.msra.mxu0 %v325
      %1635 = vmatpush.msra.mxu0 %v321
      %1636 = vmatpush.msra.mxu0 %v317
      %1637 = vmatpush.msra.mxu0 %v313
      %1638 = vmatmul.f32.gmra.mxu0 %v1541
      %v1639 = vpop.f32.mrf.mxu0
      %v1640 = vadd.f32 %v559, %v1639
      %1641 = vdwg.mxu0
      %1642 = vmatpush.msra.mxu0 %v437
      %1643 = vmatpush.msra.mxu0 %v433
      %1644 = vmatpush.msra.mxu0 %v429
      %1645 = vmatpush.msra.mxu0 %v425
      %1646 = vmatpush.msra.mxu0 %v421
      %1647 = vmatpush.msra.mxu0 %v417
      %1648 = vmatpush.msra.mxu0 %v413
      %1649 = vmatpush.msra.mxu0 %v409
      %1650 = vmatpush.msra.mxu0 %v405
      %1651 = vmatpush.msra.mxu0 %v401
      %1652 = vmatpush.msra.mxu0 %v397
      %1653 = vmatpush.msra.mxu0 %v393
      %1654 = vmatpush.msra.mxu0 %v389
      %1655 = vmatpush.msra.mxu0 %v385
      %1656 = vmatpush.msra.mxu0 %v381
      %1657 = vmatpush.msra.mxu0 %v377
      %1658 = vmatmul.f32.gmra.mxu0 %v1427
      %v1659 = vpop.f32.mrf.mxu0
      %v1660 = vadd.f32 %v1640, %v1659
      %1661 = vdwg.mxu0
      %1662 = vmatpush.msra.mxu0 %v374
      %1663 = vmatpush.msra.mxu0 %v370
      %1664 = vmatpush.msra.mxu0 %v366
      %1665 = vmatpush.msra.mxu0 %v362
      %1666 = vmatpush.msra.mxu0 %v358
      %1667 = vmatpush.msra.mxu0 %v354
      %1668 = vmatpush.msra.mxu0 %v350
      %1669 = vmatpush.msra.mxu0 %v346
      %1670 = vmatpush.msra.mxu0 %v342
      %1671 = vmatpush.msra.mxu0 %v338
      %1672 = vmatpush.msra.mxu0 %v334
      %1673 = vmatpush.msra.mxu0 %v330
      %1674 = vmatpush.msra.mxu0 %v326
      %1675 = vmatpush.msra.mxu0 %v322
      %1676 = vmatpush.msra.mxu0 %v318
      %1677 = vmatpush.msra.mxu0 %v314
      %1678 = vmatmul.f32.gmra.mxu0 %v1541
      %v1679 = vpop.f32.mrf.mxu0
      %v1680 = vadd.f32 %v560, %v1679
      %1681 = vdwg.mxu0
      %1682 = vmatpush.msra.mxu0 %v438
      %1683 = vmatpush.msra.mxu0 %v434
      %1684 = vmatpush.msra.mxu0 %v430
      %1685 = vmatpush.msra.mxu0 %v426
      %1686 = vmatpush.msra.mxu0 %v422
      %1687 = vmatpush.msra.mxu0 %v418
      %1688 = vmatpush.msra.mxu0 %v414
      %1689 = vmatpush.msra.mxu0 %v410
      %1690 = vmatpush.msra.mxu0 %v406
      %1691 = vmatpush.msra.mxu0 %v402
      %1692 = vmatpush.msra.mxu0 %v398
      %1693 = vmatpush.msra.mxu0 %v394
      %1694 = vmatpush.msra.mxu0 %v390
      %1695 = vmatpush.msra.mxu0 %v386
      %1696 = vmatpush.msra.mxu0 %v382
      %1697 = vmatpush.msra.mxu0 %v378
      %1698 = vmatmul.f32.gmra.mxu0 %v1427
      %v1699 = vpop.f32.mrf.mxu0
      %v1700 = vadd.f32 %v1680, %v1699
      %1701 = vdwg.mxu0
      %v1702 = vxor.u32 %v1580, 2147483648
      %v1703 = vmul.f32 %v1702, 1.442695
      %v1704 = vpow.pop %v1703
      %v1705 = vadd.f32 %v1704, 1.0
      %v1706 = vrcp.pop %v1705
      %v1707 = vmul.f32 %v1705, %v1706
      %v1708 = vsub.f32 1.0, %v1707
      %v1709 = vmul.f32 %v1706, %v1708
      %v1710 = vadd.f32 %v1706, %v1709
      %vm1711 = vweird.f32 %v1705
      %vm1712 = vweird.f32 %v1706
      %vm1713 = vmor %vm1711, %vm1712
      %v1714 = vsel %vm1713, %v1706, %v1710
      %v1715 = vand.u32 2147483647, %v1705
      %vm1716 = vcmp.eq.f32.partialorder %v1715, 8.507059e+37
      %v1717 = vand.u32 %v1705, 2147483648
      %v1718 = vor.u32 1.1754944e-38, %v1717
      %v1719 = vsel %vm1716, %v1718, %v1714
      %v1720 = vmul.f32 1.0, %v1719
      %v1721 = vxor.u32 %v1620, 2147483648
      %v1722 = vmul.f32 %v1721, 1.442695
      %v1723 = vpow.pop %v1722
      %v1724 = vadd.f32 %v1723, 1.0
      %v1725 = vrcp.pop %v1724
      %v1726 = vmul.f32 %v1724, %v1725
      %v1727 = vsub.f32 1.0, %v1726
      %v1728 = vmul.f32 %v1725, %v1727
      %v1729 = vadd.f32 %v1725, %v1728
      %vm1730 = vweird.f32 %v1724
      %vm1731 = vweird.f32 %v1725
      %vm1732 = vmor %vm1730, %vm1731
      %v1733 = vsel %vm1732, %v1725, %v1729
      %v1734 = vand.u32 2147483647, %v1724
      %vm1735 = vcmp.eq.f32.partialorder %v1734, 8.507059e+37
      %v1736 = vand.u32 %v1724, 2147483648
      %v1737 = vor.u32 1.1754944e-38, %v1736
      %v1738 = vsel %vm1735, %v1737, %v1733
      %v1739 = vmul.f32 1.0, %v1738
      %v1740 = vmul.f32 %v1720, %v1700
      %v1741 = vadd.f32 %v1660, %v1740
      %v1742 = vtanh.pop %v1741
      %v1743 = vsub.f32 1.0, %v1739
      %v1744 = vmul.f32 %v1743, %v1742
      %v1745 = vmul.f32 %v1739, %v1427
      %v1746 = vadd.f32 %v1744, %v1745
      %s1747 = sadd.s32 %s770, 3
      %p1748 = scmp.lt.s32.totalorder %s1747, 20
      %s1749 = scalar_select %p1748, 1, 0
      %v1750 = vstv %s1749
      %vm1751 = vcmp.eq.s32.totalorder %v1750, 1
      %v1752 = vsel %vm1751, %v1541, %v1426
      %v1753 = vsel %vm1751, %v1746, %v1427
      %s1754 = scalar_lea.vmem %s254, 24
      %1755 = vst [vmem:[%s1754] sm:$0xff] %v1753
      %s1756 = scalar_lea.vmem %s248, 96
      %v1757 = vld [vmem:[%s1756] sm:$0xff]
      %v1758 = vld [vmem:[%s1756 + $0x8] sm:$0xff]
      %v1759 = vld [vmem:[%s1756 + $0x10] sm:$0xff]
      %1760 = vmatpush.msra.mxu0 %v307
      %1761 = vmatpush.msra.mxu0 %v304
      %1762 = vmatpush.msra.mxu0 %v301
      %1763 = vmatpush.msra.mxu0 %v298
      %1764 = vmatpush.msra.mxu0 %v295
      %1765 = vmatpush.msra.mxu0 %v292
      %1766 = vmatpush.msra.mxu0 %v289
      %1767 = vmatpush.msra.mxu0 %v286
      %1768 = vmatpush.msra.mxu0 %v283
      %1769 = vmatpush.msra.mxu0 %v280
      %1770 = vmatpush.msra.mxu0 %v277
      %1771 = vmatpush.msra.mxu0 %v274
      %1772 = vmatpush.msra.mxu0 %v271
      %1773 = vmatpush.msra.mxu0 %v268
      %1774 = vmatpush.msra.mxu0 %v265
      %1775 = vmatpush.msra.mxu0 %v262
      %1776 = vmatmul.f32.gmra.mxu0 %v1752
      %v1777 = vpop.f32.mrf.mxu0
      %v1778 = vadd.f32 0.0, %v1777
      %1779 = vdwg.mxu0
      %1780 = vmatpush.msra.mxu0 %v308
      %1781 = vmatpush.msra.mxu0 %v305
      %1782 = vmatpush.msra.mxu0 %v302
      %1783 = vmatpush.msra.mxu0 %v299
      %1784 = vmatpush.msra.mxu0 %v296
      %1785 = vmatpush.msra.mxu0 %v293
      %1786 = vmatpush.msra.mxu0 %v290
      %1787 = vmatpush.msra.mxu0 %v287
      %1788 = vmatpush.msra.mxu0 %v284
      %1789 = vmatpush.msra.mxu0 %v281
      %1790 = vmatpush.msra.mxu0 %v278
      %1791 = vmatpush.msra.mxu0 %v275
      %1792 = vmatpush.msra.mxu0 %v272
      %1793 = vmatpush.msra.mxu0 %v269
      %1794 = vmatpush.msra.mxu0 %v266
      %1795 = vmatpush.msra.mxu0 %v263
      %1796 = vmatmul.f32.gmra.mxu0 %v1752
      %v1797 = vpop.f32.mrf.mxu0
      %v1798 = vadd.f32 0.0, %v1797
      %1799 = vdwg.mxu0
      %1800 = vmatpush.msra.mxu0 %v309
      %1801 = vmatpush.msra.mxu0 %v306
      %1802 = vmatpush.msra.mxu0 %v303
      %1803 = vmatpush.msra.mxu0 %v300
      %1804 = vmatpush.msra.mxu0 %v297
      %1805 = vmatpush.msra.mxu0 %v294
      %1806 = vmatpush.msra.mxu0 %v291
      %1807 = vmatpush.msra.mxu0 %v288
      %1808 = vmatpush.msra.mxu0 %v285
      %1809 = vmatpush.msra.mxu0 %v282
      %1810 = vmatpush.msra.mxu0 %v279
      %1811 = vmatpush.msra.mxu0 %v276
      %1812 = vmatpush.msra.mxu0 %v273
      %1813 = vmatpush.msra.mxu0 %v270
      %1814 = vmatpush.msra.mxu0 %v267
      %1815 = vmatpush.msra.mxu0 %v264
      %1816 = vmatmul.f32.gmra.mxu0 %v1752
      %v1817 = vpop.f32.mrf.mxu0
      %v1818 = vadd.f32 0.0, %v1817
      %1819 = vdwg.mxu0
      %v1820 = vadd.f32 %v1757, %v1778
      %v1821 = vxor.u32 %v1820, 2147483648
      %v1822 = vmul.f32 %v1821, 1.442695
      %v1823 = vpow.pop %v1822
      %v1824 = vadd.f32 %v1823, 1.0
      %v1825 = vrcp.pop %v1824
      %v1826 = vmul.f32 %v1824, %v1825
      %v1827 = vsub.f32 1.0, %v1826
      %v1828 = vmul.f32 %v1825, %v1827
      %v1829 = vadd.f32 %v1825, %v1828
      %vm1830 = vweird.f32 %v1824
      %vm1831 = vweird.f32 %v1825
      %vm1832 = vmor %vm1830, %vm1831
      %v1833 = vsel %vm1832, %v1825, %v1829
      %v1834 = vand.u32 2147483647, %v1824
      %vm1835 = vcmp.eq.f32.partialorder %v1834, 8.507059e+37
      %v1836 = vand.u32 %v1824, 2147483648
      %v1837 = vor.u32 1.1754944e-38, %v1836
      %v1838 = vsel %vm1835, %v1837, %v1833
      %v1839 = vmul.f32 1.0, %v1838
      %v1840 = vadd.f32 %v1758, %v1798
      %v1841 = vxor.u32 %v1840, 2147483648
      %v1842 = vmul.f32 %v1841, 1.442695
      %v1843 = vpow.pop %v1842
      %v1844 = vadd.f32 %v1843, 1.0
      %v1845 = vrcp.pop %v1844
      %v1846 = vmul.f32 %v1844, %v1845
      %v1847 = vsub.f32 1.0, %v1846
      %v1848 = vmul.f32 %v1845, %v1847
      %v1849 = vadd.f32 %v1845, %v1848
      %vm1850 = vweird.f32 %v1844
      %vm1851 = vweird.f32 %v1845
      %vm1852 = vmor %vm1850, %vm1851
      %v1853 = vsel %vm1852, %v1845, %v1849
      %v1854 = vand.u32 2147483647, %v1844
      %vm1855 = vcmp.eq.f32.partialorder %v1854, 8.507059e+37
      %v1856 = vand.u32 %v1844, 2147483648
      %v1857 = vor.u32 1.1754944e-38, %v1856
      %v1858 = vsel %vm1855, %v1857, %v1853
      %v1859 = vmul.f32 1.0, %v1858
      %v1860 = vadd.f32 %v1818, %v546
      %v1861 = vmul.f32 %v1839, %v1860
      %v1862 = vadd.f32 %v1759, %v1861
      %v1863 = vtanh.pop %v1862
      %v1864 = vsub.f32 1.0, %v1859
      %v1865 = vmul.f32 %v1864, %v1863
      %v1866 = vmul.f32 %v1859, %v1752
      %v1867 = vadd.f32 %v1865, %v1866
      %1868 = vmatpush.msra.mxu0 %v371
      %1869 = vmatpush.msra.mxu0 %v367
      %1870 = vmatpush.msra.mxu0 %v363
      %1871 = vmatpush.msra.mxu0 %v359
      %1872 = vmatpush.msra.mxu0 %v355
      %1873 = vmatpush.msra.mxu0 %v351
      %1874 = vmatpush.msra.mxu0 %v347
      %1875 = vmatpush.msra.mxu0 %v343
      %1876 = vmatpush.msra.mxu0 %v339
      %1877 = vmatpush.msra.mxu0 %v335
      %1878 = vmatpush.msra.mxu0 %v331
      %1879 = vmatpush.msra.mxu0 %v327
      %1880 = vmatpush.msra.mxu0 %v323
      %1881 = vmatpush.msra.mxu0 %v319
      %1882 = vmatpush.msra.mxu0 %v315
      %1883 = vmatpush.msra.mxu0 %v311
      %1884 = vmatmul.f32.gmra.mxu0 %v1867
      %v1885 = vpop.f32.mrf.mxu0
      %v1886 = vadd.f32 %v557, %v1885
      %1887 = vdwg.mxu0
      %1888 = vmatpush.msra.mxu0 %v435
      %1889 = vmatpush.msra.mxu0 %v431
      %1890 = vmatpush.msra.mxu0 %v427
      %1891 = vmatpush.msra.mxu0 %v423
      %1892 = vmatpush.msra.mxu0 %v419
      %1893 = vmatpush.msra.mxu0 %v415
      %1894 = vmatpush.msra.mxu0 %v411
      %1895 = vmatpush.msra.mxu0 %v407
      %1896 = vmatpush.msra.mxu0 %v403
      %1897 = vmatpush.msra.mxu0 %v399
      %1898 = vmatpush.msra.mxu0 %v395
      %1899 = vmatpush.msra.mxu0 %v391
      %1900 = vmatpush.msra.mxu0 %v387
      %1901 = vmatpush.msra.mxu0 %v383
      %1902 = vmatpush.msra.mxu0 %v379
      %1903 = vmatpush.msra.mxu0 %v375
      %1904 = vmatmul.f32.gmra.mxu0 %v1753
      %v1905 = vpop.f32.mrf.mxu0
      %v1906 = vadd.f32 %v1886, %v1905
      %1907 = vdwg.mxu0
      %1908 = vmatpush.msra.mxu0 %v372
      %1909 = vmatpush.msra.mxu0 %v368
      %1910 = vmatpush.msra.mxu0 %v364
      %1911 = vmatpush.msra.mxu0 %v360
      %1912 = vmatpush.msra.mxu0 %v356
      %1913 = vmatpush.msra.mxu0 %v352
      %1914 = vmatpush.msra.mxu0 %v348
      %1915 = vmatpush.msra.mxu0 %v344
      %1916 = vmatpush.msra.mxu0 %v340
      %1917 = vmatpush.msra.mxu0 %v336
      %1918 = vmatpush.msra.mxu0 %v332
      %1919 = vmatpush.msra.mxu0 %v328
      %1920 = vmatpush.msra.mxu0 %v324
      %1921 = vmatpush.msra.mxu0 %v320
      %1922 = vmatpush.msra.mxu0 %v316
      %1923 = vmatpush.msra.mxu0 %v312
      %1924 = vmatmul.f32.gmra.mxu0 %v1867
      %v1925 = vpop.f32.mrf.mxu0
      %v1926 = vadd.f32 %v558, %v1925
      %1927 = vdwg.mxu0
      %1928 = vmatpush.msra.mxu0 %v436
      %1929 = vmatpush.msra.mxu0 %v432
      %1930 = vmatpush.msra.mxu0 %v428
      %1931 = vmatpush.msra.mxu0 %v424
      %1932 = vmatpush.msra.mxu0 %v420
      %1933 = vmatpush.msra.mxu0 %v416
      %1934 = vmatpush.msra.mxu0 %v412
      %1935 = vmatpush.msra.mxu0 %v408
      %1936 = vmatpush.msra.mxu0 %v404
      %1937 = vmatpush.msra.mxu0 %v400
      %1938 = vmatpush.msra.mxu0 %v396
      %1939 = vmatpush.msra.mxu0 %v392
      %1940 = vmatpush.msra.mxu0 %v388
      %1941 = vmatpush.msra.mxu0 %v384
      %1942 = vmatpush.msra.mxu0 %v380
      %1943 = vmatpush.msra.mxu0 %v376
      %1944 = vmatmul.f32.gmra.mxu0 %v1753
      %v1945 = vpop.f32.mrf.mxu0
      %v1946 = vadd.f32 %v1926, %v1945
      %1947 = vdwg.mxu0
      %1948 = vmatpush.msra.mxu0 %v373
      %1949 = vmatpush.msra.mxu0 %v369
      %1950 = vmatpush.msra.mxu0 %v365
      %1951 = vmatpush.msra.mxu0 %v361
      %1952 = vmatpush.msra.mxu0 %v357
      %1953 = vmatpush.msra.mxu0 %v353
      %1954 = vmatpush.msra.mxu0 %v349
      %1955 = vmatpush.msra.mxu0 %v345
      %1956 = vmatpush.msra.mxu0 %v341
      %1957 = vmatpush.msra.mxu0 %v337
      %1958 = vmatpush.msra.mxu0 %v333
      %1959 = vmatpush.msra.mxu0 %v329
      %1960 = vmatpush.msra.mxu0 %v325
      %1961 = vmatpush.msra.mxu0 %v321
      %1962 = vmatpush.msra.mxu0 %v317
      %1963 = vmatpush.msra.mxu0 %v313
      %1964 = vmatmul.f32.gmra.mxu0 %v1867
      %v1965 = vpop.f32.mrf.mxu0
      %v1966 = vadd.f32 %v559, %v1965
      %1967 = vdwg.mxu0
      %1968 = vmatpush.msra.mxu0 %v437
      %1969 = vmatpush.msra.mxu0 %v433
      %1970 = vmatpush.msra.mxu0 %v429
      %1971 = vmatpush.msra.mxu0 %v425
      %1972 = vmatpush.msra.mxu0 %v421
      %1973 = vmatpush.msra.mxu0 %v417
      %1974 = vmatpush.msra.mxu0 %v413
      %1975 = vmatpush.msra.mxu0 %v409
      %1976 = vmatpush.msra.mxu0 %v405
      %1977 = vmatpush.msra.mxu0 %v401
      %1978 = vmatpush.msra.mxu0 %v397
      %1979 = vmatpush.msra.mxu0 %v393
      %1980 = vmatpush.msra.mxu0 %v389
      %1981 = vmatpush.msra.mxu0 %v385
      %1982 = vmatpush.msra.mxu0 %v381
      %1983 = vmatpush.msra.mxu0 %v377
      %1984 = vmatmul.f32.gmra.mxu0 %v1753
      %v1985 = vpop.f32.mrf.mxu0
      %v1986 = vadd.f32 %v1966, %v1985
      %1987 = vdwg.mxu0
      %1988 = vmatpush.msra.mxu0 %v374
      %1989 = vmatpush.msra.mxu0 %v370
      %1990 = vmatpush.msra.mxu0 %v366
      %1991 = vmatpush.msra.mxu0 %v362
      %1992 = vmatpush.msra.mxu0 %v358
      %1993 = vmatpush.msra.mxu0 %v354
      %1994 = vmatpush.msra.mxu0 %v350
      %1995 = vmatpush.msra.mxu0 %v346
      %1996 = vmatpush.msra.mxu0 %v342
      %1997 = vmatpush.msra.mxu0 %v338
      %1998 = vmatpush.msra.mxu0 %v334
      %1999 = vmatpush.msra.mxu0 %v330
      %2000 = vmatpush.msra.mxu0 %v326
      %2001 = vmatpush.msra.mxu0 %v322
      %2002 = vmatpush.msra.mxu0 %v318
      %2003 = vmatpush.msra.mxu0 %v314
      %2004 = vmatmul.f32.gmra.mxu0 %v1867
      %v2005 = vpop.f32.mrf.mxu0
      %v2006 = vadd.f32 %v560, %v2005
      %2007 = vdwg.mxu0
      %2008 = vmatpush.msra.mxu0 %v438
      %2009 = vmatpush.msra.mxu0 %v434
      %2010 = vmatpush.msra.mxu0 %v430
      %2011 = vmatpush.msra.mxu0 %v426
      %2012 = vmatpush.msra.mxu0 %v422
      %2013 = vmatpush.msra.mxu0 %v418
      %2014 = vmatpush.msra.mxu0 %v414
      %2015 = vmatpush.msra.mxu0 %v410
      %2016 = vmatpush.msra.mxu0 %v406
      %2017 = vmatpush.msra.mxu0 %v402
      %2018 = vmatpush.msra.mxu0 %v398
      %2019 = vmatpush.msra.mxu0 %v394
      %2020 = vmatpush.msra.mxu0 %v390
      %2021 = vmatpush.msra.mxu0 %v386
      %2022 = vmatpush.msra.mxu0 %v382
      %2023 = vmatpush.msra.mxu0 %v378
      %2024 = vmatmul.f32.gmra.mxu0 %v1753
      %v2025 = vpop.f32.mrf.mxu0
      %v2026 = vadd.f32 %v2006, %v2025
      %2027 = vdwg.mxu0
      %v2028 = vxor.u32 %v1906, 2147483648
      %v2029 = vmul.f32 %v2028, 1.442695
      %v2030 = vpow.pop %v2029
      %v2031 = vadd.f32 %v2030, 1.0
      %v2032 = vrcp.pop %v2031
      %v2033 = vmul.f32 %v2031, %v2032
      %v2034 = vsub.f32 1.0, %v2033
      %v2035 = vmul.f32 %v2032, %v2034
      %v2036 = vadd.f32 %v2032, %v2035
      %vm2037 = vweird.f32 %v2031
      %vm2038 = vweird.f32 %v2032
      %vm2039 = vmor %vm2037, %vm2038
      %v2040 = vsel %vm2039, %v2032, %v2036
      %v2041 = vand.u32 2147483647, %v2031
      %vm2042 = vcmp.eq.f32.partialorder %v2041, 8.507059e+37
      %v2043 = vand.u32 %v2031, 2147483648
      %v2044 = vor.u32 1.1754944e-38, %v2043
      %v2045 = vsel %vm2042, %v2044, %v2040
      %v2046 = vmul.f32 1.0, %v2045
      %v2047 = vxor.u32 %v1946, 2147483648
      %v2048 = vmul.f32 %v2047, 1.442695
      %v2049 = vpow.pop %v2048
      %v2050 = vadd.f32 %v2049, 1.0
      %v2051 = vrcp.pop %v2050
      %v2052 = vmul.f32 %v2050, %v2051
      %v2053 = vsub.f32 1.0, %v2052
      %v2054 = vmul.f32 %v2051, %v2053
      %v2055 = vadd.f32 %v2051, %v2054
      %vm2056 = vweird.f32 %v2050
      %vm2057 = vweird.f32 %v2051
      %vm2058 = vmor %vm2056, %vm2057
      %v2059 = vsel %vm2058, %v2051, %v2055
      %v2060 = vand.u32 2147483647, %v2050
      %vm2061 = vcmp.eq.f32.partialorder %v2060, 8.507059e+37
      %v2062 = vand.u32 %v2050, 2147483648
      %v2063 = vor.u32 1.1754944e-38, %v2062
      %v2064 = vsel %vm2061, %v2063, %v2059
      %v2065 = vmul.f32 1.0, %v2064
      %v2066 = vmul.f32 %v2046, %v2026
      %v2067 = vadd.f32 %v1986, %v2066
      %v2068 = vtanh.pop %v2067
      %v2069 = vsub.f32 1.0, %v2065
      %v2070 = vmul.f32 %v2069, %v2068
      %v2071 = vmul.f32 %v2065, %v1753
      %v2072 = vadd.f32 %v2070, %v2071
      %s2073 = sadd.s32 %s770, 4
      %p2074 = scmp.lt.s32.totalorder %s2073, 20
      %s2075 = scalar_select %p2074, 1, 0
      %v2076 = vstv %s2075
      %vm2077 = vcmp.eq.s32.totalorder %v2076, 1
      %v2078 = vsel %vm2077, %v1867, %v1752
      %v2079 = vsel %vm2077, %v2072, %v1753
      %s2080 = scalar_lea.vmem %s254, 32
      %2081 = vst [vmem:[%s2080] sm:$0xff] %v2079
      %s2082 = scalar_lea.vmem %s248, 120
      %v2083 = vld [vmem:[%s2082] sm:$0xff]
      %v2084 = vld [vmem:[%s2082 + $0x8] sm:$0xff]
      %v2085 = vld [vmem:[%s2082 + $0x10] sm:$0xff]
      %2086 = vmatpush.msra.mxu0 %v307
      %2087 = vmatpush.msra.mxu0 %v304
      %2088 = vmatpush.msra.mxu0 %v301
      %2089 = vmatpush.msra.mxu0 %v298
      %2090 = vmatpush.msra.mxu0 %v295
      %2091 = vmatpush.msra.mxu0 %v292
      %2092 = vmatpush.msra.mxu0 %v289
      %2093 = vmatpush.msra.mxu0 %v286
      %2094 = vmatpush.msra.mxu0 %v283
      %2095 = vmatpush.msra.mxu0 %v280
      %2096 = vmatpush.msra.mxu0 %v277
      %2097 = vmatpush.msra.mxu0 %v274
      %2098 = vmatpush.msra.mxu0 %v271
      %2099 = vmatpush.msra.mxu0 %v268
      %2100 = vmatpush.msra.mxu0 %v265
      %2101 = vmatpush.msra.mxu0 %v262
      %2102 = vmatmul.f32.gmra.mxu0 %v2078
      %v2103 = vpop.f32.mrf.mxu0
      %v2104 = vadd.f32 0.0, %v2103
      %2105 = vdwg.mxu0
      %2106 = vmatpush.msra.mxu0 %v308
      %2107 = vmatpush.msra.mxu0 %v305
      %2108 = vmatpush.msra.mxu0 %v302
      %2109 = vmatpush.msra.mxu0 %v299
      %2110 = vmatpush.msra.mxu0 %v296
      %2111 = vmatpush.msra.mxu0 %v293
      %2112 = vmatpush.msra.mxu0 %v290
      %2113 = vmatpush.msra.mxu0 %v287
      %2114 = vmatpush.msra.mxu0 %v284
      %2115 = vmatpush.msra.mxu0 %v281
      %2116 = vmatpush.msra.mxu0 %v278
      %2117 = vmatpush.msra.mxu0 %v275
      %2118 = vmatpush.msra.mxu0 %v272
      %2119 = vmatpush.msra.mxu0 %v269
      %2120 = vmatpush.msra.mxu0 %v266
      %2121 = vmatpush.msra.mxu0 %v263
      %2122 = vmatmul.f32.gmra.mxu0 %v2078
      %v2123 = vpop.f32.mrf.mxu0
      %v2124 = vadd.f32 0.0, %v2123
      %2125 = vdwg.mxu0
      %2126 = vmatpush.msra.mxu0 %v309
      %2127 = vmatpush.msra.mxu0 %v306
      %2128 = vmatpush.msra.mxu0 %v303
      %2129 = vmatpush.msra.mxu0 %v300
      %2130 = vmatpush.msra.mxu0 %v297
      %2131 = vmatpush.msra.mxu0 %v294
      %2132 = vmatpush.msra.mxu0 %v291
      %2133 = vmatpush.msra.mxu0 %v288
      %2134 = vmatpush.msra.mxu0 %v285
      %2135 = vmatpush.msra.mxu0 %v282
      %2136 = vmatpush.msra.mxu0 %v279
      %2137 = vmatpush.msra.mxu0 %v276
      %2138 = vmatpush.msra.mxu0 %v273
      %2139 = vmatpush.msra.mxu0 %v270
      %2140 = vmatpush.msra.mxu0 %v267
      %2141 = vmatpush.msra.mxu0 %v264
      %2142 = vmatmul.f32.gmra.mxu0 %v2078
      %v2143 = vpop.f32.mrf.mxu0
      %v2144 = vadd.f32 0.0, %v2143
      %2145 = vdwg.mxu0
      %v2146 = vadd.f32 %v2083, %v2104
      %v2147 = vxor.u32 %v2146, 2147483648
      %v2148 = vmul.f32 %v2147, 1.442695
      %v2149 = vpow.pop %v2148
      %v2150 = vadd.f32 %v2149, 1.0
      %v2151 = vrcp.pop %v2150
      %v2152 = vmul.f32 %v2150, %v2151
      %v2153 = vsub.f32 1.0, %v2152
      %v2154 = vmul.f32 %v2151, %v2153
      %v2155 = vadd.f32 %v2151, %v2154
      %vm2156 = vweird.f32 %v2150
      %vm2157 = vweird.f32 %v2151
      %vm2158 = vmor %vm2156, %vm2157
      %v2159 = vsel %vm2158, %v2151, %v2155
      %v2160 = vand.u32 2147483647, %v2150
      %vm2161 = vcmp.eq.f32.partialorder %v2160, 8.507059e+37
      %v2162 = vand.u32 %v2150, 2147483648
      %v2163 = vor.u32 1.1754944e-38, %v2162
      %v2164 = vsel %vm2161, %v2163, %v2159
      %v2165 = vmul.f32 1.0, %v2164
      %v2166 = vadd.f32 %v2084, %v2124
      %v2167 = vxor.u32 %v2166, 2147483648
      %v2168 = vmul.f32 %v2167, 1.442695
      %v2169 = vpow.pop %v2168
      %v2170 = vadd.f32 %v2169, 1.0
      %v2171 = vrcp.pop %v2170
      %v2172 = vmul.f32 %v2170, %v2171
      %v2173 = vsub.f32 1.0, %v2172
      %v2174 = vmul.f32 %v2171, %v2173
      %v2175 = vadd.f32 %v2171, %v2174
      %vm2176 = vweird.f32 %v2170
      %vm2177 = vweird.f32 %v2171
      %vm2178 = vmor %vm2176, %vm2177
      %v2179 = vsel %vm2178, %v2171, %v2175
      %v2180 = vand.u32 2147483647, %v2170
      %vm2181 = vcmp.eq.f32.partialorder %v2180, 8.507059e+37
      %v2182 = vand.u32 %v2170, 2147483648
      %v2183 = vor.u32 1.1754944e-38, %v2182
      %v2184 = vsel %vm2181, %v2183, %v2179
      %v2185 = vmul.f32 1.0, %v2184
      %v2186 = vadd.f32 %v2144, %v546
      %v2187 = vmul.f32 %v2165, %v2186
      %v2188 = vadd.f32 %v2085, %v2187
      %v2189 = vtanh.pop %v2188
      %v2190 = vsub.f32 1.0, %v2185
      %v2191 = vmul.f32 %v2190, %v2189
      %v2192 = vmul.f32 %v2185, %v2078
      %v2193 = vadd.f32 %v2191, %v2192
      %2194 = vmatpush.msra.mxu0 %v371
      %2195 = vmatpush.msra.mxu0 %v367
      %2196 = vmatpush.msra.mxu0 %v363
      %2197 = vmatpush.msra.mxu0 %v359
      %2198 = vmatpush.msra.mxu0 %v355
      %2199 = vmatpush.msra.mxu0 %v351
      %2200 = vmatpush.msra.mxu0 %v347
      %2201 = vmatpush.msra.mxu0 %v343
      %2202 = vmatpush.msra.mxu0 %v339
      %2203 = vmatpush.msra.mxu0 %v335
      %2204 = vmatpush.msra.mxu0 %v331
      %2205 = vmatpush.msra.mxu0 %v327
      %2206 = vmatpush.msra.mxu0 %v323
      %2207 = vmatpush.msra.mxu0 %v319
      %2208 = vmatpush.msra.mxu0 %v315
      %2209 = vmatpush.msra.mxu0 %v311
      %2210 = vmatmul.f32.gmra.mxu0 %v2193
      %v2211 = vpop.f32.mrf.mxu0
      %v2212 = vadd.f32 %v557, %v2211
      %2213 = vdwg.mxu0
      %2214 = vmatpush.msra.mxu0 %v435
      %2215 = vmatpush.msra.mxu0 %v431
      %2216 = vmatpush.msra.mxu0 %v427
      %2217 = vmatpush.msra.mxu0 %v423
      %2218 = vmatpush.msra.mxu0 %v419
      %2219 = vmatpush.msra.mxu0 %v415
      %2220 = vmatpush.msra.mxu0 %v411
      %2221 = vmatpush.msra.mxu0 %v407
      %2222 = vmatpush.msra.mxu0 %v403
      %2223 = vmatpush.msra.mxu0 %v399
      %2224 = vmatpush.msra.mxu0 %v395
      %2225 = vmatpush.msra.mxu0 %v391
      %2226 = vmatpush.msra.mxu0 %v387
      %2227 = vmatpush.msra.mxu0 %v383
      %2228 = vmatpush.msra.mxu0 %v379
      %2229 = vmatpush.msra.mxu0 %v375
      %2230 = vmatmul.f32.gmra.mxu0 %v2079
      %v2231 = vpop.f32.mrf.mxu0
      %v2232 = vadd.f32 %v2212, %v2231
      %2233 = vdwg.mxu0
      %2234 = vmatpush.msra.mxu0 %v372
      %2235 = vmatpush.msra.mxu0 %v368
      %2236 = vmatpush.msra.mxu0 %v364
      %2237 = vmatpush.msra.mxu0 %v360
      %2238 = vmatpush.msra.mxu0 %v356
      %2239 = vmatpush.msra.mxu0 %v352
      %2240 = vmatpush.msra.mxu0 %v348
      %2241 = vmatpush.msra.mxu0 %v344
      %2242 = vmatpush.msra.mxu0 %v340
      %2243 = vmatpush.msra.mxu0 %v336
      %2244 = vmatpush.msra.mxu0 %v332
      %2245 = vmatpush.msra.mxu0 %v328
      %2246 = vmatpush.msra.mxu0 %v324
      %2247 = vmatpush.msra.mxu0 %v320
      %2248 = vmatpush.msra.mxu0 %v316
      %2249 = vmatpush.msra.mxu0 %v312
      %2250 = vmatmul.f32.gmra.mxu0 %v2193
      %v2251 = vpop.f32.mrf.mxu0
      %v2252 = vadd.f32 %v558, %v2251
      %2253 = vdwg.mxu0
      %2254 = vmatpush.msra.mxu0 %v436
      %2255 = vmatpush.msra.mxu0 %v432
      %2256 = vmatpush.msra.mxu0 %v428
      %2257 = vmatpush.msra.mxu0 %v424
      %2258 = vmatpush.msra.mxu0 %v420
      %2259 = vmatpush.msra.mxu0 %v416
      %2260 = vmatpush.msra.mxu0 %v412
      %2261 = vmatpush.msra.mxu0 %v408
      %2262 = vmatpush.msra.mxu0 %v404
      %2263 = vmatpush.msra.mxu0 %v400
      %2264 = vmatpush.msra.mxu0 %v396
      %2265 = vmatpush.msra.mxu0 %v392
      %2266 = vmatpush.msra.mxu0 %v388
      %2267 = vmatpush.msra.mxu0 %v384
      %2268 = vmatpush.msra.mxu0 %v380
      %2269 = vmatpush.msra.mxu0 %v376
      %2270 = vmatmul.f32.gmra.mxu0 %v2079
      %v2271 = vpop.f32.mrf.mxu0
      %v2272 = vadd.f32 %v2252, %v2271
      %2273 = vdwg.mxu0
      %2274 = vmatpush.msra.mxu0 %v373
      %2275 = vmatpush.msra.mxu0 %v369
      %2276 = vmatpush.msra.mxu0 %v365
      %2277 = vmatpush.msra.mxu0 %v361
      %2278 = vmatpush.msra.mxu0 %v357
      %2279 = vmatpush.msra.mxu0 %v353
      %2280 = vmatpush.msra.mxu0 %v349
      %2281 = vmatpush.msra.mxu0 %v345
      %2282 = vmatpush.msra.mxu0 %v341
      %2283 = vmatpush.msra.mxu0 %v337
      %2284 = vmatpush.msra.mxu0 %v333
      %2285 = vmatpush.msra.mxu0 %v329
      %2286 = vmatpush.msra.mxu0 %v325
      %2287 = vmatpush.msra.mxu0 %v321
      %2288 = vmatpush.msra.mxu0 %v317
      %2289 = vmatpush.msra.mxu0 %v313
      %2290 = vmatmul.f32.gmra.mxu0 %v2193
      %v2291 = vpop.f32.mrf.mxu0
      %v2292 = vadd.f32 %v559, %v2291
      %2293 = vdwg.mxu0
      %2294 = vmatpush.msra.mxu0 %v437
      %2295 = vmatpush.msra.mxu0 %v433
      %2296 = vmatpush.msra.mxu0 %v429
      %2297 = vmatpush.msra.mxu0 %v425
      %2298 = vmatpush.msra.mxu0 %v421
      %2299 = vmatpush.msra.mxu0 %v417
      %2300 = vmatpush.msra.mxu0 %v413
      %2301 = vmatpush.msra.mxu0 %v409
      %2302 = vmatpush.msra.mxu0 %v405
      %2303 = vmatpush.msra.mxu0 %v401
      %2304 = vmatpush.msra.mxu0 %v397
      %2305 = vmatpush.msra.mxu0 %v393
      %2306 = vmatpush.msra.mxu0 %v389
      %2307 = vmatpush.msra.mxu0 %v385
      %2308 = vmatpush.msra.mxu0 %v381
      %2309 = vmatpush.msra.mxu0 %v377
      %2310 = vmatmul.f32.gmra.mxu0 %v2079
      %v2311 = vpop.f32.mrf.mxu0
      %v2312 = vadd.f32 %v2292, %v2311
      %2313 = vdwg.mxu0
      %2314 = vmatpush.msra.mxu0 %v374
      %2315 = vmatpush.msra.mxu0 %v370
      %2316 = vmatpush.msra.mxu0 %v366
      %2317 = vmatpush.msra.mxu0 %v362
      %2318 = vmatpush.msra.mxu0 %v358
      %2319 = vmatpush.msra.mxu0 %v354
      %2320 = vmatpush.msra.mxu0 %v350
      %2321 = vmatpush.msra.mxu0 %v346
      %2322 = vmatpush.msra.mxu0 %v342
      %2323 = vmatpush.msra.mxu0 %v338
      %2324 = vmatpush.msra.mxu0 %v334
      %2325 = vmatpush.msra.mxu0 %v330
      %2326 = vmatpush.msra.mxu0 %v326
      %2327 = vmatpush.msra.mxu0 %v322
      %2328 = vmatpush.msra.mxu0 %v318
      %2329 = vmatpush.msra.mxu0 %v314
      %2330 = vmatmul.f32.gmra.mxu0 %v2193
      %v2331 = vpop.f32.mrf.mxu0
      %v2332 = vadd.f32 %v560, %v2331
      %2333 = vdwg.mxu0
      %2334 = vmatpush.msra.mxu0 %v438
      %2335 = vmatpush.msra.mxu0 %v434
      %2336 = vmatpush.msra.mxu0 %v430
      %2337 = vmatpush.msra.mxu0 %v426
      %2338 = vmatpush.msra.mxu0 %v422
      %2339 = vmatpush.msra.mxu0 %v418
      %2340 = vmatpush.msra.mxu0 %v414
      %2341 = vmatpush.msra.mxu0 %v410
      %2342 = vmatpush.msra.mxu0 %v406
      %2343 = vmatpush.msra.mxu0 %v402
      %2344 = vmatpush.msra.mxu0 %v398
      %2345 = vmatpush.msra.mxu0 %v394
      %2346 = vmatpush.msra.mxu0 %v390
      %2347 = vmatpush.msra.mxu0 %v386
      %2348 = vmatpush.msra.mxu0 %v382
      %2349 = vmatpush.msra.mxu0 %v378
      %2350 = vmatmul.f32.gmra.mxu0 %v2079
      %v2351 = vpop.f32.mrf.mxu0
      %v2352 = vadd.f32 %v2332, %v2351
      %2353 = vdwg.mxu0
      %v2354 = vxor.u32 %v2232, 2147483648
      %v2355 = vmul.f32 %v2354, 1.442695
      %v2356 = vpow.pop %v2355
      %v2357 = vadd.f32 %v2356, 1.0
      %v2358 = vrcp.pop %v2357
      %v2359 = vmul.f32 %v2357, %v2358
      %v2360 = vsub.f32 1.0, %v2359
      %v2361 = vmul.f32 %v2358, %v2360
      %v2362 = vadd.f32 %v2358, %v2361
      %vm2363 = vweird.f32 %v2357
      %vm2364 = vweird.f32 %v2358
      %vm2365 = vmor %vm2363, %vm2364
      %v2366 = vsel %vm2365, %v2358, %v2362
      %v2367 = vand.u32 2147483647, %v2357
      %vm2368 = vcmp.eq.f32.partialorder %v2367, 8.507059e+37
      %v2369 = vand.u32 %v2357, 2147483648
      %v2370 = vor.u32 1.1754944e-38, %v2369
      %v2371 = vsel %vm2368, %v2370, %v2366
      %v2372 = vmul.f32 1.0, %v2371
      %v2373 = vxor.u32 %v2272, 2147483648
      %v2374 = vmul.f32 %v2373, 1.442695
      %v2375 = vpow.pop %v2374
      %v2376 = vadd.f32 %v2375, 1.0
      %v2377 = vrcp.pop %v2376
      %v2378 = vmul.f32 %v2376, %v2377
      %v2379 = vsub.f32 1.0, %v2378
      %v2380 = vmul.f32 %v2377, %v2379
      %v2381 = vadd.f32 %v2377, %v2380
      %vm2382 = vweird.f32 %v2376
      %vm2383 = vweird.f32 %v2377
      %vm2384 = vmor %vm2382, %vm2383
      %v2385 = vsel %vm2384, %v2377, %v2381
      %v2386 = vand.u32 2147483647, %v2376
      %vm2387 = vcmp.eq.f32.partialorder %v2386, 8.507059e+37
      %v2388 = vand.u32 %v2376, 2147483648
      %v2389 = vor.u32 1.1754944e-38, %v2388
      %v2390 = vsel %vm2387, %v2389, %v2385
      %v2391 = vmul.f32 1.0, %v2390
      %v2392 = vmul.f32 %v2372, %v2352
      %v2393 = vadd.f32 %v2312, %v2392
      %v2394 = vtanh.pop %v2393
      %v2395 = vsub.f32 1.0, %v2391
      %v2396 = vmul.f32 %v2395, %v2394
      %v2397 = vmul.f32 %v2391, %v2079
      %v2398 = vadd.f32 %v2396, %v2397
      %s2399 = sadd.s32 %s770, 5
      %p2400 = scmp.lt.s32.totalorder %s2399, 20
      %s2401 = scalar_select %p2400, 1, 0
      %v2402 = vstv %s2401
      %vm2403 = vcmp.eq.s32.totalorder %v2402, 1
      %v2404 = vsel %vm2403, %v2193, %v2078
      %v2405 = vsel %vm2403, %v2398, %v2079
      %s2406 = scalar_lea.vmem %s254, 40
      %2407 = vst [vmem:[%s2406] sm:$0xff] %v2405
      %s2408 = scalar_lea.vmem %s248, 144
      %v2409 = vld [vmem:[%s2408] sm:$0xff]
      %v2410 = vld [vmem:[%s2408 + $0x8] sm:$0xff]
      %v2411 = vld [vmem:[%s2408 + $0x10] sm:$0xff]
      %2412 = vmatpush.msra.mxu0 %v307
      %2413 = vmatpush.msra.mxu0 %v304
      %2414 = vmatpush.msra.mxu0 %v301
      %2415 = vmatpush.msra.mxu0 %v298
      %2416 = vmatpush.msra.mxu0 %v295
      %2417 = vmatpush.msra.mxu0 %v292
      %2418 = vmatpush.msra.mxu0 %v289
      %2419 = vmatpush.msra.mxu0 %v286
      %2420 = vmatpush.msra.mxu0 %v283
      %2421 = vmatpush.msra.mxu0 %v280
      %2422 = vmatpush.msra.mxu0 %v277
      %2423 = vmatpush.msra.mxu0 %v274
      %2424 = vmatpush.msra.mxu0 %v271
      %2425 = vmatpush.msra.mxu0 %v268
      %2426 = vmatpush.msra.mxu0 %v265
      %2427 = vmatpush.msra.mxu0 %v262
      %2428 = vmatmul.f32.gmra.mxu0 %v2404
      %v2429 = vpop.f32.mrf.mxu0
      %v2430 = vadd.f32 0.0, %v2429
      %2431 = vdwg.mxu0
      %2432 = vmatpush.msra.mxu0 %v308
      %2433 = vmatpush.msra.mxu0 %v305
      %2434 = vmatpush.msra.mxu0 %v302
      %2435 = vmatpush.msra.mxu0 %v299
      %2436 = vmatpush.msra.mxu0 %v296
      %2437 = vmatpush.msra.mxu0 %v293
      %2438 = vmatpush.msra.mxu0 %v290
      %2439 = vmatpush.msra.mxu0 %v287
      %2440 = vmatpush.msra.mxu0 %v284
      %2441 = vmatpush.msra.mxu0 %v281
      %2442 = vmatpush.msra.mxu0 %v278
      %2443 = vmatpush.msra.mxu0 %v275
      %2444 = vmatpush.msra.mxu0 %v272
      %2445 = vmatpush.msra.mxu0 %v269
      %2446 = vmatpush.msra.mxu0 %v266
      %2447 = vmatpush.msra.mxu0 %v263
      %2448 = vmatmul.f32.gmra.mxu0 %v2404
      %v2449 = vpop.f32.mrf.mxu0
      %v2450 = vadd.f32 0.0, %v2449
      %2451 = vdwg.mxu0
      %2452 = vmatpush.msra.mxu0 %v309
      %2453 = vmatpush.msra.mxu0 %v306
      %2454 = vmatpush.msra.mxu0 %v303
      %2455 = vmatpush.msra.mxu0 %v300
      %2456 = vmatpush.msra.mxu0 %v297
      %2457 = vmatpush.msra.mxu0 %v294
      %2458 = vmatpush.msra.mxu0 %v291
      %2459 = vmatpush.msra.mxu0 %v288
      %2460 = vmatpush.msra.mxu0 %v285
      %2461 = vmatpush.msra.mxu0 %v282
      %2462 = vmatpush.msra.mxu0 %v279
      %2463 = vmatpush.msra.mxu0 %v276
      %2464 = vmatpush.msra.mxu0 %v273
      %2465 = vmatpush.msra.mxu0 %v270
      %2466 = vmatpush.msra.mxu0 %v267
      %2467 = vmatpush.msra.mxu0 %v264
      %2468 = vmatmul.f32.gmra.mxu0 %v2404
      %v2469 = vpop.f32.mrf.mxu0
      %v2470 = vadd.f32 0.0, %v2469
      %2471 = vdwg.mxu0
      %v2472 = vadd.f32 %v2409, %v2430
      %v2473 = vxor.u32 %v2472, 2147483648
      %v2474 = vmul.f32 %v2473, 1.442695
      %v2475 = vpow.pop %v2474
      %v2476 = vadd.f32 %v2475, 1.0
      %v2477 = vrcp.pop %v2476
      %v2478 = vmul.f32 %v2476, %v2477
      %v2479 = vsub.f32 1.0, %v2478
      %v2480 = vmul.f32 %v2477, %v2479
      %v2481 = vadd.f32 %v2477, %v2480
      %vm2482 = vweird.f32 %v2476
      %vm2483 = vweird.f32 %v2477
      %vm2484 = vmor %vm2482, %vm2483
      %v2485 = vsel %vm2484, %v2477, %v2481
      %v2486 = vand.u32 2147483647, %v2476
      %vm2487 = vcmp.eq.f32.partialorder %v2486, 8.507059e+37
      %v2488 = vand.u32 %v2476, 2147483648
      %v2489 = vor.u32 1.1754944e-38, %v2488
      %v2490 = vsel %vm2487, %v2489, %v2485
      %v2491 = vmul.f32 1.0, %v2490
      %v2492 = vadd.f32 %v2410, %v2450
      %v2493 = vxor.u32 %v2492, 2147483648
      %v2494 = vmul.f32 %v2493, 1.442695
      %v2495 = vpow.pop %v2494
      %v2496 = vadd.f32 %v2495, 1.0
      %v2497 = vrcp.pop %v2496
      %v2498 = vmul.f32 %v2496, %v2497
      %v2499 = vsub.f32 1.0, %v2498
      %v2500 = vmul.f32 %v2497, %v2499
      %v2501 = vadd.f32 %v2497, %v2500
      %vm2502 = vweird.f32 %v2496
      %vm2503 = vweird.f32 %v2497
      %vm2504 = vmor %vm2502, %vm2503
      %v2505 = vsel %vm2504, %v2497, %v2501
      %v2506 = vand.u32 2147483647, %v2496
      %vm2507 = vcmp.eq.f32.partialorder %v2506, 8.507059e+37
      %v2508 = vand.u32 %v2496, 2147483648
      %v2509 = vor.u32 1.1754944e-38, %v2508
      %v2510 = vsel %vm2507, %v2509, %v2505
      %v2511 = vmul.f32 1.0, %v2510
      %v2512 = vadd.f32 %v2470, %v546
      %v2513 = vmul.f32 %v2491, %v2512
      %v2514 = vadd.f32 %v2411, %v2513
      %v2515 = vtanh.pop %v2514
      %v2516 = vsub.f32 1.0, %v2511
      %v2517 = vmul.f32 %v2516, %v2515
      %v2518 = vmul.f32 %v2511, %v2404
      %v2519 = vadd.f32 %v2517, %v2518
      %2520 = vmatpush.msra.mxu0 %v371
      %2521 = vmatpush.msra.mxu0 %v367
      %2522 = vmatpush.msra.mxu0 %v363
      %2523 = vmatpush.msra.mxu0 %v359
      %2524 = vmatpush.msra.mxu0 %v355
      %2525 = vmatpush.msra.mxu0 %v351
      %2526 = vmatpush.msra.mxu0 %v347
      %2527 = vmatpush.msra.mxu0 %v343
      %2528 = vmatpush.msra.mxu0 %v339
      %2529 = vmatpush.msra.mxu0 %v335
      %2530 = vmatpush.msra.mxu0 %v331
      %2531 = vmatpush.msra.mxu0 %v327
      %2532 = vmatpush.msra.mxu0 %v323
      %2533 = vmatpush.msra.mxu0 %v319
      %2534 = vmatpush.msra.mxu0 %v315
      %2535 = vmatpush.msra.mxu0 %v311
      %2536 = vmatmul.f32.gmra.mxu0 %v2519
      %v2537 = vpop.f32.mrf.mxu0
      %v2538 = vadd.f32 %v557, %v2537
      %2539 = vdwg.mxu0
      %2540 = vmatpush.msra.mxu0 %v435
      %2541 = vmatpush.msra.mxu0 %v431
      %2542 = vmatpush.msra.mxu0 %v427
      %2543 = vmatpush.msra.mxu0 %v423
      %2544 = vmatpush.msra.mxu0 %v419
      %2545 = vmatpush.msra.mxu0 %v415
      %2546 = vmatpush.msra.mxu0 %v411
      %2547 = vmatpush.msra.mxu0 %v407
      %2548 = vmatpush.msra.mxu0 %v403
      %2549 = vmatpush.msra.mxu0 %v399
      %2550 = vmatpush.msra.mxu0 %v395
      %2551 = vmatpush.msra.mxu0 %v391
      %2552 = vmatpush.msra.mxu0 %v387
      %2553 = vmatpush.msra.mxu0 %v383
      %2554 = vmatpush.msra.mxu0 %v379
      %2555 = vmatpush.msra.mxu0 %v375
      %2556 = vmatmul.f32.gmra.mxu0 %v2405
      %v2557 = vpop.f32.mrf.mxu0
      %v2558 = vadd.f32 %v2538, %v2557
      %2559 = vdwg.mxu0
      %2560 = vmatpush.msra.mxu0 %v372
      %2561 = vmatpush.msra.mxu0 %v368
      %2562 = vmatpush.msra.mxu0 %v364
      %2563 = vmatpush.msra.mxu0 %v360
      %2564 = vmatpush.msra.mxu0 %v356
      %2565 = vmatpush.msra.mxu0 %v352
      %2566 = vmatpush.msra.mxu0 %v348
      %2567 = vmatpush.msra.mxu0 %v344
      %2568 = vmatpush.msra.mxu0 %v340
      %2569 = vmatpush.msra.mxu0 %v336
      %2570 = vmatpush.msra.mxu0 %v332
      %2571 = vmatpush.msra.mxu0 %v328
      %2572 = vmatpush.msra.mxu0 %v324
      %2573 = vmatpush.msra.mxu0 %v320
      %2574 = vmatpush.msra.mxu0 %v316
      %2575 = vmatpush.msra.mxu0 %v312
      %2576 = vmatmul.f32.gmra.mxu0 %v2519
      %v2577 = vpop.f32.mrf.mxu0
      %v2578 = vadd.f32 %v558, %v2577
      %2579 = vdwg.mxu0
      %2580 = vmatpush.msra.mxu0 %v436
      %2581 = vmatpush.msra.mxu0 %v432
      %2582 = vmatpush.msra.mxu0 %v428
      %2583 = vmatpush.msra.mxu0 %v424
      %2584 = vmatpush.msra.mxu0 %v420
      %2585 = vmatpush.msra.mxu0 %v416
      %2586 = vmatpush.msra.mxu0 %v412
      %2587 = vmatpush.msra.mxu0 %v408
      %2588 = vmatpush.msra.mxu0 %v404
      %2589 = vmatpush.msra.mxu0 %v400
      %2590 = vmatpush.msra.mxu0 %v396
      %2591 = vmatpush.msra.mxu0 %v392
      %2592 = vmatpush.msra.mxu0 %v388
      %2593 = vmatpush.msra.mxu0 %v384
      %2594 = vmatpush.msra.mxu0 %v380
      %2595 = vmatpush.msra.mxu0 %v376
      %2596 = vmatmul.f32.gmra.mxu0 %v2405
      %v2597 = vpop.f32.mrf.mxu0
      %v2598 = vadd.f32 %v2578, %v2597
      %2599 = vdwg.mxu0
      %2600 = vmatpush.msra.mxu0 %v373
      %2601 = vmatpush.msra.mxu0 %v369
      %2602 = vmatpush.msra.mxu0 %v365
      %2603 = vmatpush.msra.mxu0 %v361
      %2604 = vmatpush.msra.mxu0 %v357
      %2605 = vmatpush.msra.mxu0 %v353
      %2606 = vmatpush.msra.mxu0 %v349
      %2607 = vmatpush.msra.mxu0 %v345
      %2608 = vmatpush.msra.mxu0 %v341
      %2609 = vmatpush.msra.mxu0 %v337
      %2610 = vmatpush.msra.mxu0 %v333
      %2611 = vmatpush.msra.mxu0 %v329
      %2612 = vmatpush.msra.mxu0 %v325
      %2613 = vmatpush.msra.mxu0 %v321
      %2614 = vmatpush.msra.mxu0 %v317
      %2615 = vmatpush.msra.mxu0 %v313
      %2616 = vmatmul.f32.gmra.mxu0 %v2519
      %v2617 = vpop.f32.mrf.mxu0
      %v2618 = vadd.f32 %v559, %v2617
      %2619 = vdwg.mxu0
      %2620 = vmatpush.msra.mxu0 %v437
      %2621 = vmatpush.msra.mxu0 %v433
      %2622 = vmatpush.msra.mxu0 %v429
      %2623 = vmatpush.msra.mxu0 %v425
      %2624 = vmatpush.msra.mxu0 %v421
      %2625 = vmatpush.msra.mxu0 %v417
      %2626 = vmatpush.msra.mxu0 %v413
      %2627 = vmatpush.msra.mxu0 %v409
      %2628 = vmatpush.msra.mxu0 %v405
      %2629 = vmatpush.msra.mxu0 %v401
      %2630 = vmatpush.msra.mxu0 %v397
      %2631 = vmatpush.msra.mxu0 %v393
      %2632 = vmatpush.msra.mxu0 %v389
      %2633 = vmatpush.msra.mxu0 %v385
      %2634 = vmatpush.msra.mxu0 %v381
      %2635 = vmatpush.msra.mxu0 %v377
      %2636 = vmatmul.f32.gmra.mxu0 %v2405
      %v2637 = vpop.f32.mrf.mxu0
      %v2638 = vadd.f32 %v2618, %v2637
      %2639 = vdwg.mxu0
      %2640 = vmatpush.msra.mxu0 %v374
      %2641 = vmatpush.msra.mxu0 %v370
      %2642 = vmatpush.msra.mxu0 %v366
      %2643 = vmatpush.msra.mxu0 %v362
      %2644 = vmatpush.msra.mxu0 %v358
      %2645 = vmatpush.msra.mxu0 %v354
      %2646 = vmatpush.msra.mxu0 %v350
      %2647 = vmatpush.msra.mxu0 %v346
      %2648 = vmatpush.msra.mxu0 %v342
      %2649 = vmatpush.msra.mxu0 %v338
      %2650 = vmatpush.msra.mxu0 %v334
      %2651 = vmatpush.msra.mxu0 %v330
      %2652 = vmatpush.msra.mxu0 %v326
      %2653 = vmatpush.msra.mxu0 %v322
      %2654 = vmatpush.msra.mxu0 %v318
      %2655 = vmatpush.msra.mxu0 %v314
      %2656 = vmatmul.f32.gmra.mxu0 %v2519
      %v2657 = vpop.f32.mrf.mxu0
      %v2658 = vadd.f32 %v560, %v2657
      %2659 = vdwg.mxu0
      %2660 = vmatpush.msra.mxu0 %v438
      %2661 = vmatpush.msra.mxu0 %v434
      %2662 = vmatpush.msra.mxu0 %v430
      %2663 = vmatpush.msra.mxu0 %v426
      %2664 = vmatpush.msra.mxu0 %v422
      %2665 = vmatpush.msra.mxu0 %v418
      %2666 = vmatpush.msra.mxu0 %v414
      %2667 = vmatpush.msra.mxu0 %v410
      %2668 = vmatpush.msra.mxu0 %v406
      %2669 = vmatpush.msra.mxu0 %v402
      %2670 = vmatpush.msra.mxu0 %v398
      %2671 = vmatpush.msra.mxu0 %v394
      %2672 = vmatpush.msra.mxu0 %v390
      %2673 = vmatpush.msra.mxu0 %v386
      %2674 = vmatpush.msra.mxu0 %v382
      %2675 = vmatpush.msra.mxu0 %v378
      %2676 = vmatmul.f32.gmra.mxu0 %v2405
      %v2677 = vpop.f32.mrf.mxu0
      %v2678 = vadd.f32 %v2658, %v2677
      %2679 = vdwg.mxu0
      %v2680 = vxor.u32 %v2558, 2147483648
      %v2681 = vmul.f32 %v2680, 1.442695
      %v2682 = vpow.pop %v2681
      %v2683 = vadd.f32 %v2682, 1.0
      %v2684 = vrcp.pop %v2683
      %v2685 = vmul.f32 %v2683, %v2684
      %v2686 = vsub.f32 1.0, %v2685
      %v2687 = vmul.f32 %v2684, %v2686
      %v2688 = vadd.f32 %v2684, %v2687
      %vm2689 = vweird.f32 %v2683
      %vm2690 = vweird.f32 %v2684
      %vm2691 = vmor %vm2689, %vm2690
      %v2692 = vsel %vm2691, %v2684, %v2688
      %v2693 = vand.u32 2147483647, %v2683
      %vm2694 = vcmp.eq.f32.partialorder %v2693, 8.507059e+37
      %v2695 = vand.u32 %v2683, 2147483648
      %v2696 = vor.u32 1.1754944e-38, %v2695
      %v2697 = vsel %vm2694, %v2696, %v2692
      %v2698 = vmul.f32 1.0, %v2697
      %v2699 = vxor.u32 %v2598, 2147483648
      %v2700 = vmul.f32 %v2699, 1.442695
      %v2701 = vpow.pop %v2700
      %v2702 = vadd.f32 %v2701, 1.0
      %v2703 = vrcp.pop %v2702
      %v2704 = vmul.f32 %v2702, %v2703
      %v2705 = vsub.f32 1.0, %v2704
      %v2706 = vmul.f32 %v2703, %v2705
      %v2707 = vadd.f32 %v2703, %v2706
      %vm2708 = vweird.f32 %v2702
      %vm2709 = vweird.f32 %v2703
      %vm2710 = vmor %vm2708, %vm2709
      %v2711 = vsel %vm2710, %v2703, %v2707
      %v2712 = vand.u32 2147483647, %v2702
      %vm2713 = vcmp.eq.f32.partialorder %v2712, 8.507059e+37
      %v2714 = vand.u32 %v2702, 2147483648
      %v2715 = vor.u32 1.1754944e-38, %v2714
      %v2716 = vsel %vm2713, %v2715, %v2711
      %v2717 = vmul.f32 1.0, %v2716
      %v2718 = vmul.f32 %v2698, %v2678
      %v2719 = vadd.f32 %v2638, %v2718
      %v2720 = vtanh.pop %v2719
      %v2721 = vsub.f32 1.0, %v2717
      %v2722 = vmul.f32 %v2721, %v2720
      %v2723 = vmul.f32 %v2717, %v2405
      %v2724 = vadd.f32 %v2722, %v2723
      %s2725 = sadd.s32 %s770, 6
      %p2726 = scmp.lt.s32.totalorder %s2725, 20
      %s2727 = scalar_select %p2726, 1, 0
      %v2728 = vstv %s2727
      %vm2729 = vcmp.eq.s32.totalorder %v2728, 1
      %v2730 = vsel %vm2729, %v2519, %v2404
      %v2731 = vsel %vm2729, %v2724, %v2405
      %s2732 = scalar_lea.vmem %s254, 48
      %2733 = vst [vmem:[%s2732] sm:$0xff] %v2731
      %s2734 = scalar_lea.vmem %s248, 168
      %v2735 = vld [vmem:[%s2734] sm:$0xff]
      %v2736 = vld [vmem:[%s2734 + $0x8] sm:$0xff]
      %v2737 = vld [vmem:[%s2734 + $0x10] sm:$0xff]
      %2738 = vmatpush.msra.mxu0 %v307
      %2739 = vmatpush.msra.mxu0 %v304
      %2740 = vmatpush.msra.mxu0 %v301
      %2741 = vmatpush.msra.mxu0 %v298
      %2742 = vmatpush.msra.mxu0 %v295
      %2743 = vmatpush.msra.mxu0 %v292
      %2744 = vmatpush.msra.mxu0 %v289
      %2745 = vmatpush.msra.mxu0 %v286
      %2746 = vmatpush.msra.mxu0 %v283
      %2747 = vmatpush.msra.mxu0 %v280
      %2748 = vmatpush.msra.mxu0 %v277
      %2749 = vmatpush.msra.mxu0 %v274
      %2750 = vmatpush.msra.mxu0 %v271
      %2751 = vmatpush.msra.mxu0 %v268
      %2752 = vmatpush.msra.mxu0 %v265
      %2753 = vmatpush.msra.mxu0 %v262
      %2754 = vmatmul.f32.gmra.mxu0 %v2730
      %v2755 = vpop.f32.mrf.mxu0
      %v2756 = vadd.f32 0.0, %v2755
      %2757 = vdwg.mxu0
      %2758 = vmatpush.msra.mxu0 %v308
      %2759 = vmatpush.msra.mxu0 %v305
      %2760 = vmatpush.msra.mxu0 %v302
      %2761 = vmatpush.msra.mxu0 %v299
      %2762 = vmatpush.msra.mxu0 %v296
      %2763 = vmatpush.msra.mxu0 %v293
      %2764 = vmatpush.msra.mxu0 %v290
      %2765 = vmatpush.msra.mxu0 %v287
      %2766 = vmatpush.msra.mxu0 %v284
      %2767 = vmatpush.msra.mxu0 %v281
      %2768 = vmatpush.msra.mxu0 %v278
      %2769 = vmatpush.msra.mxu0 %v275
      %2770 = vmatpush.msra.mxu0 %v272
      %2771 = vmatpush.msra.mxu0 %v269
      %2772 = vmatpush.msra.mxu0 %v266
      %2773 = vmatpush.msra.mxu0 %v263
      %2774 = vmatmul.f32.gmra.mxu0 %v2730
      %v2775 = vpop.f32.mrf.mxu0
      %v2776 = vadd.f32 0.0, %v2775
      %2777 = vdwg.mxu0
      %2778 = vmatpush.msra.mxu0 %v309
      %2779 = vmatpush.msra.mxu0 %v306
      %2780 = vmatpush.msra.mxu0 %v303
      %2781 = vmatpush.msra.mxu0 %v300
      %2782 = vmatpush.msra.mxu0 %v297
      %2783 = vmatpush.msra.mxu0 %v294
      %2784 = vmatpush.msra.mxu0 %v291
      %2785 = vmatpush.msra.mxu0 %v288
      %2786 = vmatpush.msra.mxu0 %v285
      %2787 = vmatpush.msra.mxu0 %v282
      %2788 = vmatpush.msra.mxu0 %v279
      %2789 = vmatpush.msra.mxu0 %v276
      %2790 = vmatpush.msra.mxu0 %v273
      %2791 = vmatpush.msra.mxu0 %v270
      %2792 = vmatpush.msra.mxu0 %v267
      %2793 = vmatpush.msra.mxu0 %v264
      %2794 = vmatmul.f32.gmra.mxu0 %v2730
      %v2795 = vpop.f32.mrf.mxu0
      %v2796 = vadd.f32 0.0, %v2795
      %2797 = vdwg.mxu0
      %v2798 = vadd.f32 %v2735, %v2756
      %v2799 = vxor.u32 %v2798, 2147483648
      %v2800 = vmul.f32 %v2799, 1.442695
      %v2801 = vpow.pop %v2800
      %v2802 = vadd.f32 %v2801, 1.0
      %v2803 = vrcp.pop %v2802
      %v2804 = vmul.f32 %v2802, %v2803
      %v2805 = vsub.f32 1.0, %v2804
      %v2806 = vmul.f32 %v2803, %v2805
      %v2807 = vadd.f32 %v2803, %v2806
      %vm2808 = vweird.f32 %v2802
      %vm2809 = vweird.f32 %v2803
      %vm2810 = vmor %vm2808, %vm2809
      %v2811 = vsel %vm2810, %v2803, %v2807
      %v2812 = vand.u32 2147483647, %v2802
      %vm2813 = vcmp.eq.f32.partialorder %v2812, 8.507059e+37
      %v2814 = vand.u32 %v2802, 2147483648
      %v2815 = vor.u32 1.1754944e-38, %v2814
      %v2816 = vsel %vm2813, %v2815, %v2811
      %v2817 = vmul.f32 1.0, %v2816
      %v2818 = vadd.f32 %v2736, %v2776
      %v2819 = vxor.u32 %v2818, 2147483648
      %v2820 = vmul.f32 %v2819, 1.442695
      %v2821 = vpow.pop %v2820
      %v2822 = vadd.f32 %v2821, 1.0
      %v2823 = vrcp.pop %v2822
      %v2824 = vmul.f32 %v2822, %v2823
      %v2825 = vsub.f32 1.0, %v2824
      %v2826 = vmul.f32 %v2823, %v2825
      %v2827 = vadd.f32 %v2823, %v2826
      %vm2828 = vweird.f32 %v2822
      %vm2829 = vweird.f32 %v2823
      %vm2830 = vmor %vm2828, %vm2829
      %v2831 = vsel %vm2830, %v2823, %v2827
      %v2832 = vand.u32 2147483647, %v2822
      %vm2833 = vcmp.eq.f32.partialorder %v2832, 8.507059e+37
      %v2834 = vand.u32 %v2822, 2147483648
      %v2835 = vor.u32 1.1754944e-38, %v2834
      %v2836 = vsel %vm2833, %v2835, %v2831
      %v2837 = vmul.f32 1.0, %v2836
      %v2838 = vadd.f32 %v2796, %v546
      %v2839 = vmul.f32 %v2817, %v2838
      %v2840 = vadd.f32 %v2737, %v2839
      %v2841 = vtanh.pop %v2840
      %v2842 = vsub.f32 1.0, %v2837
      %v2843 = vmul.f32 %v2842, %v2841
      %v2844 = vmul.f32 %v2837, %v2730
      %v2845 = vadd.f32 %v2843, %v2844
      %2846 = vmatpush.msra.mxu0 %v371
      %2847 = vmatpush.msra.mxu0 %v367
      %2848 = vmatpush.msra.mxu0 %v363
      %2849 = vmatpush.msra.mxu0 %v359
      %2850 = vmatpush.msra.mxu0 %v355
      %2851 = vmatpush.msra.mxu0 %v351
      %2852 = vmatpush.msra.mxu0 %v347
      %2853 = vmatpush.msra.mxu0 %v343
      %2854 = vmatpush.msra.mxu0 %v339
      %2855 = vmatpush.msra.mxu0 %v335
      %2856 = vmatpush.msra.mxu0 %v331
      %2857 = vmatpush.msra.mxu0 %v327
      %2858 = vmatpush.msra.mxu0 %v323
      %2859 = vmatpush.msra.mxu0 %v319
      %2860 = vmatpush.msra.mxu0 %v315
      %2861 = vmatpush.msra.mxu0 %v311
      %2862 = vmatmul.f32.gmra.mxu0 %v2845
      %v2863 = vpop.f32.mrf.mxu0
      %v2864 = vadd.f32 %v557, %v2863
      %2865 = vdwg.mxu0
      %2866 = vmatpush.msra.mxu0 %v435
      %2867 = vmatpush.msra.mxu0 %v431
      %2868 = vmatpush.msra.mxu0 %v427
      %2869 = vmatpush.msra.mxu0 %v423
      %2870 = vmatpush.msra.mxu0 %v419
      %2871 = vmatpush.msra.mxu0 %v415
      %2872 = vmatpush.msra.mxu0 %v411
      %2873 = vmatpush.msra.mxu0 %v407
      %2874 = vmatpush.msra.mxu0 %v403
      %2875 = vmatpush.msra.mxu0 %v399
      %2876 = vmatpush.msra.mxu0 %v395
      %2877 = vmatpush.msra.mxu0 %v391
      %2878 = vmatpush.msra.mxu0 %v387
      %2879 = vmatpush.msra.mxu0 %v383
      %2880 = vmatpush.msra.mxu0 %v379
      %2881 = vmatpush.msra.mxu0 %v375
      %2882 = vmatmul.f32.gmra.mxu0 %v2731
      %v2883 = vpop.f32.mrf.mxu0
      %v2884 = vadd.f32 %v2864, %v2883
      %2885 = vdwg.mxu0
      %2886 = vmatpush.msra.mxu0 %v372
      %2887 = vmatpush.msra.mxu0 %v368
      %2888 = vmatpush.msra.mxu0 %v364
      %2889 = vmatpush.msra.mxu0 %v360
      %2890 = vmatpush.msra.mxu0 %v356
      %2891 = vmatpush.msra.mxu0 %v352
      %2892 = vmatpush.msra.mxu0 %v348
      %2893 = vmatpush.msra.mxu0 %v344
      %2894 = vmatpush.msra.mxu0 %v340
      %2895 = vmatpush.msra.mxu0 %v336
      %2896 = vmatpush.msra.mxu0 %v332
      %2897 = vmatpush.msra.mxu0 %v328
      %2898 = vmatpush.msra.mxu0 %v324
      %2899 = vmatpush.msra.mxu0 %v320
      %2900 = vmatpush.msra.mxu0 %v316
      %2901 = vmatpush.msra.mxu0 %v312
      %2902 = vmatmul.f32.gmra.mxu0 %v2845
      %v2903 = vpop.f32.mrf.mxu0
      %v2904 = vadd.f32 %v558, %v2903
      %2905 = vdwg.mxu0
      %2906 = vmatpush.msra.mxu0 %v436
      %2907 = vmatpush.msra.mxu0 %v432
      %2908 = vmatpush.msra.mxu0 %v428
      %2909 = vmatpush.msra.mxu0 %v424
      %2910 = vmatpush.msra.mxu0 %v420
      %2911 = vmatpush.msra.mxu0 %v416
      %2912 = vmatpush.msra.mxu0 %v412
      %2913 = vmatpush.msra.mxu0 %v408
      %2914 = vmatpush.msra.mxu0 %v404
      %2915 = vmatpush.msra.mxu0 %v400
      %2916 = vmatpush.msra.mxu0 %v396
      %2917 = vmatpush.msra.mxu0 %v392
      %2918 = vmatpush.msra.mxu0 %v388
      %2919 = vmatpush.msra.mxu0 %v384
      %2920 = vmatpush.msra.mxu0 %v380
      %2921 = vmatpush.msra.mxu0 %v376
      %2922 = vmatmul.f32.gmra.mxu0 %v2731
      %v2923 = vpop.f32.mrf.mxu0
      %v2924 = vadd.f32 %v2904, %v2923
      %2925 = vdwg.mxu0
      %2926 = vmatpush.msra.mxu0 %v373
      %2927 = vmatpush.msra.mxu0 %v369
      %2928 = vmatpush.msra.mxu0 %v365
      %2929 = vmatpush.msra.mxu0 %v361
      %2930 = vmatpush.msra.mxu0 %v357
      %2931 = vmatpush.msra.mxu0 %v353
      %2932 = vmatpush.msra.mxu0 %v349
      %2933 = vmatpush.msra.mxu0 %v345
      %2934 = vmatpush.msra.mxu0 %v341
      %2935 = vmatpush.msra.mxu0 %v337
      %2936 = vmatpush.msra.mxu0 %v333
      %2937 = vmatpush.msra.mxu0 %v329
      %2938 = vmatpush.msra.mxu0 %v325
      %2939 = vmatpush.msra.mxu0 %v321
      %2940 = vmatpush.msra.mxu0 %v317
      %2941 = vmatpush.msra.mxu0 %v313
      %2942 = vmatmul.f32.gmra.mxu0 %v2845
      %v2943 = vpop.f32.mrf.mxu0
      %v2944 = vadd.f32 %v559, %v2943
      %2945 = vdwg.mxu0
      %2946 = vmatpush.msra.mxu0 %v437
      %2947 = vmatpush.msra.mxu0 %v433
      %2948 = vmatpush.msra.mxu0 %v429
      %2949 = vmatpush.msra.mxu0 %v425
      %2950 = vmatpush.msra.mxu0 %v421
      %2951 = vmatpush.msra.mxu0 %v417
      %2952 = vmatpush.msra.mxu0 %v413
      %2953 = vmatpush.msra.mxu0 %v409
      %2954 = vmatpush.msra.mxu0 %v405
      %2955 = vmatpush.msra.mxu0 %v401
      %2956 = vmatpush.msra.mxu0 %v397
      %2957 = vmatpush.msra.mxu0 %v393
      %2958 = vmatpush.msra.mxu0 %v389
      %2959 = vmatpush.msra.mxu0 %v385
      %2960 = vmatpush.msra.mxu0 %v381
      %2961 = vmatpush.msra.mxu0 %v377
      %2962 = vmatmul.f32.gmra.mxu0 %v2731
      %v2963 = vpop.f32.mrf.mxu0
      %v2964 = vadd.f32 %v2944, %v2963
      %2965 = vdwg.mxu0
      %2966 = vmatpush.msra.mxu0 %v374
      %2967 = vmatpush.msra.mxu0 %v370
      %2968 = vmatpush.msra.mxu0 %v366
      %2969 = vmatpush.msra.mxu0 %v362
      %2970 = vmatpush.msra.mxu0 %v358
      %2971 = vmatpush.msra.mxu0 %v354
      %2972 = vmatpush.msra.mxu0 %v350
      %2973 = vmatpush.msra.mxu0 %v346
      %2974 = vmatpush.msra.mxu0 %v342
      %2975 = vmatpush.msra.mxu0 %v338
      %2976 = vmatpush.msra.mxu0 %v334
      %2977 = vmatpush.msra.mxu0 %v330
      %2978 = vmatpush.msra.mxu0 %v326
      %2979 = vmatpush.msra.mxu0 %v322
      %2980 = vmatpush.msra.mxu0 %v318
      %2981 = vmatpush.msra.mxu0 %v314
      %2982 = vmatmul.f32.gmra.mxu0 %v2845
      %v2983 = vpop.f32.mrf.mxu0
      %v2984 = vadd.f32 %v560, %v2983
      %2985 = vdwg.mxu0
      %2986 = vmatpush.msra.mxu0 %v438
      %2987 = vmatpush.msra.mxu0 %v434
      %2988 = vmatpush.msra.mxu0 %v430
      %2989 = vmatpush.msra.mxu0 %v426
      %2990 = vmatpush.msra.mxu0 %v422
      %2991 = vmatpush.msra.mxu0 %v418
      %2992 = vmatpush.msra.mxu0 %v414
      %2993 = vmatpush.msra.mxu0 %v410
      %2994 = vmatpush.msra.mxu0 %v406
      %2995 = vmatpush.msra.mxu0 %v402
      %2996 = vmatpush.msra.mxu0 %v398
      %2997 = vmatpush.msra.mxu0 %v394
      %2998 = vmatpush.msra.mxu0 %v390
      %2999 = vmatpush.msra.mxu0 %v386
      %3000 = vmatpush.msra.mxu0 %v382
      %3001 = vmatpush.msra.mxu0 %v378
      %3002 = vmatmul.f32.gmra.mxu0 %v2731
      %v3003 = vpop.f32.mrf.mxu0
      %v3004 = vadd.f32 %v2984, %v3003
      %3005 = vdwg.mxu0
      %v3006 = vxor.u32 %v2884, 2147483648
      %v3007 = vmul.f32 %v3006, 1.442695
      %v3008 = vpow.pop %v3007
      %v3009 = vadd.f32 %v3008, 1.0
      %v3010 = vrcp.pop %v3009
      %v3011 = vmul.f32 %v3009, %v3010
      %v3012 = vsub.f32 1.0, %v3011
      %v3013 = vmul.f32 %v3010, %v3012
      %v3014 = vadd.f32 %v3010, %v3013
      %vm3015 = vweird.f32 %v3009
      %vm3016 = vweird.f32 %v3010
      %vm3017 = vmor %vm3015, %vm3016
      %v3018 = vsel %vm3017, %v3010, %v3014
      %v3019 = vand.u32 2147483647, %v3009
      %vm3020 = vcmp.eq.f32.partialorder %v3019, 8.507059e+37
      %v3021 = vand.u32 %v3009, 2147483648
      %v3022 = vor.u32 1.1754944e-38, %v3021
      %v3023 = vsel %vm3020, %v3022, %v3018
      %v3024 = vmul.f32 1.0, %v3023
      %v3025 = vxor.u32 %v2924, 2147483648
      %v3026 = vmul.f32 %v3025, 1.442695
      %v3027 = vpow.pop %v3026
      %v3028 = vadd.f32 %v3027, 1.0
      %v3029 = vrcp.pop %v3028
      %v3030 = vmul.f32 %v3028, %v3029
      %v3031 = vsub.f32 1.0, %v3030
      %v3032 = vmul.f32 %v3029, %v3031
      %v3033 = vadd.f32 %v3029, %v3032
      %vm3034 = vweird.f32 %v3028
      %vm3035 = vweird.f32 %v3029
      %vm3036 = vmor %vm3034, %vm3035
      %v3037 = vsel %vm3036, %v3029, %v3033
      %v3038 = vand.u32 2147483647, %v3028
      %vm3039 = vcmp.eq.f32.partialorder %v3038, 8.507059e+37
      %v3040 = vand.u32 %v3028, 2147483648
      %v3041 = vor.u32 1.1754944e-38, %v3040
      %v3042 = vsel %vm3039, %v3041, %v3037
      %v3043 = vmul.f32 1.0, %v3042
      %v3044 = vmul.f32 %v3024, %v3004
      %v3045 = vadd.f32 %v2964, %v3044
      %v3046 = vtanh.pop %v3045
      %v3047 = vsub.f32 1.0, %v3043
      %v3048 = vmul.f32 %v3047, %v3046
      %v3049 = vmul.f32 %v3043, %v2731
      %v3050 = vadd.f32 %v3048, %v3049
      %s3051 = sadd.s32 %s770, 7
      %p3052 = scmp.lt.s32.totalorder %s3051, 20
      %s3053 = scalar_select %p3052, 1, 0
      %v3054 = vstv %s3053
      %vm3055 = vcmp.eq.s32.totalorder %v3054, 1
      %v3056 = vsel %vm3055, %v2845, %v2730
      %v3057 = vsel %vm3055, %v3050, %v2731
      %s3058 = scalar_lea.vmem %s254, 56
      %3059 = vst [vmem:[%s3058] sm:$0xff] %v3057
      %s3060 = scalar_lea.vmem %s248, 192
      %v3061 = vld [vmem:[%s3060] sm:$0xff]
      %v3062 = vld [vmem:[%s3060 + $0x8] sm:$0xff]
      %v3063 = vld [vmem:[%s3060 + $0x10] sm:$0xff]
      %3064 = vmatpush.msra.mxu0 %v307
      %3065 = vmatpush.msra.mxu0 %v304
      %3066 = vmatpush.msra.mxu0 %v301
      %3067 = vmatpush.msra.mxu0 %v298
      %3068 = vmatpush.msra.mxu0 %v295
      %3069 = vmatpush.msra.mxu0 %v292
      %3070 = vmatpush.msra.mxu0 %v289
      %3071 = vmatpush.msra.mxu0 %v286
      %3072 = vmatpush.msra.mxu0 %v283
      %3073 = vmatpush.msra.mxu0 %v280
      %3074 = vmatpush.msra.mxu0 %v277
      %3075 = vmatpush.msra.mxu0 %v274
      %3076 = vmatpush.msra.mxu0 %v271
      %3077 = vmatpush.msra.mxu0 %v268
      %3078 = vmatpush.msra.mxu0 %v265
      %3079 = vmatpush.msra.mxu0 %v262
      %3080 = vmatmul.f32.gmra.mxu0 %v3056
      %v3081 = vpop.f32.mrf.mxu0
      %v3082 = vadd.f32 0.0, %v3081
      %3083 = vdwg.mxu0
      %3084 = vmatpush.msra.mxu0 %v308
      %3085 = vmatpush.msra.mxu0 %v305
      %3086 = vmatpush.msra.mxu0 %v302
      %3087 = vmatpush.msra.mxu0 %v299
      %3088 = vmatpush.msra.mxu0 %v296
      %3089 = vmatpush.msra.mxu0 %v293
      %3090 = vmatpush.msra.mxu0 %v290
      %3091 = vmatpush.msra.mxu0 %v287
      %3092 = vmatpush.msra.mxu0 %v284
      %3093 = vmatpush.msra.mxu0 %v281
      %3094 = vmatpush.msra.mxu0 %v278
      %3095 = vmatpush.msra.mxu0 %v275
      %3096 = vmatpush.msra.mxu0 %v272
      %3097 = vmatpush.msra.mxu0 %v269
      %3098 = vmatpush.msra.mxu0 %v266
      %3099 = vmatpush.msra.mxu0 %v263
      %3100 = vmatmul.f32.gmra.mxu0 %v3056
      %v3101 = vpop.f32.mrf.mxu0
      %v3102 = vadd.f32 0.0, %v3101
      %3103 = vdwg.mxu0
      %3104 = vmatpush.msra.mxu0 %v309
      %3105 = vmatpush.msra.mxu0 %v306
      %3106 = vmatpush.msra.mxu0 %v303
      %3107 = vmatpush.msra.mxu0 %v300
      %3108 = vmatpush.msra.mxu0 %v297
      %3109 = vmatpush.msra.mxu0 %v294
      %3110 = vmatpush.msra.mxu0 %v291
      %3111 = vmatpush.msra.mxu0 %v288
      %3112 = vmatpush.msra.mxu0 %v285
      %3113 = vmatpush.msra.mxu0 %v282
      %3114 = vmatpush.msra.mxu0 %v279
      %3115 = vmatpush.msra.mxu0 %v276
      %3116 = vmatpush.msra.mxu0 %v273
      %3117 = vmatpush.msra.mxu0 %v270
      %3118 = vmatpush.msra.mxu0 %v267
      %3119 = vmatpush.msra.mxu0 %v264
      %3120 = vmatmul.f32.gmra.mxu0 %v3056
      %v3121 = vpop.f32.mrf.mxu0
      %v3122 = vadd.f32 0.0, %v3121
      %3123 = vdwg.mxu0
      %v3124 = vadd.f32 %v3061, %v3082
      %v3125 = vxor.u32 %v3124, 2147483648
      %v3126 = vmul.f32 %v3125, 1.442695
      %v3127 = vpow.pop %v3126
      %v3128 = vadd.f32 %v3127, 1.0
      %v3129 = vrcp.pop %v3128
      %v3130 = vmul.f32 %v3128, %v3129
      %v3131 = vsub.f32 1.0, %v3130
      %v3132 = vmul.f32 %v3129, %v3131
      %v3133 = vadd.f32 %v3129, %v3132
      %vm3134 = vweird.f32 %v3128
      %vm3135 = vweird.f32 %v3129
      %vm3136 = vmor %vm3134, %vm3135
      %v3137 = vsel %vm3136, %v3129, %v3133
      %v3138 = vand.u32 2147483647, %v3128
      %vm3139 = vcmp.eq.f32.partialorder %v3138, 8.507059e+37
      %v3140 = vand.u32 %v3128, 2147483648
      %v3141 = vor.u32 1.1754944e-38, %v3140
      %v3142 = vsel %vm3139, %v3141, %v3137
      %v3143 = vmul.f32 1.0, %v3142
      %v3144 = vadd.f32 %v3062, %v3102
      %v3145 = vxor.u32 %v3144, 2147483648
      %v3146 = vmul.f32 %v3145, 1.442695
      %v3147 = vpow.pop %v3146
      %v3148 = vadd.f32 %v3147, 1.0
      %v3149 = vrcp.pop %v3148
      %v3150 = vmul.f32 %v3148, %v3149
      %v3151 = vsub.f32 1.0, %v3150
      %v3152 = vmul.f32 %v3149, %v3151
      %v3153 = vadd.f32 %v3149, %v3152
      %vm3154 = vweird.f32 %v3148
      %vm3155 = vweird.f32 %v3149
      %vm3156 = vmor %vm3154, %vm3155
      %v3157 = vsel %vm3156, %v3149, %v3153
      %v3158 = vand.u32 2147483647, %v3148
      %vm3159 = vcmp.eq.f32.partialorder %v3158, 8.507059e+37
      %v3160 = vand.u32 %v3148, 2147483648
      %v3161 = vor.u32 1.1754944e-38, %v3160
      %v3162 = vsel %vm3159, %v3161, %v3157
      %v3163 = vmul.f32 1.0, %v3162
      %v3164 = vadd.f32 %v3122, %v546
      %v3165 = vmul.f32 %v3143, %v3164
      %v3166 = vadd.f32 %v3063, %v3165
      %v3167 = vtanh.pop %v3166
      %v3168 = vsub.f32 1.0, %v3163
      %v3169 = vmul.f32 %v3168, %v3167
      %v3170 = vmul.f32 %v3163, %v3056
      %v3171 = vadd.f32 %v3169, %v3170
      %3172 = vmatpush.msra.mxu0 %v371
      %3173 = vmatpush.msra.mxu0 %v367
      %3174 = vmatpush.msra.mxu0 %v363
      %3175 = vmatpush.msra.mxu0 %v359
      %3176 = vmatpush.msra.mxu0 %v355
      %3177 = vmatpush.msra.mxu0 %v351
      %3178 = vmatpush.msra.mxu0 %v347
      %3179 = vmatpush.msra.mxu0 %v343
      %3180 = vmatpush.msra.mxu0 %v339
      %3181 = vmatpush.msra.mxu0 %v335
      %3182 = vmatpush.msra.mxu0 %v331
      %3183 = vmatpush.msra.mxu0 %v327
      %3184 = vmatpush.msra.mxu0 %v323
      %3185 = vmatpush.msra.mxu0 %v319
      %3186 = vmatpush.msra.mxu0 %v315
      %3187 = vmatpush.msra.mxu0 %v311
      %3188 = vmatmul.f32.gmra.mxu0 %v3171
      %v3189 = vpop.f32.mrf.mxu0
      %v3190 = vadd.f32 %v557, %v3189
      %3191 = vdwg.mxu0
      %3192 = vmatpush.msra.mxu0 %v435
      %3193 = vmatpush.msra.mxu0 %v431
      %3194 = vmatpush.msra.mxu0 %v427
      %3195 = vmatpush.msra.mxu0 %v423
      %3196 = vmatpush.msra.mxu0 %v419
      %3197 = vmatpush.msra.mxu0 %v415
      %3198 = vmatpush.msra.mxu0 %v411
      %3199 = vmatpush.msra.mxu0 %v407
      %3200 = vmatpush.msra.mxu0 %v403
      %3201 = vmatpush.msra.mxu0 %v399
      %3202 = vmatpush.msra.mxu0 %v395
      %3203 = vmatpush.msra.mxu0 %v391
      %3204 = vmatpush.msra.mxu0 %v387
      %3205 = vmatpush.msra.mxu0 %v383
      %3206 = vmatpush.msra.mxu0 %v379
      %3207 = vmatpush.msra.mxu0 %v375
      %3208 = vmatmul.f32.gmra.mxu0 %v3057
      %v3209 = vpop.f32.mrf.mxu0
      %v3210 = vadd.f32 %v3190, %v3209
      %3211 = vdwg.mxu0
      %3212 = vmatpush.msra.mxu0 %v372
      %3213 = vmatpush.msra.mxu0 %v368
      %3214 = vmatpush.msra.mxu0 %v364
      %3215 = vmatpush.msra.mxu0 %v360
      %3216 = vmatpush.msra.mxu0 %v356
      %3217 = vmatpush.msra.mxu0 %v352
      %3218 = vmatpush.msra.mxu0 %v348
      %3219 = vmatpush.msra.mxu0 %v344
      %3220 = vmatpush.msra.mxu0 %v340
      %3221 = vmatpush.msra.mxu0 %v336
      %3222 = vmatpush.msra.mxu0 %v332
      %3223 = vmatpush.msra.mxu0 %v328
      %3224 = vmatpush.msra.mxu0 %v324
      %3225 = vmatpush.msra.mxu0 %v320
      %3226 = vmatpush.msra.mxu0 %v316
      %3227 = vmatpush.msra.mxu0 %v312
      %3228 = vmatmul.f32.gmra.mxu0 %v3171
      %v3229 = vpop.f32.mrf.mxu0
      %v3230 = vadd.f32 %v558, %v3229
      %3231 = vdwg.mxu0
      %3232 = vmatpush.msra.mxu0 %v436
      %3233 = vmatpush.msra.mxu0 %v432
      %3234 = vmatpush.msra.mxu0 %v428
      %3235 = vmatpush.msra.mxu0 %v424
      %3236 = vmatpush.msra.mxu0 %v420
      %3237 = vmatpush.msra.mxu0 %v416
      %3238 = vmatpush.msra.mxu0 %v412
      %3239 = vmatpush.msra.mxu0 %v408
      %3240 = vmatpush.msra.mxu0 %v404
      %3241 = vmatpush.msra.mxu0 %v400
      %3242 = vmatpush.msra.mxu0 %v396
      %3243 = vmatpush.msra.mxu0 %v392
      %3244 = vmatpush.msra.mxu0 %v388
      %3245 = vmatpush.msra.mxu0 %v384
      %3246 = vmatpush.msra.mxu0 %v380
      %3247 = vmatpush.msra.mxu0 %v376
      %3248 = vmatmul.f32.gmra.mxu0 %v3057
      %v3249 = vpop.f32.mrf.mxu0
      %v3250 = vadd.f32 %v3230, %v3249
      %3251 = vdwg.mxu0
      %3252 = vmatpush.msra.mxu0 %v373
      %3253 = vmatpush.msra.mxu0 %v369
      %3254 = vmatpush.msra.mxu0 %v365
      %3255 = vmatpush.msra.mxu0 %v361
      %3256 = vmatpush.msra.mxu0 %v357
      %3257 = vmatpush.msra.mxu0 %v353
      %3258 = vmatpush.msra.mxu0 %v349
      %3259 = vmatpush.msra.mxu0 %v345
      %3260 = vmatpush.msra.mxu0 %v341
      %3261 = vmatpush.msra.mxu0 %v337
      %3262 = vmatpush.msra.mxu0 %v333
      %3263 = vmatpush.msra.mxu0 %v329
      %3264 = vmatpush.msra.mxu0 %v325
      %3265 = vmatpush.msra.mxu0 %v321
      %3266 = vmatpush.msra.mxu0 %v317
      %3267 = vmatpush.msra.mxu0 %v313
      %3268 = vmatmul.f32.gmra.mxu0 %v3171
      %v3269 = vpop.f32.mrf.mxu0
      %v3270 = vadd.f32 %v559, %v3269
      %3271 = vdwg.mxu0
      %3272 = vmatpush.msra.mxu0 %v437
      %3273 = vmatpush.msra.mxu0 %v433
      %3274 = vmatpush.msra.mxu0 %v429
      %3275 = vmatpush.msra.mxu0 %v425
      %3276 = vmatpush.msra.mxu0 %v421
      %3277 = vmatpush.msra.mxu0 %v417
      %3278 = vmatpush.msra.mxu0 %v413
      %3279 = vmatpush.msra.mxu0 %v409
      %3280 = vmatpush.msra.mxu0 %v405
      %3281 = vmatpush.msra.mxu0 %v401
      %3282 = vmatpush.msra.mxu0 %v397
      %3283 = vmatpush.msra.mxu0 %v393
      %3284 = vmatpush.msra.mxu0 %v389
      %3285 = vmatpush.msra.mxu0 %v385
      %3286 = vmatpush.msra.mxu0 %v381
      %3287 = vmatpush.msra.mxu0 %v377
      %3288 = vmatmul.f32.gmra.mxu0 %v3057
      %v3289 = vpop.f32.mrf.mxu0
      %v3290 = vadd.f32 %v3270, %v3289
      %3291 = vdwg.mxu0
      %3292 = vmatpush.msra.mxu0 %v374
      %3293 = vmatpush.msra.mxu0 %v370
      %3294 = vmatpush.msra.mxu0 %v366
      %3295 = vmatpush.msra.mxu0 %v362
      %3296 = vmatpush.msra.mxu0 %v358
      %3297 = vmatpush.msra.mxu0 %v354
      %3298 = vmatpush.msra.mxu0 %v350
      %3299 = vmatpush.msra.mxu0 %v346
      %3300 = vmatpush.msra.mxu0 %v342
      %3301 = vmatpush.msra.mxu0 %v338
      %3302 = vmatpush.msra.mxu0 %v334
      %3303 = vmatpush.msra.mxu0 %v330
      %3304 = vmatpush.msra.mxu0 %v326
      %3305 = vmatpush.msra.mxu0 %v322
      %3306 = vmatpush.msra.mxu0 %v318
      %3307 = vmatpush.msra.mxu0 %v314
      %3308 = vmatmul.f32.gmra.mxu0 %v3171
      %v3309 = vpop.f32.mrf.mxu0
      %v3310 = vadd.f32 %v560, %v3309
      %3311 = vdwg.mxu0
      %3312 = vmatpush.msra.mxu0 %v438
      %3313 = vmatpush.msra.mxu0 %v434
      %3314 = vmatpush.msra.mxu0 %v430
      %3315 = vmatpush.msra.mxu0 %v426
      %3316 = vmatpush.msra.mxu0 %v422
      %3317 = vmatpush.msra.mxu0 %v418
      %3318 = vmatpush.msra.mxu0 %v414
      %3319 = vmatpush.msra.mxu0 %v410
      %3320 = vmatpush.msra.mxu0 %v406
      %3321 = vmatpush.msra.mxu0 %v402
      %3322 = vmatpush.msra.mxu0 %v398
      %3323 = vmatpush.msra.mxu0 %v394
      %3324 = vmatpush.msra.mxu0 %v390
      %3325 = vmatpush.msra.mxu0 %v386
      %3326 = vmatpush.msra.mxu0 %v382
      %3327 = vmatpush.msra.mxu0 %v378
      %3328 = vmatmul.f32.gmra.mxu0 %v3057
      %v3329 = vpop.f32.mrf.mxu0
      %v3330 = vadd.f32 %v3310, %v3329
      %3331 = vdwg.mxu0
      %v3332 = vxor.u32 %v3210, 2147483648
      %v3333 = vmul.f32 %v3332, 1.442695
      %v3334 = vpow.pop %v3333
      %v3335 = vadd.f32 %v3334, 1.0
      %v3336 = vrcp.pop %v3335
      %v3337 = vmul.f32 %v3335, %v3336
      %v3338 = vsub.f32 1.0, %v3337
      %v3339 = vmul.f32 %v3336, %v3338
      %v3340 = vadd.f32 %v3336, %v3339
      %vm3341 = vweird.f32 %v3335
      %vm3342 = vweird.f32 %v3336
      %vm3343 = vmor %vm3341, %vm3342
      %v3344 = vsel %vm3343, %v3336, %v3340
      %v3345 = vand.u32 2147483647, %v3335
      %vm3346 = vcmp.eq.f32.partialorder %v3345, 8.507059e+37
      %v3347 = vand.u32 %v3335, 2147483648
      %v3348 = vor.u32 1.1754944e-38, %v3347
      %v3349 = vsel %vm3346, %v3348, %v3344
      %v3350 = vmul.f32 1.0, %v3349
      %v3351 = vxor.u32 %v3250, 2147483648
      %v3352 = vmul.f32 %v3351, 1.442695
      %v3353 = vpow.pop %v3352
      %v3354 = vadd.f32 %v3353, 1.0
      %v3355 = vrcp.pop %v3354
      %v3356 = vmul.f32 %v3354, %v3355
      %v3357 = vsub.f32 1.0, %v3356
      %v3358 = vmul.f32 %v3355, %v3357
      %v3359 = vadd.f32 %v3355, %v3358
      %vm3360 = vweird.f32 %v3354
      %vm3361 = vweird.f32 %v3355
      %vm3362 = vmor %vm3360, %vm3361
      %v3363 = vsel %vm3362, %v3355, %v3359
      %v3364 = vand.u32 2147483647, %v3354
      %vm3365 = vcmp.eq.f32.partialorder %v3364, 8.507059e+37
      %v3366 = vand.u32 %v3354, 2147483648
      %v3367 = vor.u32 1.1754944e-38, %v3366
      %v3368 = vsel %vm3365, %v3367, %v3363
      %v3369 = vmul.f32 1.0, %v3368
      %v3370 = vmul.f32 %v3350, %v3330
      %v3371 = vadd.f32 %v3290, %v3370
      %v3372 = vtanh.pop %v3371
      %v3373 = vsub.f32 1.0, %v3369
      %v3374 = vmul.f32 %v3373, %v3372
      %v3375 = vmul.f32 %v3369, %v3057
      %v3376 = vadd.f32 %v3374, %v3375
      %s3377 = sadd.s32 %s770, 8
      %p3378 = scmp.lt.s32.totalorder %s3377, 20
      %s3379 = scalar_select %p3378, 1, 0
      %v3380 = vstv %s3379
      %vm3381 = vcmp.eq.s32.totalorder %v3380, 1
      %v3382 = vsel %vm3381, %v3171, %v3056
      %v3383 = vsel %vm3381, %v3376, %v3057
      %s3384 = scalar_lea.vmem %s254, 64
      %3385 = vst [vmem:[%s3384] sm:$0xff] %v3383
      %s3386 = scalar_lea.vmem %s248, 216
      %v3387 = vld [vmem:[%s3386] sm:$0xff]
      %v3388 = vld [vmem:[%s3386 + $0x8] sm:$0xff]
      %v3389 = vld [vmem:[%s3386 + $0x10] sm:$0xff]
      %3390 = vmatpush.msra.mxu0 %v307
      %3391 = vmatpush.msra.mxu0 %v304
      %3392 = vmatpush.msra.mxu0 %v301
      %3393 = vmatpush.msra.mxu0 %v298
      %3394 = vmatpush.msra.mxu0 %v295
      %3395 = vmatpush.msra.mxu0 %v292
      %3396 = vmatpush.msra.mxu0 %v289
      %3397 = vmatpush.msra.mxu0 %v286
      %3398 = vmatpush.msra.mxu0 %v283
      %3399 = vmatpush.msra.mxu0 %v280
      %3400 = vmatpush.msra.mxu0 %v277
      %3401 = vmatpush.msra.mxu0 %v274
      %3402 = vmatpush.msra.mxu0 %v271
      %3403 = vmatpush.msra.mxu0 %v268
      %3404 = vmatpush.msra.mxu0 %v265
      %3405 = vmatpush.msra.mxu0 %v262
      %3406 = vmatmul.f32.gmra.mxu0 %v3382
      %v3407 = vpop.f32.mrf.mxu0
      %v3408 = vadd.f32 0.0, %v3407
      %3409 = vdwg.mxu0
      %3410 = vmatpush.msra.mxu0 %v308
      %3411 = vmatpush.msra.mxu0 %v305
      %3412 = vmatpush.msra.mxu0 %v302
      %3413 = vmatpush.msra.mxu0 %v299
      %3414 = vmatpush.msra.mxu0 %v296
      %3415 = vmatpush.msra.mxu0 %v293
      %3416 = vmatpush.msra.mxu0 %v290
      %3417 = vmatpush.msra.mxu0 %v287
      %3418 = vmatpush.msra.mxu0 %v284
      %3419 = vmatpush.msra.mxu0 %v281
      %3420 = vmatpush.msra.mxu0 %v278
      %3421 = vmatpush.msra.mxu0 %v275
      %3422 = vmatpush.msra.mxu0 %v272
      %3423 = vmatpush.msra.mxu0 %v269
      %3424 = vmatpush.msra.mxu0 %v266
      %3425 = vmatpush.msra.mxu0 %v263
      %3426 = vmatmul.f32.gmra.mxu0 %v3382
      %v3427 = vpop.f32.mrf.mxu0
      %v3428 = vadd.f32 0.0, %v3427
      %3429 = vdwg.mxu0
      %3430 = vmatpush.msra.mxu0 %v309
      %3431 = vmatpush.msra.mxu0 %v306
      %3432 = vmatpush.msra.mxu0 %v303
      %3433 = vmatpush.msra.mxu0 %v300
      %3434 = vmatpush.msra.mxu0 %v297
      %3435 = vmatpush.msra.mxu0 %v294
      %3436 = vmatpush.msra.mxu0 %v291
      %3437 = vmatpush.msra.mxu0 %v288
      %3438 = vmatpush.msra.mxu0 %v285
      %3439 = vmatpush.msra.mxu0 %v282
      %3440 = vmatpush.msra.mxu0 %v279
      %3441 = vmatpush.msra.mxu0 %v276
      %3442 = vmatpush.msra.mxu0 %v273
      %3443 = vmatpush.msra.mxu0 %v270
      %3444 = vmatpush.msra.mxu0 %v267
      %3445 = vmatpush.msra.mxu0 %v264
      %3446 = vmatmul.f32.gmra.mxu0 %v3382
      %v3447 = vpop.f32.mrf.mxu0
      %v3448 = vadd.f32 0.0, %v3447
      %3449 = vdwg.mxu0
      %v3450 = vadd.f32 %v3387, %v3408
      %v3451 = vxor.u32 %v3450, 2147483648
      %v3452 = vmul.f32 %v3451, 1.442695
      %v3453 = vpow.pop %v3452
      %v3454 = vadd.f32 %v3453, 1.0
      %v3455 = vrcp.pop %v3454
      %v3456 = vmul.f32 %v3454, %v3455
      %v3457 = vsub.f32 1.0, %v3456
      %v3458 = vmul.f32 %v3455, %v3457
      %v3459 = vadd.f32 %v3455, %v3458
      %vm3460 = vweird.f32 %v3454
      %vm3461 = vweird.f32 %v3455
      %vm3462 = vmor %vm3460, %vm3461
      %v3463 = vsel %vm3462, %v3455, %v3459
      %v3464 = vand.u32 2147483647, %v3454
      %vm3465 = vcmp.eq.f32.partialorder %v3464, 8.507059e+37
      %v3466 = vand.u32 %v3454, 2147483648
      %v3467 = vor.u32 1.1754944e-38, %v3466
      %v3468 = vsel %vm3465, %v3467, %v3463
      %v3469 = vmul.f32 1.0, %v3468
      %v3470 = vadd.f32 %v3388, %v3428
      %v3471 = vxor.u32 %v3470, 2147483648
      %v3472 = vmul.f32 %v3471, 1.442695
      %v3473 = vpow.pop %v3472
      %v3474 = vadd.f32 %v3473, 1.0
      %v3475 = vrcp.pop %v3474
      %v3476 = vmul.f32 %v3474, %v3475
      %v3477 = vsub.f32 1.0, %v3476
      %v3478 = vmul.f32 %v3475, %v3477
      %v3479 = vadd.f32 %v3475, %v3478
      %vm3480 = vweird.f32 %v3474
      %vm3481 = vweird.f32 %v3475
      %vm3482 = vmor %vm3480, %vm3481
      %v3483 = vsel %vm3482, %v3475, %v3479
      %v3484 = vand.u32 2147483647, %v3474
      %vm3485 = vcmp.eq.f32.partialorder %v3484, 8.507059e+37
      %v3486 = vand.u32 %v3474, 2147483648
      %v3487 = vor.u32 1.1754944e-38, %v3486
      %v3488 = vsel %vm3485, %v3487, %v3483
      %v3489 = vmul.f32 1.0, %v3488
      %v3490 = vadd.f32 %v3448, %v546
      %v3491 = vmul.f32 %v3469, %v3490
      %v3492 = vadd.f32 %v3389, %v3491
      %v3493 = vtanh.pop %v3492
      %v3494 = vsub.f32 1.0, %v3489
      %v3495 = vmul.f32 %v3494, %v3493
      %v3496 = vmul.f32 %v3489, %v3382
      %v3497 = vadd.f32 %v3495, %v3496
      %3498 = vmatpush.msra.mxu0 %v371
      %3499 = vmatpush.msra.mxu0 %v367
      %3500 = vmatpush.msra.mxu0 %v363
      %3501 = vmatpush.msra.mxu0 %v359
      %3502 = vmatpush.msra.mxu0 %v355
      %3503 = vmatpush.msra.mxu0 %v351
      %3504 = vmatpush.msra.mxu0 %v347
      %3505 = vmatpush.msra.mxu0 %v343
      %3506 = vmatpush.msra.mxu0 %v339
      %3507 = vmatpush.msra.mxu0 %v335
      %3508 = vmatpush.msra.mxu0 %v331
      %3509 = vmatpush.msra.mxu0 %v327
      %3510 = vmatpush.msra.mxu0 %v323
      %3511 = vmatpush.msra.mxu0 %v319
      %3512 = vmatpush.msra.mxu0 %v315
      %3513 = vmatpush.msra.mxu0 %v311
      %3514 = vmatmul.f32.gmra.mxu0 %v3497
      %v3515 = vpop.f32.mrf.mxu0
      %v3516 = vadd.f32 %v557, %v3515
      %3517 = vdwg.mxu0
      %3518 = vmatpush.msra.mxu0 %v435
      %3519 = vmatpush.msra.mxu0 %v431
      %3520 = vmatpush.msra.mxu0 %v427
      %3521 = vmatpush.msra.mxu0 %v423
      %3522 = vmatpush.msra.mxu0 %v419
      %3523 = vmatpush.msra.mxu0 %v415
      %3524 = vmatpush.msra.mxu0 %v411
      %3525 = vmatpush.msra.mxu0 %v407
      %3526 = vmatpush.msra.mxu0 %v403
      %3527 = vmatpush.msra.mxu0 %v399
      %3528 = vmatpush.msra.mxu0 %v395
      %3529 = vmatpush.msra.mxu0 %v391
      %3530 = vmatpush.msra.mxu0 %v387
      %3531 = vmatpush.msra.mxu0 %v383
      %3532 = vmatpush.msra.mxu0 %v379
      %3533 = vmatpush.msra.mxu0 %v375
      %3534 = vmatmul.f32.gmra.mxu0 %v3383
      %v3535 = vpop.f32.mrf.mxu0
      %v3536 = vadd.f32 %v3516, %v3535
      %3537 = vdwg.mxu0
      %3538 = vmatpush.msra.mxu0 %v372
      %3539 = vmatpush.msra.mxu0 %v368
      %3540 = vmatpush.msra.mxu0 %v364
      %3541 = vmatpush.msra.mxu0 %v360
      %3542 = vmatpush.msra.mxu0 %v356
      %3543 = vmatpush.msra.mxu0 %v352
      %3544 = vmatpush.msra.mxu0 %v348
      %3545 = vmatpush.msra.mxu0 %v344
      %3546 = vmatpush.msra.mxu0 %v340
      %3547 = vmatpush.msra.mxu0 %v336
      %3548 = vmatpush.msra.mxu0 %v332
      %3549 = vmatpush.msra.mxu0 %v328
      %3550 = vmatpush.msra.mxu0 %v324
      %3551 = vmatpush.msra.mxu0 %v320
      %3552 = vmatpush.msra.mxu0 %v316
      %3553 = vmatpush.msra.mxu0 %v312
      %3554 = vmatmul.f32.gmra.mxu0 %v3497
      %v3555 = vpop.f32.mrf.mxu0
      %v3556 = vadd.f32 %v558, %v3555
      %3557 = vdwg.mxu0
      %3558 = vmatpush.msra.mxu0 %v436
      %3559 = vmatpush.msra.mxu0 %v432
      %3560 = vmatpush.msra.mxu0 %v428
      %3561 = vmatpush.msra.mxu0 %v424
      %3562 = vmatpush.msra.mxu0 %v420
      %3563 = vmatpush.msra.mxu0 %v416
      %3564 = vmatpush.msra.mxu0 %v412
      %3565 = vmatpush.msra.mxu0 %v408
      %3566 = vmatpush.msra.mxu0 %v404
      %3567 = vmatpush.msra.mxu0 %v400
      %3568 = vmatpush.msra.mxu0 %v396
      %3569 = vmatpush.msra.mxu0 %v392
      %3570 = vmatpush.msra.mxu0 %v388
      %3571 = vmatpush.msra.mxu0 %v384
      %3572 = vmatpush.msra.mxu0 %v380
      %3573 = vmatpush.msra.mxu0 %v376
      %3574 = vmatmul.f32.gmra.mxu0 %v3383
      %v3575 = vpop.f32.mrf.mxu0
      %v3576 = vadd.f32 %v3556, %v3575
      %3577 = vdwg.mxu0
      %3578 = vmatpush.msra.mxu0 %v373
      %3579 = vmatpush.msra.mxu0 %v369
      %3580 = vmatpush.msra.mxu0 %v365
      %3581 = vmatpush.msra.mxu0 %v361
      %3582 = vmatpush.msra.mxu0 %v357
      %3583 = vmatpush.msra.mxu0 %v353
      %3584 = vmatpush.msra.mxu0 %v349
      %3585 = vmatpush.msra.mxu0 %v345
      %3586 = vmatpush.msra.mxu0 %v341
      %3587 = vmatpush.msra.mxu0 %v337
      %3588 = vmatpush.msra.mxu0 %v333
      %3589 = vmatpush.msra.mxu0 %v329
      %3590 = vmatpush.msra.mxu0 %v325
      %3591 = vmatpush.msra.mxu0 %v321
      %3592 = vmatpush.msra.mxu0 %v317
      %3593 = vmatpush.msra.mxu0 %v313
      %3594 = vmatmul.f32.gmra.mxu0 %v3497
      %v3595 = vpop.f32.mrf.mxu0
      %v3596 = vadd.f32 %v559, %v3595
      %3597 = vdwg.mxu0
      %3598 = vmatpush.msra.mxu0 %v437
      %3599 = vmatpush.msra.mxu0 %v433
      %3600 = vmatpush.msra.mxu0 %v429
      %3601 = vmatpush.msra.mxu0 %v425
      %3602 = vmatpush.msra.mxu0 %v421
      %3603 = vmatpush.msra.mxu0 %v417
      %3604 = vmatpush.msra.mxu0 %v413
      %3605 = vmatpush.msra.mxu0 %v409
      %3606 = vmatpush.msra.mxu0 %v405
      %3607 = vmatpush.msra.mxu0 %v401
      %3608 = vmatpush.msra.mxu0 %v397
      %3609 = vmatpush.msra.mxu0 %v393
      %3610 = vmatpush.msra.mxu0 %v389
      %3611 = vmatpush.msra.mxu0 %v385
      %3612 = vmatpush.msra.mxu0 %v381
      %3613 = vmatpush.msra.mxu0 %v377
      %3614 = vmatmul.f32.gmra.mxu0 %v3383
      %v3615 = vpop.f32.mrf.mxu0
      %v3616 = vadd.f32 %v3596, %v3615
      %3617 = vdwg.mxu0
      %3618 = vmatpush.msra.mxu0 %v374
      %3619 = vmatpush.msra.mxu0 %v370
      %3620 = vmatpush.msra.mxu0 %v366
      %3621 = vmatpush.msra.mxu0 %v362
      %3622 = vmatpush.msra.mxu0 %v358
      %3623 = vmatpush.msra.mxu0 %v354
      %3624 = vmatpush.msra.mxu0 %v350
      %3625 = vmatpush.msra.mxu0 %v346
      %3626 = vmatpush.msra.mxu0 %v342
      %3627 = vmatpush.msra.mxu0 %v338
      %3628 = vmatpush.msra.mxu0 %v334
      %3629 = vmatpush.msra.mxu0 %v330
      %3630 = vmatpush.msra.mxu0 %v326
      %3631 = vmatpush.msra.mxu0 %v322
      %3632 = vmatpush.msra.mxu0 %v318
      %3633 = vmatpush.msra.mxu0 %v314
      %3634 = vmatmul.f32.gmra.mxu0 %v3497
      %v3635 = vpop.f32.mrf.mxu0
      %v3636 = vadd.f32 %v560, %v3635
      %3637 = vdwg.mxu0
      %3638 = vmatpush.msra.mxu0 %v438
      %3639 = vmatpush.msra.mxu0 %v434
      %3640 = vmatpush.msra.mxu0 %v430
      %3641 = vmatpush.msra.mxu0 %v426
      %3642 = vmatpush.msra.mxu0 %v422
      %3643 = vmatpush.msra.mxu0 %v418
      %3644 = vmatpush.msra.mxu0 %v414
      %3645 = vmatpush.msra.mxu0 %v410
      %3646 = vmatpush.msra.mxu0 %v406
      %3647 = vmatpush.msra.mxu0 %v402
      %3648 = vmatpush.msra.mxu0 %v398
      %3649 = vmatpush.msra.mxu0 %v394
      %3650 = vmatpush.msra.mxu0 %v390
      %3651 = vmatpush.msra.mxu0 %v386
      %3652 = vmatpush.msra.mxu0 %v382
      %3653 = vmatpush.msra.mxu0 %v378
      %3654 = vmatmul.f32.gmra.mxu0 %v3383
      %v3655 = vpop.f32.mrf.mxu0
      %v3656 = vadd.f32 %v3636, %v3655
      %3657 = vdwg.mxu0
      %v3658 = vxor.u32 %v3536, 2147483648
      %v3659 = vmul.f32 %v3658, 1.442695
      %v3660 = vpow.pop %v3659
      %v3661 = vadd.f32 %v3660, 1.0
      %v3662 = vrcp.pop %v3661
      %v3663 = vmul.f32 %v3661, %v3662
      %v3664 = vsub.f32 1.0, %v3663
      %v3665 = vmul.f32 %v3662, %v3664
      %v3666 = vadd.f32 %v3662, %v3665
      %vm3667 = vweird.f32 %v3661
      %vm3668 = vweird.f32 %v3662
      %vm3669 = vmor %vm3667, %vm3668
      %v3670 = vsel %vm3669, %v3662, %v3666
      %v3671 = vand.u32 2147483647, %v3661
      %vm3672 = vcmp.eq.f32.partialorder %v3671, 8.507059e+37
      %v3673 = vand.u32 %v3661, 2147483648
      %v3674 = vor.u32 1.1754944e-38, %v3673
      %v3675 = vsel %vm3672, %v3674, %v3670
      %v3676 = vmul.f32 1.0, %v3675
      %v3677 = vxor.u32 %v3576, 2147483648
      %v3678 = vmul.f32 %v3677, 1.442695
      %v3679 = vpow.pop %v3678
      %v3680 = vadd.f32 %v3679, 1.0
      %v3681 = vrcp.pop %v3680
      %v3682 = vmul.f32 %v3680, %v3681
      %v3683 = vsub.f32 1.0, %v3682
      %v3684 = vmul.f32 %v3681, %v3683
      %v3685 = vadd.f32 %v3681, %v3684
      %vm3686 = vweird.f32 %v3680
      %vm3687 = vweird.f32 %v3681
      %vm3688 = vmor %vm3686, %vm3687
      %v3689 = vsel %vm3688, %v3681, %v3685
      %v3690 = vand.u32 2147483647, %v3680
      %vm3691 = vcmp.eq.f32.partialorder %v3690, 8.507059e+37
      %v3692 = vand.u32 %v3680, 2147483648
      %v3693 = vor.u32 1.1754944e-38, %v3692
      %v3694 = vsel %vm3691, %v3693, %v3689
      %v3695 = vmul.f32 1.0, %v3694
      %v3696 = vmul.f32 %v3676, %v3656
      %v3697 = vadd.f32 %v3616, %v3696
      %v3698 = vtanh.pop %v3697
      %v3699 = vsub.f32 1.0, %v3695
      %v3700 = vmul.f32 %v3699, %v3698
      %v3701 = vmul.f32 %v3695, %v3383
      %v3702 = vadd.f32 %v3700, %v3701
      %s3703 = sadd.s32 %s770, 9
      %p3704 = scmp.lt.s32.totalorder %s3703, 20
      %s3705 = scalar_select %p3704, 1, 0
      %v3706 = vstv %s3705
      %vm3707 = vcmp.eq.s32.totalorder %v3706, 1
      %v3708 = vsel %vm3707, %v3497, %v3382
      %v3709 = vsel %vm3707, %v3702, %v3383
      %s3710 = scalar_lea.vmem %s254, 72
      %3711 = vst [vmem:[%s3710] sm:$0xff] %v3709
      %s3712 = scalar_lea.vmem %s248, 240
      %v3713 = vld [vmem:[%s3712] sm:$0xff]
      %v3714 = vld [vmem:[%s3712 + $0x8] sm:$0xff]
      %v3715 = vld [vmem:[%s3712 + $0x10] sm:$0xff]
      %3716 = vmatpush.msra.mxu0 %v307
      %3717 = vmatpush.msra.mxu0 %v304
      %3718 = vmatpush.msra.mxu0 %v301
      %3719 = vmatpush.msra.mxu0 %v298
      %3720 = vmatpush.msra.mxu0 %v295
      %3721 = vmatpush.msra.mxu0 %v292
      %3722 = vmatpush.msra.mxu0 %v289
      %3723 = vmatpush.msra.mxu0 %v286
      %3724 = vmatpush.msra.mxu0 %v283
      %3725 = vmatpush.msra.mxu0 %v280
      %3726 = vmatpush.msra.mxu0 %v277
      %3727 = vmatpush.msra.mxu0 %v274
      %3728 = vmatpush.msra.mxu0 %v271
      %3729 = vmatpush.msra.mxu0 %v268
      %3730 = vmatpush.msra.mxu0 %v265
      %3731 = vmatpush.msra.mxu0 %v262
      %3732 = vmatmul.f32.gmra.mxu0 %v3708
      %v3733 = vpop.f32.mrf.mxu0
      %v3734 = vadd.f32 0.0, %v3733
      %3735 = vdwg.mxu0
      %3736 = vmatpush.msra.mxu0 %v308
      %3737 = vmatpush.msra.mxu0 %v305
      %3738 = vmatpush.msra.mxu0 %v302
      %3739 = vmatpush.msra.mxu0 %v299
      %3740 = vmatpush.msra.mxu0 %v296
      %3741 = vmatpush.msra.mxu0 %v293
      %3742 = vmatpush.msra.mxu0 %v290
      %3743 = vmatpush.msra.mxu0 %v287
      %3744 = vmatpush.msra.mxu0 %v284
      %3745 = vmatpush.msra.mxu0 %v281
      %3746 = vmatpush.msra.mxu0 %v278
      %3747 = vmatpush.msra.mxu0 %v275
      %3748 = vmatpush.msra.mxu0 %v272
      %3749 = vmatpush.msra.mxu0 %v269
      %3750 = vmatpush.msra.mxu0 %v266
      %3751 = vmatpush.msra.mxu0 %v263
      %3752 = vmatmul.f32.gmra.mxu0 %v3708
      %v3753 = vpop.f32.mrf.mxu0
      %v3754 = vadd.f32 0.0, %v3753
      %3755 = vdwg.mxu0
      %3756 = vmatpush.msra.mxu0 %v309
      %3757 = vmatpush.msra.mxu0 %v306
      %3758 = vmatpush.msra.mxu0 %v303
      %3759 = vmatpush.msra.mxu0 %v300
      %3760 = vmatpush.msra.mxu0 %v297
      %3761 = vmatpush.msra.mxu0 %v294
      %3762 = vmatpush.msra.mxu0 %v291
      %3763 = vmatpush.msra.mxu0 %v288
      %3764 = vmatpush.msra.mxu0 %v285
      %3765 = vmatpush.msra.mxu0 %v282
      %3766 = vmatpush.msra.mxu0 %v279
      %3767 = vmatpush.msra.mxu0 %v276
      %3768 = vmatpush.msra.mxu0 %v273
      %3769 = vmatpush.msra.mxu0 %v270
      %3770 = vmatpush.msra.mxu0 %v267
      %3771 = vmatpush.msra.mxu0 %v264
      %3772 = vmatmul.f32.gmra.mxu0 %v3708
      %v3773 = vpop.f32.mrf.mxu0
      %v3774 = vadd.f32 0.0, %v3773
      %3775 = vdwg.mxu0
      %v3776 = vadd.f32 %v3713, %v3734
      %v3777 = vxor.u32 %v3776, 2147483648
      %v3778 = vmul.f32 %v3777, 1.442695
      %v3779 = vpow.pop %v3778
      %v3780 = vadd.f32 %v3779, 1.0
      %v3781 = vrcp.pop %v3780
      %v3782 = vmul.f32 %v3780, %v3781
      %v3783 = vsub.f32 1.0, %v3782
      %v3784 = vmul.f32 %v3781, %v3783
      %v3785 = vadd.f32 %v3781, %v3784
      %vm3786 = vweird.f32 %v3780
      %vm3787 = vweird.f32 %v3781
      %vm3788 = vmor %vm3786, %vm3787
      %v3789 = vsel %vm3788, %v3781, %v3785
      %v3790 = vand.u32 2147483647, %v3780
      %vm3791 = vcmp.eq.f32.partialorder %v3790, 8.507059e+37
      %v3792 = vand.u32 %v3780, 2147483648
      %v3793 = vor.u32 1.1754944e-38, %v3792
      %v3794 = vsel %vm3791, %v3793, %v3789
      %v3795 = vmul.f32 1.0, %v3794
      %v3796 = vadd.f32 %v3714, %v3754
      %v3797 = vxor.u32 %v3796, 2147483648
      %v3798 = vmul.f32 %v3797, 1.442695
      %v3799 = vpow.pop %v3798
      %v3800 = vadd.f32 %v3799, 1.0
      %v3801 = vrcp.pop %v3800
      %v3802 = vmul.f32 %v3800, %v3801
      %v3803 = vsub.f32 1.0, %v3802
      %v3804 = vmul.f32 %v3801, %v3803
      %v3805 = vadd.f32 %v3801, %v3804
      %vm3806 = vweird.f32 %v3800
      %vm3807 = vweird.f32 %v3801
      %vm3808 = vmor %vm3806, %vm3807
      %v3809 = vsel %vm3808, %v3801, %v3805
      %v3810 = vand.u32 2147483647, %v3800
      %vm3811 = vcmp.eq.f32.partialorder %v3810, 8.507059e+37
      %v3812 = vand.u32 %v3800, 2147483648
      %v3813 = vor.u32 1.1754944e-38, %v3812
      %v3814 = vsel %vm3811, %v3813, %v3809
      %v3815 = vmul.f32 1.0, %v3814
      %v3816 = vadd.f32 %v3774, %v546
      %v3817 = vmul.f32 %v3795, %v3816
      %v3818 = vadd.f32 %v3715, %v3817
      %v3819 = vtanh.pop %v3818
      %v3820 = vsub.f32 1.0, %v3815
      %v3821 = vmul.f32 %v3820, %v3819
      %v3822 = vmul.f32 %v3815, %v3708
      %v3823 = vadd.f32 %v3821, %v3822
      %3824 = vmatpush.msra.mxu0 %v371
      %3825 = vmatpush.msra.mxu0 %v367
      %3826 = vmatpush.msra.mxu0 %v363
      %3827 = vmatpush.msra.mxu0 %v359
      %3828 = vmatpush.msra.mxu0 %v355
      %3829 = vmatpush.msra.mxu0 %v351
      %3830 = vmatpush.msra.mxu0 %v347
      %3831 = vmatpush.msra.mxu0 %v343
      %3832 = vmatpush.msra.mxu0 %v339
      %3833 = vmatpush.msra.mxu0 %v335
      %3834 = vmatpush.msra.mxu0 %v331
      %3835 = vmatpush.msra.mxu0 %v327
      %3836 = vmatpush.msra.mxu0 %v323
      %3837 = vmatpush.msra.mxu0 %v319
      %3838 = vmatpush.msra.mxu0 %v315
      %3839 = vmatpush.msra.mxu0 %v311
      %3840 = vmatmul.f32.gmra.mxu0 %v3823
      %v3841 = vpop.f32.mrf.mxu0
      %v3842 = vadd.f32 %v557, %v3841
      %3843 = vdwg.mxu0
      %3844 = vmatpush.msra.mxu0 %v435
      %3845 = vmatpush.msra.mxu0 %v431
      %3846 = vmatpush.msra.mxu0 %v427
      %3847 = vmatpush.msra.mxu0 %v423
      %3848 = vmatpush.msra.mxu0 %v419
      %3849 = vmatpush.msra.mxu0 %v415
      %3850 = vmatpush.msra.mxu0 %v411
      %3851 = vmatpush.msra.mxu0 %v407
      %3852 = vmatpush.msra.mxu0 %v403
      %3853 = vmatpush.msra.mxu0 %v399
      %3854 = vmatpush.msra.mxu0 %v395
      %3855 = vmatpush.msra.mxu0 %v391
      %3856 = vmatpush.msra.mxu0 %v387
      %3857 = vmatpush.msra.mxu0 %v383
      %3858 = vmatpush.msra.mxu0 %v379
      %3859 = vmatpush.msra.mxu0 %v375
      %3860 = vmatmul.f32.gmra.mxu0 %v3709
      %v3861 = vpop.f32.mrf.mxu0
      %v3862 = vadd.f32 %v3842, %v3861
      %3863 = vdwg.mxu0
      %3864 = vmatpush.msra.mxu0 %v372
      %3865 = vmatpush.msra.mxu0 %v368
      %3866 = vmatpush.msra.mxu0 %v364
      %3867 = vmatpush.msra.mxu0 %v360
      %3868 = vmatpush.msra.mxu0 %v356
      %3869 = vmatpush.msra.mxu0 %v352
      %3870 = vmatpush.msra.mxu0 %v348
      %3871 = vmatpush.msra.mxu0 %v344
      %3872 = vmatpush.msra.mxu0 %v340
      %3873 = vmatpush.msra.mxu0 %v336
      %3874 = vmatpush.msra.mxu0 %v332
      %3875 = vmatpush.msra.mxu0 %v328
      %3876 = vmatpush.msra.mxu0 %v324
      %3877 = vmatpush.msra.mxu0 %v320
      %3878 = vmatpush.msra.mxu0 %v316
      %3879 = vmatpush.msra.mxu0 %v312
      %3880 = vmatmul.f32.gmra.mxu0 %v3823
      %v3881 = vpop.f32.mrf.mxu0
      %v3882 = vadd.f32 %v558, %v3881
      %3883 = vdwg.mxu0
      %3884 = vmatpush.msra.mxu0 %v436
      %3885 = vmatpush.msra.mxu0 %v432
      %3886 = vmatpush.msra.mxu0 %v428
      %3887 = vmatpush.msra.mxu0 %v424
      %3888 = vmatpush.msra.mxu0 %v420
      %3889 = vmatpush.msra.mxu0 %v416
      %3890 = vmatpush.msra.mxu0 %v412
      %3891 = vmatpush.msra.mxu0 %v408
      %3892 = vmatpush.msra.mxu0 %v404
      %3893 = vmatpush.msra.mxu0 %v400
      %3894 = vmatpush.msra.mxu0 %v396
      %3895 = vmatpush.msra.mxu0 %v392
      %3896 = vmatpush.msra.mxu0 %v388
      %3897 = vmatpush.msra.mxu0 %v384
      %3898 = vmatpush.msra.mxu0 %v380
      %3899 = vmatpush.msra.mxu0 %v376
      %3900 = vmatmul.f32.gmra.mxu0 %v3709
      %v3901 = vpop.f32.mrf.mxu0
      %v3902 = vadd.f32 %v3882, %v3901
      %3903 = vdwg.mxu0
      %3904 = vmatpush.msra.mxu0 %v373
      %3905 = vmatpush.msra.mxu0 %v369
      %3906 = vmatpush.msra.mxu0 %v365
      %3907 = vmatpush.msra.mxu0 %v361
      %3908 = vmatpush.msra.mxu0 %v357
      %3909 = vmatpush.msra.mxu0 %v353
      %3910 = vmatpush.msra.mxu0 %v349
      %3911 = vmatpush.msra.mxu0 %v345
      %3912 = vmatpush.msra.mxu0 %v341
      %3913 = vmatpush.msra.mxu0 %v337
      %3914 = vmatpush.msra.mxu0 %v333
      %3915 = vmatpush.msra.mxu0 %v329
      %3916 = vmatpush.msra.mxu0 %v325
      %3917 = vmatpush.msra.mxu0 %v321
      %3918 = vmatpush.msra.mxu0 %v317
      %3919 = vmatpush.msra.mxu0 %v313
      %3920 = vmatmul.f32.gmra.mxu0 %v3823
      %v3921 = vpop.f32.mrf.mxu0
      %v3922 = vadd.f32 %v559, %v3921
      %3923 = vdwg.mxu0
      %3924 = vmatpush.msra.mxu0 %v437
      %3925 = vmatpush.msra.mxu0 %v433
      %3926 = vmatpush.msra.mxu0 %v429
      %3927 = vmatpush.msra.mxu0 %v425
      %3928 = vmatpush.msra.mxu0 %v421
      %3929 = vmatpush.msra.mxu0 %v417
      %3930 = vmatpush.msra.mxu0 %v413
      %3931 = vmatpush.msra.mxu0 %v409
      %3932 = vmatpush.msra.mxu0 %v405
      %3933 = vmatpush.msra.mxu0 %v401
      %3934 = vmatpush.msra.mxu0 %v397
      %3935 = vmatpush.msra.mxu0 %v393
      %3936 = vmatpush.msra.mxu0 %v389
      %3937 = vmatpush.msra.mxu0 %v385
      %3938 = vmatpush.msra.mxu0 %v381
      %3939 = vmatpush.msra.mxu0 %v377
      %3940 = vmatmul.f32.gmra.mxu0 %v3709
      %v3941 = vpop.f32.mrf.mxu0
      %v3942 = vadd.f32 %v3922, %v3941
      %3943 = vdwg.mxu0
      %3944 = vmatpush.msra.mxu0 %v374
      %3945 = vmatpush.msra.mxu0 %v370
      %3946 = vmatpush.msra.mxu0 %v366
      %3947 = vmatpush.msra.mxu0 %v362
      %3948 = vmatpush.msra.mxu0 %v358
      %3949 = vmatpush.msra.mxu0 %v354
      %3950 = vmatpush.msra.mxu0 %v350
      %3951 = vmatpush.msra.mxu0 %v346
      %3952 = vmatpush.msra.mxu0 %v342
      %3953 = vmatpush.msra.mxu0 %v338
      %3954 = vmatpush.msra.mxu0 %v334
      %3955 = vmatpush.msra.mxu0 %v330
      %3956 = vmatpush.msra.mxu0 %v326
      %3957 = vmatpush.msra.mxu0 %v322
      %3958 = vmatpush.msra.mxu0 %v318
      %3959 = vmatpush.msra.mxu0 %v314
      %3960 = vmatmul.f32.gmra.mxu0 %v3823
      %v3961 = vpop.f32.mrf.mxu0
      %v3962 = vadd.f32 %v560, %v3961
      %3963 = vdwg.mxu0
      %3964 = vmatpush.msra.mxu0 %v438
      %3965 = vmatpush.msra.mxu0 %v434
      %3966 = vmatpush.msra.mxu0 %v430
      %3967 = vmatpush.msra.mxu0 %v426
      %3968 = vmatpush.msra.mxu0 %v422
      %3969 = vmatpush.msra.mxu0 %v418
      %3970 = vmatpush.msra.mxu0 %v414
      %3971 = vmatpush.msra.mxu0 %v410
      %3972 = vmatpush.msra.mxu0 %v406
      %3973 = vmatpush.msra.mxu0 %v402
      %3974 = vmatpush.msra.mxu0 %v398
      %3975 = vmatpush.msra.mxu0 %v394
      %3976 = vmatpush.msra.mxu0 %v390
      %3977 = vmatpush.msra.mxu0 %v386
      %3978 = vmatpush.msra.mxu0 %v382
      %3979 = vmatpush.msra.mxu0 %v378
      %3980 = vmatmul.f32.gmra.mxu0 %v3709
      %v3981 = vpop.f32.mrf.mxu0
      %v3982 = vadd.f32 %v3962, %v3981
      %3983 = vdwg.mxu0
      %v3984 = vxor.u32 %v3862, 2147483648
      %v3985 = vmul.f32 %v3984, 1.442695
      %v3986 = vpow.pop %v3985
      %v3987 = vadd.f32 %v3986, 1.0
      %v3988 = vrcp.pop %v3987
      %v3989 = vmul.f32 %v3987, %v3988
      %v3990 = vsub.f32 1.0, %v3989
      %v3991 = vmul.f32 %v3988, %v3990
      %v3992 = vadd.f32 %v3988, %v3991
      %vm3993 = vweird.f32 %v3987
      %vm3994 = vweird.f32 %v3988
      %vm3995 = vmor %vm3993, %vm3994
      %v3996 = vsel %vm3995, %v3988, %v3992
      %v3997 = vand.u32 2147483647, %v3987
      %vm3998 = vcmp.eq.f32.partialorder %v3997, 8.507059e+37
      %v3999 = vand.u32 %v3987, 2147483648
      %v4000 = vor.u32 1.1754944e-38, %v3999
      %v4001 = vsel %vm3998, %v4000, %v3996
      %v4002 = vmul.f32 1.0, %v4001
      %v4003 = vxor.u32 %v3902, 2147483648
      %v4004 = vmul.f32 %v4003, 1.442695
      %v4005 = vpow.pop %v4004
      %v4006 = vadd.f32 %v4005, 1.0
      %v4007 = vrcp.pop %v4006
      %v4008 = vmul.f32 %v4006, %v4007
      %v4009 = vsub.f32 1.0, %v4008
      %v4010 = vmul.f32 %v4007, %v4009
      %v4011 = vadd.f32 %v4007, %v4010
      %vm4012 = vweird.f32 %v4006
      %vm4013 = vweird.f32 %v4007
      %vm4014 = vmor %vm4012, %vm4013
      %v4015 = vsel %vm4014, %v4007, %v4011
      %v4016 = vand.u32 2147483647, %v4006
      %vm4017 = vcmp.eq.f32.partialorder %v4016, 8.507059e+37
      %v4018 = vand.u32 %v4006, 2147483648
      %v4019 = vor.u32 1.1754944e-38, %v4018
      %v4020 = vsel %vm4017, %v4019, %v4015
      %v4021 = vmul.f32 1.0, %v4020
      %v4022 = vmul.f32 %v4002, %v3982
      %v4023 = vadd.f32 %v3942, %v4022
      %v4024 = vtanh.pop %v4023
      %v4025 = vsub.f32 1.0, %v4021
      %v4026 = vmul.f32 %v4025, %v4024
      %v4027 = vmul.f32 %v4021, %v3709
      %v4028 = vadd.f32 %v4026, %v4027
      %s4029 = sadd.s32 %s770, 10
      %p4030 = scmp.lt.s32.totalorder %s4029, 20
      %s4031 = scalar_select %p4030, 1, 0
      %v4032 = vstv %s4031
      %vm4033 = vcmp.eq.s32.totalorder %v4032, 1
      %v4034 = vsel %vm4033, %v3823, %v3708
      %v4035 = vsel %vm4033, %v4028, %v3709
      %s4036 = scalar_lea.vmem %s254, 80
      %4037 = vst [vmem:[%s4036] sm:$0xff] %v4035
      %s4038 = scalar_lea.vmem %s248, 264
      %v4039 = vld [vmem:[%s4038] sm:$0xff]
      %v4040 = vld [vmem:[%s4038 + $0x8] sm:$0xff]
      %v4041 = vld [vmem:[%s4038 + $0x10] sm:$0xff]
      %4042 = vmatpush.msra.mxu0 %v307
      %4043 = vmatpush.msra.mxu0 %v304
      %4044 = vmatpush.msra.mxu0 %v301
      %4045 = vmatpush.msra.mxu0 %v298
      %4046 = vmatpush.msra.mxu0 %v295
      %4047 = vmatpush.msra.mxu0 %v292
      %4048 = vmatpush.msra.mxu0 %v289
      %4049 = vmatpush.msra.mxu0 %v286
      %4050 = vmatpush.msra.mxu0 %v283
      %4051 = vmatpush.msra.mxu0 %v280
      %4052 = vmatpush.msra.mxu0 %v277
      %4053 = vmatpush.msra.mxu0 %v274
      %4054 = vmatpush.msra.mxu0 %v271
      %4055 = vmatpush.msra.mxu0 %v268
      %4056 = vmatpush.msra.mxu0 %v265
      %4057 = vmatpush.msra.mxu0 %v262
      %4058 = vmatmul.f32.gmra.mxu0 %v4034
      %v4059 = vpop.f32.mrf.mxu0
      %v4060 = vadd.f32 0.0, %v4059
      %4061 = vdwg.mxu0
      %4062 = vmatpush.msra.mxu0 %v308
      %4063 = vmatpush.msra.mxu0 %v305
      %4064 = vmatpush.msra.mxu0 %v302
      %4065 = vmatpush.msra.mxu0 %v299
      %4066 = vmatpush.msra.mxu0 %v296
      %4067 = vmatpush.msra.mxu0 %v293
      %4068 = vmatpush.msra.mxu0 %v290
      %4069 = vmatpush.msra.mxu0 %v287
      %4070 = vmatpush.msra.mxu0 %v284
      %4071 = vmatpush.msra.mxu0 %v281
      %4072 = vmatpush.msra.mxu0 %v278
      %4073 = vmatpush.msra.mxu0 %v275
      %4074 = vmatpush.msra.mxu0 %v272
      %4075 = vmatpush.msra.mxu0 %v269
      %4076 = vmatpush.msra.mxu0 %v266
      %4077 = vmatpush.msra.mxu0 %v263
      %4078 = vmatmul.f32.gmra.mxu0 %v4034
      %v4079 = vpop.f32.mrf.mxu0
      %v4080 = vadd.f32 0.0, %v4079
      %4081 = vdwg.mxu0
      %4082 = vmatpush.msra.mxu0 %v309
      %4083 = vmatpush.msra.mxu0 %v306
      %4084 = vmatpush.msra.mxu0 %v303
      %4085 = vmatpush.msra.mxu0 %v300
      %4086 = vmatpush.msra.mxu0 %v297
      %4087 = vmatpush.msra.mxu0 %v294
      %4088 = vmatpush.msra.mxu0 %v291
      %4089 = vmatpush.msra.mxu0 %v288
      %4090 = vmatpush.msra.mxu0 %v285
      %4091 = vmatpush.msra.mxu0 %v282
      %4092 = vmatpush.msra.mxu0 %v279
      %4093 = vmatpush.msra.mxu0 %v276
      %4094 = vmatpush.msra.mxu0 %v273
      %4095 = vmatpush.msra.mxu0 %v270
      %4096 = vmatpush.msra.mxu0 %v267
      %4097 = vmatpush.msra.mxu0 %v264
      %4098 = vmatmul.f32.gmra.mxu0 %v4034
      %v4099 = vpop.f32.mrf.mxu0
      %v4100 = vadd.f32 0.0, %v4099
      %4101 = vdwg.mxu0
      %v4102 = vadd.f32 %v4039, %v4060
      %v4103 = vxor.u32 %v4102, 2147483648
      %v4104 = vmul.f32 %v4103, 1.442695
      %v4105 = vpow.pop %v4104
      %v4106 = vadd.f32 %v4105, 1.0
      %v4107 = vrcp.pop %v4106
      %v4108 = vmul.f32 %v4106, %v4107
      %v4109 = vsub.f32 1.0, %v4108
      %v4110 = vmul.f32 %v4107, %v4109
      %v4111 = vadd.f32 %v4107, %v4110
      %vm4112 = vweird.f32 %v4106
      %vm4113 = vweird.f32 %v4107
      %vm4114 = vmor %vm4112, %vm4113
      %v4115 = vsel %vm4114, %v4107, %v4111
      %v4116 = vand.u32 2147483647, %v4106
      %vm4117 = vcmp.eq.f32.partialorder %v4116, 8.507059e+37
      %v4118 = vand.u32 %v4106, 2147483648
      %v4119 = vor.u32 1.1754944e-38, %v4118
      %v4120 = vsel %vm4117, %v4119, %v4115
      %v4121 = vmul.f32 1.0, %v4120
      %v4122 = vadd.f32 %v4040, %v4080
      %v4123 = vxor.u32 %v4122, 2147483648
      %v4124 = vmul.f32 %v4123, 1.442695
      %v4125 = vpow.pop %v4124
      %v4126 = vadd.f32 %v4125, 1.0
      %v4127 = vrcp.pop %v4126
      %v4128 = vmul.f32 %v4126, %v4127
      %v4129 = vsub.f32 1.0, %v4128
      %v4130 = vmul.f32 %v4127, %v4129
      %v4131 = vadd.f32 %v4127, %v4130
      %vm4132 = vweird.f32 %v4126
      %vm4133 = vweird.f32 %v4127
      %vm4134 = vmor %vm4132, %vm4133
      %v4135 = vsel %vm4134, %v4127, %v4131
      %v4136 = vand.u32 2147483647, %v4126
      %vm4137 = vcmp.eq.f32.partialorder %v4136, 8.507059e+37
      %v4138 = vand.u32 %v4126, 2147483648
      %v4139 = vor.u32 1.1754944e-38, %v4138
      %v4140 = vsel %vm4137, %v4139, %v4135
      %v4141 = vmul.f32 1.0, %v4140
      %v4142 = vadd.f32 %v4100, %v546
      %v4143 = vmul.f32 %v4121, %v4142
      %v4144 = vadd.f32 %v4041, %v4143
      %v4145 = vtanh.pop %v4144
      %v4146 = vsub.f32 1.0, %v4141
      %v4147 = vmul.f32 %v4146, %v4145
      %v4148 = vmul.f32 %v4141, %v4034
      %v4149 = vadd.f32 %v4147, %v4148
      %4150 = vmatpush.msra.mxu0 %v371
      %4151 = vmatpush.msra.mxu0 %v367
      %4152 = vmatpush.msra.mxu0 %v363
      %4153 = vmatpush.msra.mxu0 %v359
      %4154 = vmatpush.msra.mxu0 %v355
      %4155 = vmatpush.msra.mxu0 %v351
      %4156 = vmatpush.msra.mxu0 %v347
      %4157 = vmatpush.msra.mxu0 %v343
      %4158 = vmatpush.msra.mxu0 %v339
      %4159 = vmatpush.msra.mxu0 %v335
      %4160 = vmatpush.msra.mxu0 %v331
      %4161 = vmatpush.msra.mxu0 %v327
      %4162 = vmatpush.msra.mxu0 %v323
      %4163 = vmatpush.msra.mxu0 %v319
      %4164 = vmatpush.msra.mxu0 %v315
      %4165 = vmatpush.msra.mxu0 %v311
      %4166 = vmatmul.f32.gmra.mxu0 %v4149
      %v4167 = vpop.f32.mrf.mxu0
      %v4168 = vadd.f32 %v557, %v4167
      %4169 = vdwg.mxu0
      %4170 = vmatpush.msra.mxu0 %v435
      %4171 = vmatpush.msra.mxu0 %v431
      %4172 = vmatpush.msra.mxu0 %v427
      %4173 = vmatpush.msra.mxu0 %v423
      %4174 = vmatpush.msra.mxu0 %v419
      %4175 = vmatpush.msra.mxu0 %v415
      %4176 = vmatpush.msra.mxu0 %v411
      %4177 = vmatpush.msra.mxu0 %v407
      %4178 = vmatpush.msra.mxu0 %v403
      %4179 = vmatpush.msra.mxu0 %v399
      %4180 = vmatpush.msra.mxu0 %v395
      %4181 = vmatpush.msra.mxu0 %v391
      %4182 = vmatpush.msra.mxu0 %v387
      %4183 = vmatpush.msra.mxu0 %v383
      %4184 = vmatpush.msra.mxu0 %v379
      %4185 = vmatpush.msra.mxu0 %v375
      %4186 = vmatmul.f32.gmra.mxu0 %v4035
      %v4187 = vpop.f32.mrf.mxu0
      %v4188 = vadd.f32 %v4168, %v4187
      %4189 = vdwg.mxu0
      %4190 = vmatpush.msra.mxu0 %v372
      %4191 = vmatpush.msra.mxu0 %v368
      %4192 = vmatpush.msra.mxu0 %v364
      %4193 = vmatpush.msra.mxu0 %v360
      %4194 = vmatpush.msra.mxu0 %v356
      %4195 = vmatpush.msra.mxu0 %v352
      %4196 = vmatpush.msra.mxu0 %v348
      %4197 = vmatpush.msra.mxu0 %v344
      %4198 = vmatpush.msra.mxu0 %v340
      %4199 = vmatpush.msra.mxu0 %v336
      %4200 = vmatpush.msra.mxu0 %v332
      %4201 = vmatpush.msra.mxu0 %v328
      %4202 = vmatpush.msra.mxu0 %v324
      %4203 = vmatpush.msra.mxu0 %v320
      %4204 = vmatpush.msra.mxu0 %v316
      %4205 = vmatpush.msra.mxu0 %v312
      %4206 = vmatmul.f32.gmra.mxu0 %v4149
      %v4207 = vpop.f32.mrf.mxu0
      %v4208 = vadd.f32 %v558, %v4207
      %4209 = vdwg.mxu0
      %4210 = vmatpush.msra.mxu0 %v436
      %4211 = vmatpush.msra.mxu0 %v432
      %4212 = vmatpush.msra.mxu0 %v428
      %4213 = vmatpush.msra.mxu0 %v424
      %4214 = vmatpush.msra.mxu0 %v420
      %4215 = vmatpush.msra.mxu0 %v416
      %4216 = vmatpush.msra.mxu0 %v412
      %4217 = vmatpush.msra.mxu0 %v408
      %4218 = vmatpush.msra.mxu0 %v404
      %4219 = vmatpush.msra.mxu0 %v400
      %4220 = vmatpush.msra.mxu0 %v396
      %4221 = vmatpush.msra.mxu0 %v392
      %4222 = vmatpush.msra.mxu0 %v388
      %4223 = vmatpush.msra.mxu0 %v384
      %4224 = vmatpush.msra.mxu0 %v380
      %4225 = vmatpush.msra.mxu0 %v376
      %4226 = vmatmul.f32.gmra.mxu0 %v4035
      %v4227 = vpop.f32.mrf.mxu0
      %v4228 = vadd.f32 %v4208, %v4227
      %4229 = vdwg.mxu0
      %4230 = vmatpush.msra.mxu0 %v373
      %4231 = vmatpush.msra.mxu0 %v369
      %4232 = vmatpush.msra.mxu0 %v365
      %4233 = vmatpush.msra.mxu0 %v361
      %4234 = vmatpush.msra.mxu0 %v357
      %4235 = vmatpush.msra.mxu0 %v353
      %4236 = vmatpush.msra.mxu0 %v349
      %4237 = vmatpush.msra.mxu0 %v345
      %4238 = vmatpush.msra.mxu0 %v341
      %4239 = vmatpush.msra.mxu0 %v337
      %4240 = vmatpush.msra.mxu0 %v333
      %4241 = vmatpush.msra.mxu0 %v329
      %4242 = vmatpush.msra.mxu0 %v325
      %4243 = vmatpush.msra.mxu0 %v321
      %4244 = vmatpush.msra.mxu0 %v317
      %4245 = vmatpush.msra.mxu0 %v313
      %4246 = vmatmul.f32.gmra.mxu0 %v4149
      %v4247 = vpop.f32.mrf.mxu0
      %v4248 = vadd.f32 %v559, %v4247
      %4249 = vdwg.mxu0
      %4250 = vmatpush.msra.mxu0 %v437
      %4251 = vmatpush.msra.mxu0 %v433
      %4252 = vmatpush.msra.mxu0 %v429
      %4253 = vmatpush.msra.mxu0 %v425
      %4254 = vmatpush.msra.mxu0 %v421
      %4255 = vmatpush.msra.mxu0 %v417
      %4256 = vmatpush.msra.mxu0 %v413
      %4257 = vmatpush.msra.mxu0 %v409
      %4258 = vmatpush.msra.mxu0 %v405
      %4259 = vmatpush.msra.mxu0 %v401
      %4260 = vmatpush.msra.mxu0 %v397
      %4261 = vmatpush.msra.mxu0 %v393
      %4262 = vmatpush.msra.mxu0 %v389
      %4263 = vmatpush.msra.mxu0 %v385
      %4264 = vmatpush.msra.mxu0 %v381
      %4265 = vmatpush.msra.mxu0 %v377
      %4266 = vmatmul.f32.gmra.mxu0 %v4035
      %v4267 = vpop.f32.mrf.mxu0
      %v4268 = vadd.f32 %v4248, %v4267
      %4269 = vdwg.mxu0
      %4270 = vmatpush.msra.mxu0 %v374
      %4271 = vmatpush.msra.mxu0 %v370
      %4272 = vmatpush.msra.mxu0 %v366
      %4273 = vmatpush.msra.mxu0 %v362
      %4274 = vmatpush.msra.mxu0 %v358
      %4275 = vmatpush.msra.mxu0 %v354
      %4276 = vmatpush.msra.mxu0 %v350
      %4277 = vmatpush.msra.mxu0 %v346
      %4278 = vmatpush.msra.mxu0 %v342
      %4279 = vmatpush.msra.mxu0 %v338
      %4280 = vmatpush.msra.mxu0 %v334
      %4281 = vmatpush.msra.mxu0 %v330
      %4282 = vmatpush.msra.mxu0 %v326
      %4283 = vmatpush.msra.mxu0 %v322
      %4284 = vmatpush.msra.mxu0 %v318
      %4285 = vmatpush.msra.mxu0 %v314
      %4286 = vmatmul.f32.gmra.mxu0 %v4149
      %v4287 = vpop.f32.mrf.mxu0
      %v4288 = vadd.f32 %v560, %v4287
      %4289 = vdwg.mxu0
      %4290 = vmatpush.msra.mxu0 %v438
      %4291 = vmatpush.msra.mxu0 %v434
      %4292 = vmatpush.msra.mxu0 %v430
      %4293 = vmatpush.msra.mxu0 %v426
      %4294 = vmatpush.msra.mxu0 %v422
      %4295 = vmatpush.msra.mxu0 %v418
      %4296 = vmatpush.msra.mxu0 %v414
      %4297 = vmatpush.msra.mxu0 %v410
      %4298 = vmatpush.msra.mxu0 %v406
      %4299 = vmatpush.msra.mxu0 %v402
      %4300 = vmatpush.msra.mxu0 %v398
      %4301 = vmatpush.msra.mxu0 %v394
      %4302 = vmatpush.msra.mxu0 %v390
      %4303 = vmatpush.msra.mxu0 %v386
      %4304 = vmatpush.msra.mxu0 %v382
      %4305 = vmatpush.msra.mxu0 %v378
      %4306 = vmatmul.f32.gmra.mxu0 %v4035
      %v4307 = vpop.f32.mrf.mxu0
      %v4308 = vadd.f32 %v4288, %v4307
      %4309 = vdwg.mxu0
      %v4310 = vxor.u32 %v4188, 2147483648
      %v4311 = vmul.f32 %v4310, 1.442695
      %v4312 = vpow.pop %v4311
      %v4313 = vadd.f32 %v4312, 1.0
      %v4314 = vrcp.pop %v4313
      %v4315 = vmul.f32 %v4313, %v4314
      %v4316 = vsub.f32 1.0, %v4315
      %v4317 = vmul.f32 %v4314, %v4316
      %v4318 = vadd.f32 %v4314, %v4317
      %vm4319 = vweird.f32 %v4313
      %vm4320 = vweird.f32 %v4314
      %vm4321 = vmor %vm4319, %vm4320
      %v4322 = vsel %vm4321, %v4314, %v4318
      %v4323 = vand.u32 2147483647, %v4313
      %vm4324 = vcmp.eq.f32.partialorder %v4323, 8.507059e+37
      %v4325 = vand.u32 %v4313, 2147483648
      %v4326 = vor.u32 1.1754944e-38, %v4325
      %v4327 = vsel %vm4324, %v4326, %v4322
      %v4328 = vmul.f32 1.0, %v4327
      %v4329 = vxor.u32 %v4228, 2147483648
      %v4330 = vmul.f32 %v4329, 1.442695
      %v4331 = vpow.pop %v4330
      %v4332 = vadd.f32 %v4331, 1.0
      %v4333 = vrcp.pop %v4332
      %v4334 = vmul.f32 %v4332, %v4333
      %v4335 = vsub.f32 1.0, %v4334
      %v4336 = vmul.f32 %v4333, %v4335
      %v4337 = vadd.f32 %v4333, %v4336
      %vm4338 = vweird.f32 %v4332
      %vm4339 = vweird.f32 %v4333
      %vm4340 = vmor %vm4338, %vm4339
      %v4341 = vsel %vm4340, %v4333, %v4337
      %v4342 = vand.u32 2147483647, %v4332
      %vm4343 = vcmp.eq.f32.partialorder %v4342, 8.507059e+37
      %v4344 = vand.u32 %v4332, 2147483648
      %v4345 = vor.u32 1.1754944e-38, %v4344
      %v4346 = vsel %vm4343, %v4345, %v4341
      %v4347 = vmul.f32 1.0, %v4346
      %v4348 = vmul.f32 %v4328, %v4308
      %v4349 = vadd.f32 %v4268, %v4348
      %v4350 = vtanh.pop %v4349
      %v4351 = vsub.f32 1.0, %v4347
      %v4352 = vmul.f32 %v4351, %v4350
      %v4353 = vmul.f32 %v4347, %v4035
      %v4354 = vadd.f32 %v4352, %v4353
      %s4355 = sadd.s32 %s770, 11
      %p4356 = scmp.lt.s32.totalorder %s4355, 20
      %s4357 = scalar_select %p4356, 1, 0
      %v4358 = vstv %s4357
      %vm4359 = vcmp.eq.s32.totalorder %v4358, 1
      %v4360 = vsel %vm4359, %v4149, %v4034
      %v4361 = vsel %vm4359, %v4354, %v4035
      %s4362 = scalar_lea.vmem %s254, 88
      %4363 = vst [vmem:[%s4362] sm:$0xff] %v4361
      %s4364 = scalar_lea.vmem %s248, 288
      %v4365 = vld [vmem:[%s4364] sm:$0xff]
      %v4366 = vld [vmem:[%s4364 + $0x8] sm:$0xff]
      %v4367 = vld [vmem:[%s4364 + $0x10] sm:$0xff]
      %4368 = vmatpush.msra.mxu0 %v307
      %4369 = vmatpush.msra.mxu0 %v304
      %4370 = vmatpush.msra.mxu0 %v301
      %4371 = vmatpush.msra.mxu0 %v298
      %4372 = vmatpush.msra.mxu0 %v295
      %4373 = vmatpush.msra.mxu0 %v292
      %4374 = vmatpush.msra.mxu0 %v289
      %4375 = vmatpush.msra.mxu0 %v286
      %4376 = vmatpush.msra.mxu0 %v283
      %4377 = vmatpush.msra.mxu0 %v280
      %4378 = vmatpush.msra.mxu0 %v277
      %4379 = vmatpush.msra.mxu0 %v274
      %4380 = vmatpush.msra.mxu0 %v271
      %4381 = vmatpush.msra.mxu0 %v268
      %4382 = vmatpush.msra.mxu0 %v265
      %4383 = vmatpush.msra.mxu0 %v262
      %4384 = vmatmul.f32.gmra.mxu0 %v4360
      %v4385 = vpop.f32.mrf.mxu0
      %v4386 = vadd.f32 0.0, %v4385
      %4387 = vdwg.mxu0
      %4388 = vmatpush.msra.mxu0 %v308
      %4389 = vmatpush.msra.mxu0 %v305
      %4390 = vmatpush.msra.mxu0 %v302
      %4391 = vmatpush.msra.mxu0 %v299
      %4392 = vmatpush.msra.mxu0 %v296
      %4393 = vmatpush.msra.mxu0 %v293
      %4394 = vmatpush.msra.mxu0 %v290
      %4395 = vmatpush.msra.mxu0 %v287
      %4396 = vmatpush.msra.mxu0 %v284
      %4397 = vmatpush.msra.mxu0 %v281
      %4398 = vmatpush.msra.mxu0 %v278
      %4399 = vmatpush.msra.mxu0 %v275
      %4400 = vmatpush.msra.mxu0 %v272
      %4401 = vmatpush.msra.mxu0 %v269
      %4402 = vmatpush.msra.mxu0 %v266
      %4403 = vmatpush.msra.mxu0 %v263
      %4404 = vmatmul.f32.gmra.mxu0 %v4360
      %v4405 = vpop.f32.mrf.mxu0
      %v4406 = vadd.f32 0.0, %v4405
      %4407 = vdwg.mxu0
      %4408 = vmatpush.msra.mxu0 %v309
      %4409 = vmatpush.msra.mxu0 %v306
      %4410 = vmatpush.msra.mxu0 %v303
      %4411 = vmatpush.msra.mxu0 %v300
      %4412 = vmatpush.msra.mxu0 %v297
      %4413 = vmatpush.msra.mxu0 %v294
      %4414 = vmatpush.msra.mxu0 %v291
      %4415 = vmatpush.msra.mxu0 %v288
      %4416 = vmatpush.msra.mxu0 %v285
      %4417 = vmatpush.msra.mxu0 %v282
      %4418 = vmatpush.msra.mxu0 %v279
      %4419 = vmatpush.msra.mxu0 %v276
      %4420 = vmatpush.msra.mxu0 %v273
      %4421 = vmatpush.msra.mxu0 %v270
      %4422 = vmatpush.msra.mxu0 %v267
      %4423 = vmatpush.msra.mxu0 %v264
      %4424 = vmatmul.f32.gmra.mxu0 %v4360
      %v4425 = vpop.f32.mrf.mxu0
      %v4426 = vadd.f32 0.0, %v4425
      %4427 = vdwg.mxu0
      %v4428 = vadd.f32 %v4365, %v4386
      %v4429 = vxor.u32 %v4428, 2147483648
      %v4430 = vmul.f32 %v4429, 1.442695
      %v4431 = vpow.pop %v4430
      %v4432 = vadd.f32 %v4431, 1.0
      %v4433 = vrcp.pop %v4432
      %v4434 = vmul.f32 %v4432, %v4433
      %v4435 = vsub.f32 1.0, %v4434
      %v4436 = vmul.f32 %v4433, %v4435
      %v4437 = vadd.f32 %v4433, %v4436
      %vm4438 = vweird.f32 %v4432
      %vm4439 = vweird.f32 %v4433
      %vm4440 = vmor %vm4438, %vm4439
      %v4441 = vsel %vm4440, %v4433, %v4437
      %v4442 = vand.u32 2147483647, %v4432
      %vm4443 = vcmp.eq.f32.partialorder %v4442, 8.507059e+37
      %v4444 = vand.u32 %v4432, 2147483648
      %v4445 = vor.u32 1.1754944e-38, %v4444
      %v4446 = vsel %vm4443, %v4445, %v4441
      %v4447 = vmul.f32 1.0, %v4446
      %v4448 = vadd.f32 %v4366, %v4406
      %v4449 = vxor.u32 %v4448, 2147483648
      %v4450 = vmul.f32 %v4449, 1.442695
      %v4451 = vpow.pop %v4450
      %v4452 = vadd.f32 %v4451, 1.0
      %v4453 = vrcp.pop %v4452
      %v4454 = vmul.f32 %v4452, %v4453
      %v4455 = vsub.f32 1.0, %v4454
      %v4456 = vmul.f32 %v4453, %v4455
      %v4457 = vadd.f32 %v4453, %v4456
      %vm4458 = vweird.f32 %v4452
      %vm4459 = vweird.f32 %v4453
      %vm4460 = vmor %vm4458, %vm4459
      %v4461 = vsel %vm4460, %v4453, %v4457
      %v4462 = vand.u32 2147483647, %v4452
      %vm4463 = vcmp.eq.f32.partialorder %v4462, 8.507059e+37
      %v4464 = vand.u32 %v4452, 2147483648
      %v4465 = vor.u32 1.1754944e-38, %v4464
      %v4466 = vsel %vm4463, %v4465, %v4461
      %v4467 = vmul.f32 1.0, %v4466
      %v4468 = vadd.f32 %v4426, %v546
      %v4469 = vmul.f32 %v4447, %v4468
      %v4470 = vadd.f32 %v4367, %v4469
      %v4471 = vtanh.pop %v4470
      %v4472 = vsub.f32 1.0, %v4467
      %v4473 = vmul.f32 %v4472, %v4471
      %v4474 = vmul.f32 %v4467, %v4360
      %v4475 = vadd.f32 %v4473, %v4474
      %4476 = vmatpush.msra.mxu0 %v371
      %4477 = vmatpush.msra.mxu0 %v367
      %4478 = vmatpush.msra.mxu0 %v363
      %4479 = vmatpush.msra.mxu0 %v359
      %4480 = vmatpush.msra.mxu0 %v355
      %4481 = vmatpush.msra.mxu0 %v351
      %4482 = vmatpush.msra.mxu0 %v347
      %4483 = vmatpush.msra.mxu0 %v343
      %4484 = vmatpush.msra.mxu0 %v339
      %4485 = vmatpush.msra.mxu0 %v335
      %4486 = vmatpush.msra.mxu0 %v331
      %4487 = vmatpush.msra.mxu0 %v327
      %4488 = vmatpush.msra.mxu0 %v323
      %4489 = vmatpush.msra.mxu0 %v319
      %4490 = vmatpush.msra.mxu0 %v315
      %4491 = vmatpush.msra.mxu0 %v311
      %4492 = vmatmul.f32.gmra.mxu0 %v4475
      %v4493 = vpop.f32.mrf.mxu0
      %v4494 = vadd.f32 %v557, %v4493
      %4495 = vdwg.mxu0
      %4496 = vmatpush.msra.mxu0 %v435
      %4497 = vmatpush.msra.mxu0 %v431
      %4498 = vmatpush.msra.mxu0 %v427
      %4499 = vmatpush.msra.mxu0 %v423
      %4500 = vmatpush.msra.mxu0 %v419
      %4501 = vmatpush.msra.mxu0 %v415
      %4502 = vmatpush.msra.mxu0 %v411
      %4503 = vmatpush.msra.mxu0 %v407
      %4504 = vmatpush.msra.mxu0 %v403
      %4505 = vmatpush.msra.mxu0 %v399
      %4506 = vmatpush.msra.mxu0 %v395
      %4507 = vmatpush.msra.mxu0 %v391
      %4508 = vmatpush.msra.mxu0 %v387
      %4509 = vmatpush.msra.mxu0 %v383
      %4510 = vmatpush.msra.mxu0 %v379
      %4511 = vmatpush.msra.mxu0 %v375
      %4512 = vmatmul.f32.gmra.mxu0 %v4361
      %v4513 = vpop.f32.mrf.mxu0
      %v4514 = vadd.f32 %v4494, %v4513
      %4515 = vdwg.mxu0
      %4516 = vmatpush.msra.mxu0 %v372
      %4517 = vmatpush.msra.mxu0 %v368
      %4518 = vmatpush.msra.mxu0 %v364
      %4519 = vmatpush.msra.mxu0 %v360
      %4520 = vmatpush.msra.mxu0 %v356
      %4521 = vmatpush.msra.mxu0 %v352
      %4522 = vmatpush.msra.mxu0 %v348
      %4523 = vmatpush.msra.mxu0 %v344
      %4524 = vmatpush.msra.mxu0 %v340
      %4525 = vmatpush.msra.mxu0 %v336
      %4526 = vmatpush.msra.mxu0 %v332
      %4527 = vmatpush.msra.mxu0 %v328
      %4528 = vmatpush.msra.mxu0 %v324
      %4529 = vmatpush.msra.mxu0 %v320
      %4530 = vmatpush.msra.mxu0 %v316
      %4531 = vmatpush.msra.mxu0 %v312
      %4532 = vmatmul.f32.gmra.mxu0 %v4475
      %v4533 = vpop.f32.mrf.mxu0
      %v4534 = vadd.f32 %v558, %v4533
      %4535 = vdwg.mxu0
      %4536 = vmatpush.msra.mxu0 %v436
      %4537 = vmatpush.msra.mxu0 %v432
      %4538 = vmatpush.msra.mxu0 %v428
      %4539 = vmatpush.msra.mxu0 %v424
      %4540 = vmatpush.msra.mxu0 %v420
      %4541 = vmatpush.msra.mxu0 %v416
      %4542 = vmatpush.msra.mxu0 %v412
      %4543 = vmatpush.msra.mxu0 %v408
      %4544 = vmatpush.msra.mxu0 %v404
      %4545 = vmatpush.msra.mxu0 %v400
      %4546 = vmatpush.msra.mxu0 %v396
      %4547 = vmatpush.msra.mxu0 %v392
      %4548 = vmatpush.msra.mxu0 %v388
      %4549 = vmatpush.msra.mxu0 %v384
      %4550 = vmatpush.msra.mxu0 %v380
      %4551 = vmatpush.msra.mxu0 %v376
      %4552 = vmatmul.f32.gmra.mxu0 %v4361
      %v4553 = vpop.f32.mrf.mxu0
      %v4554 = vadd.f32 %v4534, %v4553
      %4555 = vdwg.mxu0
      %4556 = vmatpush.msra.mxu0 %v373
      %4557 = vmatpush.msra.mxu0 %v369
      %4558 = vmatpush.msra.mxu0 %v365
      %4559 = vmatpush.msra.mxu0 %v361
      %4560 = vmatpush.msra.mxu0 %v357
      %4561 = vmatpush.msra.mxu0 %v353
      %4562 = vmatpush.msra.mxu0 %v349
      %4563 = vmatpush.msra.mxu0 %v345
      %4564 = vmatpush.msra.mxu0 %v341
      %4565 = vmatpush.msra.mxu0 %v337
      %4566 = vmatpush.msra.mxu0 %v333
      %4567 = vmatpush.msra.mxu0 %v329
      %4568 = vmatpush.msra.mxu0 %v325
      %4569 = vmatpush.msra.mxu0 %v321
      %4570 = vmatpush.msra.mxu0 %v317
      %4571 = vmatpush.msra.mxu0 %v313
      %4572 = vmatmul.f32.gmra.mxu0 %v4475
      %v4573 = vpop.f32.mrf.mxu0
      %v4574 = vadd.f32 %v559, %v4573
      %4575 = vdwg.mxu0
      %4576 = vmatpush.msra.mxu0 %v437
      %4577 = vmatpush.msra.mxu0 %v433
      %4578 = vmatpush.msra.mxu0 %v429
      %4579 = vmatpush.msra.mxu0 %v425
      %4580 = vmatpush.msra.mxu0 %v421
      %4581 = vmatpush.msra.mxu0 %v417
      %4582 = vmatpush.msra.mxu0 %v413
      %4583 = vmatpush.msra.mxu0 %v409
      %4584 = vmatpush.msra.mxu0 %v405
      %4585 = vmatpush.msra.mxu0 %v401
      %4586 = vmatpush.msra.mxu0 %v397
      %4587 = vmatpush.msra.mxu0 %v393
      %4588 = vmatpush.msra.mxu0 %v389
      %4589 = vmatpush.msra.mxu0 %v385
      %4590 = vmatpush.msra.mxu0 %v381
      %4591 = vmatpush.msra.mxu0 %v377
      %4592 = vmatmul.f32.gmra.mxu0 %v4361
      %v4593 = vpop.f32.mrf.mxu0
      %v4594 = vadd.f32 %v4574, %v4593
      %4595 = vdwg.mxu0
      %4596 = vmatpush.msra.mxu0 %v374
      %4597 = vmatpush.msra.mxu0 %v370
      %4598 = vmatpush.msra.mxu0 %v366
      %4599 = vmatpush.msra.mxu0 %v362
      %4600 = vmatpush.msra.mxu0 %v358
      %4601 = vmatpush.msra.mxu0 %v354
      %4602 = vmatpush.msra.mxu0 %v350
      %4603 = vmatpush.msra.mxu0 %v346
      %4604 = vmatpush.msra.mxu0 %v342
      %4605 = vmatpush.msra.mxu0 %v338
      %4606 = vmatpush.msra.mxu0 %v334
      %4607 = vmatpush.msra.mxu0 %v330
      %4608 = vmatpush.msra.mxu0 %v326
      %4609 = vmatpush.msra.mxu0 %v322
      %4610 = vmatpush.msra.mxu0 %v318
      %4611 = vmatpush.msra.mxu0 %v314
      %4612 = vmatmul.f32.gmra.mxu0 %v4475
      %v4613 = vpop.f32.mrf.mxu0
      %v4614 = vadd.f32 %v560, %v4613
      %4615 = vdwg.mxu0
      %4616 = vmatpush.msra.mxu0 %v438
      %4617 = vmatpush.msra.mxu0 %v434
      %4618 = vmatpush.msra.mxu0 %v430
      %4619 = vmatpush.msra.mxu0 %v426
      %4620 = vmatpush.msra.mxu0 %v422
      %4621 = vmatpush.msra.mxu0 %v418
      %4622 = vmatpush.msra.mxu0 %v414
      %4623 = vmatpush.msra.mxu0 %v410
      %4624 = vmatpush.msra.mxu0 %v406
      %4625 = vmatpush.msra.mxu0 %v402
      %4626 = vmatpush.msra.mxu0 %v398
      %4627 = vmatpush.msra.mxu0 %v394
      %4628 = vmatpush.msra.mxu0 %v390
      %4629 = vmatpush.msra.mxu0 %v386
      %4630 = vmatpush.msra.mxu0 %v382
      %4631 = vmatpush.msra.mxu0 %v378
      %4632 = vmatmul.f32.gmra.mxu0 %v4361
      %v4633 = vpop.f32.mrf.mxu0
      %v4634 = vadd.f32 %v4614, %v4633
      %4635 = vdwg.mxu0
      %v4636 = vxor.u32 %v4514, 2147483648
      %v4637 = vmul.f32 %v4636, 1.442695
      %v4638 = vpow.pop %v4637
      %v4639 = vadd.f32 %v4638, 1.0
      %v4640 = vrcp.pop %v4639
      %v4641 = vmul.f32 %v4639, %v4640
      %v4642 = vsub.f32 1.0, %v4641
      %v4643 = vmul.f32 %v4640, %v4642
      %v4644 = vadd.f32 %v4640, %v4643
      %vm4645 = vweird.f32 %v4639
      %vm4646 = vweird.f32 %v4640
      %vm4647 = vmor %vm4645, %vm4646
      %v4648 = vsel %vm4647, %v4640, %v4644
      %v4649 = vand.u32 2147483647, %v4639
      %vm4650 = vcmp.eq.f32.partialorder %v4649, 8.507059e+37
      %v4651 = vand.u32 %v4639, 2147483648
      %v4652 = vor.u32 1.1754944e-38, %v4651
      %v4653 = vsel %vm4650, %v4652, %v4648
      %v4654 = vmul.f32 1.0, %v4653
      %v4655 = vxor.u32 %v4554, 2147483648
      %v4656 = vmul.f32 %v4655, 1.442695
      %v4657 = vpow.pop %v4656
      %v4658 = vadd.f32 %v4657, 1.0
      %v4659 = vrcp.pop %v4658
      %v4660 = vmul.f32 %v4658, %v4659
      %v4661 = vsub.f32 1.0, %v4660
      %v4662 = vmul.f32 %v4659, %v4661
      %v4663 = vadd.f32 %v4659, %v4662
      %vm4664 = vweird.f32 %v4658
      %vm4665 = vweird.f32 %v4659
      %vm4666 = vmor %vm4664, %vm4665
      %v4667 = vsel %vm4666, %v4659, %v4663
      %v4668 = vand.u32 2147483647, %v4658
      %vm4669 = vcmp.eq.f32.partialorder %v4668, 8.507059e+37
      %v4670 = vand.u32 %v4658, 2147483648
      %v4671 = vor.u32 1.1754944e-38, %v4670
      %v4672 = vsel %vm4669, %v4671, %v4667
      %v4673 = vmul.f32 1.0, %v4672
      %v4674 = vmul.f32 %v4654, %v4634
      %v4675 = vadd.f32 %v4594, %v4674
      %v4676 = vtanh.pop %v4675
      %v4677 = vsub.f32 1.0, %v4673
      %v4678 = vmul.f32 %v4677, %v4676
      %v4679 = vmul.f32 %v4673, %v4361
      %v4680 = vadd.f32 %v4678, %v4679
      %s4681 = sadd.s32 %s770, 12
      %p4682 = scmp.lt.s32.totalorder %s4681, 20
      %s4683 = scalar_select %p4682, 1, 0
      %v4684 = vstv %s4683
      %vm4685 = vcmp.eq.s32.totalorder %v4684, 1
      %v4686 = vsel %vm4685, %v4475, %v4360
      %v4687 = vsel %vm4685, %v4680, %v4361
      %s4688 = scalar_lea.vmem %s254, 96
      %4689 = vst [vmem:[%s4688] sm:$0xff] %v4687
      %s4690 = scalar_lea.vmem %s248, 312
      %v4691 = vld [vmem:[%s4690] sm:$0xff]
      %v4692 = vld [vmem:[%s4690 + $0x8] sm:$0xff]
      %v4693 = vld [vmem:[%s4690 + $0x10] sm:$0xff]
      %4694 = vmatpush.msra.mxu0 %v307
      %4695 = vmatpush.msra.mxu0 %v304
      %4696 = vmatpush.msra.mxu0 %v301
      %4697 = vmatpush.msra.mxu0 %v298
      %4698 = vmatpush.msra.mxu0 %v295
      %4699 = vmatpush.msra.mxu0 %v292
      %4700 = vmatpush.msra.mxu0 %v289
      %4701 = vmatpush.msra.mxu0 %v286
      %4702 = vmatpush.msra.mxu0 %v283
      %4703 = vmatpush.msra.mxu0 %v280
      %4704 = vmatpush.msra.mxu0 %v277
      %4705 = vmatpush.msra.mxu0 %v274
      %4706 = vmatpush.msra.mxu0 %v271
      %4707 = vmatpush.msra.mxu0 %v268
      %4708 = vmatpush.msra.mxu0 %v265
      %4709 = vmatpush.msra.mxu0 %v262
      %4710 = vmatmul.f32.gmra.mxu0 %v4686
      %v4711 = vpop.f32.mrf.mxu0
      %v4712 = vadd.f32 0.0, %v4711
      %4713 = vdwg.mxu0
      %4714 = vmatpush.msra.mxu0 %v308
      %4715 = vmatpush.msra.mxu0 %v305
      %4716 = vmatpush.msra.mxu0 %v302
      %4717 = vmatpush.msra.mxu0 %v299
      %4718 = vmatpush.msra.mxu0 %v296
      %4719 = vmatpush.msra.mxu0 %v293
      %4720 = vmatpush.msra.mxu0 %v290
      %4721 = vmatpush.msra.mxu0 %v287
      %4722 = vmatpush.msra.mxu0 %v284
      %4723 = vmatpush.msra.mxu0 %v281
      %4724 = vmatpush.msra.mxu0 %v278
      %4725 = vmatpush.msra.mxu0 %v275
      %4726 = vmatpush.msra.mxu0 %v272
      %4727 = vmatpush.msra.mxu0 %v269
      %4728 = vmatpush.msra.mxu0 %v266
      %4729 = vmatpush.msra.mxu0 %v263
      %4730 = vmatmul.f32.gmra.mxu0 %v4686
      %v4731 = vpop.f32.mrf.mxu0
      %v4732 = vadd.f32 0.0, %v4731
      %4733 = vdwg.mxu0
      %4734 = vmatpush.msra.mxu0 %v309
      %4735 = vmatpush.msra.mxu0 %v306
      %4736 = vmatpush.msra.mxu0 %v303
      %4737 = vmatpush.msra.mxu0 %v300
      %4738 = vmatpush.msra.mxu0 %v297
      %4739 = vmatpush.msra.mxu0 %v294
      %4740 = vmatpush.msra.mxu0 %v291
      %4741 = vmatpush.msra.mxu0 %v288
      %4742 = vmatpush.msra.mxu0 %v285
      %4743 = vmatpush.msra.mxu0 %v282
      %4744 = vmatpush.msra.mxu0 %v279
      %4745 = vmatpush.msra.mxu0 %v276
      %4746 = vmatpush.msra.mxu0 %v273
      %4747 = vmatpush.msra.mxu0 %v270
      %4748 = vmatpush.msra.mxu0 %v267
      %4749 = vmatpush.msra.mxu0 %v264
      %4750 = vmatmul.f32.gmra.mxu0 %v4686
      %v4751 = vpop.f32.mrf.mxu0
      %v4752 = vadd.f32 0.0, %v4751
      %4753 = vdwg.mxu0
      %v4754 = vadd.f32 %v4691, %v4712
      %v4755 = vxor.u32 %v4754, 2147483648
      %v4756 = vmul.f32 %v4755, 1.442695
      %v4757 = vpow.pop %v4756
      %v4758 = vadd.f32 %v4757, 1.0
      %v4759 = vrcp.pop %v4758
      %v4760 = vmul.f32 %v4758, %v4759
      %v4761 = vsub.f32 1.0, %v4760
      %v4762 = vmul.f32 %v4759, %v4761
      %v4763 = vadd.f32 %v4759, %v4762
      %vm4764 = vweird.f32 %v4758
      %vm4765 = vweird.f32 %v4759
      %vm4766 = vmor %vm4764, %vm4765
      %v4767 = vsel %vm4766, %v4759, %v4763
      %v4768 = vand.u32 2147483647, %v4758
      %vm4769 = vcmp.eq.f32.partialorder %v4768, 8.507059e+37
      %v4770 = vand.u32 %v4758, 2147483648
      %v4771 = vor.u32 1.1754944e-38, %v4770
      %v4772 = vsel %vm4769, %v4771, %v4767
      %v4773 = vmul.f32 1.0, %v4772
      %v4774 = vadd.f32 %v4692, %v4732
      %v4775 = vxor.u32 %v4774, 2147483648
      %v4776 = vmul.f32 %v4775, 1.442695
      %v4777 = vpow.pop %v4776
      %v4778 = vadd.f32 %v4777, 1.0
      %v4779 = vrcp.pop %v4778
      %v4780 = vmul.f32 %v4778, %v4779
      %v4781 = vsub.f32 1.0, %v4780
      %v4782 = vmul.f32 %v4779, %v4781
      %v4783 = vadd.f32 %v4779, %v4782
      %vm4784 = vweird.f32 %v4778
      %vm4785 = vweird.f32 %v4779
      %vm4786 = vmor %vm4784, %vm4785
      %v4787 = vsel %vm4786, %v4779, %v4783
      %v4788 = vand.u32 2147483647, %v4778
      %vm4789 = vcmp.eq.f32.partialorder %v4788, 8.507059e+37
      %v4790 = vand.u32 %v4778, 2147483648
      %v4791 = vor.u32 1.1754944e-38, %v4790
      %v4792 = vsel %vm4789, %v4791, %v4787
      %v4793 = vmul.f32 1.0, %v4792
      %v4794 = vadd.f32 %v4752, %v546
      %v4795 = vmul.f32 %v4773, %v4794
      %v4796 = vadd.f32 %v4693, %v4795
      %v4797 = vtanh.pop %v4796
      %v4798 = vsub.f32 1.0, %v4793
      %v4799 = vmul.f32 %v4798, %v4797
      %v4800 = vmul.f32 %v4793, %v4686
      %v4801 = vadd.f32 %v4799, %v4800
      %4802 = vmatpush.msra.mxu0 %v371
      %4803 = vmatpush.msra.mxu0 %v367
      %4804 = vmatpush.msra.mxu0 %v363
      %4805 = vmatpush.msra.mxu0 %v359
      %4806 = vmatpush.msra.mxu0 %v355
      %4807 = vmatpush.msra.mxu0 %v351
      %4808 = vmatpush.msra.mxu0 %v347
      %4809 = vmatpush.msra.mxu0 %v343
      %4810 = vmatpush.msra.mxu0 %v339
      %4811 = vmatpush.msra.mxu0 %v335
      %4812 = vmatpush.msra.mxu0 %v331
      %4813 = vmatpush.msra.mxu0 %v327
      %4814 = vmatpush.msra.mxu0 %v323
      %4815 = vmatpush.msra.mxu0 %v319
      %4816 = vmatpush.msra.mxu0 %v315
      %4817 = vmatpush.msra.mxu0 %v311
      %4818 = vmatmul.f32.gmra.mxu0 %v4801
      %v4819 = vpop.f32.mrf.mxu0
      %v4820 = vadd.f32 %v557, %v4819
      %4821 = vdwg.mxu0
      %4822 = vmatpush.msra.mxu0 %v435
      %4823 = vmatpush.msra.mxu0 %v431
      %4824 = vmatpush.msra.mxu0 %v427
      %4825 = vmatpush.msra.mxu0 %v423
      %4826 = vmatpush.msra.mxu0 %v419
      %4827 = vmatpush.msra.mxu0 %v415
      %4828 = vmatpush.msra.mxu0 %v411
      %4829 = vmatpush.msra.mxu0 %v407
      %4830 = vmatpush.msra.mxu0 %v403
      %4831 = vmatpush.msra.mxu0 %v399
      %4832 = vmatpush.msra.mxu0 %v395
      %4833 = vmatpush.msra.mxu0 %v391
      %4834 = vmatpush.msra.mxu0 %v387
      %4835 = vmatpush.msra.mxu0 %v383
      %4836 = vmatpush.msra.mxu0 %v379
      %4837 = vmatpush.msra.mxu0 %v375
      %4838 = vmatmul.f32.gmra.mxu0 %v4687
      %v4839 = vpop.f32.mrf.mxu0
      %v4840 = vadd.f32 %v4820, %v4839
      %4841 = vdwg.mxu0
      %4842 = vmatpush.msra.mxu0 %v372
      %4843 = vmatpush.msra.mxu0 %v368
      %4844 = vmatpush.msra.mxu0 %v364
      %4845 = vmatpush.msra.mxu0 %v360
      %4846 = vmatpush.msra.mxu0 %v356
      %4847 = vmatpush.msra.mxu0 %v352
      %4848 = vmatpush.msra.mxu0 %v348
      %4849 = vmatpush.msra.mxu0 %v344
      %4850 = vmatpush.msra.mxu0 %v340
      %4851 = vmatpush.msra.mxu0 %v336
      %4852 = vmatpush.msra.mxu0 %v332
      %4853 = vmatpush.msra.mxu0 %v328
      %4854 = vmatpush.msra.mxu0 %v324
      %4855 = vmatpush.msra.mxu0 %v320
      %4856 = vmatpush.msra.mxu0 %v316
      %4857 = vmatpush.msra.mxu0 %v312
      %4858 = vmatmul.f32.gmra.mxu0 %v4801
      %v4859 = vpop.f32.mrf.mxu0
      %v4860 = vadd.f32 %v558, %v4859
      %4861 = vdwg.mxu0
      %4862 = vmatpush.msra.mxu0 %v436
      %4863 = vmatpush.msra.mxu0 %v432
      %4864 = vmatpush.msra.mxu0 %v428
      %4865 = vmatpush.msra.mxu0 %v424
      %4866 = vmatpush.msra.mxu0 %v420
      %4867 = vmatpush.msra.mxu0 %v416
      %4868 = vmatpush.msra.mxu0 %v412
      %4869 = vmatpush.msra.mxu0 %v408
      %4870 = vmatpush.msra.mxu0 %v404
      %4871 = vmatpush.msra.mxu0 %v400
      %4872 = vmatpush.msra.mxu0 %v396
      %4873 = vmatpush.msra.mxu0 %v392
      %4874 = vmatpush.msra.mxu0 %v388
      %4875 = vmatpush.msra.mxu0 %v384
      %4876 = vmatpush.msra.mxu0 %v380
      %4877 = vmatpush.msra.mxu0 %v376
      %4878 = vmatmul.f32.gmra.mxu0 %v4687
      %v4879 = vpop.f32.mrf.mxu0
      %v4880 = vadd.f32 %v4860, %v4879
      %4881 = vdwg.mxu0
      %4882 = vmatpush.msra.mxu0 %v373
      %4883 = vmatpush.msra.mxu0 %v369
      %4884 = vmatpush.msra.mxu0 %v365
      %4885 = vmatpush.msra.mxu0 %v361
      %4886 = vmatpush.msra.mxu0 %v357
      %4887 = vmatpush.msra.mxu0 %v353
      %4888 = vmatpush.msra.mxu0 %v349
      %4889 = vmatpush.msra.mxu0 %v345
      %4890 = vmatpush.msra.mxu0 %v341
      %4891 = vmatpush.msra.mxu0 %v337
      %4892 = vmatpush.msra.mxu0 %v333
      %4893 = vmatpush.msra.mxu0 %v329
      %4894 = vmatpush.msra.mxu0 %v325
      %4895 = vmatpush.msra.mxu0 %v321
      %4896 = vmatpush.msra.mxu0 %v317
      %4897 = vmatpush.msra.mxu0 %v313
      %4898 = vmatmul.f32.gmra.mxu0 %v4801
      %v4899 = vpop.f32.mrf.mxu0
      %v4900 = vadd.f32 %v559, %v4899
      %4901 = vdwg.mxu0
      %4902 = vmatpush.msra.mxu0 %v437
      %4903 = vmatpush.msra.mxu0 %v433
      %4904 = vmatpush.msra.mxu0 %v429
      %4905 = vmatpush.msra.mxu0 %v425
      %4906 = vmatpush.msra.mxu0 %v421
      %4907 = vmatpush.msra.mxu0 %v417
      %4908 = vmatpush.msra.mxu0 %v413
      %4909 = vmatpush.msra.mxu0 %v409
      %4910 = vmatpush.msra.mxu0 %v405
      %4911 = vmatpush.msra.mxu0 %v401
      %4912 = vmatpush.msra.mxu0 %v397
      %4913 = vmatpush.msra.mxu0 %v393
      %4914 = vmatpush.msra.mxu0 %v389
      %4915 = vmatpush.msra.mxu0 %v385
      %4916 = vmatpush.msra.mxu0 %v381
      %4917 = vmatpush.msra.mxu0 %v377
      %4918 = vmatmul.f32.gmra.mxu0 %v4687
      %v4919 = vpop.f32.mrf.mxu0
      %v4920 = vadd.f32 %v4900, %v4919
      %4921 = vdwg.mxu0
      %4922 = vmatpush.msra.mxu0 %v374
      %4923 = vmatpush.msra.mxu0 %v370
      %4924 = vmatpush.msra.mxu0 %v366
      %4925 = vmatpush.msra.mxu0 %v362
      %4926 = vmatpush.msra.mxu0 %v358
      %4927 = vmatpush.msra.mxu0 %v354
      %4928 = vmatpush.msra.mxu0 %v350
      %4929 = vmatpush.msra.mxu0 %v346
      %4930 = vmatpush.msra.mxu0 %v342
      %4931 = vmatpush.msra.mxu0 %v338
      %4932 = vmatpush.msra.mxu0 %v334
      %4933 = vmatpush.msra.mxu0 %v330
      %4934 = vmatpush.msra.mxu0 %v326
      %4935 = vmatpush.msra.mxu0 %v322
      %4936 = vmatpush.msra.mxu0 %v318
      %4937 = vmatpush.msra.mxu0 %v314
      %4938 = vmatmul.f32.gmra.mxu0 %v4801
      %v4939 = vpop.f32.mrf.mxu0
      %v4940 = vadd.f32 %v560, %v4939
      %4941 = vdwg.mxu0
      %4942 = vmatpush.msra.mxu0 %v438
      %4943 = vmatpush.msra.mxu0 %v434
      %4944 = vmatpush.msra.mxu0 %v430
      %4945 = vmatpush.msra.mxu0 %v426
      %4946 = vmatpush.msra.mxu0 %v422
      %4947 = vmatpush.msra.mxu0 %v418
      %4948 = vmatpush.msra.mxu0 %v414
      %4949 = vmatpush.msra.mxu0 %v410
      %4950 = vmatpush.msra.mxu0 %v406
      %4951 = vmatpush.msra.mxu0 %v402
      %4952 = vmatpush.msra.mxu0 %v398
      %4953 = vmatpush.msra.mxu0 %v394
      %4954 = vmatpush.msra.mxu0 %v390
      %4955 = vmatpush.msra.mxu0 %v386
      %4956 = vmatpush.msra.mxu0 %v382
      %4957 = vmatpush.msra.mxu0 %v378
      %4958 = vmatmul.f32.gmra.mxu0 %v4687
      %v4959 = vpop.f32.mrf.mxu0
      %v4960 = vadd.f32 %v4940, %v4959
      %4961 = vdwg.mxu0
      %v4962 = vxor.u32 %v4840, 2147483648
      %v4963 = vmul.f32 %v4962, 1.442695
      %v4964 = vpow.pop %v4963
      %v4965 = vadd.f32 %v4964, 1.0
      %v4966 = vrcp.pop %v4965
      %v4967 = vmul.f32 %v4965, %v4966
      %v4968 = vsub.f32 1.0, %v4967
      %v4969 = vmul.f32 %v4966, %v4968
      %v4970 = vadd.f32 %v4966, %v4969
      %vm4971 = vweird.f32 %v4965
      %vm4972 = vweird.f32 %v4966
      %vm4973 = vmor %vm4971, %vm4972
      %v4974 = vsel %vm4973, %v4966, %v4970
      %v4975 = vand.u32 2147483647, %v4965
      %vm4976 = vcmp.eq.f32.partialorder %v4975, 8.507059e+37
      %v4977 = vand.u32 %v4965, 2147483648
      %v4978 = vor.u32 1.1754944e-38, %v4977
      %v4979 = vsel %vm4976, %v4978, %v4974
      %v4980 = vmul.f32 1.0, %v4979
      %v4981 = vxor.u32 %v4880, 2147483648
      %v4982 = vmul.f32 %v4981, 1.442695
      %v4983 = vpow.pop %v4982
      %v4984 = vadd.f32 %v4983, 1.0
      %v4985 = vrcp.pop %v4984
      %v4986 = vmul.f32 %v4984, %v4985
      %v4987 = vsub.f32 1.0, %v4986
      %v4988 = vmul.f32 %v4985, %v4987
      %v4989 = vadd.f32 %v4985, %v4988
      %vm4990 = vweird.f32 %v4984
      %vm4991 = vweird.f32 %v4985
      %vm4992 = vmor %vm4990, %vm4991
      %v4993 = vsel %vm4992, %v4985, %v4989
      %v4994 = vand.u32 2147483647, %v4984
      %vm4995 = vcmp.eq.f32.partialorder %v4994, 8.507059e+37
      %v4996 = vand.u32 %v4984, 2147483648
      %v4997 = vor.u32 1.1754944e-38, %v4996
      %v4998 = vsel %vm4995, %v4997, %v4993
      %v4999 = vmul.f32 1.0, %v4998
      %v5000 = vmul.f32 %v4980, %v4960
      %v5001 = vadd.f32 %v4920, %v5000
      %v5002 = vtanh.pop %v5001
      %v5003 = vsub.f32 1.0, %v4999
      %v5004 = vmul.f32 %v5003, %v5002
      %v5005 = vmul.f32 %v4999, %v4687
      %v5006 = vadd.f32 %v5004, %v5005
      %s5007 = sadd.s32 %s770, 13
      %p5008 = scmp.lt.s32.totalorder %s5007, 20
      %s5009 = scalar_select %p5008, 1, 0
      %v5010 = vstv %s5009
      %vm5011 = vcmp.eq.s32.totalorder %v5010, 1
      %v5012 = vsel %vm5011, %v4801, %v4686
      %v5013 = vsel %vm5011, %v5006, %v4687
      %s5014 = scalar_lea.vmem %s254, 104
      %5015 = vst [vmem:[%s5014] sm:$0xff] %v5013
      %s5016 = scalar_lea.vmem %s248, 336
      %v5017 = vld [vmem:[%s5016] sm:$0xff]
      %v5018 = vld [vmem:[%s5016 + $0x8] sm:$0xff]
      %v5019 = vld [vmem:[%s5016 + $0x10] sm:$0xff]
      %5020 = vmatpush.msra.mxu0 %v307
      %5021 = vmatpush.msra.mxu0 %v304
      %5022 = vmatpush.msra.mxu0 %v301
      %5023 = vmatpush.msra.mxu0 %v298
      %5024 = vmatpush.msra.mxu0 %v295
      %5025 = vmatpush.msra.mxu0 %v292
      %5026 = vmatpush.msra.mxu0 %v289
      %5027 = vmatpush.msra.mxu0 %v286
      %5028 = vmatpush.msra.mxu0 %v283
      %5029 = vmatpush.msra.mxu0 %v280
      %5030 = vmatpush.msra.mxu0 %v277
      %5031 = vmatpush.msra.mxu0 %v274
      %5032 = vmatpush.msra.mxu0 %v271
      %5033 = vmatpush.msra.mxu0 %v268
      %5034 = vmatpush.msra.mxu0 %v265
      %5035 = vmatpush.msra.mxu0 %v262
      %5036 = vmatmul.f32.gmra.mxu0 %v5012
      %v5037 = vpop.f32.mrf.mxu0
      %v5038 = vadd.f32 0.0, %v5037
      %5039 = vdwg.mxu0
      %5040 = vmatpush.msra.mxu0 %v308
      %5041 = vmatpush.msra.mxu0 %v305
      %5042 = vmatpush.msra.mxu0 %v302
      %5043 = vmatpush.msra.mxu0 %v299
      %5044 = vmatpush.msra.mxu0 %v296
      %5045 = vmatpush.msra.mxu0 %v293
      %5046 = vmatpush.msra.mxu0 %v290
      %5047 = vmatpush.msra.mxu0 %v287
      %5048 = vmatpush.msra.mxu0 %v284
      %5049 = vmatpush.msra.mxu0 %v281
      %5050 = vmatpush.msra.mxu0 %v278
      %5051 = vmatpush.msra.mxu0 %v275
      %5052 = vmatpush.msra.mxu0 %v272
      %5053 = vmatpush.msra.mxu0 %v269
      %5054 = vmatpush.msra.mxu0 %v266
      %5055 = vmatpush.msra.mxu0 %v263
      %5056 = vmatmul.f32.gmra.mxu0 %v5012
      %v5057 = vpop.f32.mrf.mxu0
      %v5058 = vadd.f32 0.0, %v5057
      %5059 = vdwg.mxu0
      %5060 = vmatpush.msra.mxu0 %v309
      %5061 = vmatpush.msra.mxu0 %v306
      %5062 = vmatpush.msra.mxu0 %v303
      %5063 = vmatpush.msra.mxu0 %v300
      %5064 = vmatpush.msra.mxu0 %v297
      %5065 = vmatpush.msra.mxu0 %v294
      %5066 = vmatpush.msra.mxu0 %v291
      %5067 = vmatpush.msra.mxu0 %v288
      %5068 = vmatpush.msra.mxu0 %v285
      %5069 = vmatpush.msra.mxu0 %v282
      %5070 = vmatpush.msra.mxu0 %v279
      %5071 = vmatpush.msra.mxu0 %v276
      %5072 = vmatpush.msra.mxu0 %v273
      %5073 = vmatpush.msra.mxu0 %v270
      %5074 = vmatpush.msra.mxu0 %v267
      %5075 = vmatpush.msra.mxu0 %v264
      %5076 = vmatmul.f32.gmra.mxu0 %v5012
      %v5077 = vpop.f32.mrf.mxu0
      %v5078 = vadd.f32 0.0, %v5077
      %5079 = vdwg.mxu0
      %v5080 = vadd.f32 %v5017, %v5038
      %v5081 = vxor.u32 %v5080, 2147483648
      %v5082 = vmul.f32 %v5081, 1.442695
      %v5083 = vpow.pop %v5082
      %v5084 = vadd.f32 %v5083, 1.0
      %v5085 = vrcp.pop %v5084
      %v5086 = vmul.f32 %v5084, %v5085
      %v5087 = vsub.f32 1.0, %v5086
      %v5088 = vmul.f32 %v5085, %v5087
      %v5089 = vadd.f32 %v5085, %v5088
      %vm5090 = vweird.f32 %v5084
      %vm5091 = vweird.f32 %v5085
      %vm5092 = vmor %vm5090, %vm5091
      %v5093 = vsel %vm5092, %v5085, %v5089
      %v5094 = vand.u32 2147483647, %v5084
      %vm5095 = vcmp.eq.f32.partialorder %v5094, 8.507059e+37
      %v5096 = vand.u32 %v5084, 2147483648
      %v5097 = vor.u32 1.1754944e-38, %v5096
      %v5098 = vsel %vm5095, %v5097, %v5093
      %v5099 = vmul.f32 1.0, %v5098
      %v5100 = vadd.f32 %v5018, %v5058
      %v5101 = vxor.u32 %v5100, 2147483648
      %v5102 = vmul.f32 %v5101, 1.442695
      %v5103 = vpow.pop %v5102
      %v5104 = vadd.f32 %v5103, 1.0
      %v5105 = vrcp.pop %v5104
      %v5106 = vmul.f32 %v5104, %v5105
      %v5107 = vsub.f32 1.0, %v5106
      %v5108 = vmul.f32 %v5105, %v5107
      %v5109 = vadd.f32 %v5105, %v5108
      %vm5110 = vweird.f32 %v5104
      %vm5111 = vweird.f32 %v5105
      %vm5112 = vmor %vm5110, %vm5111
      %v5113 = vsel %vm5112, %v5105, %v5109
      %v5114 = vand.u32 2147483647, %v5104
      %vm5115 = vcmp.eq.f32.partialorder %v5114, 8.507059e+37
      %v5116 = vand.u32 %v5104, 2147483648
      %v5117 = vor.u32 1.1754944e-38, %v5116
      %v5118 = vsel %vm5115, %v5117, %v5113
      %v5119 = vmul.f32 1.0, %v5118
      %v5120 = vadd.f32 %v5078, %v546
      %v5121 = vmul.f32 %v5099, %v5120
      %v5122 = vadd.f32 %v5019, %v5121
      %v5123 = vtanh.pop %v5122
      %v5124 = vsub.f32 1.0, %v5119
      %v5125 = vmul.f32 %v5124, %v5123
      %v5126 = vmul.f32 %v5119, %v5012
      %v5127 = vadd.f32 %v5125, %v5126
      %5128 = vmatpush.msra.mxu0 %v371
      %5129 = vmatpush.msra.mxu0 %v367
      %5130 = vmatpush.msra.mxu0 %v363
      %5131 = vmatpush.msra.mxu0 %v359
      %5132 = vmatpush.msra.mxu0 %v355
      %5133 = vmatpush.msra.mxu0 %v351
      %5134 = vmatpush.msra.mxu0 %v347
      %5135 = vmatpush.msra.mxu0 %v343
      %5136 = vmatpush.msra.mxu0 %v339
      %5137 = vmatpush.msra.mxu0 %v335
      %5138 = vmatpush.msra.mxu0 %v331
      %5139 = vmatpush.msra.mxu0 %v327
      %5140 = vmatpush.msra.mxu0 %v323
      %5141 = vmatpush.msra.mxu0 %v319
      %5142 = vmatpush.msra.mxu0 %v315
      %5143 = vmatpush.msra.mxu0 %v311
      %5144 = vmatmul.f32.gmra.mxu0 %v5127
      %v5145 = vpop.f32.mrf.mxu0
      %v5146 = vadd.f32 %v557, %v5145
      %5147 = vdwg.mxu0
      %5148 = vmatpush.msra.mxu0 %v435
      %5149 = vmatpush.msra.mxu0 %v431
      %5150 = vmatpush.msra.mxu0 %v427
      %5151 = vmatpush.msra.mxu0 %v423
      %5152 = vmatpush.msra.mxu0 %v419
      %5153 = vmatpush.msra.mxu0 %v415
      %5154 = vmatpush.msra.mxu0 %v411
      %5155 = vmatpush.msra.mxu0 %v407
      %5156 = vmatpush.msra.mxu0 %v403
      %5157 = vmatpush.msra.mxu0 %v399
      %5158 = vmatpush.msra.mxu0 %v395
      %5159 = vmatpush.msra.mxu0 %v391
      %5160 = vmatpush.msra.mxu0 %v387
      %5161 = vmatpush.msra.mxu0 %v383
      %5162 = vmatpush.msra.mxu0 %v379
      %5163 = vmatpush.msra.mxu0 %v375
      %5164 = vmatmul.f32.gmra.mxu0 %v5013
      %v5165 = vpop.f32.mrf.mxu0
      %v5166 = vadd.f32 %v5146, %v5165
      %5167 = vdwg.mxu0
      %5168 = vmatpush.msra.mxu0 %v372
      %5169 = vmatpush.msra.mxu0 %v368
      %5170 = vmatpush.msra.mxu0 %v364
      %5171 = vmatpush.msra.mxu0 %v360
      %5172 = vmatpush.msra.mxu0 %v356
      %5173 = vmatpush.msra.mxu0 %v352
      %5174 = vmatpush.msra.mxu0 %v348
      %5175 = vmatpush.msra.mxu0 %v344
      %5176 = vmatpush.msra.mxu0 %v340
      %5177 = vmatpush.msra.mxu0 %v336
      %5178 = vmatpush.msra.mxu0 %v332
      %5179 = vmatpush.msra.mxu0 %v328
      %5180 = vmatpush.msra.mxu0 %v324
      %5181 = vmatpush.msra.mxu0 %v320
      %5182 = vmatpush.msra.mxu0 %v316
      %5183 = vmatpush.msra.mxu0 %v312
      %5184 = vmatmul.f32.gmra.mxu0 %v5127
      %v5185 = vpop.f32.mrf.mxu0
      %v5186 = vadd.f32 %v558, %v5185
      %5187 = vdwg.mxu0
      %5188 = vmatpush.msra.mxu0 %v436
      %5189 = vmatpush.msra.mxu0 %v432
      %5190 = vmatpush.msra.mxu0 %v428
      %5191 = vmatpush.msra.mxu0 %v424
      %5192 = vmatpush.msra.mxu0 %v420
      %5193 = vmatpush.msra.mxu0 %v416
      %5194 = vmatpush.msra.mxu0 %v412
      %5195 = vmatpush.msra.mxu0 %v408
      %5196 = vmatpush.msra.mxu0 %v404
      %5197 = vmatpush.msra.mxu0 %v400
      %5198 = vmatpush.msra.mxu0 %v396
      %5199 = vmatpush.msra.mxu0 %v392
      %5200 = vmatpush.msra.mxu0 %v388
      %5201 = vmatpush.msra.mxu0 %v384
      %5202 = vmatpush.msra.mxu0 %v380
      %5203 = vmatpush.msra.mxu0 %v376
      %5204 = vmatmul.f32.gmra.mxu0 %v5013
      %v5205 = vpop.f32.mrf.mxu0
      %v5206 = vadd.f32 %v5186, %v5205
      %5207 = vdwg.mxu0
      %5208 = vmatpush.msra.mxu0 %v373
      %5209 = vmatpush.msra.mxu0 %v369
      %5210 = vmatpush.msra.mxu0 %v365
      %5211 = vmatpush.msra.mxu0 %v361
      %5212 = vmatpush.msra.mxu0 %v357
      %5213 = vmatpush.msra.mxu0 %v353
      %5214 = vmatpush.msra.mxu0 %v349
      %5215 = vmatpush.msra.mxu0 %v345
      %5216 = vmatpush.msra.mxu0 %v341
      %5217 = vmatpush.msra.mxu0 %v337
      %5218 = vmatpush.msra.mxu0 %v333
      %5219 = vmatpush.msra.mxu0 %v329
      %5220 = vmatpush.msra.mxu0 %v325
      %5221 = vmatpush.msra.mxu0 %v321
      %5222 = vmatpush.msra.mxu0 %v317
      %5223 = vmatpush.msra.mxu0 %v313
      %5224 = vmatmul.f32.gmra.mxu0 %v5127
      %v5225 = vpop.f32.mrf.mxu0
      %v5226 = vadd.f32 %v559, %v5225
      %5227 = vdwg.mxu0
      %5228 = vmatpush.msra.mxu0 %v437
      %5229 = vmatpush.msra.mxu0 %v433
      %5230 = vmatpush.msra.mxu0 %v429
      %5231 = vmatpush.msra.mxu0 %v425
      %5232 = vmatpush.msra.mxu0 %v421
      %5233 = vmatpush.msra.mxu0 %v417
      %5234 = vmatpush.msra.mxu0 %v413
      %5235 = vmatpush.msra.mxu0 %v409
      %5236 = vmatpush.msra.mxu0 %v405
      %5237 = vmatpush.msra.mxu0 %v401
      %5238 = vmatpush.msra.mxu0 %v397
      %5239 = vmatpush.msra.mxu0 %v393
      %5240 = vmatpush.msra.mxu0 %v389
      %5241 = vmatpush.msra.mxu0 %v385
      %5242 = vmatpush.msra.mxu0 %v381
      %5243 = vmatpush.msra.mxu0 %v377
      %5244 = vmatmul.f32.gmra.mxu0 %v5013
      %v5245 = vpop.f32.mrf.mxu0
      %v5246 = vadd.f32 %v5226, %v5245
      %5247 = vdwg.mxu0
      %5248 = vmatpush.msra.mxu0 %v374
      %5249 = vmatpush.msra.mxu0 %v370
      %5250 = vmatpush.msra.mxu0 %v366
      %5251 = vmatpush.msra.mxu0 %v362
      %5252 = vmatpush.msra.mxu0 %v358
      %5253 = vmatpush.msra.mxu0 %v354
      %5254 = vmatpush.msra.mxu0 %v350
      %5255 = vmatpush.msra.mxu0 %v346
      %5256 = vmatpush.msra.mxu0 %v342
      %5257 = vmatpush.msra.mxu0 %v338
      %5258 = vmatpush.msra.mxu0 %v334
      %5259 = vmatpush.msra.mxu0 %v330
      %5260 = vmatpush.msra.mxu0 %v326
      %5261 = vmatpush.msra.mxu0 %v322
      %5262 = vmatpush.msra.mxu0 %v318
      %5263 = vmatpush.msra.mxu0 %v314
      %5264 = vmatmul.f32.gmra.mxu0 %v5127
      %v5265 = vpop.f32.mrf.mxu0
      %v5266 = vadd.f32 %v560, %v5265
      %5267 = vdwg.mxu0
      %5268 = vmatpush.msra.mxu0 %v438
      %5269 = vmatpush.msra.mxu0 %v434
      %5270 = vmatpush.msra.mxu0 %v430
      %5271 = vmatpush.msra.mxu0 %v426
      %5272 = vmatpush.msra.mxu0 %v422
      %5273 = vmatpush.msra.mxu0 %v418
      %5274 = vmatpush.msra.mxu0 %v414
      %5275 = vmatpush.msra.mxu0 %v410
      %5276 = vmatpush.msra.mxu0 %v406
      %5277 = vmatpush.msra.mxu0 %v402
      %5278 = vmatpush.msra.mxu0 %v398
      %5279 = vmatpush.msra.mxu0 %v394
      %5280 = vmatpush.msra.mxu0 %v390
      %5281 = vmatpush.msra.mxu0 %v386
      %5282 = vmatpush.msra.mxu0 %v382
      %5283 = vmatpush.msra.mxu0 %v378
      %5284 = vmatmul.f32.gmra.mxu0 %v5013
      %v5285 = vpop.f32.mrf.mxu0
      %v5286 = vadd.f32 %v5266, %v5285
      %5287 = vdwg.mxu0
      %v5288 = vxor.u32 %v5166, 2147483648
      %v5289 = vmul.f32 %v5288, 1.442695
      %v5290 = vpow.pop %v5289
      %v5291 = vadd.f32 %v5290, 1.0
      %v5292 = vrcp.pop %v5291
      %v5293 = vmul.f32 %v5291, %v5292
      %v5294 = vsub.f32 1.0, %v5293
      %v5295 = vmul.f32 %v5292, %v5294
      %v5296 = vadd.f32 %v5292, %v5295
      %vm5297 = vweird.f32 %v5291
      %vm5298 = vweird.f32 %v5292
      %vm5299 = vmor %vm5297, %vm5298
      %v5300 = vsel %vm5299, %v5292, %v5296
      %v5301 = vand.u32 2147483647, %v5291
      %vm5302 = vcmp.eq.f32.partialorder %v5301, 8.507059e+37
      %v5303 = vand.u32 %v5291, 2147483648
      %v5304 = vor.u32 1.1754944e-38, %v5303
      %v5305 = vsel %vm5302, %v5304, %v5300
      %v5306 = vmul.f32 1.0, %v5305
      %v5307 = vxor.u32 %v5206, 2147483648
      %v5308 = vmul.f32 %v5307, 1.442695
      %v5309 = vpow.pop %v5308
      %v5310 = vadd.f32 %v5309, 1.0
      %v5311 = vrcp.pop %v5310
      %v5312 = vmul.f32 %v5310, %v5311
      %v5313 = vsub.f32 1.0, %v5312
      %v5314 = vmul.f32 %v5311, %v5313
      %v5315 = vadd.f32 %v5311, %v5314
      %vm5316 = vweird.f32 %v5310
      %vm5317 = vweird.f32 %v5311
      %vm5318 = vmor %vm5316, %vm5317
      %v5319 = vsel %vm5318, %v5311, %v5315
      %v5320 = vand.u32 2147483647, %v5310
      %vm5321 = vcmp.eq.f32.partialorder %v5320, 8.507059e+37
      %v5322 = vand.u32 %v5310, 2147483648
      %v5323 = vor.u32 1.1754944e-38, %v5322
      %v5324 = vsel %vm5321, %v5323, %v5319
      %v5325 = vmul.f32 1.0, %v5324
      %v5326 = vmul.f32 %v5306, %v5286
      %v5327 = vadd.f32 %v5246, %v5326
      %v5328 = vtanh.pop %v5327
      %v5329 = vsub.f32 1.0, %v5325
      %v5330 = vmul.f32 %v5329, %v5328
      %v5331 = vmul.f32 %v5325, %v5013
      %v5332 = vadd.f32 %v5330, %v5331
      %s5333 = sadd.s32 %s770, 14
      %p5334 = scmp.lt.s32.totalorder %s5333, 20
      %s5335 = scalar_select %p5334, 1, 0
      %v5336 = vstv %s5335
      %vm5337 = vcmp.eq.s32.totalorder %v5336, 1
      %v5338 = vsel %vm5337, %v5127, %v5012
      %v5339 = vsel %vm5337, %v5332, %v5013
      %s5340 = scalar_lea.vmem %s254, 112
      %5341 = vst [vmem:[%s5340] sm:$0xff] %v5339
      %s5342 = scalar_lea.vmem %s248, 360
      %v5343 = vld [vmem:[%s5342] sm:$0xff]
      %v5344 = vld [vmem:[%s5342 + $0x8] sm:$0xff]
      %v5345 = vld [vmem:[%s5342 + $0x10] sm:$0xff]
      %5346 = vmatpush.msra.mxu0 %v307
      %5347 = vmatpush.msra.mxu0 %v304
      %5348 = vmatpush.msra.mxu0 %v301
      %5349 = vmatpush.msra.mxu0 %v298
      %5350 = vmatpush.msra.mxu0 %v295
      %5351 = vmatpush.msra.mxu0 %v292
      %5352 = vmatpush.msra.mxu0 %v289
      %5353 = vmatpush.msra.mxu0 %v286
      %5354 = vmatpush.msra.mxu0 %v283
      %5355 = vmatpush.msra.mxu0 %v280
      %5356 = vmatpush.msra.mxu0 %v277
      %5357 = vmatpush.msra.mxu0 %v274
      %5358 = vmatpush.msra.mxu0 %v271
      %5359 = vmatpush.msra.mxu0 %v268
      %5360 = vmatpush.msra.mxu0 %v265
      %5361 = vmatpush.msra.mxu0 %v262
      %5362 = vmatmul.f32.gmra.mxu0 %v5338
      %v5363 = vpop.f32.mrf.mxu0
      %v5364 = vadd.f32 0.0, %v5363
      %5365 = vdwg.mxu0
      %5366 = vmatpush.msra.mxu0 %v308
      %5367 = vmatpush.msra.mxu0 %v305
      %5368 = vmatpush.msra.mxu0 %v302
      %5369 = vmatpush.msra.mxu0 %v299
      %5370 = vmatpush.msra.mxu0 %v296
      %5371 = vmatpush.msra.mxu0 %v293
      %5372 = vmatpush.msra.mxu0 %v290
      %5373 = vmatpush.msra.mxu0 %v287
      %5374 = vmatpush.msra.mxu0 %v284
      %5375 = vmatpush.msra.mxu0 %v281
      %5376 = vmatpush.msra.mxu0 %v278
      %5377 = vmatpush.msra.mxu0 %v275
      %5378 = vmatpush.msra.mxu0 %v272
      %5379 = vmatpush.msra.mxu0 %v269
      %5380 = vmatpush.msra.mxu0 %v266
      %5381 = vmatpush.msra.mxu0 %v263
      %5382 = vmatmul.f32.gmra.mxu0 %v5338
      %v5383 = vpop.f32.mrf.mxu0
      %v5384 = vadd.f32 0.0, %v5383
      %5385 = vdwg.mxu0
      %5386 = vmatpush.msra.mxu0 %v309
      %5387 = vmatpush.msra.mxu0 %v306
      %5388 = vmatpush.msra.mxu0 %v303
      %5389 = vmatpush.msra.mxu0 %v300
      %5390 = vmatpush.msra.mxu0 %v297
      %5391 = vmatpush.msra.mxu0 %v294
      %5392 = vmatpush.msra.mxu0 %v291
      %5393 = vmatpush.msra.mxu0 %v288
      %5394 = vmatpush.msra.mxu0 %v285
      %5395 = vmatpush.msra.mxu0 %v282
      %5396 = vmatpush.msra.mxu0 %v279
      %5397 = vmatpush.msra.mxu0 %v276
      %5398 = vmatpush.msra.mxu0 %v273
      %5399 = vmatpush.msra.mxu0 %v270
      %5400 = vmatpush.msra.mxu0 %v267
      %5401 = vmatpush.msra.mxu0 %v264
      %5402 = vmatmul.f32.gmra.mxu0 %v5338
      %v5403 = vpop.f32.mrf.mxu0
      %v5404 = vadd.f32 0.0, %v5403
      %5405 = vdwg.mxu0
      %v5406 = vadd.f32 %v5343, %v5364
      %v5407 = vxor.u32 %v5406, 2147483648
      %v5408 = vmul.f32 %v5407, 1.442695
      %v5409 = vpow.pop %v5408
      %v5410 = vadd.f32 %v5409, 1.0
      %v5411 = vrcp.pop %v5410
      %v5412 = vmul.f32 %v5410, %v5411
      %v5413 = vsub.f32 1.0, %v5412
      %v5414 = vmul.f32 %v5411, %v5413
      %v5415 = vadd.f32 %v5411, %v5414
      %vm5416 = vweird.f32 %v5410
      %vm5417 = vweird.f32 %v5411
      %vm5418 = vmor %vm5416, %vm5417
      %v5419 = vsel %vm5418, %v5411, %v5415
      %v5420 = vand.u32 2147483647, %v5410
      %vm5421 = vcmp.eq.f32.partialorder %v5420, 8.507059e+37
      %v5422 = vand.u32 %v5410, 2147483648
      %v5423 = vor.u32 1.1754944e-38, %v5422
      %v5424 = vsel %vm5421, %v5423, %v5419
      %v5425 = vmul.f32 1.0, %v5424
      %v5426 = vadd.f32 %v5344, %v5384
      %v5427 = vxor.u32 %v5426, 2147483648
      %v5428 = vmul.f32 %v5427, 1.442695
      %v5429 = vpow.pop %v5428
      %v5430 = vadd.f32 %v5429, 1.0
      %v5431 = vrcp.pop %v5430
      %v5432 = vmul.f32 %v5430, %v5431
      %v5433 = vsub.f32 1.0, %v5432
      %v5434 = vmul.f32 %v5431, %v5433
      %v5435 = vadd.f32 %v5431, %v5434
      %vm5436 = vweird.f32 %v5430
      %vm5437 = vweird.f32 %v5431
      %vm5438 = vmor %vm5436, %vm5437
      %v5439 = vsel %vm5438, %v5431, %v5435
      %v5440 = vand.u32 2147483647, %v5430
      %vm5441 = vcmp.eq.f32.partialorder %v5440, 8.507059e+37
      %v5442 = vand.u32 %v5430, 2147483648
      %v5443 = vor.u32 1.1754944e-38, %v5442
      %v5444 = vsel %vm5441, %v5443, %v5439
      %v5445 = vmul.f32 1.0, %v5444
      %v5446 = vadd.f32 %v5404, %v546
      %v5447 = vmul.f32 %v5425, %v5446
      %v5448 = vadd.f32 %v5345, %v5447
      %v5449 = vtanh.pop %v5448
      %v5450 = vsub.f32 1.0, %v5445
      %v5451 = vmul.f32 %v5450, %v5449
      %v5452 = vmul.f32 %v5445, %v5338
      %v5453 = vadd.f32 %v5451, %v5452
      %5454 = vmatpush.msra.mxu0 %v371
      %5455 = vmatpush.msra.mxu0 %v367
      %5456 = vmatpush.msra.mxu0 %v363
      %5457 = vmatpush.msra.mxu0 %v359
      %5458 = vmatpush.msra.mxu0 %v355
      %5459 = vmatpush.msra.mxu0 %v351
      %5460 = vmatpush.msra.mxu0 %v347
      %5461 = vmatpush.msra.mxu0 %v343
      %5462 = vmatpush.msra.mxu0 %v339
      %5463 = vmatpush.msra.mxu0 %v335
      %5464 = vmatpush.msra.mxu0 %v331
      %5465 = vmatpush.msra.mxu0 %v327
      %5466 = vmatpush.msra.mxu0 %v323
      %5467 = vmatpush.msra.mxu0 %v319
      %5468 = vmatpush.msra.mxu0 %v315
      %5469 = vmatpush.msra.mxu0 %v311
      %5470 = vmatmul.f32.gmra.mxu0 %v5453
      %v5471 = vpop.f32.mrf.mxu0
      %v5472 = vadd.f32 %v557, %v5471
      %5473 = vdwg.mxu0
      %5474 = vmatpush.msra.mxu0 %v435
      %5475 = vmatpush.msra.mxu0 %v431
      %5476 = vmatpush.msra.mxu0 %v427
      %5477 = vmatpush.msra.mxu0 %v423
      %5478 = vmatpush.msra.mxu0 %v419
      %5479 = vmatpush.msra.mxu0 %v415
      %5480 = vmatpush.msra.mxu0 %v411
      %5481 = vmatpush.msra.mxu0 %v407
      %5482 = vmatpush.msra.mxu0 %v403
      %5483 = vmatpush.msra.mxu0 %v399
      %5484 = vmatpush.msra.mxu0 %v395
      %5485 = vmatpush.msra.mxu0 %v391
      %5486 = vmatpush.msra.mxu0 %v387
      %5487 = vmatpush.msra.mxu0 %v383
      %5488 = vmatpush.msra.mxu0 %v379
      %5489 = vmatpush.msra.mxu0 %v375
      %5490 = vmatmul.f32.gmra.mxu0 %v5339
      %v5491 = vpop.f32.mrf.mxu0
      %v5492 = vadd.f32 %v5472, %v5491
      %5493 = vdwg.mxu0
      %5494 = vmatpush.msra.mxu0 %v372
      %5495 = vmatpush.msra.mxu0 %v368
      %5496 = vmatpush.msra.mxu0 %v364
      %5497 = vmatpush.msra.mxu0 %v360
      %5498 = vmatpush.msra.mxu0 %v356
      %5499 = vmatpush.msra.mxu0 %v352
      %5500 = vmatpush.msra.mxu0 %v348
      %5501 = vmatpush.msra.mxu0 %v344
      %5502 = vmatpush.msra.mxu0 %v340
      %5503 = vmatpush.msra.mxu0 %v336
      %5504 = vmatpush.msra.mxu0 %v332
      %5505 = vmatpush.msra.mxu0 %v328
      %5506 = vmatpush.msra.mxu0 %v324
      %5507 = vmatpush.msra.mxu0 %v320
      %5508 = vmatpush.msra.mxu0 %v316
      %5509 = vmatpush.msra.mxu0 %v312
      %5510 = vmatmul.f32.gmra.mxu0 %v5453
      %v5511 = vpop.f32.mrf.mxu0
      %v5512 = vadd.f32 %v558, %v5511
      %5513 = vdwg.mxu0
      %5514 = vmatpush.msra.mxu0 %v436
      %5515 = vmatpush.msra.mxu0 %v432
      %5516 = vmatpush.msra.mxu0 %v428
      %5517 = vmatpush.msra.mxu0 %v424
      %5518 = vmatpush.msra.mxu0 %v420
      %5519 = vmatpush.msra.mxu0 %v416
      %5520 = vmatpush.msra.mxu0 %v412
      %5521 = vmatpush.msra.mxu0 %v408
      %5522 = vmatpush.msra.mxu0 %v404
      %5523 = vmatpush.msra.mxu0 %v400
      %5524 = vmatpush.msra.mxu0 %v396
      %5525 = vmatpush.msra.mxu0 %v392
      %5526 = vmatpush.msra.mxu0 %v388
      %5527 = vmatpush.msra.mxu0 %v384
      %5528 = vmatpush.msra.mxu0 %v380
      %5529 = vmatpush.msra.mxu0 %v376
      %5530 = vmatmul.f32.gmra.mxu0 %v5339
      %v5531 = vpop.f32.mrf.mxu0
      %v5532 = vadd.f32 %v5512, %v5531
      %5533 = vdwg.mxu0
      %5534 = vmatpush.msra.mxu0 %v373
      %5535 = vmatpush.msra.mxu0 %v369
      %5536 = vmatpush.msra.mxu0 %v365
      %5537 = vmatpush.msra.mxu0 %v361
      %5538 = vmatpush.msra.mxu0 %v357
      %5539 = vmatpush.msra.mxu0 %v353
      %5540 = vmatpush.msra.mxu0 %v349
      %5541 = vmatpush.msra.mxu0 %v345
      %5542 = vmatpush.msra.mxu0 %v341
      %5543 = vmatpush.msra.mxu0 %v337
      %5544 = vmatpush.msra.mxu0 %v333
      %5545 = vmatpush.msra.mxu0 %v329
      %5546 = vmatpush.msra.mxu0 %v325
      %5547 = vmatpush.msra.mxu0 %v321
      %5548 = vmatpush.msra.mxu0 %v317
      %5549 = vmatpush.msra.mxu0 %v313
      %5550 = vmatmul.f32.gmra.mxu0 %v5453
      %v5551 = vpop.f32.mrf.mxu0
      %v5552 = vadd.f32 %v559, %v5551
      %5553 = vdwg.mxu0
      %5554 = vmatpush.msra.mxu0 %v437
      %5555 = vmatpush.msra.mxu0 %v433
      %5556 = vmatpush.msra.mxu0 %v429
      %5557 = vmatpush.msra.mxu0 %v425
      %5558 = vmatpush.msra.mxu0 %v421
      %5559 = vmatpush.msra.mxu0 %v417
      %5560 = vmatpush.msra.mxu0 %v413
      %5561 = vmatpush.msra.mxu0 %v409
      %5562 = vmatpush.msra.mxu0 %v405
      %5563 = vmatpush.msra.mxu0 %v401
      %5564 = vmatpush.msra.mxu0 %v397
      %5565 = vmatpush.msra.mxu0 %v393
      %5566 = vmatpush.msra.mxu0 %v389
      %5567 = vmatpush.msra.mxu0 %v385
      %5568 = vmatpush.msra.mxu0 %v381
      %5569 = vmatpush.msra.mxu0 %v377
      %5570 = vmatmul.f32.gmra.mxu0 %v5339
      %v5571 = vpop.f32.mrf.mxu0
      %v5572 = vadd.f32 %v5552, %v5571
      %5573 = vdwg.mxu0
      %5574 = vmatpush.msra.mxu0 %v374
      %5575 = vmatpush.msra.mxu0 %v370
      %5576 = vmatpush.msra.mxu0 %v366
      %5577 = vmatpush.msra.mxu0 %v362
      %5578 = vmatpush.msra.mxu0 %v358
      %5579 = vmatpush.msra.mxu0 %v354
      %5580 = vmatpush.msra.mxu0 %v350
      %5581 = vmatpush.msra.mxu0 %v346
      %5582 = vmatpush.msra.mxu0 %v342
      %5583 = vmatpush.msra.mxu0 %v338
      %5584 = vmatpush.msra.mxu0 %v334
      %5585 = vmatpush.msra.mxu0 %v330
      %5586 = vmatpush.msra.mxu0 %v326
      %5587 = vmatpush.msra.mxu0 %v322
      %5588 = vmatpush.msra.mxu0 %v318
      %5589 = vmatpush.msra.mxu0 %v314
      %5590 = vmatmul.f32.gmra.mxu0 %v5453
      %v5591 = vpop.f32.mrf.mxu0
      %v5592 = vadd.f32 %v560, %v5591
      %5593 = vdwg.mxu0
      %5594 = vmatpush.msra.mxu0 %v438
      %5595 = vmatpush.msra.mxu0 %v434
      %5596 = vmatpush.msra.mxu0 %v430
      %5597 = vmatpush.msra.mxu0 %v426
      %5598 = vmatpush.msra.mxu0 %v422
      %5599 = vmatpush.msra.mxu0 %v418
      %5600 = vmatpush.msra.mxu0 %v414
      %5601 = vmatpush.msra.mxu0 %v410
      %5602 = vmatpush.msra.mxu0 %v406
      %5603 = vmatpush.msra.mxu0 %v402
      %5604 = vmatpush.msra.mxu0 %v398
      %5605 = vmatpush.msra.mxu0 %v394
      %5606 = vmatpush.msra.mxu0 %v390
      %5607 = vmatpush.msra.mxu0 %v386
      %5608 = vmatpush.msra.mxu0 %v382
      %5609 = vmatpush.msra.mxu0 %v378
      %5610 = vmatmul.f32.gmra.mxu0 %v5339
      %v5611 = vpop.f32.mrf.mxu0
      %v5612 = vadd.f32 %v5592, %v5611
      %5613 = vdwg.mxu0
      %v5614 = vxor.u32 %v5492, 2147483648
      %v5615 = vmul.f32 %v5614, 1.442695
      %v5616 = vpow.pop %v5615
      %v5617 = vadd.f32 %v5616, 1.0
      %v5618 = vrcp.pop %v5617
      %v5619 = vmul.f32 %v5617, %v5618
      %v5620 = vsub.f32 1.0, %v5619
      %v5621 = vmul.f32 %v5618, %v5620
      %v5622 = vadd.f32 %v5618, %v5621
      %vm5623 = vweird.f32 %v5617
      %vm5624 = vweird.f32 %v5618
      %vm5625 = vmor %vm5623, %vm5624
      %v5626 = vsel %vm5625, %v5618, %v5622
      %v5627 = vand.u32 2147483647, %v5617
      %vm5628 = vcmp.eq.f32.partialorder %v5627, 8.507059e+37
      %v5629 = vand.u32 %v5617, 2147483648
      %v5630 = vor.u32 1.1754944e-38, %v5629
      %v5631 = vsel %vm5628, %v5630, %v5626
      %v5632 = vmul.f32 1.0, %v5631
      %v5633 = vxor.u32 %v5532, 2147483648
      %v5634 = vmul.f32 %v5633, 1.442695
      %v5635 = vpow.pop %v5634
      %v5636 = vadd.f32 %v5635, 1.0
      %v5637 = vrcp.pop %v5636
      %v5638 = vmul.f32 %v5636, %v5637
      %v5639 = vsub.f32 1.0, %v5638
      %v5640 = vmul.f32 %v5637, %v5639
      %v5641 = vadd.f32 %v5637, %v5640
      %vm5642 = vweird.f32 %v5636
      %vm5643 = vweird.f32 %v5637
      %vm5644 = vmor %vm5642, %vm5643
      %v5645 = vsel %vm5644, %v5637, %v5641
      %v5646 = vand.u32 2147483647, %v5636
      %vm5647 = vcmp.eq.f32.partialorder %v5646, 8.507059e+37
      %v5648 = vand.u32 %v5636, 2147483648
      %v5649 = vor.u32 1.1754944e-38, %v5648
      %v5650 = vsel %vm5647, %v5649, %v5645
      %v5651 = vmul.f32 1.0, %v5650
      %v5652 = vmul.f32 %v5632, %v5612
      %v5653 = vadd.f32 %v5572, %v5652
      %v5654 = vtanh.pop %v5653
      %v5655 = vsub.f32 1.0, %v5651
      %v5656 = vmul.f32 %v5655, %v5654
      %v5657 = vmul.f32 %v5651, %v5339
      %v5658 = vadd.f32 %v5656, %v5657
      %s5659 = sadd.s32 %s770, 15
      %p5660 = scmp.lt.s32.totalorder %s5659, 20
      %s5661 = scalar_select %p5660, 1, 0
      %v5662 = vstv %s5661
      %vm5663 = vcmp.eq.s32.totalorder %v5662, 1
      %v5664 = vsel %vm5663, %v5453, %v5338
      %v5665 = vsel %vm5663, %v5658, %v5339
      %s5666 = scalar_lea.vmem %s254, 120
      %5667 = vst [vmem:[%s5666] sm:$0xff] %v5665
      %5668 = vst [vmem:[#allocation2] sm:$0xff] %v5664
      %5669 = vst [vmem:[#allocation3] sm:$0xff] %v5665
      %p5670 = scmp.eq.s32.totalorder %s18, 1
      // Predicated region
      $region45: #{gaussian_handwriting_forward.1} parent=39 // pred_check
        %p5671 = pneg %p5670
      $region46: #{gaussian_handwriting_forward.1} parent=39 // pred_check_branch
        %5673 = sbr.rel (%p5671) target = $region48
      $region47: #{gaussian_handwriting_forward.1} parent=39 // pred_region
        %5674 = vst [vmem:[%s6] sm:$0xff] %v5664
        %s5675 = scalar_lea.vmem %s6, 8
        %5676 = vst [vmem:[%s5675] sm:$0xff] %v5665
      $region48: #{gaussian_handwriting_forward.1} parent=39 // pred_fallthru
        _
      %s5677 = smul.u32 16, %s18
      %p5678 = scmp.lt.s32.totalorder %s5677, 31
      %s5679 = scalar_select %p5678, %s5677, 31
      %s5680 = smul.addr %s5679, 8
      %s5681 = scalar_lea.vmem %s5, %s5680
      // Predicated region
      $region49: #{gaussian_handwriting_forward.1} parent=39 // pred_check
        %p5682 = pneg %p146
      $region50: #{gaussian_handwriting_forward.1} parent=39 // pred_check_branch
        %5684 = sbr.rel (%p5682) target = $region52
      $region51: #{gaussian_handwriting_forward.1} parent=39 // pred_region
        %s5685 = smul.u32 16, %s18
      $region52: #{gaussian_handwriting_forward.1} parent=39 // pred_fallthru
        _
      // Predicated region
      $region53: #{gaussian_handwriting_forward.1} parent=39 // pred_check
        %p5686 = pneg %p167
      $region54: #{gaussian_handwriting_forward.1} parent=39 // pred_check_branch
        %5688 = sbr.rel (%p5686) target = $region56
      $region55: #{gaussian_handwriting_forward.1} parent=39 // pred_region
        _
      $region56: #{gaussian_handwriting_forward.1} parent=39 // pred_fallthru
        _
      // Predicated region
      $region57: #{gaussian_handwriting_forward.1} parent=39 // pred_check
        %p5689 = pneg %p167
      $region58: #{gaussian_handwriting_forward.1} parent=39 // pred_check_branch
        %5691 = sbr.rel (%p5689) target = $region60
      $region59: #{gaussian_handwriting_forward.1} parent=39 // pred_region
        _
      $region60: #{gaussian_handwriting_forward.1} parent=39 // pred_fallthru
        _
    $region40: #{gaussian_handwriting_forward.1} parent=5 // pred_fallthru
      _
    %p5692 = scmp.le.s32.totalorder 2, %s13
    // Predicated region
    $region61: #{gaussian_handwriting_forward.1} parent=5 // pred_check
      %p5693 = pneg %p5692
    $region62: #{gaussian_handwriting_forward.1} parent=5 // pred_check_branch
      %5695 = sbr.rel (%p5693) target = $region64
    $region63: #{gaussian_handwriting_forward.1} parent=5 // pred_region
      %s5696 = ssub.s32 %s13, 2
      // Predicated region
      $region65: #{gaussian_handwriting_forward.1} parent=63 // pred_check
        %p5697 = pneg %p152
      $region66: #{gaussian_handwriting_forward.1} parent=63 // pred_check_branch
        %5699 = sbr.rel (%p5697) target = $region68
      $region67: #{gaussian_handwriting_forward.1} parent=63 // pred_region
        %s5700 = smul.u32 16, %s19
        %p5701 = scmp.lt.s32.totalorder %s5700, 31
        %s5702 = scalar_select %p5701, %s5700, 31
        %s5703 = smul.addr %s5702, 8
        %s5704 = scalar_lea.vmem %s5, %s5703
      $region68: #{gaussian_handwriting_forward.1} parent=63 // pred_fallthru
        _
    $region64: #{gaussian_handwriting_forward.1} parent=5 // pred_fallthru
      _
  $region6: #{gaussian_handwriting_forward.1} parent=0 // loop_footer
    %s17 = sadd.s32 1, %s13
  $region7: #{gaussian_handwriting_forward.1} parent=0 // loop_footer_branch
    %12 = sbr.rel target = $region3
  $region8: #{gaussian_handwriting_forward.1} parent=0 // loop_exit
    _

</llo_original>
